<compile_context>
chip_gen: v7x
topology: tpu7x:2x2x1
jax: 0.10.0
libtpu: 0.0.40
codegen_flags: <defaults>
</compile_context>

<pallas_src>
import functools

import jax
import jax.numpy as jnp
from jax import lax
from jax.experimental import pallas as pl
from jax.experimental.pallas import tpu as pltpu


# ----------------------------- Fused model kernel ----------------------------- #
def make_fused_kernel(T, B_pad, Hp, E, n_layers):
    TB = T * B_pad

    def kernel(*refs):
        # refs = [tok (TB,) SMEM, embed (V, E)]
        #        + [w_ih_l (D_l, 4Hp), w_hh_l (Hp, 4Hp), b_l (1, 4Hp)] * n_layers
        #        + [w_fc (Hp, Op), b_fc (1, Op), out (B_pad, Op),
        #           x_s (TB, E), xp_s (TB, 4Hp), hist_s (TB, Hp)]
        tok_ref, embed_ref = refs[0], refs[1]
        layer_refs = refs[2:2 + 3 * n_layers]
        w_fc_ref = refs[2 + 3 * n_layers]
        b_fc_ref = refs[3 + 3 * n_layers]
        out_ref = refs[4 + 3 * n_layers]
        x_s, xp_s, hist_s = refs[5 + 3 * n_layers:8 + 3 * n_layers]

        # In-kernel embedding gather: static destination row, dynamic source row from SMEM ids.
        # Off the recurrence critical path; removes the pre-kernel XLA gather + HBM roundtrip.
        for r in range(TB):
            tok = tok_ref[r]
            x_s[pl.ds(r, 1), :] = embed_ref[pl.ds(tok, 1), :]

        h = jnp.zeros((B_pad, Hp), jnp.float32)
        for l in range(n_layers):
            w_ih_ref = layer_refs[3 * l]          # (D_l, 4Hp)  gate blocks packed i|f|o|g
            w_hh_ref = layer_refs[3 * l + 1]      # (Hp, 4Hp)
            b_ref = layer_refs[3 * l + 2]         # (1, 4Hp)

            src = x_s if l == 0 else hist_s
            # Hoisted input projection: one MXU matmul over all timesteps, bias folded once,
            # result parked in VMEM so only a (B_pad, 4Hp) slab is live per recurrence step.
            xp_s[...] = (jnp.dot(src[...], w_ih_ref[...],
                                 preferred_element_type=jnp.float32) + b_ref[...])

            store_hist = l < n_layers - 1

            def step(t, carry):
                h, c = carry
                row0 = pl.multiple_of(t * B_pad, B_pad)      # aligned sublane-tile slab
                gates = xp_s[pl.ds(row0, B_pad), :] + jnp.dot(
                    h, w_hh_ref[...], preferred_element_type=jnp.float32)   # (B_pad, 4Hp)
                sig = jax.nn.sigmoid(gates[:, 0:3 * Hp])     # i|f|o -> one EUP slab
                i_g = sig[:, 0:Hp]                           # 128-lane aligned slabs
                f_g = sig[:, Hp:2 * Hp]
                o_g = sig[:, 2 * Hp:3 * Hp]
                g_g = jnp.tanh(gates[:, 3 * Hp:4 * Hp])
                c = f_g * c + i_g * g_g
                h = o_g * jnp.tanh(c)
                if store_hist:
                    hist_s[pl.ds(row0, B_pad), :] = h        # one aligned vst per step
                return (h, c)

            h, _ = lax.fori_loop(
                0, T, step,
                (jnp.zeros((B_pad, Hp), jnp.float32),
                 jnp.zeros((B_pad, Hp), jnp.float32)),
                unroll=True)

        # Fused final Linear on the top layer's last-timestep hidden; lane-dense output store.
        out_ref[...] = (jnp.dot(h, w_fc_ref[...], preferred_element_type=jnp.float32)
                        + b_fc_ref[...])

    return kernel


def lstm_forward(tokens, packed, n_outputs):
    """tokens: (B, T) int32 -> (B, n_outputs) float32. Entire model = one pallas_call."""
    B, T = tokens.shape
    E = packed["embed"].shape[1]
    Hp = packed["w_hh_0"].shape[0]
    out_pad = packed["w_fc"].shape[1]
    n_layers = sum(1 for k in packed if k.startswith("w_hh_"))
    B_pad = ((B + 7) // 8) * 8

    # Time-major padded token ids (row = t*B_pad + b); pad rows use token 0 and are discarded.
    tok_tm = jnp.zeros((T, B_pad), jnp.int32).at[:, :B].set(tokens.T.astype(jnp.int32))
    tok_flat = tok_tm.reshape(-1)

    inputs = [tok_flat, packed["embed"]]
    for l in range(n_layers):
        inputs += [packed[f"w_ih_{l}"], packed[f"w_hh_{l}"], packed[f"b_{l}"]]
    inputs += [packed["w_fc"], packed["b_fc"]]

    in_specs = ([pl.BlockSpec(memory_space=pltpu.MemorySpace.SMEM)]
                + [pl.BlockSpec(memory_space=pltpu.MemorySpace.VMEM)] * (len(inputs) - 1))

    out = pl.pallas_call(
        make_fused_kernel(T, B_pad, Hp, E, n_layers),
        out_shape=jax.ShapeDtypeStruct((B_pad, out_pad), jnp.float32),
        in_specs=in_specs,
        out_specs=pl.BlockSpec(memory_space=pltpu.MemorySpace.VMEM),
        scratch_shapes=[
            pltpu.VMEM((T * B_pad, E), jnp.float32),        # gathered embeddings, time-major
            pltpu.VMEM((T * B_pad, 4 * Hp), jnp.float32),   # hoisted input projection xp
            pltpu.VMEM((T * B_pad, Hp), jnp.float32),       # per-layer h history
        ],
    )(*inputs)
    return out[:B, :n_outputs]


# ----------------------------- Parameter handling ----------------------------- #
def init_params(key, vocab_size, embed_size, hidden_size, n_layers, n_outputs):
    """Parameters in PyTorch layout (nn.Embedding / nn.LSTM / nn.Linear shapes + init ranges)."""
    keys = jax.random.split(key, 2 + 4 * n_layers + 2)
    k = 1.0 / jnp.sqrt(hidden_size)
    p = {"embed": jax.random.normal(keys[0], (vocab_size, embed_size), jnp.float32)}
    idx = 1
    for l in range(n_layers):
        d_in = embed_size if l == 0 else hidden_size
        p[f"w_ih_{l}"] = jax.random.uniform(keys[idx], (4 * hidden_size, d_in), jnp.float32, -k, k); idx += 1
        p[f"w_hh_{l}"] = jax.random.uniform(keys[idx], (4 * hidden_size, hidden_size), jnp.float32, -k, k); idx += 1
        p[f"b_ih_{l}"] = jax.random.uniform(keys[idx], (4 * hidden_size,), jnp.float32, -k, k); idx += 1
        p[f"b_hh_{l}"] = jax.random.uniform(keys[idx], (4 * hidden_size,), jnp.float32, -k, k); idx += 1
    p["w_fc"] = jax.random.uniform(keys[idx], (n_outputs, hidden_size), jnp.float32, -k, k); idx += 1
    p["b_fc"] = jax.random.uniform(keys[idx], (n_outputs,), jnp.float32, -k, k)
    return p


def pack_params(p, n_layers, hidden_size, n_outputs, lane=128):
    """Repack PyTorch-layout params for the fused kernel.

    - W transposed so the kernel does plain x @ W matmuls.
    - Gate rows reordered (i, f, g, o) -> (i, f, o, g): three sigmoids = one contiguous slab.
    - H padded to Hp=multiple of 128 so every gate slab / h / c is a whole-vreg lane block;
      pad rows/cols are zero, which keeps the pad lanes of h and c exactly 0.
    - b_ih + b_hh folded into one (1, 4Hp) bias row (added once, outside the time loop).
    - w_fc/b_fc padded to 128 output lanes for a lane-dense final store.
    """
    H = hidden_size
    Hp = ((H + lane - 1) // lane) * lane
    Op = ((n_outputs + lane - 1) // lane) * lane
    perm = jnp.concatenate([jnp.arange(0, 2 * H),          # i, f
                            jnp.arange(3 * H, 4 * H),      # o
                            jnp.arange(2 * H, 3 * H)])     # g

    def pad_gate_cols(w):                                   # (D, 4H) -> (D, 4Hp)
        out = jnp.zeros((w.shape[0], 4 * Hp), jnp.float32)
        for g in range(4):
            out = out.at[:, g * Hp:g * Hp + H].set(w[:, g * H:(g + 1) * H])
        return out

    def pad_rows(w, rows):                                  # (r, X) -> (rows, X)
        return jnp.zeros((rows, w.shape[1]), jnp.float32).at[:w.shape[0], :].set(w)

    packed = {"embed": p["embed"]}
    for l in range(n_layers):
        w_ih = pad_gate_cols(p[f"w_ih_{l}"][perm, :].T)     # (D_l, 4Hp)
        if l > 0:
            w_ih = pad_rows(w_ih, Hp)                       # hidden-fed layers take padded h
        packed[f"w_ih_{l}"] = w_ih
        packed[f"w_hh_{l}"] = pad_rows(pad_gate_cols(p[f"w_hh_{l}"][perm, :].T), Hp)  # (Hp, 4Hp)
        packed[f"b_{l}"] = pad_gate_cols(((p[f"b_ih_{l}"] + p[f"b_hh_{l}"])[perm])[None, :])
    w_fc = pad_rows(p["w_fc"].T, Hp)                        # (Hp, n_out)
    packed["w_fc"] = jnp.zeros((Hp, Op), jnp.float32).at[:, :n_outputs].set(w_fc)
    packed["b_fc"] = jnp.zeros((1, Op), jnp.float32).at[0, :n_outputs].set(p["b_fc"])
    return packed


# ----------------------------- Pure-JAX reference ------------------------------ #
def lstm_forward_ref(tokens, p, n_layers, hidden_size):
    """Exact PyTorch semantics (i,f,g,o gate order, zero init state, no dropout at eval)."""
    H = hidden_size
    x = jnp.take(p["embed"], tokens, axis=0)                # (B, T, E)
    B, T, _ = x.shape
    for l in range(n_layers):
        w_ih, w_hh = p[f"w_ih_{l}"], p[f"w_hh_{l}"]
        b = p[f"b_ih_{l}"] + p[f"b_hh_{l}"]
        h = jnp.zeros((B, H), jnp.float32)
        c = jnp.zeros((B, H), jnp.float32)
        outs = []
        for t in range(T):
            gates = x[:, t, :] @ w_ih.T + h @ w_hh.T + b
            i = jax.nn.sigmoid(gates[:, 0:H])
            f = jax.nn.sigmoid(gates[:, H:2 * H])
            g = jnp.tanh(gates[:, 2 * H:3 * H])
            o = jax.nn.sigmoid(gates[:, 3 * H:4 * H])
            c = f * c + i * g
            h = o * jnp.tanh(c)
            outs.append(h)
        x = jnp.stack(outs, axis=1)
    return x[:, -1, :] @ p["w_fc"].T + p["b_fc"]


if __name__ == "__main__":
    vocab_size, embed_size, hidden_size = 50, 32, 32
    n_layers, n_outputs = 2, 4
    batch, seq = 2, 8

    key = jax.random.PRNGKey(0)
    k_param, k_tok = jax.random.split(key)
    raw = init_params(k_param, vocab_size, embed_size, hidden_size, n_layers, n_outputs)
    packed = pack_params(raw, n_layers, hidden_size, n_outputs)
    tokens = jax.random.randint(k_tok, (batch, seq), 0, vocab_size, dtype=jnp.int32)

    fwd = jax.jit(functools.partial(lstm_forward, n_outputs=n_outputs))
    out = fwd(tokens, packed)
    out = jax.block_until_ready(out)

    ref = lstm_forward_ref(tokens, raw, n_layers, hidden_size)
    assert out.shape == (batch, n_outputs)
    assert jnp.allclose(out, ref, atol=1e-5, rtol=1e-5), (out, ref)

    print("KERNEL_OK")
</pallas_src>

<mosaic_0001>
module attributes {stable_mosaic.version = 11 : i64} {
  func.func @kernel(%arg0: memref<64xi32, #tpu.memory_space<smem>>, %arg1: memref<50x32xf32, #tpu.memory_space<vmem>>, %arg2: memref<32x512xf32, #tpu.memory_space<vmem>>, %arg3: memref<128x512xf32, #tpu.memory_space<vmem>>, %arg4: memref<1x512xf32, #tpu.memory_space<vmem>>, %arg5: memref<128x512xf32, #tpu.memory_space<vmem>>, %arg6: memref<128x512xf32, #tpu.memory_space<vmem>>, %arg7: memref<1x512xf32, #tpu.memory_space<vmem>>, %arg8: memref<128x128xf32, #tpu.memory_space<vmem>>, %arg9: memref<1x128xf32, #tpu.memory_space<vmem>>, %arg10: memref<8x128xf32, #tpu.memory_space<vmem>>, %arg11: memref<64x32xf32, #tpu.memory_space<vmem>>, %arg12: memref<64x512xf32, #tpu.memory_space<vmem>>, %arg13: memref<64x128xf32, #tpu.memory_space<vmem>>) attributes {dimension_semantics = [], scalar_prefetch = 0 : i64, scratch_operands = 3 : i64, tpu.core_type = #tpu.core_type<tc>} {
    %c0 = arith.constant 0 : index
    %0 = memref.load %arg0[%c0] : memref<64xi32, #tpu.memory_space<smem>>
    %1 = arith.index_cast %0 : i32 to index
    %c0_0 = arith.constant 0 : index
    %2 = vector.load %arg1[%1, %c0_0] : memref<50x32xf32, #tpu.memory_space<vmem>>, vector<1x32xf32>
    %c0_1 = arith.constant 0 : index
    %c0_2 = arith.constant 0 : index
    %3 = vector.load %arg11[%c0_1, %c0_2] : memref<64x32xf32, #tpu.memory_space<vmem>>, vector<1x32xf32>
    tpu.vector_store %arg11[%c0_1, %c0_2], %2 {strides = array<i32>} : memref<64x32xf32, #tpu.memory_space<vmem>>, vector<1x32xf32>,
    %c1 = arith.constant 1 : index
    %4 = memref.load %arg0[%c1] : memref<64xi32, #tpu.memory_space<smem>>
    %5 = arith.index_cast %4 : i32 to index
    %c0_3 = arith.constant 0 : index
    %6 = vector.load %arg1[%5, %c0_3] : memref<50x32xf32, #tpu.memory_space<vmem>>, vector<1x32xf32>
    %c1_4 = arith.constant 1 : index
    %c0_5 = arith.constant 0 : index
    %7 = vector.load %arg11[%c1_4, %c0_5] : memref<64x32xf32, #tpu.memory_space<vmem>>, vector<1x32xf32>
    tpu.vector_store %arg11[%c1_4, %c0_5], %6 {strides = array<i32>} : memref<64x32xf32, #tpu.memory_space<vmem>>, vector<1x32xf32>,
    %c2 = arith.constant 2 : index
    %8 = memref.load %arg0[%c2] : memref<64xi32, #tpu.memory_space<smem>>
    %9 = arith.index_cast %8 : i32 to index
    %c0_6 = arith.constant 0 : index
    %10 = vector.load %arg1[%9, %c0_6] : memref<50x32xf32, #tpu.memory_space<vmem>>, vector<1x32xf32>
    %c2_7 = arith.constant 2 : index
    %c0_8 = arith.constant 0 : index
    %11 = vector.load %arg11[%c2_7, %c0_8] : memref<64x32xf32, #tpu.memory_space<vmem>>, vector<1x32xf32>
    tpu.vector_store %arg11[%c2_7, %c0_8], %10 {strides = array<i32>} : memref<64x32xf32, #tpu.memory_space<vmem>>, vector<1x32xf32>,
    %c3 = arith.constant 3 : index
    %12 = memref.load %arg0[%c3] : memref<64xi32, #tpu.memory_space<smem>>
    %13 = arith.index_cast %12 : i32 to index
    %c0_9 = arith.constant 0 : index
    %14 = vector.load %arg1[%13, %c0_9] : memref<50x32xf32, #tpu.memory_space<vmem>>, vector<1x32xf32>
    %c3_10 = arith.constant 3 : index
    %c0_11 = arith.constant 0 : index
    %15 = vector.load %arg11[%c3_10, %c0_11] : memref<64x32xf32, #tpu.memory_space<vmem>>, vector<1x32xf32>
    tpu.vector_store %arg11[%c3_10, %c0_11], %14 {strides = array<i32>} : memref<64x32xf32, #tpu.memory_space<vmem>>, vector<1x32xf32>,
    %c4 = arith.constant 4 : index
    %16 = memref.load %arg0[%c4] : memref<64xi32, #tpu.memory_space<smem>>
    %17 = arith.index_cast %16 : i32 to index
    %c0_12 = arith.constant 0 : index
    %18 = vector.load %arg1[%17, %c0_12] : memref<50x32xf32, #tpu.memory_space<vmem>>, vector<1x32xf32>
    %c4_13 = arith.constant 4 : index
    %c0_14 = arith.constant 0 : index
    %19 = vector.load %arg11[%c4_13, %c0_14] : memref<64x32xf32, #tpu.memory_space<vmem>>, vector<1x32xf32>
    tpu.vector_store %arg11[%c4_13, %c0_14], %18 {strides = array<i32>} : memref<64x32xf32, #tpu.memory_space<vmem>>, vector<1x32xf32>,
    %c5 = arith.constant 5 : index
    %20 = memref.load %arg0[%c5] : memref<64xi32, #tpu.memory_space<smem>>
    %21 = arith.index_cast %20 : i32 to index
    %c0_15 = arith.constant 0 : index
    %22 = vector.load %arg1[%21, %c0_15] : memref<50x32xf32, #tpu.memory_space<vmem>>, vector<1x32xf32>
    %c5_16 = arith.constant 5 : index
    %c0_17 = arith.constant 0 : index
    %23 = vector.load %arg11[%c5_16, %c0_17] : memref<64x32xf32, #tpu.memory_space<vmem>>, vector<1x32xf32>
    tpu.vector_store %arg11[%c5_16, %c0_17], %22 {strides = array<i32>} : memref<64x32xf32, #tpu.memory_space<vmem>>, vector<1x32xf32>,
    %c6 = arith.constant 6 : index
    %24 = memref.load %arg0[%c6] : memref<64xi32, #tpu.memory_space<smem>>
    %25 = arith.index_cast %24 : i32 to index
    %c0_18 = arith.constant 0 : index
    %26 = vector.load %arg1[%25, %c0_18] : memref<50x32xf32, #tpu.memory_space<vmem>>, vector<1x32xf32>
    %c6_19 = arith.constant 6 : index
    %c0_20 = arith.constant 0 : index
    %27 = vector.load %arg11[%c6_19, %c0_20] : memref<64x32xf32, #tpu.memory_space<vmem>>, vector<1x32xf32>
    tpu.vector_store %arg11[%c6_19, %c0_20], %26 {strides = array<i32>} : memref<64x32xf32, #tpu.memory_space<vmem>>, vector<1x32xf32>,
    %c7 = arith.constant 7 : index
    %28 = memref.load %arg0[%c7] : memref<64xi32, #tpu.memory_space<smem>>
    %29 = arith.index_cast %28 : i32 to index
    %c0_21 = arith.constant 0 : index
    %30 = vector.load %arg1[%29, %c0_21] : memref<50x32xf32, #tpu.memory_space<vmem>>, vector<1x32xf32>
    %c7_22 = arith.constant 7 : index
    %c0_23 = arith.constant 0 : index
    %31 = vector.load %arg11[%c7_22, %c0_23] : memref<64x32xf32, #tpu.memory_space<vmem>>, vector<1x32xf32>
    tpu.vector_store %arg11[%c7_22, %c0_23], %30 {strides = array<i32>} : memref<64x32xf32, #tpu.memory_space<vmem>>, vector<1x32xf32>,
    %c8 = arith.constant 8 : index
    %32 = memref.load %arg0[%c8] : memref<64xi32, #tpu.memory_space<smem>>
    %33 = arith.index_cast %32 : i32 to index
    %c0_24 = arith.constant 0 : index
    %34 = vector.load %arg1[%33, %c0_24] : memref<50x32xf32, #tpu.memory_space<vmem>>, vector<1x32xf32>
    %c8_25 = arith.constant 8 : index
    %c0_26 = arith.constant 0 : index
    %35 = vector.load %arg11[%c8_25, %c0_26] : memref<64x32xf32, #tpu.memory_space<vmem>>, vector<1x32xf32>
    tpu.vector_store %arg11[%c8_25, %c0_26], %34 {strides = array<i32>} : memref<64x32xf32, #tpu.memory_space<vmem>>, vector<1x32xf32>,
    %c9 = arith.constant 9 : index
    %36 = memref.load %arg0[%c9] : memref<64xi32, #tpu.memory_space<smem>>
    %37 = arith.index_cast %36 : i32 to index
    %c0_27 = arith.constant 0 : index
    %38 = vector.load %arg1[%37, %c0_27] : memref<50x32xf32, #tpu.memory_space<vmem>>, vector<1x32xf32>
    %c9_28 = arith.constant 9 : index
    %c0_29 = arith.constant 0 : index
    %39 = vector.load %arg11[%c9_28, %c0_29] : memref<64x32xf32, #tpu.memory_space<vmem>>, vector<1x32xf32>
    tpu.vector_store %arg11[%c9_28, %c0_29], %38 {strides = array<i32>} : memref<64x32xf32, #tpu.memory_space<vmem>>, vector<1x32xf32>,
    %c10 = arith.constant 10 : index
    %40 = memref.load %arg0[%c10] : memref<64xi32, #tpu.memory_space<smem>>
    %41 = arith.index_cast %40 : i32 to index
    %c0_30 = arith.constant 0 : index
    %42 = vector.load %arg1[%41, %c0_30] : memref<50x32xf32, #tpu.memory_space<vmem>>, vector<1x32xf32>
    %c10_31 = arith.constant 10 : index
    %c0_32 = arith.constant 0 : index
    %43 = vector.load %arg11[%c10_31, %c0_32] : memref<64x32xf32, #tpu.memory_space<vmem>>, vector<1x32xf32>
    tpu.vector_store %arg11[%c10_31, %c0_32], %42 {strides = array<i32>} : memref<64x32xf32, #tpu.memory_space<vmem>>, vector<1x32xf32>,
    %c11 = arith.constant 11 : index
    %44 = memref.load %arg0[%c11] : memref<64xi32, #tpu.memory_space<smem>>
    %45 = arith.index_cast %44 : i32 to index
    %c0_33 = arith.constant 0 : index
    %46 = vector.load %arg1[%45, %c0_33] : memref<50x32xf32, #tpu.memory_space<vmem>>, vector<1x32xf32>
    %c11_34 = arith.constant 11 : index
    %c0_35 = arith.constant 0 : index
    %47 = vector.load %arg11[%c11_34, %c0_35] : memref<64x32xf32, #tpu.memory_space<vmem>>, vector<1x32xf32>
    tpu.vector_store %arg11[%c11_34, %c0_35], %46 {strides = array<i32>} : memref<64x32xf32, #tpu.memory_space<vmem>>, vector<1x32xf32>,
    %c12 = arith.constant 12 : index
    %48 = memref.load %arg0[%c12] : memref<64xi32, #tpu.memory_space<smem>>
    %49 = arith.index_cast %48 : i32 to index
    %c0_36 = arith.constant 0 : index
    %50 = vector.load %arg1[%49, %c0_36] : memref<50x32xf32, #tpu.memory_space<vmem>>, vector<1x32xf32>
    %c12_37 = arith.constant 12 : index
    %c0_38 = arith.constant 0 : index
    %51 = vector.load %arg11[%c12_37, %c0_38] : memref<64x32xf32, #tpu.memory_space<vmem>>, vector<1x32xf32>
    tpu.vector_store %arg11[%c12_37, %c0_38], %50 {strides = array<i32>} : memref<64x32xf32, #tpu.memory_space<vmem>>, vector<1x32xf32>,
    %c13 = arith.constant 13 : index
    %52 = memref.load %arg0[%c13] : memref<64xi32, #tpu.memory_space<smem>>
    %53 = arith.index_cast %52 : i32 to index
    %c0_39 = arith.constant 0 : index
    %54 = vector.load %arg1[%53, %c0_39] : memref<50x32xf32, #tpu.memory_space<vmem>>, vector<1x32xf32>
    %c13_40 = arith.constant 13 : index
    %c0_41 = arith.constant 0 : index
    %55 = vector.load %arg11[%c13_40, %c0_41] : memref<64x32xf32, #tpu.memory_space<vmem>>, vector<1x32xf32>
    tpu.vector_store %arg11[%c13_40, %c0_41], %54 {strides = array<i32>} : memref<64x32xf32, #tpu.memory_space<vmem>>, vector<1x32xf32>,
    %c14 = arith.constant 14 : index
    %56 = memref.load %arg0[%c14] : memref<64xi32, #tpu.memory_space<smem>>
    %57 = arith.index_cast %56 : i32 to index
    %c0_42 = arith.constant 0 : index
    %58 = vector.load %arg1[%57, %c0_42] : memref<50x32xf32, #tpu.memory_space<vmem>>, vector<1x32xf32>
    %c14_43 = arith.constant 14 : index
    %c0_44 = arith.constant 0 : index
    %59 = vector.load %arg11[%c14_43, %c0_44] : memref<64x32xf32, #tpu.memory_space<vmem>>, vector<1x32xf32>
    tpu.vector_store %arg11[%c14_43, %c0_44], %58 {strides = array<i32>} : memref<64x32xf32, #tpu.memory_space<vmem>>, vector<1x32xf32>,
    %c15 = arith.constant 15 : index
    %60 = memref.load %arg0[%c15] : memref<64xi32, #tpu.memory_space<smem>>
    %61 = arith.index_cast %60 : i32 to index
    %c0_45 = arith.constant 0 : index
    %62 = vector.load %arg1[%61, %c0_45] : memref<50x32xf32, #tpu.memory_space<vmem>>, vector<1x32xf32>
    %c15_46 = arith.constant 15 : index
    %c0_47 = arith.constant 0 : index
    %63 = vector.load %arg11[%c15_46, %c0_47] : memref<64x32xf32, #tpu.memory_space<vmem>>, vector<1x32xf32>
    tpu.vector_store %arg11[%c15_46, %c0_47], %62 {strides = array<i32>} : memref<64x32xf32, #tpu.memory_space<vmem>>, vector<1x32xf32>,
    %c16 = arith.constant 16 : index
    %64 = memref.load %arg0[%c16] : memref<64xi32, #tpu.memory_space<smem>>
    %65 = arith.index_cast %64 : i32 to index
    %c0_48 = arith.constant 0 : index
    %66 = vector.load %arg1[%65, %c0_48] : memref<50x32xf32, #tpu.memory_space<vmem>>, vector<1x32xf32>
    %c16_49 = arith.constant 16 : index
    %c0_50 = arith.constant 0 : index
    %67 = vector.load %arg11[%c16_49, %c0_50] : memref<64x32xf32, #tpu.memory_space<vmem>>, vector<1x32xf32>
    tpu.vector_store %arg11[%c16_49, %c0_50], %66 {strides = array<i32>} : memref<64x32xf32, #tpu.memory_space<vmem>>, vector<1x32xf32>,
    %c17 = arith.constant 17 : index
    %68 = memref.load %arg0[%c17] : memref<64xi32, #tpu.memory_space<smem>>
    %69 = arith.index_cast %68 : i32 to index
    %c0_51 = arith.constant 0 : index
    %70 = vector.load %arg1[%69, %c0_51] : memref<50x32xf32, #tpu.memory_space<vmem>>, vector<1x32xf32>
    %c17_52 = arith.constant 17 : index
    %c0_53 = arith.constant 0 : index
    %71 = vector.load %arg11[%c17_52, %c0_53] : memref<64x32xf32, #tpu.memory_space<vmem>>, vector<1x32xf32>
    tpu.vector_store %arg11[%c17_52, %c0_53], %70 {strides = array<i32>} : memref<64x32xf32, #tpu.memory_space<vmem>>, vector<1x32xf32>,
    %c18 = arith.constant 18 : index
    %72 = memref.load %arg0[%c18] : memref<64xi32, #tpu.memory_space<smem>>
    %73 = arith.index_cast %72 : i32 to index
    %c0_54 = arith.constant 0 : index
    %74 = vector.load %arg1[%73, %c0_54] : memref<50x32xf32, #tpu.memory_space<vmem>>, vector<1x32xf32>
    %c18_55 = arith.constant 18 : index
    %c0_56 = arith.constant 0 : index
    %75 = vector.load %arg11[%c18_55, %c0_56] : memref<64x32xf32, #tpu.memory_space<vmem>>, vector<1x32xf32>
    tpu.vector_store %arg11[%c18_55, %c0_56], %74 {strides = array<i32>} : memref<64x32xf32, #tpu.memory_space<vmem>>, vector<1x32xf32>,
    %c19 = arith.constant 19 : index
    %76 = memref.load %arg0[%c19] : memref<64xi32, #tpu.memory_space<smem>>
    %77 = arith.index_cast %76 : i32 to index
    %c0_57 = arith.constant 0 : index
    %78 = vector.load %arg1[%77, %c0_57] : memref<50x32xf32, #tpu.memory_space<vmem>>, vector<1x32xf32>
    %c19_58 = arith.constant 19 : index
    %c0_59 = arith.constant 0 : index
    %79 = vector.load %arg11[%c19_58, %c0_59] : memref<64x32xf32, #tpu.memory_space<vmem>>, vector<1x32xf32>
    tpu.vector_store %arg11[%c19_58, %c0_59], %78 {strides = array<i32>} : memref<64x32xf32, #tpu.memory_space<vmem>>, vector<1x32xf32>,
    %c20 = arith.constant 20 : index
    %80 = memref.load %arg0[%c20] : memref<64xi32, #tpu.memory_space<smem>>
    %81 = arith.index_cast %80 : i32 to index
    %c0_60 = arith.constant 0 : index
    %82 = vector.load %arg1[%81, %c0_60] : memref<50x32xf32, #tpu.memory_space<vmem>>, vector<1x32xf32>
    %c20_61 = arith.constant 20 : index
    %c0_62 = arith.constant 0 : index
    %83 = vector.load %arg11[%c20_61, %c0_62] : memref<64x32xf32, #tpu.memory_space<vmem>>, vector<1x32xf32>
    tpu.vector_store %arg11[%c20_61, %c0_62], %82 {strides = array<i32>} : memref<64x32xf32, #tpu.memory_space<vmem>>, vector<1x32xf32>,
    %c21 = arith.constant 21 : index
    %84 = memref.load %arg0[%c21] : memref<64xi32, #tpu.memory_space<smem>>
    %85 = arith.index_cast %84 : i32 to index
    %c0_63 = arith.constant 0 : index
    %86 = vector.load %arg1[%85, %c0_63] : memref<50x32xf32, #tpu.memory_space<vmem>>, vector<1x32xf32>
    %c21_64 = arith.constant 21 : index
    %c0_65 = arith.constant 0 : index
    %87 = vector.load %arg11[%c21_64, %c0_65] : memref<64x32xf32, #tpu.memory_space<vmem>>, vector<1x32xf32>
    tpu.vector_store %arg11[%c21_64, %c0_65], %86 {strides = array<i32>} : memref<64x32xf32, #tpu.memory_space<vmem>>, vector<1x32xf32>,
    %c22 = arith.constant 22 : index
    %88 = memref.load %arg0[%c22] : memref<64xi32, #tpu.memory_space<smem>>
    %89 = arith.index_cast %88 : i32 to index
    %c0_66 = arith.constant 0 : index
    %90 = vector.load %arg1[%89, %c0_66] : memref<50x32xf32, #tpu.memory_space<vmem>>, vector<1x32xf32>
    %c22_67 = arith.constant 22 : index
    %c0_68 = arith.constant 0 : index
    %91 = vector.load %arg11[%c22_67, %c0_68] : memref<64x32xf32, #tpu.memory_space<vmem>>, vector<1x32xf32>
    tpu.vector_store %arg11[%c22_67, %c0_68], %90 {strides = array<i32>} : memref<64x32xf32, #tpu.memory_space<vmem>>, vector<1x32xf32>,
    %c23 = arith.constant 23 : index
    %92 = memref.load %arg0[%c23] : memref<64xi32, #tpu.memory_space<smem>>
    %93 = arith.index_cast %92 : i32 to index
    %c0_69 = arith.constant 0 : index
    %94 = vector.load %arg1[%93, %c0_69] : memref<50x32xf32, #tpu.memory_space<vmem>>, vector<1x32xf32>
    %c23_70 = arith.constant 23 : index
    %c0_71 = arith.constant 0 : index
    %95 = vector.load %arg11[%c23_70, %c0_71] : memref<64x32xf32, #tpu.memory_space<vmem>>, vector<1x32xf32>
    tpu.vector_store %arg11[%c23_70, %c0_71], %94 {strides = array<i32>} : memref<64x32xf32, #tpu.memory_space<vmem>>, vector<1x32xf32>,
    %c24 = arith.constant 24 : index
    %96 = memref.load %arg0[%c24] : memref<64xi32, #tpu.memory_space<smem>>
    %97 = arith.index_cast %96 : i32 to index
    %c0_72 = arith.constant 0 : index
    %98 = vector.load %arg1[%97, %c0_72] : memref<50x32xf32, #tpu.memory_space<vmem>>, vector<1x32xf32>
    %c24_73 = arith.constant 24 : index
    %c0_74 = arith.constant 0 : index
    %99 = vector.load %arg11[%c24_73, %c0_74] : memref<64x32xf32, #tpu.memory_space<vmem>>, vector<1x32xf32>
    tpu.vector_store %arg11[%c24_73, %c0_74], %98 {strides = array<i32>} : memref<64x32xf32, #tpu.memory_space<vmem>>, vector<1x32xf32>,
    %c25 = arith.constant 25 : index
    %100 = memref.load %arg0[%c25] : memref<64xi32, #tpu.memory_space<smem>>
    %101 = arith.index_cast %100 : i32 to index
    %c0_75 = arith.constant 0 : index
    %102 = vector.load %arg1[%101, %c0_75] : memref<50x32xf32, #tpu.memory_space<vmem>>, vector<1x32xf32>
    %c25_76 = arith.constant 25 : index
    %c0_77 = arith.constant 0 : index
    %103 = vector.load %arg11[%c25_76, %c0_77] : memref<64x32xf32, #tpu.memory_space<vmem>>, vector<1x32xf32>
    tpu.vector_store %arg11[%c25_76, %c0_77], %102 {strides = array<i32>} : memref<64x32xf32, #tpu.memory_space<vmem>>, vector<1x32xf32>,
    %c26 = arith.constant 26 : index
    %104 = memref.load %arg0[%c26] : memref<64xi32, #tpu.memory_space<smem>>
    %105 = arith.index_cast %104 : i32 to index
    %c0_78 = arith.constant 0 : index
    %106 = vector.load %arg1[%105, %c0_78] : memref<50x32xf32, #tpu.memory_space<vmem>>, vector<1x32xf32>
    %c26_79 = arith.constant 26 : index
    %c0_80 = arith.constant 0 : index
    %107 = vector.load %arg11[%c26_79, %c0_80] : memref<64x32xf32, #tpu.memory_space<vmem>>, vector<1x32xf32>
    tpu.vector_store %arg11[%c26_79, %c0_80], %106 {strides = array<i32>} : memref<64x32xf32, #tpu.memory_space<vmem>>, vector<1x32xf32>,
    %c27 = arith.constant 27 : index
    %108 = memref.load %arg0[%c27] : memref<64xi32, #tpu.memory_space<smem>>
    %109 = arith.index_cast %108 : i32 to index
    %c0_81 = arith.constant 0 : index
    %110 = vector.load %arg1[%109, %c0_81] : memref<50x32xf32, #tpu.memory_space<vmem>>, vector<1x32xf32>
    %c27_82 = arith.constant 27 : index
    %c0_83 = arith.constant 0 : index
    %111 = vector.load %arg11[%c27_82, %c0_83] : memref<64x32xf32, #tpu.memory_space<vmem>>, vector<1x32xf32>
    tpu.vector_store %arg11[%c27_82, %c0_83], %110 {strides = array<i32>} : memref<64x32xf32, #tpu.memory_space<vmem>>, vector<1x32xf32>,
    %c28 = arith.constant 28 : index
    %112 = memref.load %arg0[%c28] : memref<64xi32, #tpu.memory_space<smem>>
    %113 = arith.index_cast %112 : i32 to index
    %c0_84 = arith.constant 0 : index
    %114 = vector.load %arg1[%113, %c0_84] : memref<50x32xf32, #tpu.memory_space<vmem>>, vector<1x32xf32>
    %c28_85 = arith.constant 28 : index
    %c0_86 = arith.constant 0 : index
    %115 = vector.load %arg11[%c28_85, %c0_86] : memref<64x32xf32, #tpu.memory_space<vmem>>, vector<1x32xf32>
    tpu.vector_store %arg11[%c28_85, %c0_86], %114 {strides = array<i32>} : memref<64x32xf32, #tpu.memory_space<vmem>>, vector<1x32xf32>,
    %c29 = arith.constant 29 : index
    %116 = memref.load %arg0[%c29] : memref<64xi32, #tpu.memory_space<smem>>
    %117 = arith.index_cast %116 : i32 to index
    %c0_87 = arith.constant 0 : index
    %118 = vector.load %arg1[%117, %c0_87] : memref<50x32xf32, #tpu.memory_space<vmem>>, vector<1x32xf32>
    %c29_88 = arith.constant 29 : index
    %c0_89 = arith.constant 0 : index
    %119 = vector.load %arg11[%c29_88, %c0_89] : memref<64x32xf32, #tpu.memory_space<vmem>>, vector<1x32xf32>
    tpu.vector_store %arg11[%c29_88, %c0_89], %118 {strides = array<i32>} : memref<64x32xf32, #tpu.memory_space<vmem>>, vector<1x32xf32>,
    %c30 = arith.constant 30 : index
    %120 = memref.load %arg0[%c30] : memref<64xi32, #tpu.memory_space<smem>>
    %121 = arith.index_cast %120 : i32 to index
    %c0_90 = arith.constant 0 : index
    %122 = vector.load %arg1[%121, %c0_90] : memref<50x32xf32, #tpu.memory_space<vmem>>, vector<1x32xf32>
    %c30_91 = arith.constant 30 : index
    %c0_92 = arith.constant 0 : index
    %123 = vector.load %arg11[%c30_91, %c0_92] : memref<64x32xf32, #tpu.memory_space<vmem>>, vector<1x32xf32>
    tpu.vector_store %arg11[%c30_91, %c0_92], %122 {strides = array<i32>} : memref<64x32xf32, #tpu.memory_space<vmem>>, vector<1x32xf32>,
    %c31 = arith.constant 31 : index
    %124 = memref.load %arg0[%c31] : memref<64xi32, #tpu.memory_space<smem>>
    %125 = arith.index_cast %124 : i32 to index
    %c0_93 = arith.constant 0 : index
    %126 = vector.load %arg1[%125, %c0_93] : memref<50x32xf32, #tpu.memory_space<vmem>>, vector<1x32xf32>
    %c31_94 = arith.constant 31 : index
    %c0_95 = arith.constant 0 : index
    %127 = vector.load %arg11[%c31_94, %c0_95] : memref<64x32xf32, #tpu.memory_space<vmem>>, vector<1x32xf32>
    tpu.vector_store %arg11[%c31_94, %c0_95], %126 {strides = array<i32>} : memref<64x32xf32, #tpu.memory_space<vmem>>, vector<1x32xf32>,
    %c32 = arith.constant 32 : index
    %128 = memref.load %arg0[%c32] : memref<64xi32, #tpu.memory_space<smem>>
    %129 = arith.index_cast %128 : i32 to index
    %c0_96 = arith.constant 0 : index
    %130 = vector.load %arg1[%129, %c0_96] : memref<50x32xf32, #tpu.memory_space<vmem>>, vector<1x32xf32>
    %c32_97 = arith.constant 32 : index
    %c0_98 = arith.constant 0 : index
    %131 = vector.load %arg11[%c32_97, %c0_98] : memref<64x32xf32, #tpu.memory_space<vmem>>, vector<1x32xf32>
    tpu.vector_store %arg11[%c32_97, %c0_98], %130 {strides = array<i32>} : memref<64x32xf32, #tpu.memory_space<vmem>>, vector<1x32xf32>,
    %c33 = arith.constant 33 : index
    %132 = memref.load %arg0[%c33] : memref<64xi32, #tpu.memory_space<smem>>
    %133 = arith.index_cast %132 : i32 to index
    %c0_99 = arith.constant 0 : index
    %134 = vector.load %arg1[%133, %c0_99] : memref<50x32xf32, #tpu.memory_space<vmem>>, vector<1x32xf32>
    %c33_100 = arith.constant 33 : index
    %c0_101 = arith.constant 0 : index
    %135 = vector.load %arg11[%c33_100, %c0_101] : memref<64x32xf32, #tpu.memory_space<vmem>>, vector<1x32xf32>
    tpu.vector_store %arg11[%c33_100, %c0_101], %134 {strides = array<i32>} : memref<64x32xf32, #tpu.memory_space<vmem>>, vector<1x32xf32>,
    %c34 = arith.constant 34 : index
    %136 = memref.load %arg0[%c34] : memref<64xi32, #tpu.memory_space<smem>>
    %137 = arith.index_cast %136 : i32 to index
    %c0_102 = arith.constant 0 : index
    %138 = vector.load %arg1[%137, %c0_102] : memref<50x32xf32, #tpu.memory_space<vmem>>, vector<1x32xf32>
    %c34_103 = arith.constant 34 : index
    %c0_104 = arith.constant 0 : index
    %139 = vector.load %arg11[%c34_103, %c0_104] : memref<64x32xf32, #tpu.memory_space<vmem>>, vector<1x32xf32>
    tpu.vector_store %arg11[%c34_103, %c0_104], %138 {strides = array<i32>} : memref<64x32xf32, #tpu.memory_space<vmem>>, vector<1x32xf32>,
    %c35 = arith.constant 35 : index
    %140 = memref.load %arg0[%c35] : memref<64xi32, #tpu.memory_space<smem>>
    %141 = arith.index_cast %140 : i32 to index
    %c0_105 = arith.constant 0 : index
    %142 = vector.load %arg1[%141, %c0_105] : memref<50x32xf32, #tpu.memory_space<vmem>>, vector<1x32xf32>
    %c35_106 = arith.constant 35 : index
    %c0_107 = arith.constant 0 : index
    %143 = vector.load %arg11[%c35_106, %c0_107] : memref<64x32xf32, #tpu.memory_space<vmem>>, vector<1x32xf32>
    tpu.vector_store %arg11[%c35_106, %c0_107], %142 {strides = array<i32>} : memref<64x32xf32, #tpu.memory_space<vmem>>, vector<1x32xf32>,
    %c36 = arith.constant 36 : index
    %144 = memref.load %arg0[%c36] : memref<64xi32, #tpu.memory_space<smem>>
    %145 = arith.index_cast %144 : i32 to index
    %c0_108 = arith.constant 0 : index
    %146 = vector.load %arg1[%145, %c0_108] : memref<50x32xf32, #tpu.memory_space<vmem>>, vector<1x32xf32>
    %c36_109 = arith.constant 36 : index
    %c0_110 = arith.constant 0 : index
    %147 = vector.load %arg11[%c36_109, %c0_110] : memref<64x32xf32, #tpu.memory_space<vmem>>, vector<1x32xf32>
    tpu.vector_store %arg11[%c36_109, %c0_110], %146 {strides = array<i32>} : memref<64x32xf32, #tpu.memory_space<vmem>>, vector<1x32xf32>,
    %c37 = arith.constant 37 : index
    %148 = memref.load %arg0[%c37] : memref<64xi32, #tpu.memory_space<smem>>
    %149 = arith.index_cast %148 : i32 to index
    %c0_111 = arith.constant 0 : index
    %150 = vector.load %arg1[%149, %c0_111] : memref<50x32xf32, #tpu.memory_space<vmem>>, vector<1x32xf32>
    %c37_112 = arith.constant 37 : index
    %c0_113 = arith.constant 0 : index
    %151 = vector.load %arg11[%c37_112, %c0_113] : memref<64x32xf32, #tpu.memory_space<vmem>>, vector<1x32xf32>
    tpu.vector_store %arg11[%c37_112, %c0_113], %150 {strides = array<i32>} : memref<64x32xf32, #tpu.memory_space<vmem>>, vector<1x32xf32>,
    %c38 = arith.constant 38 : index
    %152 = memref.load %arg0[%c38] : memref<64xi32, #tpu.memory_space<smem>>
    %153 = arith.index_cast %152 : i32 to index
    %c0_114 = arith.constant 0 : index
    %154 = vector.load %arg1[%153, %c0_114] : memref<50x32xf32, #tpu.memory_space<vmem>>, vector<1x32xf32>
    %c38_115 = arith.constant 38 : index
    %c0_116 = arith.constant 0 : index
    %155 = vector.load %arg11[%c38_115, %c0_116] : memref<64x32xf32, #tpu.memory_space<vmem>>, vector<1x32xf32>
    tpu.vector_store %arg11[%c38_115, %c0_116], %154 {strides = array<i32>} : memref<64x32xf32, #tpu.memory_space<vmem>>, vector<1x32xf32>,
    %c39 = arith.constant 39 : index
    %156 = memref.load %arg0[%c39] : memref<64xi32, #tpu.memory_space<smem>>
    %157 = arith.index_cast %156 : i32 to index
    %c0_117 = arith.constant 0 : index
    %158 = vector.load %arg1[%157, %c0_117] : memref<50x32xf32, #tpu.memory_space<vmem>>, vector<1x32xf32>
    %c39_118 = arith.constant 39 : index
    %c0_119 = arith.constant 0 : index
    %159 = vector.load %arg11[%c39_118, %c0_119] : memref<64x32xf32, #tpu.memory_space<vmem>>, vector<1x32xf32>
    tpu.vector_store %arg11[%c39_118, %c0_119], %158 {strides = array<i32>} : memref<64x32xf32, #tpu.memory_space<vmem>>, vector<1x32xf32>,
    %c40 = arith.constant 40 : index
    %160 = memref.load %arg0[%c40] : memref<64xi32, #tpu.memory_space<smem>>
    %161 = arith.index_cast %160 : i32 to index
    %c0_120 = arith.constant 0 : index
    %162 = vector.load %arg1[%161, %c0_120] : memref<50x32xf32, #tpu.memory_space<vmem>>, vector<1x32xf32>
    %c40_121 = arith.constant 40 : index
    %c0_122 = arith.constant 0 : index
    %163 = vector.load %arg11[%c40_121, %c0_122] : memref<64x32xf32, #tpu.memory_space<vmem>>, vector<1x32xf32>
    tpu.vector_store %arg11[%c40_121, %c0_122], %162 {strides = array<i32>} : memref<64x32xf32, #tpu.memory_space<vmem>>, vector<1x32xf32>,
    %c41 = arith.constant 41 : index
    %164 = memref.load %arg0[%c41] : memref<64xi32, #tpu.memory_space<smem>>
    %165 = arith.index_cast %164 : i32 to index
    %c0_123 = arith.constant 0 : index
    %166 = vector.load %arg1[%165, %c0_123] : memref<50x32xf32, #tpu.memory_space<vmem>>, vector<1x32xf32>
    %c41_124 = arith.constant 41 : index
    %c0_125 = arith.constant 0 : index
    %167 = vector.load %arg11[%c41_124, %c0_125] : memref<64x32xf32, #tpu.memory_space<vmem>>, vector<1x32xf32>
    tpu.vector_store %arg11[%c41_124, %c0_125], %166 {strides = array<i32>} : memref<64x32xf32, #tpu.memory_space<vmem>>, vector<1x32xf32>,
    %c42 = arith.constant 42 : index
    %168 = memref.load %arg0[%c42] : memref<64xi32, #tpu.memory_space<smem>>
    %169 = arith.index_cast %168 : i32 to index
    %c0_126 = arith.constant 0 : index
    %170 = vector.load %arg1[%169, %c0_126] : memref<50x32xf32, #tpu.memory_space<vmem>>, vector<1x32xf32>
    %c42_127 = arith.constant 42 : index
    %c0_128 = arith.constant 0 : index
    %171 = vector.load %arg11[%c42_127, %c0_128] : memref<64x32xf32, #tpu.memory_space<vmem>>, vector<1x32xf32>
    tpu.vector_store %arg11[%c42_127, %c0_128], %170 {strides = array<i32>} : memref<64x32xf32, #tpu.memory_space<vmem>>, vector<1x32xf32>,
    %c43 = arith.constant 43 : index
    %172 = memref.load %arg0[%c43] : memref<64xi32, #tpu.memory_space<smem>>
    %173 = arith.index_cast %172 : i32 to index
    %c0_129 = arith.constant 0 : index
    %174 = vector.load %arg1[%173, %c0_129] : memref<50x32xf32, #tpu.memory_space<vmem>>, vector<1x32xf32>
    %c43_130 = arith.constant 43 : index
    %c0_131 = arith.constant 0 : index
    %175 = vector.load %arg11[%c43_130, %c0_131] : memref<64x32xf32, #tpu.memory_space<vmem>>, vector<1x32xf32>
    tpu.vector_store %arg11[%c43_130, %c0_131], %174 {strides = array<i32>} : memref<64x32xf32, #tpu.memory_space<vmem>>, vector<1x32xf32>,
    %c44 = arith.constant 44 : index
    %176 = memref.load %arg0[%c44] : memref<64xi32, #tpu.memory_space<smem>>
    %177 = arith.index_cast %176 : i32 to index
    %c0_132 = arith.constant 0 : index
    %178 = vector.load %arg1[%177, %c0_132] : memref<50x32xf32, #tpu.memory_space<vmem>>, vector<1x32xf32>
    %c44_133 = arith.constant 44 : index
    %c0_134 = arith.constant 0 : index
    %179 = vector.load %arg11[%c44_133, %c0_134] : memref<64x32xf32, #tpu.memory_space<vmem>>, vector<1x32xf32>
    tpu.vector_store %arg11[%c44_133, %c0_134], %178 {strides = array<i32>} : memref<64x32xf32, #tpu.memory_space<vmem>>, vector<1x32xf32>,
    %c45 = arith.constant 45 : index
    %180 = memref.load %arg0[%c45] : memref<64xi32, #tpu.memory_space<smem>>
    %181 = arith.index_cast %180 : i32 to index
    %c0_135 = arith.constant 0 : index
    %182 = vector.load %arg1[%181, %c0_135] : memref<50x32xf32, #tpu.memory_space<vmem>>, vector<1x32xf32>
    %c45_136 = arith.constant 45 : index
    %c0_137 = arith.constant 0 : index
    %183 = vector.load %arg11[%c45_136, %c0_137] : memref<64x32xf32, #tpu.memory_space<vmem>>, vector<1x32xf32>
    tpu.vector_store %arg11[%c45_136, %c0_137], %182 {strides = array<i32>} : memref<64x32xf32, #tpu.memory_space<vmem>>, vector<1x32xf32>,
    %c46 = arith.constant 46 : index
    %184 = memref.load %arg0[%c46] : memref<64xi32, #tpu.memory_space<smem>>
    %185 = arith.index_cast %184 : i32 to index
    %c0_138 = arith.constant 0 : index
    %186 = vector.load %arg1[%185, %c0_138] : memref<50x32xf32, #tpu.memory_space<vmem>>, vector<1x32xf32>
    %c46_139 = arith.constant 46 : index
    %c0_140 = arith.constant 0 : index
    %187 = vector.load %arg11[%c46_139, %c0_140] : memref<64x32xf32, #tpu.memory_space<vmem>>, vector<1x32xf32>
    tpu.vector_store %arg11[%c46_139, %c0_140], %186 {strides = array<i32>} : memref<64x32xf32, #tpu.memory_space<vmem>>, vector<1x32xf32>,
    %c47 = arith.constant 47 : index
    %188 = memref.load %arg0[%c47] : memref<64xi32, #tpu.memory_space<smem>>
    %189 = arith.index_cast %188 : i32 to index
    %c0_141 = arith.constant 0 : index
    %190 = vector.load %arg1[%189, %c0_141] : memref<50x32xf32, #tpu.memory_space<vmem>>, vector<1x32xf32>
    %c47_142 = arith.constant 47 : index
    %c0_143 = arith.constant 0 : index
    %191 = vector.load %arg11[%c47_142, %c0_143] : memref<64x32xf32, #tpu.memory_space<vmem>>, vector<1x32xf32>
    tpu.vector_store %arg11[%c47_142, %c0_143], %190 {strides = array<i32>} : memref<64x32xf32, #tpu.memory_space<vmem>>, vector<1x32xf32>,
    %c48 = arith.constant 48 : index
    %192 = memref.load %arg0[%c48] : memref<64xi32, #tpu.memory_space<smem>>
    %193 = arith.index_cast %192 : i32 to index
    %c0_144 = arith.constant 0 : index
    %194 = vector.load %arg1[%193, %c0_144] : memref<50x32xf32, #tpu.memory_space<vmem>>, vector<1x32xf32>
    %c48_145 = arith.constant 48 : index
    %c0_146 = arith.constant 0 : index
    %195 = vector.load %arg11[%c48_145, %c0_146] : memref<64x32xf32, #tpu.memory_space<vmem>>, vector<1x32xf32>
    tpu.vector_store %arg11[%c48_145, %c0_146], %194 {strides = array<i32>} : memref<64x32xf32, #tpu.memory_space<vmem>>, vector<1x32xf32>,
    %c49 = arith.constant 49 : index
    %196 = memref.load %arg0[%c49] : memref<64xi32, #tpu.memory_space<smem>>
    %197 = arith.index_cast %196 : i32 to index
    %c0_147 = arith.constant 0 : index
    %198 = vector.load %arg1[%197, %c0_147] : memref<50x32xf32, #tpu.memory_space<vmem>>, vector<1x32xf32>
    %c49_148 = arith.constant 49 : index
    %c0_149 = arith.constant 0 : index
    %199 = vector.load %arg11[%c49_148, %c0_149] : memref<64x32xf32, #tpu.memory_space<vmem>>, vector<1x32xf32>
    tpu.vector_store %arg11[%c49_148, %c0_149], %198 {strides = array<i32>} : memref<64x32xf32, #tpu.memory_space<vmem>>, vector<1x32xf32>,
    %c50 = arith.constant 50 : index
    %200 = memref.load %arg0[%c50] : memref<64xi32, #tpu.memory_space<smem>>
    %201 = arith.index_cast %200 : i32 to index
    %c0_150 = arith.constant 0 : index
    %202 = vector.load %arg1[%201, %c0_150] : memref<50x32xf32, #tpu.memory_space<vmem>>, vector<1x32xf32>
    %c50_151 = arith.constant 50 : index
    %c0_152 = arith.constant 0 : index
    %203 = vector.load %arg11[%c50_151, %c0_152] : memref<64x32xf32, #tpu.memory_space<vmem>>, vector<1x32xf32>
    tpu.vector_store %arg11[%c50_151, %c0_152], %202 {strides = array<i32>} : memref<64x32xf32, #tpu.memory_space<vmem>>, vector<1x32xf32>,
    %c51 = arith.constant 51 : index
    %204 = memref.load %arg0[%c51] : memref<64xi32, #tpu.memory_space<smem>>
    %205 = arith.index_cast %204 : i32 to index
    %c0_153 = arith.constant 0 : index
    %206 = vector.load %arg1[%205, %c0_153] : memref<50x32xf32, #tpu.memory_space<vmem>>, vector<1x32xf32>
    %c51_154 = arith.constant 51 : index
    %c0_155 = arith.constant 0 : index
    %207 = vector.load %arg11[%c51_154, %c0_155] : memref<64x32xf32, #tpu.memory_space<vmem>>, vector<1x32xf32>
    tpu.vector_store %arg11[%c51_154, %c0_155], %206 {strides = array<i32>} : memref<64x32xf32, #tpu.memory_space<vmem>>, vector<1x32xf32>,
    %c52 = arith.constant 52 : index
    %208 = memref.load %arg0[%c52] : memref<64xi32, #tpu.memory_space<smem>>
    %209 = arith.index_cast %208 : i32 to index
    %c0_156 = arith.constant 0 : index
    %210 = vector.load %arg1[%209, %c0_156] : memref<50x32xf32, #tpu.memory_space<vmem>>, vector<1x32xf32>
    %c52_157 = arith.constant 52 : index
    %c0_158 = arith.constant 0 : index
    %211 = vector.load %arg11[%c52_157, %c0_158] : memref<64x32xf32, #tpu.memory_space<vmem>>, vector<1x32xf32>
    tpu.vector_store %arg11[%c52_157, %c0_158], %210 {strides = array<i32>} : memref<64x32xf32, #tpu.memory_space<vmem>>, vector<1x32xf32>,
    %c53 = arith.constant 53 : index
    %212 = memref.load %arg0[%c53] : memref<64xi32, #tpu.memory_space<smem>>
    %213 = arith.index_cast %212 : i32 to index
    %c0_159 = arith.constant 0 : index
    %214 = vector.load %arg1[%213, %c0_159] : memref<50x32xf32, #tpu.memory_space<vmem>>, vector<1x32xf32>
    %c53_160 = arith.constant 53 : index
    %c0_161 = arith.constant 0 : index
    %215 = vector.load %arg11[%c53_160, %c0_161] : memref<64x32xf32, #tpu.memory_space<vmem>>, vector<1x32xf32>
    tpu.vector_store %arg11[%c53_160, %c0_161], %214 {strides = array<i32>} : memref<64x32xf32, #tpu.memory_space<vmem>>, vector<1x32xf32>,
    %c54 = arith.constant 54 : index
    %216 = memref.load %arg0[%c54] : memref<64xi32, #tpu.memory_space<smem>>
    %217 = arith.index_cast %216 : i32 to index
    %c0_162 = arith.constant 0 : index
    %218 = vector.load %arg1[%217, %c0_162] : memref<50x32xf32, #tpu.memory_space<vmem>>, vector<1x32xf32>
    %c54_163 = arith.constant 54 : index
    %c0_164 = arith.constant 0 : index
    %219 = vector.load %arg11[%c54_163, %c0_164] : memref<64x32xf32, #tpu.memory_space<vmem>>, vector<1x32xf32>
    tpu.vector_store %arg11[%c54_163, %c0_164], %218 {strides = array<i32>} : memref<64x32xf32, #tpu.memory_space<vmem>>, vector<1x32xf32>,
    %c55 = arith.constant 55 : index
    %220 = memref.load %arg0[%c55] : memref<64xi32, #tpu.memory_space<smem>>
    %221 = arith.index_cast %220 : i32 to index
    %c0_165 = arith.constant 0 : index
    %222 = vector.load %arg1[%221, %c0_165] : memref<50x32xf32, #tpu.memory_space<vmem>>, vector<1x32xf32>
    %c55_166 = arith.constant 55 : index
    %c0_167 = arith.constant 0 : index
    %223 = vector.load %arg11[%c55_166, %c0_167] : memref<64x32xf32, #tpu.memory_space<vmem>>, vector<1x32xf32>
    tpu.vector_store %arg11[%c55_166, %c0_167], %222 {strides = array<i32>} : memref<64x32xf32, #tpu.memory_space<vmem>>, vector<1x32xf32>,
    %c56 = arith.constant 56 : index
    %224 = memref.load %arg0[%c56] : memref<64xi32, #tpu.memory_space<smem>>
    %225 = arith.index_cast %224 : i32 to index
    %c0_168 = arith.constant 0 : index
    %226 = vector.load %arg1[%225, %c0_168] : memref<50x32xf32, #tpu.memory_space<vmem>>, vector<1x32xf32>
    %c56_169 = arith.constant 56 : index
    %c0_170 = arith.constant 0 : index
    %227 = vector.load %arg11[%c56_169, %c0_170] : memref<64x32xf32, #tpu.memory_space<vmem>>, vector<1x32xf32>
    tpu.vector_store %arg11[%c56_169, %c0_170], %226 {strides = array<i32>} : memref<64x32xf32, #tpu.memory_space<vmem>>, vector<1x32xf32>,
    %c57 = arith.constant 57 : index
    %228 = memref.load %arg0[%c57] : memref<64xi32, #tpu.memory_space<smem>>
    %229 = arith.index_cast %228 : i32 to index
    %c0_171 = arith.constant 0 : index
    %230 = vector.load %arg1[%229, %c0_171] : memref<50x32xf32, #tpu.memory_space<vmem>>, vector<1x32xf32>
    %c57_172 = arith.constant 57 : index
    %c0_173 = arith.constant 0 : index
    %231 = vector.load %arg11[%c57_172, %c0_173] : memref<64x32xf32, #tpu.memory_space<vmem>>, vector<1x32xf32>
    tpu.vector_store %arg11[%c57_172, %c0_173], %230 {strides = array<i32>} : memref<64x32xf32, #tpu.memory_space<vmem>>, vector<1x32xf32>,
    %c58 = arith.constant 58 : index
    %232 = memref.load %arg0[%c58] : memref<64xi32, #tpu.memory_space<smem>>
    %233 = arith.index_cast %232 : i32 to index
    %c0_174 = arith.constant 0 : index
    %234 = vector.load %arg1[%233, %c0_174] : memref<50x32xf32, #tpu.memory_space<vmem>>, vector<1x32xf32>
    %c58_175 = arith.constant 58 : index
    %c0_176 = arith.constant 0 : index
    %235 = vector.load %arg11[%c58_175, %c0_176] : memref<64x32xf32, #tpu.memory_space<vmem>>, vector<1x32xf32>
    tpu.vector_store %arg11[%c58_175, %c0_176], %234 {strides = array<i32>} : memref<64x32xf32, #tpu.memory_space<vmem>>, vector<1x32xf32>,
    %c59 = arith.constant 59 : index
    %236 = memref.load %arg0[%c59] : memref<64xi32, #tpu.memory_space<smem>>
    %237 = arith.index_cast %236 : i32 to index
    %c0_177 = arith.constant 0 : index
    %238 = vector.load %arg1[%237, %c0_177] : memref<50x32xf32, #tpu.memory_space<vmem>>, vector<1x32xf32>
    %c59_178 = arith.constant 59 : index
    %c0_179 = arith.constant 0 : index
    %239 = vector.load %arg11[%c59_178, %c0_179] : memref<64x32xf32, #tpu.memory_space<vmem>>, vector<1x32xf32>
    tpu.vector_store %arg11[%c59_178, %c0_179], %238 {strides = array<i32>} : memref<64x32xf32, #tpu.memory_space<vmem>>, vector<1x32xf32>,
    %c60 = arith.constant 60 : index
    %240 = memref.load %arg0[%c60] : memref<64xi32, #tpu.memory_space<smem>>
    %241 = arith.index_cast %240 : i32 to index
    %c0_180 = arith.constant 0 : index
    %242 = vector.load %arg1[%241, %c0_180] : memref<50x32xf32, #tpu.memory_space<vmem>>, vector<1x32xf32>
    %c60_181 = arith.constant 60 : index
    %c0_182 = arith.constant 0 : index
    %243 = vector.load %arg11[%c60_181, %c0_182] : memref<64x32xf32, #tpu.memory_space<vmem>>, vector<1x32xf32>
    tpu.vector_store %arg11[%c60_181, %c0_182], %242 {strides = array<i32>} : memref<64x32xf32, #tpu.memory_space<vmem>>, vector<1x32xf32>,
    %c61 = arith.constant 61 : index
    %244 = memref.load %arg0[%c61] : memref<64xi32, #tpu.memory_space<smem>>
    %245 = arith.index_cast %244 : i32 to index
    %c0_183 = arith.constant 0 : index
    %246 = vector.load %arg1[%245, %c0_183] : memref<50x32xf32, #tpu.memory_space<vmem>>, vector<1x32xf32>
    %c61_184 = arith.constant 61 : index
    %c0_185 = arith.constant 0 : index
    %247 = vector.load %arg11[%c61_184, %c0_185] : memref<64x32xf32, #tpu.memory_space<vmem>>, vector<1x32xf32>
    tpu.vector_store %arg11[%c61_184, %c0_185], %246 {strides = array<i32>} : memref<64x32xf32, #tpu.memory_space<vmem>>, vector<1x32xf32>,
    %c62 = arith.constant 62 : index
    %248 = memref.load %arg0[%c62] : memref<64xi32, #tpu.memory_space<smem>>
    %249 = arith.index_cast %248 : i32 to index
    %c0_186 = arith.constant 0 : index
    %250 = vector.load %arg1[%249, %c0_186] : memref<50x32xf32, #tpu.memory_space<vmem>>, vector<1x32xf32>
    %c62_187 = arith.constant 62 : index
    %c0_188 = arith.constant 0 : index
    %251 = vector.load %arg11[%c62_187, %c0_188] : memref<64x32xf32, #tpu.memory_space<vmem>>, vector<1x32xf32>
    tpu.vector_store %arg11[%c62_187, %c0_188], %250 {strides = array<i32>} : memref<64x32xf32, #tpu.memory_space<vmem>>, vector<1x32xf32>,
    %c63 = arith.constant 63 : index
    %252 = memref.load %arg0[%c63] : memref<64xi32, #tpu.memory_space<smem>>
    %253 = arith.index_cast %252 : i32 to index
    %c0_189 = arith.constant 0 : index
    %254 = vector.load %arg1[%253, %c0_189] : memref<50x32xf32, #tpu.memory_space<vmem>>, vector<1x32xf32>
    %c63_190 = arith.constant 63 : index
    %c0_191 = arith.constant 0 : index
    %255 = vector.load %arg11[%c63_190, %c0_191] : memref<64x32xf32, #tpu.memory_space<vmem>>, vector<1x32xf32>
    tpu.vector_store %arg11[%c63_190, %c0_191], %254 {strides = array<i32>} : memref<64x32xf32, #tpu.memory_space<vmem>>, vector<1x32xf32>,
    %c0_192 = arith.constant 0 : index
    %c0_193 = arith.constant 0 : index
    %256 = vector.load %arg11[%c0_192, %c0_193] : memref<64x32xf32, #tpu.memory_space<vmem>>, vector<64x32xf32>
    %c0_194 = arith.constant 0 : index
    %c0_195 = arith.constant 0 : index
    %257 = vector.load %arg2[%c0_194, %c0_195] : memref<32x512xf32, #tpu.memory_space<vmem>>, vector<32x512xf32>
    %cst = arith.constant dense<0.000000e+00> : vector<64x512xf32>
    %258 = tpu.matmul %256, %257, %cst {dimension_numbers = #tpu.dot_dimension_numbers<[1], [0], [0], [1], [0, 0, 1, 1], [], []>} : vector<64x32xf32>, vector<32x512xf32>, vector<64x512xf32> -> vector<64x512xf32>
    %c0_196 = arith.constant 0 : index
    %c0_197 = arith.constant 0 : index
    %259 = vector.load %arg4[%c0_196, %c0_197] : memref<1x512xf32, #tpu.memory_space<vmem>>, vector<1x512xf32>
    %260 = vector.broadcast %259 : vector<1x512xf32> to vector<64x512xf32>
    %261 = arith.addf %258, %260 : vector<64x512xf32>
    %c0_198 = arith.constant 0 : index
    %c0_199 = arith.constant 0 : index
    %262 = vector.load %arg12[%c0_198, %c0_199] : memref<64x512xf32, #tpu.memory_space<vmem>>, vector<64x512xf32>
    tpu.vector_store %arg12[%c0_198, %c0_199], %261 {strides = array<i32>} : memref<64x512xf32, #tpu.memory_space<vmem>>, vector<64x512xf32>,
    %cst_200 = arith.constant 0.000000e+00 : f32
    %263 = vector.broadcast %cst_200 : f32 to vector<8x128xf32>
    %cst_201 = arith.constant 0.000000e+00 : f32
    %264 = vector.broadcast %cst_201 : f32 to vector<8x128xf32>
    %c0_i32 = arith.constant 0 : i32
    %c8_i32 = arith.constant 8 : i32
    %265 = arith.muli %c0_i32, %c8_i32 : i32
    %266 = tpu.assume_multiple %265, 8 : i32
    %267 = arith.index_cast %266 : i32 to index
    %c0_202 = arith.constant 0 : index
    %268 = vector.load %arg12[%267, %c0_202] : memref<64x512xf32, #tpu.memory_space<vmem>>, vector<8x512xf32>
    %c0_203 = arith.constant 0 : index
    %c0_204 = arith.constant 0 : index
    %269 = vector.load %arg3[%c0_203, %c0_204] : memref<128x512xf32, #tpu.memory_space<vmem>>, vector<128x512xf32>
    %cst_205 = arith.constant dense<0.000000e+00> : vector<8x512xf32>
    %270 = tpu.matmul %263, %269, %cst_205 {dimension_numbers = #tpu.dot_dimension_numbers<[1], [0], [0], [1], [0, 0, 1, 1], [], []>} : vector<8x128xf32>, vector<128x512xf32>, vector<8x512xf32> -> vector<8x512xf32>
    %271 = arith.addf %268, %270 : vector<8x512xf32>
    %272 = vector.extract_strided_slice %271 {offsets = [0, 0], sizes = [8, 384], strides = [1, 1]} : vector<8x512xf32> to vector<8x384xf32>
    %273 = arith.negf %272 : vector<8x384xf32>
    %274 = math.exp %273 : vector<8x384xf32>
    %cst_206 = arith.constant 1.000000e+00 : f32
    %275 = vector.broadcast %cst_206 : f32 to vector<8x384xf32>
    %276 = arith.addf %275, %274 : vector<8x384xf32>
    %277 = arith.divf %275, %276 : vector<8x384xf32>
    %278 = vector.extract_strided_slice %277 {offsets = [0, 0], sizes = [8, 128], strides = [1, 1]} : vector<8x384xf32> to vector<8x128xf32>
    %279 = vector.extract_strided_slice %277 {offsets = [0, 128], sizes = [8, 128], strides = [1, 1]} : vector<8x384xf32> to vector<8x128xf32>
    %280 = vector.extract_strided_slice %277 {offsets = [0, 256], sizes = [8, 128], strides = [1, 1]} : vector<8x384xf32> to vector<8x128xf32>
    %281 = vector.extract_strided_slice %271 {offsets = [0, 384], sizes = [8, 128], strides = [1, 1]} : vector<8x512xf32> to vector<8x128xf32>
    %282 = math.tanh %281 : vector<8x128xf32>
    %283 = arith.mulf %279, %264 : vector<8x128xf32>
    %284 = arith.mulf %278, %282 : vector<8x128xf32>
    %285 = arith.addf %283, %284 : vector<8x128xf32>
    %286 = math.tanh %285 : vector<8x128xf32>
    %287 = arith.mulf %280, %286 : vector<8x128xf32>
    %288 = arith.index_cast %266 : i32 to index
    %c0_207 = arith.constant 0 : index
    %289 = vector.load %arg13[%288, %c0_207] : memref<64x128xf32, #tpu.memory_space<vmem>>, vector<8x128xf32>
    tpu.vector_store %arg13[%288, %c0_207], %287 {strides = array<i32>} : memref<64x128xf32, #tpu.memory_space<vmem>>, vector<8x128xf32>,
    %c1_i32 = arith.constant 1 : i32
    %c8_i32_208 = arith.constant 8 : i32
    %290 = arith.muli %c1_i32, %c8_i32_208 : i32
    %291 = tpu.assume_multiple %290, 8 : i32
    %292 = arith.index_cast %291 : i32 to index
    %c0_209 = arith.constant 0 : index
    %293 = vector.load %arg12[%292, %c0_209] : memref<64x512xf32, #tpu.memory_space<vmem>>, vector<8x512xf32>
    %c0_210 = arith.constant 0 : index
    %c0_211 = arith.constant 0 : index
    %294 = vector.load %arg3[%c0_210, %c0_211] : memref<128x512xf32, #tpu.memory_space<vmem>>, vector<128x512xf32>
    %cst_212 = arith.constant dense<0.000000e+00> : vector<8x512xf32>
    %295 = tpu.matmul %287, %294, %cst_212 {dimension_numbers = #tpu.dot_dimension_numbers<[1], [0], [0], [1], [0, 0, 1, 1], [], []>} : vector<8x128xf32>, vector<128x512xf32>, vector<8x512xf32> -> vector<8x512xf32>
    %296 = arith.addf %293, %295 : vector<8x512xf32>
    %297 = vector.extract_strided_slice %296 {offsets = [0, 0], sizes = [8, 384], strides = [1, 1]} : vector<8x512xf32> to vector<8x384xf32>
    %298 = arith.negf %297 : vector<8x384xf32>
    %299 = math.exp %298 : vector<8x384xf32>
    %cst_213 = arith.constant 1.000000e+00 : f32
    %300 = vector.broadcast %cst_213 : f32 to vector<8x384xf32>
    %301 = arith.addf %300, %299 : vector<8x384xf32>
    %302 = arith.divf %300, %301 : vector<8x384xf32>
    %303 = vector.extract_strided_slice %302 {offsets = [0, 0], sizes = [8, 128], strides = [1, 1]} : vector<8x384xf32> to vector<8x128xf32>
    %304 = vector.extract_strided_slice %302 {offsets = [0, 128], sizes = [8, 128], strides = [1, 1]} : vector<8x384xf32> to vector<8x128xf32>
    %305 = vector.extract_strided_slice %302 {offsets = [0, 256], sizes = [8, 128], strides = [1, 1]} : vector<8x384xf32> to vector<8x128xf32>
    %306 = vector.extract_strided_slice %296 {offsets = [0, 384], sizes = [8, 128], strides = [1, 1]} : vector<8x512xf32> to vector<8x128xf32>
    %307 = math.tanh %306 : vector<8x128xf32>
    %308 = arith.mulf %304, %285 : vector<8x128xf32>
    %309 = arith.mulf %303, %307 : vector<8x128xf32>
    %310 = arith.addf %308, %309 : vector<8x128xf32>
    %311 = math.tanh %310 : vector<8x128xf32>
    %312 = arith.mulf %305, %311 : vector<8x128xf32>
    %313 = arith.index_cast %291 : i32 to index
    %c0_214 = arith.constant 0 : index
    %314 = vector.load %arg13[%313, %c0_214] : memref<64x128xf32, #tpu.memory_space<vmem>>, vector<8x128xf32>
    tpu.vector_store %arg13[%313, %c0_214], %312 {strides = array<i32>} : memref<64x128xf32, #tpu.memory_space<vmem>>, vector<8x128xf32>,
    %c2_i32 = arith.constant 2 : i32
    %c8_i32_215 = arith.constant 8 : i32
    %315 = arith.muli %c2_i32, %c8_i32_215 : i32
    %316 = tpu.assume_multiple %315, 8 : i32
    %317 = arith.index_cast %316 : i32 to index
    %c0_216 = arith.constant 0 : index
    %318 = vector.load %arg12[%317, %c0_216] : memref<64x512xf32, #tpu.memory_space<vmem>>, vector<8x512xf32>
    %c0_217 = arith.constant 0 : index
    %c0_218 = arith.constant 0 : index
    %319 = vector.load %arg3[%c0_217, %c0_218] : memref<128x512xf32, #tpu.memory_space<vmem>>, vector<128x512xf32>
    %cst_219 = arith.constant dense<0.000000e+00> : vector<8x512xf32>
    %320 = tpu.matmul %312, %319, %cst_219 {dimension_numbers = #tpu.dot_dimension_numbers<[1], [0], [0], [1], [0, 0, 1, 1], [], []>} : vector<8x128xf32>, vector<128x512xf32>, vector<8x512xf32> -> vector<8x512xf32>
    %321 = arith.addf %318, %320 : vector<8x512xf32>
    %322 = vector.extract_strided_slice %321 {offsets = [0, 0], sizes = [8, 384], strides = [1, 1]} : vector<8x512xf32> to vector<8x384xf32>
    %323 = arith.negf %322 : vector<8x384xf32>
    %324 = math.exp %323 : vector<8x384xf32>
    %cst_220 = arith.constant 1.000000e+00 : f32
    %325 = vector.broadcast %cst_220 : f32 to vector<8x384xf32>
    %326 = arith.addf %325, %324 : vector<8x384xf32>
    %327 = arith.divf %325, %326 : vector<8x384xf32>
    %328 = vector.extract_strided_slice %327 {offsets = [0, 0], sizes = [8, 128], strides = [1, 1]} : vector<8x384xf32> to vector<8x128xf32>
    %329 = vector.extract_strided_slice %327 {offsets = [0, 128], sizes = [8, 128], strides = [1, 1]} : vector<8x384xf32> to vector<8x128xf32>
    %330 = vector.extract_strided_slice %327 {offsets = [0, 256], sizes = [8, 128], strides = [1, 1]} : vector<8x384xf32> to vector<8x128xf32>
    %331 = vector.extract_strided_slice %321 {offsets = [0, 384], sizes = [8, 128], strides = [1, 1]} : vector<8x512xf32> to vector<8x128xf32>
    %332 = math.tanh %331 : vector<8x128xf32>
    %333 = arith.mulf %329, %310 : vector<8x128xf32>
    %334 = arith.mulf %328, %332 : vector<8x128xf32>
    %335 = arith.addf %333, %334 : vector<8x128xf32>
    %336 = math.tanh %335 : vector<8x128xf32>
    %337 = arith.mulf %330, %336 : vector<8x128xf32>
    %338 = arith.index_cast %316 : i32 to index
    %c0_221 = arith.constant 0 : index
    %339 = vector.load %arg13[%338, %c0_221] : memref<64x128xf32, #tpu.memory_space<vmem>>, vector<8x128xf32>
    tpu.vector_store %arg13[%338, %c0_221], %337 {strides = array<i32>} : memref<64x128xf32, #tpu.memory_space<vmem>>, vector<8x128xf32>,
    %c3_i32 = arith.constant 3 : i32
    %c8_i32_222 = arith.constant 8 : i32
    %340 = arith.muli %c3_i32, %c8_i32_222 : i32
    %341 = tpu.assume_multiple %340, 8 : i32
    %342 = arith.index_cast %341 : i32 to index
    %c0_223 = arith.constant 0 : index
    %343 = vector.load %arg12[%342, %c0_223] : memref<64x512xf32, #tpu.memory_space<vmem>>, vector<8x512xf32>
    %c0_224 = arith.constant 0 : index
    %c0_225 = arith.constant 0 : index
    %344 = vector.load %arg3[%c0_224, %c0_225] : memref<128x512xf32, #tpu.memory_space<vmem>>, vector<128x512xf32>
    %cst_226 = arith.constant dense<0.000000e+00> : vector<8x512xf32>
    %345 = tpu.matmul %337, %344, %cst_226 {dimension_numbers = #tpu.dot_dimension_numbers<[1], [0], [0], [1], [0, 0, 1, 1], [], []>} : vector<8x128xf32>, vector<128x512xf32>, vector<8x512xf32> -> vector<8x512xf32>
    %346 = arith.addf %343, %345 : vector<8x512xf32>
    %347 = vector.extract_strided_slice %346 {offsets = [0, 0], sizes = [8, 384], strides = [1, 1]} : vector<8x512xf32> to vector<8x384xf32>
    %348 = arith.negf %347 : vector<8x384xf32>
    %349 = math.exp %348 : vector<8x384xf32>
    %cst_227 = arith.constant 1.000000e+00 : f32
    %350 = vector.broadcast %cst_227 : f32 to vector<8x384xf32>
    %351 = arith.addf %350, %349 : vector<8x384xf32>
    %352 = arith.divf %350, %351 : vector<8x384xf32>
    %353 = vector.extract_strided_slice %352 {offsets = [0, 0], sizes = [8, 128], strides = [1, 1]} : vector<8x384xf32> to vector<8x128xf32>
    %354 = vector.extract_strided_slice %352 {offsets = [0, 128], sizes = [8, 128], strides = [1, 1]} : vector<8x384xf32> to vector<8x128xf32>
    %355 = vector.extract_strided_slice %352 {offsets = [0, 256], sizes = [8, 128], strides = [1, 1]} : vector<8x384xf32> to vector<8x128xf32>
    %356 = vector.extract_strided_slice %346 {offsets = [0, 384], sizes = [8, 128], strides = [1, 1]} : vector<8x512xf32> to vector<8x128xf32>
    %357 = math.tanh %356 : vector<8x128xf32>
    %358 = arith.mulf %354, %335 : vector<8x128xf32>
    %359 = arith.mulf %353, %357 : vector<8x128xf32>
    %360 = arith.addf %358, %359 : vector<8x128xf32>
    %361 = math.tanh %360 : vector<8x128xf32>
    %362 = arith.mulf %355, %361 : vector<8x128xf32>
    %363 = arith.index_cast %341 : i32 to index
    %c0_228 = arith.constant 0 : index
    %364 = vector.load %arg13[%363, %c0_228] : memref<64x128xf32, #tpu.memory_space<vmem>>, vector<8x128xf32>
    tpu.vector_store %arg13[%363, %c0_228], %362 {strides = array<i32>} : memref<64x128xf32, #tpu.memory_space<vmem>>, vector<8x128xf32>,
    %c4_i32 = arith.constant 4 : i32
    %c8_i32_229 = arith.constant 8 : i32
    %365 = arith.muli %c4_i32, %c8_i32_229 : i32
    %366 = tpu.assume_multiple %365, 8 : i32
    %367 = arith.index_cast %366 : i32 to index
    %c0_230 = arith.constant 0 : index
    %368 = vector.load %arg12[%367, %c0_230] : memref<64x512xf32, #tpu.memory_space<vmem>>, vector<8x512xf32>
    %c0_231 = arith.constant 0 : index
    %c0_232 = arith.constant 0 : index
    %369 = vector.load %arg3[%c0_231, %c0_232] : memref<128x512xf32, #tpu.memory_space<vmem>>, vector<128x512xf32>
    %cst_233 = arith.constant dense<0.000000e+00> : vector<8x512xf32>
    %370 = tpu.matmul %362, %369, %cst_233 {dimension_numbers = #tpu.dot_dimension_numbers<[1], [0], [0], [1], [0, 0, 1, 1], [], []>} : vector<8x128xf32>, vector<128x512xf32>, vector<8x512xf32> -> vector<8x512xf32>
    %371 = arith.addf %368, %370 : vector<8x512xf32>
    %372 = vector.extract_strided_slice %371 {offsets = [0, 0], sizes = [8, 384], strides = [1, 1]} : vector<8x512xf32> to vector<8x384xf32>
    %373 = arith.negf %372 : vector<8x384xf32>
    %374 = math.exp %373 : vector<8x384xf32>
    %cst_234 = arith.constant 1.000000e+00 : f32
    %375 = vector.broadcast %cst_234 : f32 to vector<8x384xf32>
    %376 = arith.addf %375, %374 : vector<8x384xf32>
    %377 = arith.divf %375, %376 : vector<8x384xf32>
    %378 = vector.extract_strided_slice %377 {offsets = [0, 0], sizes = [8, 128], strides = [1, 1]} : vector<8x384xf32> to vector<8x128xf32>
    %379 = vector.extract_strided_slice %377 {offsets = [0, 128], sizes = [8, 128], strides = [1, 1]} : vector<8x384xf32> to vector<8x128xf32>
    %380 = vector.extract_strided_slice %377 {offsets = [0, 256], sizes = [8, 128], strides = [1, 1]} : vector<8x384xf32> to vector<8x128xf32>
    %381 = vector.extract_strided_slice %371 {offsets = [0, 384], sizes = [8, 128], strides = [1, 1]} : vector<8x512xf32> to vector<8x128xf32>
    %382 = math.tanh %381 : vector<8x128xf32>
    %383 = arith.mulf %379, %360 : vector<8x128xf32>
    %384 = arith.mulf %378, %382 : vector<8x128xf32>
    %385 = arith.addf %383, %384 : vector<8x128xf32>
    %386 = math.tanh %385 : vector<8x128xf32>
    %387 = arith.mulf %380, %386 : vector<8x128xf32>
    %388 = arith.index_cast %366 : i32 to index
    %c0_235 = arith.constant 0 : index
    %389 = vector.load %arg13[%388, %c0_235] : memref<64x128xf32, #tpu.memory_space<vmem>>, vector<8x128xf32>
    tpu.vector_store %arg13[%388, %c0_235], %387 {strides = array<i32>} : memref<64x128xf32, #tpu.memory_space<vmem>>, vector<8x128xf32>,
    %c5_i32 = arith.constant 5 : i32
    %c8_i32_236 = arith.constant 8 : i32
    %390 = arith.muli %c5_i32, %c8_i32_236 : i32
    %391 = tpu.assume_multiple %390, 8 : i32
    %392 = arith.index_cast %391 : i32 to index
    %c0_237 = arith.constant 0 : index
    %393 = vector.load %arg12[%392, %c0_237] : memref<64x512xf32, #tpu.memory_space<vmem>>, vector<8x512xf32>
    %c0_238 = arith.constant 0 : index
    %c0_239 = arith.constant 0 : index
    %394 = vector.load %arg3[%c0_238, %c0_239] : memref<128x512xf32, #tpu.memory_space<vmem>>, vector<128x512xf32>
    %cst_240 = arith.constant dense<0.000000e+00> : vector<8x512xf32>
    %395 = tpu.matmul %387, %394, %cst_240 {dimension_numbers = #tpu.dot_dimension_numbers<[1], [0], [0], [1], [0, 0, 1, 1], [], []>} : vector<8x128xf32>, vector<128x512xf32>, vector<8x512xf32> -> vector<8x512xf32>
    %396 = arith.addf %393, %395 : vector<8x512xf32>
    %397 = vector.extract_strided_slice %396 {offsets = [0, 0], sizes = [8, 384], strides = [1, 1]} : vector<8x512xf32> to vector<8x384xf32>
    %398 = arith.negf %397 : vector<8x384xf32>
    %399 = math.exp %398 : vector<8x384xf32>
    %cst_241 = arith.constant 1.000000e+00 : f32
    %400 = vector.broadcast %cst_241 : f32 to vector<8x384xf32>
    %401 = arith.addf %400, %399 : vector<8x384xf32>
    %402 = arith.divf %400, %401 : vector<8x384xf32>
    %403 = vector.extract_strided_slice %402 {offsets = [0, 0], sizes = [8, 128], strides = [1, 1]} : vector<8x384xf32> to vector<8x128xf32>
    %404 = vector.extract_strided_slice %402 {offsets = [0, 128], sizes = [8, 128], strides = [1, 1]} : vector<8x384xf32> to vector<8x128xf32>
    %405 = vector.extract_strided_slice %402 {offsets = [0, 256], sizes = [8, 128], strides = [1, 1]} : vector<8x384xf32> to vector<8x128xf32>
    %406 = vector.extract_strided_slice %396 {offsets = [0, 384], sizes = [8, 128], strides = [1, 1]} : vector<8x512xf32> to vector<8x128xf32>
    %407 = math.tanh %406 : vector<8x128xf32>
    %408 = arith.mulf %404, %385 : vector<8x128xf32>
    %409 = arith.mulf %403, %407 : vector<8x128xf32>
    %410 = arith.addf %408, %409 : vector<8x128xf32>
    %411 = math.tanh %410 : vector<8x128xf32>
    %412 = arith.mulf %405, %411 : vector<8x128xf32>
    %413 = arith.index_cast %391 : i32 to index
    %c0_242 = arith.constant 0 : index
    %414 = vector.load %arg13[%413, %c0_242] : memref<64x128xf32, #tpu.memory_space<vmem>>, vector<8x128xf32>
    tpu.vector_store %arg13[%413, %c0_242], %412 {strides = array<i32>} : memref<64x128xf32, #tpu.memory_space<vmem>>, vector<8x128xf32>,
    %c6_i32 = arith.constant 6 : i32
    %c8_i32_243 = arith.constant 8 : i32
    %415 = arith.muli %c6_i32, %c8_i32_243 : i32
    %416 = tpu.assume_multiple %415, 8 : i32
    %417 = arith.index_cast %416 : i32 to index
    %c0_244 = arith.constant 0 : index
    %418 = vector.load %arg12[%417, %c0_244] : memref<64x512xf32, #tpu.memory_space<vmem>>, vector<8x512xf32>
    %c0_245 = arith.constant 0 : index
    %c0_246 = arith.constant 0 : index
    %419 = vector.load %arg3[%c0_245, %c0_246] : memref<128x512xf32, #tpu.memory_space<vmem>>, vector<128x512xf32>
    %cst_247 = arith.constant dense<0.000000e+00> : vector<8x512xf32>
    %420 = tpu.matmul %412, %419, %cst_247 {dimension_numbers = #tpu.dot_dimension_numbers<[1], [0], [0], [1], [0, 0, 1, 1], [], []>} : vector<8x128xf32>, vector<128x512xf32>, vector<8x512xf32> -> vector<8x512xf32>
    %421 = arith.addf %418, %420 : vector<8x512xf32>
    %422 = vector.extract_strided_slice %421 {offsets = [0, 0], sizes = [8, 384], strides = [1, 1]} : vector<8x512xf32> to vector<8x384xf32>
    %423 = arith.negf %422 : vector<8x384xf32>
    %424 = math.exp %423 : vector<8x384xf32>
    %cst_248 = arith.constant 1.000000e+00 : f32
    %425 = vector.broadcast %cst_248 : f32 to vector<8x384xf32>
    %426 = arith.addf %425, %424 : vector<8x384xf32>
    %427 = arith.divf %425, %426 : vector<8x384xf32>
    %428 = vector.extract_strided_slice %427 {offsets = [0, 0], sizes = [8, 128], strides = [1, 1]} : vector<8x384xf32> to vector<8x128xf32>
    %429 = vector.extract_strided_slice %427 {offsets = [0, 128], sizes = [8, 128], strides = [1, 1]} : vector<8x384xf32> to vector<8x128xf32>
    %430 = vector.extract_strided_slice %427 {offsets = [0, 256], sizes = [8, 128], strides = [1, 1]} : vector<8x384xf32> to vector<8x128xf32>
    %431 = vector.extract_strided_slice %421 {offsets = [0, 384], sizes = [8, 128], strides = [1, 1]} : vector<8x512xf32> to vector<8x128xf32>
    %432 = math.tanh %431 : vector<8x128xf32>
    %433 = arith.mulf %429, %410 : vector<8x128xf32>
    %434 = arith.mulf %428, %432 : vector<8x128xf32>
    %435 = arith.addf %433, %434 : vector<8x128xf32>
    %436 = math.tanh %435 : vector<8x128xf32>
    %437 = arith.mulf %430, %436 : vector<8x128xf32>
    %438 = arith.index_cast %416 : i32 to index
    %c0_249 = arith.constant 0 : index
    %439 = vector.load %arg13[%438, %c0_249] : memref<64x128xf32, #tpu.memory_space<vmem>>, vector<8x128xf32>
    tpu.vector_store %arg13[%438, %c0_249], %437 {strides = array<i32>} : memref<64x128xf32, #tpu.memory_space<vmem>>, vector<8x128xf32>,
    %c7_i32 = arith.constant 7 : i32
    %c8_i32_250 = arith.constant 8 : i32
    %440 = arith.muli %c7_i32, %c8_i32_250 : i32
    %441 = tpu.assume_multiple %440, 8 : i32
    %442 = arith.index_cast %441 : i32 to index
    %c0_251 = arith.constant 0 : index
    %443 = vector.load %arg12[%442, %c0_251] : memref<64x512xf32, #tpu.memory_space<vmem>>, vector<8x512xf32>
    %c0_252 = arith.constant 0 : index
    %c0_253 = arith.constant 0 : index
    %444 = vector.load %arg3[%c0_252, %c0_253] : memref<128x512xf32, #tpu.memory_space<vmem>>, vector<128x512xf32>
    %cst_254 = arith.constant dense<0.000000e+00> : vector<8x512xf32>
    %445 = tpu.matmul %437, %444, %cst_254 {dimension_numbers = #tpu.dot_dimension_numbers<[1], [0], [0], [1], [0, 0, 1, 1], [], []>} : vector<8x128xf32>, vector<128x512xf32>, vector<8x512xf32> -> vector<8x512xf32>
    %446 = arith.addf %443, %445 : vector<8x512xf32>
    %447 = vector.extract_strided_slice %446 {offsets = [0, 0], sizes = [8, 384], strides = [1, 1]} : vector<8x512xf32> to vector<8x384xf32>
    %448 = arith.negf %447 : vector<8x384xf32>
    %449 = math.exp %448 : vector<8x384xf32>
    %cst_255 = arith.constant 1.000000e+00 : f32
    %450 = vector.broadcast %cst_255 : f32 to vector<8x384xf32>
    %451 = arith.addf %450, %449 : vector<8x384xf32>
    %452 = arith.divf %450, %451 : vector<8x384xf32>
    %453 = vector.extract_strided_slice %452 {offsets = [0, 0], sizes = [8, 128], strides = [1, 1]} : vector<8x384xf32> to vector<8x128xf32>
    %454 = vector.extract_strided_slice %452 {offsets = [0, 128], sizes = [8, 128], strides = [1, 1]} : vector<8x384xf32> to vector<8x128xf32>
    %455 = vector.extract_strided_slice %452 {offsets = [0, 256], sizes = [8, 128], strides = [1, 1]} : vector<8x384xf32> to vector<8x128xf32>
    %456 = vector.extract_strided_slice %446 {offsets = [0, 384], sizes = [8, 128], strides = [1, 1]} : vector<8x512xf32> to vector<8x128xf32>
    %457 = math.tanh %456 : vector<8x128xf32>
    %458 = arith.mulf %454, %435 : vector<8x128xf32>
    %459 = arith.mulf %453, %457 : vector<8x128xf32>
    %460 = arith.addf %458, %459 : vector<8x128xf32>
    %461 = math.tanh %460 : vector<8x128xf32>
    %462 = arith.mulf %455, %461 : vector<8x128xf32>
    %463 = arith.index_cast %441 : i32 to index
    %c0_256 = arith.constant 0 : index
    %464 = vector.load %arg13[%463, %c0_256] : memref<64x128xf32, #tpu.memory_space<vmem>>, vector<8x128xf32>
    tpu.vector_store %arg13[%463, %c0_256], %462 {strides = array<i32>} : memref<64x128xf32, #tpu.memory_space<vmem>>, vector<8x128xf32>,
    %c8_i32_257 = arith.constant 8 : i32
    %c0_258 = arith.constant 0 : index
    %c0_259 = arith.constant 0 : index
    %465 = vector.load %arg13[%c0_258, %c0_259] : memref<64x128xf32, #tpu.memory_space<vmem>>, vector<64x128xf32>
    %c0_260 = arith.constant 0 : index
    %c0_261 = arith.constant 0 : index
    %466 = vector.load %arg5[%c0_260, %c0_261] : memref<128x512xf32, #tpu.memory_space<vmem>>, vector<128x512xf32>
    %cst_262 = arith.constant dense<0.000000e+00> : vector<64x512xf32>
    %467 = tpu.matmul %465, %466, %cst_262 {dimension_numbers = #tpu.dot_dimension_numbers<[1], [0], [0], [1], [0, 0, 1, 1], [], []>} : vector<64x128xf32>, vector<128x512xf32>, vector<64x512xf32> -> vector<64x512xf32>
    %c0_263 = arith.constant 0 : index
    %c0_264 = arith.constant 0 : index
    %468 = vector.load %arg7[%c0_263, %c0_264] : memref<1x512xf32, #tpu.memory_space<vmem>>, vector<1x512xf32>
    %469 = vector.broadcast %468 : vector<1x512xf32> to vector<64x512xf32>
    %470 = arith.addf %467, %469 : vector<64x512xf32>
    %c0_265 = arith.constant 0 : index
    %c0_266 = arith.constant 0 : index
    %471 = vector.load %arg12[%c0_265, %c0_266] : memref<64x512xf32, #tpu.memory_space<vmem>>, vector<64x512xf32>
    tpu.vector_store %arg12[%c0_265, %c0_266], %470 {strides = array<i32>} : memref<64x512xf32, #tpu.memory_space<vmem>>, vector<64x512xf32>,
    %cst_267 = arith.constant 0.000000e+00 : f32
    %472 = vector.broadcast %cst_267 : f32 to vector<8x128xf32>
    %cst_268 = arith.constant 0.000000e+00 : f32
    %473 = vector.broadcast %cst_268 : f32 to vector<8x128xf32>
    %c0_i32_269 = arith.constant 0 : i32
    %c8_i32_270 = arith.constant 8 : i32
    %474 = arith.muli %c0_i32_269, %c8_i32_270 : i32
    %475 = tpu.assume_multiple %474, 8 : i32
    %476 = arith.index_cast %475 : i32 to index
    %c0_271 = arith.constant 0 : index
    %477 = vector.load %arg12[%476, %c0_271] : memref<64x512xf32, #tpu.memory_space<vmem>>, vector<8x512xf32>
    %c0_272 = arith.constant 0 : index
    %c0_273 = arith.constant 0 : index
    %478 = vector.load %arg6[%c0_272, %c0_273] : memref<128x512xf32, #tpu.memory_space<vmem>>, vector<128x512xf32>
    %cst_274 = arith.constant dense<0.000000e+00> : vector<8x512xf32>
    %479 = tpu.matmul %472, %478, %cst_274 {dimension_numbers = #tpu.dot_dimension_numbers<[1], [0], [0], [1], [0, 0, 1, 1], [], []>} : vector<8x128xf32>, vector<128x512xf32>, vector<8x512xf32> -> vector<8x512xf32>
    %480 = arith.addf %477, %479 : vector<8x512xf32>
    %481 = vector.extract_strided_slice %480 {offsets = [0, 0], sizes = [8, 384], strides = [1, 1]} : vector<8x512xf32> to vector<8x384xf32>
    %482 = arith.negf %481 : vector<8x384xf32>
    %483 = math.exp %482 : vector<8x384xf32>
    %cst_275 = arith.constant 1.000000e+00 : f32
    %484 = vector.broadcast %cst_275 : f32 to vector<8x384xf32>
    %485 = arith.addf %484, %483 : vector<8x384xf32>
    %486 = arith.divf %484, %485 : vector<8x384xf32>
    %487 = vector.extract_strided_slice %486 {offsets = [0, 0], sizes = [8, 128], strides = [1, 1]} : vector<8x384xf32> to vector<8x128xf32>
    %488 = vector.extract_strided_slice %486 {offsets = [0, 128], sizes = [8, 128], strides = [1, 1]} : vector<8x384xf32> to vector<8x128xf32>
    %489 = vector.extract_strided_slice %486 {offsets = [0, 256], sizes = [8, 128], strides = [1, 1]} : vector<8x384xf32> to vector<8x128xf32>
    %490 = vector.extract_strided_slice %480 {offsets = [0, 384], sizes = [8, 128], strides = [1, 1]} : vector<8x512xf32> to vector<8x128xf32>
    %491 = math.tanh %490 : vector<8x128xf32>
    %492 = arith.mulf %488, %473 : vector<8x128xf32>
    %493 = arith.mulf %487, %491 : vector<8x128xf32>
    %494 = arith.addf %492, %493 : vector<8x128xf32>
    %495 = math.tanh %494 : vector<8x128xf32>
    %496 = arith.mulf %489, %495 : vector<8x128xf32>
    %c1_i32_276 = arith.constant 1 : i32
    %c8_i32_277 = arith.constant 8 : i32
    %497 = arith.muli %c1_i32_276, %c8_i32_277 : i32
    %498 = tpu.assume_multiple %497, 8 : i32
    %499 = arith.index_cast %498 : i32 to index
    %c0_278 = arith.constant 0 : index
    %500 = vector.load %arg12[%499, %c0_278] : memref<64x512xf32, #tpu.memory_space<vmem>>, vector<8x512xf32>
    %c0_279 = arith.constant 0 : index
    %c0_280 = arith.constant 0 : index
    %501 = vector.load %arg6[%c0_279, %c0_280] : memref<128x512xf32, #tpu.memory_space<vmem>>, vector<128x512xf32>
    %cst_281 = arith.constant dense<0.000000e+00> : vector<8x512xf32>
    %502 = tpu.matmul %496, %501, %cst_281 {dimension_numbers = #tpu.dot_dimension_numbers<[1], [0], [0], [1], [0, 0, 1, 1], [], []>} : vector<8x128xf32>, vector<128x512xf32>, vector<8x512xf32> -> vector<8x512xf32>
    %503 = arith.addf %500, %502 : vector<8x512xf32>
    %504 = vector.extract_strided_slice %503 {offsets = [0, 0], sizes = [8, 384], strides = [1, 1]} : vector<8x512xf32> to vector<8x384xf32>
    %505 = arith.negf %504 : vector<8x384xf32>
    %506 = math.exp %505 : vector<8x384xf32>
    %cst_282 = arith.constant 1.000000e+00 : f32
    %507 = vector.broadcast %cst_282 : f32 to vector<8x384xf32>
    %508 = arith.addf %507, %506 : vector<8x384xf32>
    %509 = arith.divf %507, %508 : vector<8x384xf32>
    %510 = vector.extract_strided_slice %509 {offsets = [0, 0], sizes = [8, 128], strides = [1, 1]} : vector<8x384xf32> to vector<8x128xf32>
    %511 = vector.extract_strided_slice %509 {offsets = [0, 128], sizes = [8, 128], strides = [1, 1]} : vector<8x384xf32> to vector<8x128xf32>
    %512 = vector.extract_strided_slice %509 {offsets = [0, 256], sizes = [8, 128], strides = [1, 1]} : vector<8x384xf32> to vector<8x128xf32>
    %513 = vector.extract_strided_slice %503 {offsets = [0, 384], sizes = [8, 128], strides = [1, 1]} : vector<8x512xf32> to vector<8x128xf32>
    %514 = math.tanh %513 : vector<8x128xf32>
    %515 = arith.mulf %511, %494 : vector<8x128xf32>
    %516 = arith.mulf %510, %514 : vector<8x128xf32>
    %517 = arith.addf %515, %516 : vector<8x128xf32>
    %518 = math.tanh %517 : vector<8x128xf32>
    %519 = arith.mulf %512, %518 : vector<8x128xf32>
    %c2_i32_283 = arith.constant 2 : i32
    %c8_i32_284 = arith.constant 8 : i32
    %520 = arith.muli %c2_i32_283, %c8_i32_284 : i32
    %521 = tpu.assume_multiple %520, 8 : i32
    %522 = arith.index_cast %521 : i32 to index
    %c0_285 = arith.constant 0 : index
    %523 = vector.load %arg12[%522, %c0_285] : memref<64x512xf32, #tpu.memory_space<vmem>>, vector<8x512xf32>
    %c0_286 = arith.constant 0 : index
    %c0_287 = arith.constant 0 : index
    %524 = vector.load %arg6[%c0_286, %c0_287] : memref<128x512xf32, #tpu.memory_space<vmem>>, vector<128x512xf32>
    %cst_288 = arith.constant dense<0.000000e+00> : vector<8x512xf32>
    %525 = tpu.matmul %519, %524, %cst_288 {dimension_numbers = #tpu.dot_dimension_numbers<[1], [0], [0], [1], [0, 0, 1, 1], [], []>} : vector<8x128xf32>, vector<128x512xf32>, vector<8x512xf32> -> vector<8x512xf32>
    %526 = arith.addf %523, %525 : vector<8x512xf32>
    %527 = vector.extract_strided_slice %526 {offsets = [0, 0], sizes = [8, 384], strides = [1, 1]} : vector<8x512xf32> to vector<8x384xf32>
    %528 = arith.negf %527 : vector<8x384xf32>
    %529 = math.exp %528 : vector<8x384xf32>
    %cst_289 = arith.constant 1.000000e+00 : f32
    %530 = vector.broadcast %cst_289 : f32 to vector<8x384xf32>
    %531 = arith.addf %530, %529 : vector<8x384xf32>
    %532 = arith.divf %530, %531 : vector<8x384xf32>
    %533 = vector.extract_strided_slice %532 {offsets = [0, 0], sizes = [8, 128], strides = [1, 1]} : vector<8x384xf32> to vector<8x128xf32>
    %534 = vector.extract_strided_slice %532 {offsets = [0, 128], sizes = [8, 128], strides = [1, 1]} : vector<8x384xf32> to vector<8x128xf32>
    %535 = vector.extract_strided_slice %532 {offsets = [0, 256], sizes = [8, 128], strides = [1, 1]} : vector<8x384xf32> to vector<8x128xf32>
    %536 = vector.extract_strided_slice %526 {offsets = [0, 384], sizes = [8, 128], strides = [1, 1]} : vector<8x512xf32> to vector<8x128xf32>
    %537 = math.tanh %536 : vector<8x128xf32>
    %538 = arith.mulf %534, %517 : vector<8x128xf32>
    %539 = arith.mulf %533, %537 : vector<8x128xf32>
    %540 = arith.addf %538, %539 : vector<8x128xf32>
    %541 = math.tanh %540 : vector<8x128xf32>
    %542 = arith.mulf %535, %541 : vector<8x128xf32>
    %c3_i32_290 = arith.constant 3 : i32
    %c8_i32_291 = arith.constant 8 : i32
    %543 = arith.muli %c3_i32_290, %c8_i32_291 : i32
    %544 = tpu.assume_multiple %543, 8 : i32
    %545 = arith.index_cast %544 : i32 to index
    %c0_292 = arith.constant 0 : index
    %546 = vector.load %arg12[%545, %c0_292] : memref<64x512xf32, #tpu.memory_space<vmem>>, vector<8x512xf32>
    %c0_293 = arith.constant 0 : index
    %c0_294 = arith.constant 0 : index
    %547 = vector.load %arg6[%c0_293, %c0_294] : memref<128x512xf32, #tpu.memory_space<vmem>>, vector<128x512xf32>
    %cst_295 = arith.constant dense<0.000000e+00> : vector<8x512xf32>
    %548 = tpu.matmul %542, %547, %cst_295 {dimension_numbers = #tpu.dot_dimension_numbers<[1], [0], [0], [1], [0, 0, 1, 1], [], []>} : vector<8x128xf32>, vector<128x512xf32>, vector<8x512xf32> -> vector<8x512xf32>
    %549 = arith.addf %546, %548 : vector<8x512xf32>
    %550 = vector.extract_strided_slice %549 {offsets = [0, 0], sizes = [8, 384], strides = [1, 1]} : vector<8x512xf32> to vector<8x384xf32>
    %551 = arith.negf %550 : vector<8x384xf32>
    %552 = math.exp %551 : vector<8x384xf32>
    %cst_296 = arith.constant 1.000000e+00 : f32
    %553 = vector.broadcast %cst_296 : f32 to vector<8x384xf32>
    %554 = arith.addf %553, %552 : vector<8x384xf32>
    %555 = arith.divf %553, %554 : vector<8x384xf32>
    %556 = vector.extract_strided_slice %555 {offsets = [0, 0], sizes = [8, 128], strides = [1, 1]} : vector<8x384xf32> to vector<8x128xf32>
    %557 = vector.extract_strided_slice %555 {offsets = [0, 128], sizes = [8, 128], strides = [1, 1]} : vector<8x384xf32> to vector<8x128xf32>
    %558 = vector.extract_strided_slice %555 {offsets = [0, 256], sizes = [8, 128], strides = [1, 1]} : vector<8x384xf32> to vector<8x128xf32>
    %559 = vector.extract_strided_slice %549 {offsets = [0, 384], sizes = [8, 128], strides = [1, 1]} : vector<8x512xf32> to vector<8x128xf32>
    %560 = math.tanh %559 : vector<8x128xf32>
    %561 = arith.mulf %557, %540 : vector<8x128xf32>
    %562 = arith.mulf %556, %560 : vector<8x128xf32>
    %563 = arith.addf %561, %562 : vector<8x128xf32>
    %564 = math.tanh %563 : vector<8x128xf32>
    %565 = arith.mulf %558, %564 : vector<8x128xf32>
    %c4_i32_297 = arith.constant 4 : i32
    %c8_i32_298 = arith.constant 8 : i32
    %566 = arith.muli %c4_i32_297, %c8_i32_298 : i32
    %567 = tpu.assume_multiple %566, 8 : i32
    %568 = arith.index_cast %567 : i32 to index
    %c0_299 = arith.constant 0 : index
    %569 = vector.load %arg12[%568, %c0_299] : memref<64x512xf32, #tpu.memory_space<vmem>>, vector<8x512xf32>
    %c0_300 = arith.constant 0 : index
    %c0_301 = arith.constant 0 : index
    %570 = vector.load %arg6[%c0_300, %c0_301] : memref<128x512xf32, #tpu.memory_space<vmem>>, vector<128x512xf32>
    %cst_302 = arith.constant dense<0.000000e+00> : vector<8x512xf32>
    %571 = tpu.matmul %565, %570, %cst_302 {dimension_numbers = #tpu.dot_dimension_numbers<[1], [0], [0], [1], [0, 0, 1, 1], [], []>} : vector<8x128xf32>, vector<128x512xf32>, vector<8x512xf32> -> vector<8x512xf32>
    %572 = arith.addf %569, %571 : vector<8x512xf32>
    %573 = vector.extract_strided_slice %572 {offsets = [0, 0], sizes = [8, 384], strides = [1, 1]} : vector<8x512xf32> to vector<8x384xf32>
    %574 = arith.negf %573 : vector<8x384xf32>
    %575 = math.exp %574 : vector<8x384xf32>
    %cst_303 = arith.constant 1.000000e+00 : f32
    %576 = vector.broadcast %cst_303 : f32 to vector<8x384xf32>
    %577 = arith.addf %576, %575 : vector<8x384xf32>
    %578 = arith.divf %576, %577 : vector<8x384xf32>
    %579 = vector.extract_strided_slice %578 {offsets = [0, 0], sizes = [8, 128], strides = [1, 1]} : vector<8x384xf32> to vector<8x128xf32>
    %580 = vector.extract_strided_slice %578 {offsets = [0, 128], sizes = [8, 128], strides = [1, 1]} : vector<8x384xf32> to vector<8x128xf32>
    %581 = vector.extract_strided_slice %578 {offsets = [0, 256], sizes = [8, 128], strides = [1, 1]} : vector<8x384xf32> to vector<8x128xf32>
    %582 = vector.extract_strided_slice %572 {offsets = [0, 384], sizes = [8, 128], strides = [1, 1]} : vector<8x512xf32> to vector<8x128xf32>
    %583 = math.tanh %582 : vector<8x128xf32>
    %584 = arith.mulf %580, %563 : vector<8x128xf32>
    %585 = arith.mulf %579, %583 : vector<8x128xf32>
    %586 = arith.addf %584, %585 : vector<8x128xf32>
    %587 = math.tanh %586 : vector<8x128xf32>
    %588 = arith.mulf %581, %587 : vector<8x128xf32>
    %c5_i32_304 = arith.constant 5 : i32
    %c8_i32_305 = arith.constant 8 : i32
    %589 = arith.muli %c5_i32_304, %c8_i32_305 : i32
    %590 = tpu.assume_multiple %589, 8 : i32
    %591 = arith.index_cast %590 : i32 to index
    %c0_306 = arith.constant 0 : index
    %592 = vector.load %arg12[%591, %c0_306] : memref<64x512xf32, #tpu.memory_space<vmem>>, vector<8x512xf32>
    %c0_307 = arith.constant 0 : index
    %c0_308 = arith.constant 0 : index
    %593 = vector.load %arg6[%c0_307, %c0_308] : memref<128x512xf32, #tpu.memory_space<vmem>>, vector<128x512xf32>
    %cst_309 = arith.constant dense<0.000000e+00> : vector<8x512xf32>
    %594 = tpu.matmul %588, %593, %cst_309 {dimension_numbers = #tpu.dot_dimension_numbers<[1], [0], [0], [1], [0, 0, 1, 1], [], []>} : vector<8x128xf32>, vector<128x512xf32>, vector<8x512xf32> -> vector<8x512xf32>
    %595 = arith.addf %592, %594 : vector<8x512xf32>
    %596 = vector.extract_strided_slice %595 {offsets = [0, 0], sizes = [8, 384], strides = [1, 1]} : vector<8x512xf32> to vector<8x384xf32>
    %597 = arith.negf %596 : vector<8x384xf32>
    %598 = math.exp %597 : vector<8x384xf32>
    %cst_310 = arith.constant 1.000000e+00 : f32
    %599 = vector.broadcast %cst_310 : f32 to vector<8x384xf32>
    %600 = arith.addf %599, %598 : vector<8x384xf32>
    %601 = arith.divf %599, %600 : vector<8x384xf32>
    %602 = vector.extract_strided_slice %601 {offsets = [0, 0], sizes = [8, 128], strides = [1, 1]} : vector<8x384xf32> to vector<8x128xf32>
    %603 = vector.extract_strided_slice %601 {offsets = [0, 128], sizes = [8, 128], strides = [1, 1]} : vector<8x384xf32> to vector<8x128xf32>
    %604 = vector.extract_strided_slice %601 {offsets = [0, 256], sizes = [8, 128], strides = [1, 1]} : vector<8x384xf32> to vector<8x128xf32>
    %605 = vector.extract_strided_slice %595 {offsets = [0, 384], sizes = [8, 128], strides = [1, 1]} : vector<8x512xf32> to vector<8x128xf32>
    %606 = math.tanh %605 : vector<8x128xf32>
    %607 = arith.mulf %603, %586 : vector<8x128xf32>
    %608 = arith.mulf %602, %606 : vector<8x128xf32>
    %609 = arith.addf %607, %608 : vector<8x128xf32>
    %610 = math.tanh %609 : vector<8x128xf32>
    %611 = arith.mulf %604, %610 : vector<8x128xf32>
    %c6_i32_311 = arith.constant 6 : i32
    %c8_i32_312 = arith.constant 8 : i32
    %612 = arith.muli %c6_i32_311, %c8_i32_312 : i32
    %613 = tpu.assume_multiple %612, 8 : i32
    %614 = arith.index_cast %613 : i32 to index
    %c0_313 = arith.constant 0 : index
    %615 = vector.load %arg12[%614, %c0_313] : memref<64x512xf32, #tpu.memory_space<vmem>>, vector<8x512xf32>
    %c0_314 = arith.constant 0 : index
    %c0_315 = arith.constant 0 : index
    %616 = vector.load %arg6[%c0_314, %c0_315] : memref<128x512xf32, #tpu.memory_space<vmem>>, vector<128x512xf32>
    %cst_316 = arith.constant dense<0.000000e+00> : vector<8x512xf32>
    %617 = tpu.matmul %611, %616, %cst_316 {dimension_numbers = #tpu.dot_dimension_numbers<[1], [0], [0], [1], [0, 0, 1, 1], [], []>} : vector<8x128xf32>, vector<128x512xf32>, vector<8x512xf32> -> vector<8x512xf32>
    %618 = arith.addf %615, %617 : vector<8x512xf32>
    %619 = vector.extract_strided_slice %618 {offsets = [0, 0], sizes = [8, 384], strides = [1, 1]} : vector<8x512xf32> to vector<8x384xf32>
    %620 = arith.negf %619 : vector<8x384xf32>
    %621 = math.exp %620 : vector<8x384xf32>
    %cst_317 = arith.constant 1.000000e+00 : f32
    %622 = vector.broadcast %cst_317 : f32 to vector<8x384xf32>
    %623 = arith.addf %622, %621 : vector<8x384xf32>
    %624 = arith.divf %622, %623 : vector<8x384xf32>
    %625 = vector.extract_strided_slice %624 {offsets = [0, 0], sizes = [8, 128], strides = [1, 1]} : vector<8x384xf32> to vector<8x128xf32>
    %626 = vector.extract_strided_slice %624 {offsets = [0, 128], sizes = [8, 128], strides = [1, 1]} : vector<8x384xf32> to vector<8x128xf32>
    %627 = vector.extract_strided_slice %624 {offsets = [0, 256], sizes = [8, 128], strides = [1, 1]} : vector<8x384xf32> to vector<8x128xf32>
    %628 = vector.extract_strided_slice %618 {offsets = [0, 384], sizes = [8, 128], strides = [1, 1]} : vector<8x512xf32> to vector<8x128xf32>
    %629 = math.tanh %628 : vector<8x128xf32>
    %630 = arith.mulf %626, %609 : vector<8x128xf32>
    %631 = arith.mulf %625, %629 : vector<8x128xf32>
    %632 = arith.addf %630, %631 : vector<8x128xf32>
    %633 = math.tanh %632 : vector<8x128xf32>
    %634 = arith.mulf %627, %633 : vector<8x128xf32>
    %c7_i32_318 = arith.constant 7 : i32
    %c8_i32_319 = arith.constant 8 : i32
    %635 = arith.muli %c7_i32_318, %c8_i32_319 : i32
    %636 = tpu.assume_multiple %635, 8 : i32
    %637 = arith.index_cast %636 : i32 to index
    %c0_320 = arith.constant 0 : index
    %638 = vector.load %arg12[%637, %c0_320] : memref<64x512xf32, #tpu.memory_space<vmem>>, vector<8x512xf32>
    %c0_321 = arith.constant 0 : index
    %c0_322 = arith.constant 0 : index
    %639 = vector.load %arg6[%c0_321, %c0_322] : memref<128x512xf32, #tpu.memory_space<vmem>>, vector<128x512xf32>
    %cst_323 = arith.constant dense<0.000000e+00> : vector<8x512xf32>
    %640 = tpu.matmul %634, %639, %cst_323 {dimension_numbers = #tpu.dot_dimension_numbers<[1], [0], [0], [1], [0, 0, 1, 1], [], []>} : vector<8x128xf32>, vector<128x512xf32>, vector<8x512xf32> -> vector<8x512xf32>
    %641 = arith.addf %638, %640 : vector<8x512xf32>
    %642 = vector.extract_strided_slice %641 {offsets = [0, 0], sizes = [8, 384], strides = [1, 1]} : vector<8x512xf32> to vector<8x384xf32>
    %643 = arith.negf %642 : vector<8x384xf32>
    %644 = math.exp %643 : vector<8x384xf32>
    %cst_324 = arith.constant 1.000000e+00 : f32
    %645 = vector.broadcast %cst_324 : f32 to vector<8x384xf32>
    %646 = arith.addf %645, %644 : vector<8x384xf32>
    %647 = arith.divf %645, %646 : vector<8x384xf32>
    %648 = vector.extract_strided_slice %647 {offsets = [0, 0], sizes = [8, 128], strides = [1, 1]} : vector<8x384xf32> to vector<8x128xf32>
    %649 = vector.extract_strided_slice %647 {offsets = [0, 128], sizes = [8, 128], strides = [1, 1]} : vector<8x384xf32> to vector<8x128xf32>
    %650 = vector.extract_strided_slice %647 {offsets = [0, 256], sizes = [8, 128], strides = [1, 1]} : vector<8x384xf32> to vector<8x128xf32>
    %651 = vector.extract_strided_slice %641 {offsets = [0, 384], sizes = [8, 128], strides = [1, 1]} : vector<8x512xf32> to vector<8x128xf32>
    %652 = math.tanh %651 : vector<8x128xf32>
    %653 = arith.mulf %649, %632 : vector<8x128xf32>
    %654 = arith.mulf %648, %652 : vector<8x128xf32>
    %655 = arith.addf %653, %654 : vector<8x128xf32>
    %656 = math.tanh %655 : vector<8x128xf32>
    %657 = arith.mulf %650, %656 : vector<8x128xf32>
    %c8_i32_325 = arith.constant 8 : i32
    %c0_326 = arith.constant 0 : index
    %c0_327 = arith.constant 0 : index
    %658 = vector.load %arg8[%c0_326, %c0_327] : memref<128x128xf32, #tpu.memory_space<vmem>>, vector<128x128xf32>
    %cst_328 = arith.constant dense<0.000000e+00> : vector<8x128xf32>
    %659 = tpu.matmul %657, %658, %cst_328 {dimension_numbers = #tpu.dot_dimension_numbers<[1], [0], [0], [1], [0, 0, 1, 1], [], []>} : vector<8x128xf32>, vector<128x128xf32>, vector<8x128xf32> -> vector<8x128xf32>
    %c0_329 = arith.constant 0 : index
    %c0_330 = arith.constant 0 : index
    %660 = vector.load %arg9[%c0_329, %c0_330] : memref<1x128xf32, #tpu.memory_space<vmem>>, vector<1x128xf32>
    %661 = vector.broadcast %660 : vector<1x128xf32> to vector<8x128xf32>
    %662 = arith.addf %659, %661 : vector<8x128xf32>
    %c0_331 = arith.constant 0 : index
    %c0_332 = arith.constant 0 : index
    %663 = vector.load %arg10[%c0_331, %c0_332] : memref<8x128xf32, #tpu.memory_space<vmem>>, vector<8x128xf32>
    tpu.vector_store %arg10[%c0_331, %c0_332], %662 {strides = array<i32>} : memref<8x128xf32, #tpu.memory_space<vmem>>, vector<8x128xf32>,
    return
  }
}

</mosaic_0001>

<llo_original>
// kernel: lstm_forward.1
$region0: #{lstm_forward.1}
  #allocation0 [shape = 'u32[]', space=smem, size = 0x4, offset = 0x4, fixed_abs, tag = 'smem constant byte address 0x4 - core index']
  #allocation1 [shape = 'u32[144,128]{1,0:T(1,128)}', space=vmem, size = 0x12000, scoped, tag = 'internal scratch']
  #allocation2 [shape = 'f32[64,32]{1,0:T(8,128)}', space=vmem, size = 0x8000, scoped, tag = 'scratch operand']
  #allocation3 [shape = 'f32[64,512]{1,0:T(8,128)}', space=vmem, size = 0x20000, scoped, tag = 'scratch operand']
  #allocation4 [shape = 'f32[64,128]{1,0:T(8,128)}', space=vmem, size = 0x8000, scoped, tag = 'scratch operand']
  %s0 = inlined_call_operand.vmem [shape: s32[64], index: 0, kind: input, shape index: {}]
  %s1 = inlined_call_operand.vmem [shape: f32[50,32], index: 1, kind: input, shape index: {}]
  %s2 = inlined_call_operand.vmem [shape: f32[32,512], index: 2, kind: input, shape index: {}]
  %s3 = inlined_call_operand.hbm [shape: f32[128,512], index: 3, kind: input, shape index: {}]
  %s4 = inlined_call_operand.vmem [shape: f32[1,512], index: 4, kind: input, shape index: {}]
  %s5 = inlined_call_operand.hbm [shape: f32[128,512], index: 5, kind: input, shape index: {}]
  %s6 = inlined_call_operand.hbm [shape: f32[128,512], index: 6, kind: input, shape index: {}]
  %s7 = inlined_call_operand.vmem [shape: f32[1,512], index: 7, kind: input, shape index: {}]
  %s8 = inlined_call_operand.hbm [shape: f32[128,128], index: 8, kind: input, shape index: {}]
  %s9 = inlined_call_operand.vmem [shape: f32[1,128], index: 9, kind: input, shape index: {}]
  %s10 = inlined_call_operand.vmem [shape: f32[8,128], index: 10, kind: output, shape index: {}]
  %s11 = sld [smem:[#allocation0]]
  $region70: #{lstm_forward.1} parent=0
    _
  %s13 = ssub.s32 1, %s11
  %s14 = scalar_select 0, %s13, %s11
  $region1: #{lstm_forward.1} parent=0
    #allocation5 [shape = 'u8[512]{0}', space=smem, size = 0x200, scoped, tag = 'input window, operand 0, single buffered']
    #allocation6 [shape = 's32[1]{0}', space=sflag, size = 0x4, scoped, tag = 'scoped memory for lstm_forward.1']
    #allocation7 [shape = 's32[1]{0}', space=sflag, size = 0x4, scoped, tag = 'scoped memory for lstm_forward.1']
    #allocation8 [shape = 'u8[262144]{0}', space=vmem, size = 0x40000, scoped, tag = 'input window, operand 3, single buffered']
    #allocation9 [shape = 'u8[262144]{0}', space=vmem, size = 0x40000, scoped, tag = 'input window, operand 5, single buffered']
    #allocation10 [shape = 's32[1]{0}', space=sflag, size = 0x4, scoped, tag = 'scoped memory for lstm_forward.1']
    #allocation11 [shape = 'u8[262144]{0}', space=vmem, size = 0x40000, scoped, tag = 'input window, operand 6, single buffered']
    #allocation12 [shape = 'u8[65536]{0}', space=vmem, size = 0x10000, scoped, tag = 'input window, operand 8, single buffered']
    #allocation13 [shape = 's32[1]{0}', space=sflag, size = 0x4, scoped, tag = 'scoped memory for lstm_forward.1']
    %15 = vsyncpa [#allocation7], 0
    %16 = vsyncpa [#allocation6], 0
    %17 = vsyncpa [#allocation10], 0
    %18 = vsyncpa [#allocation13], 0
    // Predicated region
    $region2: #{lstm_forward.1} parent=1 // pred_check
      _
    $region3: #{lstm_forward.1} parent=1 // pred_check_branch
      %20 = sbr.rel (0) target = $region5
    $region4: #{lstm_forward.1} parent=1 // pred_region
      %s22 = ssub.s32 16, 16
      %23 = vsyncadd [#allocation7], %s22
      %s25 = sshll.u32 %s0, 4
      %s26 = int_to_ptr.vmem [resolvable:$true] %s25
      %28 = dma.vmem_to_smem %s26, 16, [#allocation5], [#allocation7]
    $region5: #{lstm_forward.1} parent=1 // pred_fallthru
      _
    // Predicated region
    $region6: #{lstm_forward.1} parent=1 // pred_check
      _
    $region7: #{lstm_forward.1} parent=1 // pred_check_branch
      %30 = sbr.rel (0) target = $region9
    $region8: #{lstm_forward.1} parent=1 // pred_region
      _
    $region9: #{lstm_forward.1} parent=1 // pred_fallthru
      _
    // Predicated region
    $region10: #{lstm_forward.1} parent=1 // pred_check
      _
    $region11: #{lstm_forward.1} parent=1 // pred_check_branch
      %32 = sbr.rel (0) target = $region13
    $region12: #{lstm_forward.1} parent=1 // pred_region
      _
    $region13: #{lstm_forward.1} parent=1 // pred_fallthru
      _
    // Predicated region
    $region14: #{lstm_forward.1} parent=1 // pred_check
      _
    $region15: #{lstm_forward.1} parent=1 // pred_check_branch
      %34 = sbr.rel (0) target = $region17
    $region16: #{lstm_forward.1} parent=1 // pred_region
      %s36 = ssub.s32 8192, 8192
      %37 = vsyncadd [#allocation6], %s36
      %s38 = sshll.u32 [#allocation8], 4
      %s39 = int_to_ptr.vmem [resolvable:$true] %s38
      %44 = dma.hbm_to_vmem [thread:$0]  %s3, 8192, %s39, [#allocation6], 512, 512, 32
    $region17: #{lstm_forward.1} parent=1 // pred_fallthru
      _
    // Predicated region
    $region18: #{lstm_forward.1} parent=1 // pred_check
      _
    $region19: #{lstm_forward.1} parent=1 // pred_check_branch
      %46 = sbr.rel (0) target = $region21
    $region20: #{lstm_forward.1} parent=1 // pred_region
      _
    $region21: #{lstm_forward.1} parent=1 // pred_fallthru
      _
    // Predicated region
    $region22: #{lstm_forward.1} parent=1 // pred_check
      _
    $region23: #{lstm_forward.1} parent=1 // pred_check_branch
      %48 = sbr.rel (0) target = $region25
    $region24: #{lstm_forward.1} parent=1 // pred_region
      %s50 = ssub.s32 8192, 8192
      %51 = vsyncadd [#allocation10], %s50
      %s52 = sshll.u32 [#allocation9], 4
      %s53 = int_to_ptr.vmem [resolvable:$true] %s52
      %58 = dma.hbm_to_vmem [thread:$0]  %s5, 8192, %s53, [#allocation10], 512, 512, 32
    $region25: #{lstm_forward.1} parent=1 // pred_fallthru
      _
    // Predicated region
    $region26: #{lstm_forward.1} parent=1 // pred_check
      _
    $region27: #{lstm_forward.1} parent=1 // pred_check_branch
      %60 = sbr.rel (0) target = $region29
    $region28: #{lstm_forward.1} parent=1 // pred_region
      %s62 = ssub.s32 8192, 8192
      %63 = vsyncadd [#allocation10], %s62
      %s64 = sshll.u32 [#allocation11], 4
      %s65 = int_to_ptr.vmem [resolvable:$true] %s64
      %70 = dma.hbm_to_vmem [thread:$0]  %s6, 8192, %s65, [#allocation10], 512, 512, 32
    $region29: #{lstm_forward.1} parent=1 // pred_fallthru
      _
    // Predicated region
    $region30: #{lstm_forward.1} parent=1 // pred_check
      _
    $region31: #{lstm_forward.1} parent=1 // pred_check_branch
      %72 = sbr.rel (0) target = $region33
    $region32: #{lstm_forward.1} parent=1 // pred_region
      _
    $region33: #{lstm_forward.1} parent=1 // pred_fallthru
      _
    // Predicated region
    $region34: #{lstm_forward.1} parent=1 // pred_check
      _
    $region35: #{lstm_forward.1} parent=1 // pred_check_branch
      %74 = sbr.rel (0) target = $region37
    $region36: #{lstm_forward.1} parent=1 // pred_region
      %s76 = ssub.s32 2048, 2048
      %77 = vsyncadd [#allocation13], %s76
      %s78 = sshll.u32 [#allocation12], 4
      %s79 = int_to_ptr.vmem [resolvable:$true] %s78
      %84 = dma.hbm_to_vmem [thread:$0]  %s8, 2048, %s79, [#allocation13], 128, 128, 8
    $region37: #{lstm_forward.1} parent=1 // pred_fallthru
      _
    // Predicated region
    $region38: #{lstm_forward.1} parent=1 // pred_check
      _
    $region39: #{lstm_forward.1} parent=1 // pred_check_branch
      %86 = sbr.rel (0) target = $region41
    $region40: #{lstm_forward.1} parent=1 // pred_region
      _
    $region41: #{lstm_forward.1} parent=1 // pred_fallthru
      _
    // Predicated region
    $region42: #{lstm_forward.1} parent=1 // pred_check
      _
    $region43: #{lstm_forward.1} parent=1 // pred_check_branch
      %88 = sbr.rel (0) target = $region45
    $region44: #{lstm_forward.1} parent=1 // pred_region
      %89 = dma.done [#allocation7], 16
    $region45: #{lstm_forward.1} parent=1 // pred_fallthru
      _
    // Predicated region
    $region46: #{lstm_forward.1} parent=1 // pred_check
      _
    $region47: #{lstm_forward.1} parent=1 // pred_check_branch
      %91 = sbr.rel (0) target = $region49
    $region48: #{lstm_forward.1} parent=1 // pred_region
      %92 = dma.done [#allocation6], 8192
    $region49: #{lstm_forward.1} parent=1 // pred_fallthru
      _
    // Predicated region
    $region50: #{lstm_forward.1} parent=1 // pred_check
      _
    $region51: #{lstm_forward.1} parent=1 // pred_check_branch
      %94 = sbr.rel (0) target = $region53
    $region52: #{lstm_forward.1} parent=1 // pred_region
      %95 = dma.done [#allocation10], 8192
    $region53: #{lstm_forward.1} parent=1 // pred_fallthru
      _
    // Predicated region
    $region54: #{lstm_forward.1} parent=1 // pred_check
      _
    $region55: #{lstm_forward.1} parent=1 // pred_check_branch
      %97 = sbr.rel (0) target = $region57
    $region56: #{lstm_forward.1} parent=1 // pred_region
      %98 = dma.done [#allocation10], 8192
    $region57: #{lstm_forward.1} parent=1 // pred_fallthru
      _
    // Predicated region
    $region58: #{lstm_forward.1} parent=1 // pred_check
      _
    $region59: #{lstm_forward.1} parent=1 // pred_check_branch
      %100 = sbr.rel (0) target = $region61
    $region60: #{lstm_forward.1} parent=1 // pred_region
      %101 = dma.done [#allocation13], 2048
    $region61: #{lstm_forward.1} parent=1 // pred_fallthru
      _
    %102 = sfence
    %s103 = sld [smem:[#allocation5]]
    %s104 = scalar_lea.vmem %s1, %s103
    %v105 = vld [vmem:[%s104] sm:$0x1]
    %vm106 = vcmask 253952
    %107 = vst.msk [vmem:[#allocation2] sm:$0x1] %vm106, %v105
    %s108 = sld [smem:[#allocation5 + $0x1]]
    %s109 = scalar_lea.vmem %s1, %s108
    %v110 = vld [vmem:[%s109] sm:$0x1]
    %111 = vst.msk [vmem:[#allocation2 + $0x1] sm:$0x1] %vm106, %v110
    %s112 = sld [smem:[#allocation5 + $0x2]]
    %s113 = scalar_lea.vmem %s1, %s112
    %v114 = vld [vmem:[%s113] sm:$0x1]
    %115 = vst.msk [vmem:[#allocation2 + $0x2] sm:$0x1] %vm106, %v114
    %s116 = sld [smem:[#allocation5 + $0x3]]
    %s117 = scalar_lea.vmem %s1, %s116
    %v118 = vld [vmem:[%s117] sm:$0x1]
    %119 = vst.msk [vmem:[#allocation2 + $0x3] sm:$0x1] %vm106, %v118
    %s120 = sld [smem:[#allocation5 + $0x4]]
    %s121 = scalar_lea.vmem %s1, %s120
    %v122 = vld [vmem:[%s121] sm:$0x1]
    %123 = vst.msk [vmem:[#allocation2 + $0x4] sm:$0x1] %vm106, %v122
    %s124 = sld [smem:[#allocation5 + $0x5]]
    %s125 = scalar_lea.vmem %s1, %s124
    %v126 = vld [vmem:[%s125] sm:$0x1]
    %127 = vst.msk [vmem:[#allocation2 + $0x5] sm:$0x1] %vm106, %v126
    %s128 = sld [smem:[#allocation5 + $0x6]]
    %s129 = scalar_lea.vmem %s1, %s128
    %v130 = vld [vmem:[%s129] sm:$0x1]
    %131 = vst.msk [vmem:[#allocation2 + $0x6] sm:$0x1] %vm106, %v130
    %s132 = sld [smem:[#allocation5 + $0x7]]
    %s133 = scalar_lea.vmem %s1, %s132
    %v134 = vld [vmem:[%s133] sm:$0x1]
    %135 = vst.msk [vmem:[#allocation2 + $0x7] sm:$0x1] %vm106, %v134
    %s136 = sld [smem:[#allocation5 + $0x8]]
    %s137 = scalar_lea.vmem %s1, %s136
    %v138 = vld [vmem:[%s137] sm:$0x1]
    %139 = vst.msk [vmem:[#allocation2 + $0x8] sm:$0x1] %vm106, %v138
    %s140 = sld [smem:[#allocation5 + $0x9]]
    %s141 = scalar_lea.vmem %s1, %s140
    %v142 = vld [vmem:[%s141] sm:$0x1]
    %143 = vst.msk [vmem:[#allocation2 + $0x9] sm:$0x1] %vm106, %v142
    %s144 = sld [smem:[#allocation5 + $0xa]]
    %s145 = scalar_lea.vmem %s1, %s144
    %v146 = vld [vmem:[%s145] sm:$0x1]
    %147 = vst.msk [vmem:[#allocation2 + $0xa] sm:$0x1] %vm106, %v146
    %s148 = sld [smem:[#allocation5 + $0xb]]
    %s149 = scalar_lea.vmem %s1, %s148
    %v150 = vld [vmem:[%s149] sm:$0x1]
    %151 = vst.msk [vmem:[#allocation2 + $0xb] sm:$0x1] %vm106, %v150
    %s152 = sld [smem:[#allocation5 + $0xc]]
    %s153 = scalar_lea.vmem %s1, %s152
    %v154 = vld [vmem:[%s153] sm:$0x1]
    %155 = vst.msk [vmem:[#allocation2 + $0xc] sm:$0x1] %vm106, %v154
    %s156 = sld [smem:[#allocation5 + $0xd]]
    %s157 = scalar_lea.vmem %s1, %s156
    %v158 = vld [vmem:[%s157] sm:$0x1]
    %159 = vst.msk [vmem:[#allocation2 + $0xd] sm:$0x1] %vm106, %v158
    %s160 = sld [smem:[#allocation5 + $0xe]]
    %s161 = scalar_lea.vmem %s1, %s160
    %v162 = vld [vmem:[%s161] sm:$0x1]
    %163 = vst.msk [vmem:[#allocation2 + $0xe] sm:$0x1] %vm106, %v162
    %s164 = sld [smem:[#allocation5 + $0xf]]
    %s165 = scalar_lea.vmem %s1, %s164
    %v166 = vld [vmem:[%s165] sm:$0x1]
    %167 = vst.msk [vmem:[#allocation2 + $0xf] sm:$0x1] %vm106, %v166
    %s168 = sld [smem:[#allocation5 + $0x10]]
    %s169 = scalar_lea.vmem %s1, %s168
    %v170 = vld [vmem:[%s169] sm:$0x1]
    %171 = vst.msk [vmem:[#allocation2 + $0x10] sm:$0x1] %vm106, %v170
    %s172 = sld [smem:[#allocation5 + $0x11]]
    %s173 = scalar_lea.vmem %s1, %s172
    %v174 = vld [vmem:[%s173] sm:$0x1]
    %175 = vst.msk [vmem:[#allocation2 + $0x11] sm:$0x1] %vm106, %v174
    %s176 = sld [smem:[#allocation5 + $0x12]]
    %s177 = scalar_lea.vmem %s1, %s176
    %v178 = vld [vmem:[%s177] sm:$0x1]
    %179 = vst.msk [vmem:[#allocation2 + $0x12] sm:$0x1] %vm106, %v178
    %s180 = sld [smem:[#allocation5 + $0x13]]
    %s181 = scalar_lea.vmem %s1, %s180
    %v182 = vld [vmem:[%s181] sm:$0x1]
    %183 = vst.msk [vmem:[#allocation2 + $0x13] sm:$0x1] %vm106, %v182
    %s184 = sld [smem:[#allocation5 + $0x14]]
    %s185 = scalar_lea.vmem %s1, %s184
    %v186 = vld [vmem:[%s185] sm:$0x1]
    %187 = vst.msk [vmem:[#allocation2 + $0x14] sm:$0x1] %vm106, %v186
    %s188 = sld [smem:[#allocation5 + $0x15]]
    %s189 = scalar_lea.vmem %s1, %s188
    %v190 = vld [vmem:[%s189] sm:$0x1]
    %191 = vst.msk [vmem:[#allocation2 + $0x15] sm:$0x1] %vm106, %v190
    %s192 = sld [smem:[#allocation5 + $0x16]]
    %s193 = scalar_lea.vmem %s1, %s192
    %v194 = vld [vmem:[%s193] sm:$0x1]
    %195 = vst.msk [vmem:[#allocation2 + $0x16] sm:$0x1] %vm106, %v194
    %s196 = sld [smem:[#allocation5 + $0x17]]
    %s197 = scalar_lea.vmem %s1, %s196
    %v198 = vld [vmem:[%s197] sm:$0x1]
    %199 = vst.msk [vmem:[#allocation2 + $0x17] sm:$0x1] %vm106, %v198
    %s200 = sld [smem:[#allocation5 + $0x18]]
    %s201 = scalar_lea.vmem %s1, %s200
    %v202 = vld [vmem:[%s201] sm:$0x1]
    %203 = vst.msk [vmem:[#allocation2 + $0x18] sm:$0x1] %vm106, %v202
    %s204 = sld [smem:[#allocation5 + $0x19]]
    %s205 = scalar_lea.vmem %s1, %s204
    %v206 = vld [vmem:[%s205] sm:$0x1]
    %207 = vst.msk [vmem:[#allocation2 + $0x19] sm:$0x1] %vm106, %v206
    %s208 = sld [smem:[#allocation5 + $0x1a]]
    %s209 = scalar_lea.vmem %s1, %s208
    %v210 = vld [vmem:[%s209] sm:$0x1]
    %211 = vst.msk [vmem:[#allocation2 + $0x1a] sm:$0x1] %vm106, %v210
    %s212 = sld [smem:[#allocation5 + $0x1b]]
    %s213 = scalar_lea.vmem %s1, %s212
    %v214 = vld [vmem:[%s213] sm:$0x1]
    %215 = vst.msk [vmem:[#allocation2 + $0x1b] sm:$0x1] %vm106, %v214
    %s216 = sld [smem:[#allocation5 + $0x1c]]
    %s217 = scalar_lea.vmem %s1, %s216
    %v218 = vld [vmem:[%s217] sm:$0x1]
    %219 = vst.msk [vmem:[#allocation2 + $0x1c] sm:$0x1] %vm106, %v218
    %s220 = sld [smem:[#allocation5 + $0x1d]]
    %s221 = scalar_lea.vmem %s1, %s220
    %v222 = vld [vmem:[%s221] sm:$0x1]
    %223 = vst.msk [vmem:[#allocation2 + $0x1d] sm:$0x1] %vm106, %v222
    %s224 = sld [smem:[#allocation5 + $0x1e]]
    %s225 = scalar_lea.vmem %s1, %s224
    %v226 = vld [vmem:[%s225] sm:$0x1]
    %227 = vst.msk [vmem:[#allocation2 + $0x1e] sm:$0x1] %vm106, %v226
    %s228 = sld [smem:[#allocation5 + $0x1f]]
    %s229 = scalar_lea.vmem %s1, %s228
    %v230 = vld [vmem:[%s229] sm:$0x1]
    %231 = vst.msk [vmem:[#allocation2 + $0x1f] sm:$0x1] %vm106, %v230
    %s232 = sld [smem:[#allocation5 + $0x20]]
    %s233 = scalar_lea.vmem %s1, %s232
    %v234 = vld [vmem:[%s233] sm:$0x1]
    %235 = vst.msk [vmem:[#allocation2 + $0x20] sm:$0x1] %vm106, %v234
    %s236 = sld [smem:[#allocation5 + $0x21]]
    %s237 = scalar_lea.vmem %s1, %s236
    %v238 = vld [vmem:[%s237] sm:$0x1]
    %239 = vst.msk [vmem:[#allocation2 + $0x21] sm:$0x1] %vm106, %v238
    %s240 = sld [smem:[#allocation5 + $0x22]]
    %s241 = scalar_lea.vmem %s1, %s240
    %v242 = vld [vmem:[%s241] sm:$0x1]
    %243 = vst.msk [vmem:[#allocation2 + $0x22] sm:$0x1] %vm106, %v242
    %s244 = sld [smem:[#allocation5 + $0x23]]
    %s245 = scalar_lea.vmem %s1, %s244
    %v246 = vld [vmem:[%s245] sm:$0x1]
    %247 = vst.msk [vmem:[#allocation2 + $0x23] sm:$0x1] %vm106, %v246
    %s248 = sld [smem:[#allocation5 + $0x24]]
    %s249 = scalar_lea.vmem %s1, %s248
    %v250 = vld [vmem:[%s249] sm:$0x1]
    %251 = vst.msk [vmem:[#allocation2 + $0x24] sm:$0x1] %vm106, %v250
    %s252 = sld [smem:[#allocation5 + $0x25]]
    %s253 = scalar_lea.vmem %s1, %s252
    %v254 = vld [vmem:[%s253] sm:$0x1]
    %255 = vst.msk [vmem:[#allocation2 + $0x25] sm:$0x1] %vm106, %v254
    %s256 = sld [smem:[#allocation5 + $0x26]]
    %s257 = scalar_lea.vmem %s1, %s256
    %v258 = vld [vmem:[%s257] sm:$0x1]
    %259 = vst.msk [vmem:[#allocation2 + $0x26] sm:$0x1] %vm106, %v258
    %s260 = sld [smem:[#allocation5 + $0x27]]
    %s261 = scalar_lea.vmem %s1, %s260
    %v262 = vld [vmem:[%s261] sm:$0x1]
    %263 = vst.msk [vmem:[#allocation2 + $0x27] sm:$0x1] %vm106, %v262
    %s264 = sld [smem:[#allocation5 + $0x28]]
    %s265 = scalar_lea.vmem %s1, %s264
    %v266 = vld [vmem:[%s265] sm:$0x1]
    %267 = vst.msk [vmem:[#allocation2 + $0x28] sm:$0x1] %vm106, %v266
    %s268 = sld [smem:[#allocation5 + $0x29]]
    %s269 = scalar_lea.vmem %s1, %s268
    %v270 = vld [vmem:[%s269] sm:$0x1]
    %271 = vst.msk [vmem:[#allocation2 + $0x29] sm:$0x1] %vm106, %v270
    %s272 = sld [smem:[#allocation5 + $0x2a]]
    %s273 = scalar_lea.vmem %s1, %s272
    %v274 = vld [vmem:[%s273] sm:$0x1]
    %275 = vst.msk [vmem:[#allocation2 + $0x2a] sm:$0x1] %vm106, %v274
    %s276 = sld [smem:[#allocation5 + $0x2b]]
    %s277 = scalar_lea.vmem %s1, %s276
    %v278 = vld [vmem:[%s277] sm:$0x1]
    %279 = vst.msk [vmem:[#allocation2 + $0x2b] sm:$0x1] %vm106, %v278
    %s280 = sld [smem:[#allocation5 + $0x2c]]
    %s281 = scalar_lea.vmem %s1, %s280
    %v282 = vld [vmem:[%s281] sm:$0x1]
    %283 = vst.msk [vmem:[#allocation2 + $0x2c] sm:$0x1] %vm106, %v282
    %s284 = sld [smem:[#allocation5 + $0x2d]]
    %s285 = scalar_lea.vmem %s1, %s284
    %v286 = vld [vmem:[%s285] sm:$0x1]
    %287 = vst.msk [vmem:[#allocation2 + $0x2d] sm:$0x1] %vm106, %v286
    %s288 = sld [smem:[#allocation5 + $0x2e]]
    %s289 = scalar_lea.vmem %s1, %s288
    %v290 = vld [vmem:[%s289] sm:$0x1]
    %291 = vst.msk [vmem:[#allocation2 + $0x2e] sm:$0x1] %vm106, %v290
    %s292 = sld [smem:[#allocation5 + $0x2f]]
    %s293 = scalar_lea.vmem %s1, %s292
    %v294 = vld [vmem:[%s293] sm:$0x1]
    %295 = vst.msk [vmem:[#allocation2 + $0x2f] sm:$0x1] %vm106, %v294
    %s296 = sld [smem:[#allocation5 + $0x30]]
    %s297 = scalar_lea.vmem %s1, %s296
    %v298 = vld [vmem:[%s297] sm:$0x1]
    %299 = vst.msk [vmem:[#allocation2 + $0x30] sm:$0x1] %vm106, %v298
    %s300 = sld [smem:[#allocation5 + $0x31]]
    %s301 = scalar_lea.vmem %s1, %s300
    %v302 = vld [vmem:[%s301] sm:$0x1]
    %303 = vst.msk [vmem:[#allocation2 + $0x31] sm:$0x1] %vm106, %v302
    %s304 = sld [smem:[#allocation5 + $0x32]]
    %s305 = scalar_lea.vmem %s1, %s304
    %v306 = vld [vmem:[%s305] sm:$0x1]
    %307 = vst.msk [vmem:[#allocation2 + $0x32] sm:$0x1] %vm106, %v306
    %s308 = sld [smem:[#allocation5 + $0x33]]
    %s309 = scalar_lea.vmem %s1, %s308
    %v310 = vld [vmem:[%s309] sm:$0x1]
    %311 = vst.msk [vmem:[#allocation2 + $0x33] sm:$0x1] %vm106, %v310
    %s312 = sld [smem:[#allocation5 + $0x34]]
    %s313 = scalar_lea.vmem %s1, %s312
    %v314 = vld [vmem:[%s313] sm:$0x1]
    %315 = vst.msk [vmem:[#allocation2 + $0x34] sm:$0x1] %vm106, %v314
    %s316 = sld [smem:[#allocation5 + $0x35]]
    %s317 = scalar_lea.vmem %s1, %s316
    %v318 = vld [vmem:[%s317] sm:$0x1]
    %319 = vst.msk [vmem:[#allocation2 + $0x35] sm:$0x1] %vm106, %v318
    %s320 = sld [smem:[#allocation5 + $0x36]]
    %s321 = scalar_lea.vmem %s1, %s320
    %v322 = vld [vmem:[%s321] sm:$0x1]
    %323 = vst.msk [vmem:[#allocation2 + $0x36] sm:$0x1] %vm106, %v322
    %s324 = sld [smem:[#allocation5 + $0x37]]
    %s325 = scalar_lea.vmem %s1, %s324
    %v326 = vld [vmem:[%s325] sm:$0x1]
    %327 = vst.msk [vmem:[#allocation2 + $0x37] sm:$0x1] %vm106, %v326
    %s328 = sld [smem:[#allocation5 + $0x38]]
    %s329 = scalar_lea.vmem %s1, %s328
    %v330 = vld [vmem:[%s329] sm:$0x1]
    %331 = vst.msk [vmem:[#allocation2 + $0x38] sm:$0x1] %vm106, %v330
    %s332 = sld [smem:[#allocation5 + $0x39]]
    %s333 = scalar_lea.vmem %s1, %s332
    %v334 = vld [vmem:[%s333] sm:$0x1]
    %335 = vst.msk [vmem:[#allocation2 + $0x39] sm:$0x1] %vm106, %v334
    %s336 = sld [smem:[#allocation5 + $0x3a]]
    %s337 = scalar_lea.vmem %s1, %s336
    %v338 = vld [vmem:[%s337] sm:$0x1]
    %339 = vst.msk [vmem:[#allocation2 + $0x3a] sm:$0x1] %vm106, %v338
    %s340 = sld [smem:[#allocation5 + $0x3b]]
    %s341 = scalar_lea.vmem %s1, %s340
    %v342 = vld [vmem:[%s341] sm:$0x1]
    %343 = vst.msk [vmem:[#allocation2 + $0x3b] sm:$0x1] %vm106, %v342
    %s344 = sld [smem:[#allocation5 + $0x3c]]
    %s345 = scalar_lea.vmem %s1, %s344
    %v346 = vld [vmem:[%s345] sm:$0x1]
    %347 = vst.msk [vmem:[#allocation2 + $0x3c] sm:$0x1] %vm106, %v346
    %s348 = sld [smem:[#allocation5 + $0x3d]]
    %s349 = scalar_lea.vmem %s1, %s348
    %v350 = vld [vmem:[%s349] sm:$0x1]
    %351 = vst.msk [vmem:[#allocation2 + $0x3d] sm:$0x1] %vm106, %v350
    %s352 = sld [smem:[#allocation5 + $0x3e]]
    %s353 = scalar_lea.vmem %s1, %s352
    %v354 = vld [vmem:[%s353] sm:$0x1]
    %355 = vst.msk [vmem:[#allocation2 + $0x3e] sm:$0x1] %vm106, %v354
    %s356 = sld [smem:[#allocation5 + $0x3f]]
    %s357 = scalar_lea.vmem %s1, %s356
    %v358 = vld [vmem:[%s357] sm:$0x1]
    %359 = vst.msk [vmem:[#allocation2 + $0x3f] sm:$0x1] %vm106, %v358
    %v360 = vld [vmem:[#allocation2] sm:$0xff]
    %v361 = vld [vmem:[#allocation2 + $0x8] sm:$0xff]
    %v362 = vld [vmem:[#allocation2 + $0x10] sm:$0xff]
    %v363 = vld [vmem:[#allocation2 + $0x18] sm:$0xff]
    %v364 = vld [vmem:[#allocation2 + $0x20] sm:$0xff]
    %v365 = vld [vmem:[#allocation2 + $0x28] sm:$0xff]
    %v366 = vld [vmem:[#allocation2 + $0x30] sm:$0xff]
    %v367 = vld [vmem:[#allocation2 + $0x38] sm:$0xff]
    %v368 = vld [vmem:[%s2] sm:$0xff]
    %v369 = vld [vmem:[%s2 + $0x8] sm:$0xff]
    %v370 = vld [vmem:[%s2 + $0x10] sm:$0xff]
    %v371 = vld [vmem:[%s2 + $0x18] sm:$0xff]
    %v372 = vld [vmem:[%s2 + $0x20] sm:$0xff]
    %v373 = vld [vmem:[%s2 + $0x28] sm:$0xff]
    %v374 = vld [vmem:[%s2 + $0x30] sm:$0xff]
    %v375 = vld [vmem:[%s2 + $0x38] sm:$0xff]
    %v376 = vld [vmem:[%s2 + $0x40] sm:$0xff]
    %v377 = vld [vmem:[%s2 + $0x48] sm:$0xff]
    %v378 = vld [vmem:[%s2 + $0x50] sm:$0xff]
    %v379 = vld [vmem:[%s2 + $0x58] sm:$0xff]
    %v380 = vld [vmem:[%s2 + $0x60] sm:$0xff]
    %v381 = vld [vmem:[%s2 + $0x68] sm:$0xff]
    %v382 = vld [vmem:[%s2 + $0x70] sm:$0xff]
    %v383 = vld [vmem:[%s2 + $0x78] sm:$0xff]
    %v384 = vld [vmem:[%s4] sm:$0xf]
    %v386 = vlaneseq
    %v387 = vshrl.u32 %v386, 7
    %v388 = vsub.s32 0, %v387
    %v389 = vrot.slane %v384, %v388
    %v390 = vlaneseq
    %v391 = vshrl.u32 %v390, 7
    %v392 = vsub.s32 1, %v391
    %v393 = vrot.slane %v384, %v392
    %v394 = vlaneseq
    %v395 = vshrl.u32 %v394, 7
    %v396 = vsub.s32 2, %v395
    %v397 = vrot.slane %v384, %v396
    %v398 = vlaneseq
    %v399 = vshrl.u32 %v398, 7
    %v400 = vsub.s32 3, %v399
    %v401 = vrot.slane %v384, %v400
    %vm406 = vcmask 261120
    %v408 = vsel %vm406, %v360, 0
    %v411 = vsel %vm406, %v361, 0
    %v414 = vsel %vm406, %v362, 0
    %v417 = vsel %vm406, %v363, 0
    %v420 = vsel %vm406, %v364, 0
    %v423 = vsel %vm406, %v365, 0
    %v426 = vsel %vm406, %v366, 0
    %v429 = vsel %vm406, %v367, 0
    %431 = vmatprep.subr.mxu0 %v369
    %432 = vmatpush1.msra.mxu0 %v368
    %433 = vmatprep.subr.mxu0 %v373
    %434 = vmatpush1.msra.mxu0 %v372
    %435 = vmatprep.subr.mxu0 %v377
    %436 = vmatpush1.msra.mxu0 %v376
    %437 = vmatprep.subr.mxu0 %v381
    %438 = vmatpush1.msra.mxu0 %v380
    %439 = vmatprep.subr.mxu0 0.0
    %440 = vmatpush1.msra.mxu0 0.0
    %441 = vmatprep.subr.mxu0 0.0
    %442 = vmatpush1.msra.mxu0 0.0
    %443 = vmatprep.subr.mxu0 0.0
    %444 = vmatpush1.msra.mxu0 0.0
    %445 = vmatprep.subr.mxu0 0.0
    %446 = vmatpush1.msra.mxu0 0.0
    %447 = vmatprep.subr.mxu0 0.0
    %448 = vmatpush1.msra.mxu0 0.0
    %449 = vmatprep.subr.mxu0 0.0
    %450 = vmatpush1.msra.mxu0 0.0
    %451 = vmatprep.subr.mxu0 0.0
    %452 = vmatpush1.msra.mxu0 0.0
    %453 = vmatprep.subr.mxu0 0.0
    %454 = vmatpush1.msra.mxu0 0.0
    %455 = vmatprep.subr.mxu0 0.0
    %456 = vmatpush1.msra.mxu0 0.0
    %457 = vmatprep.subr.mxu0 0.0
    %458 = vmatpush1.msra.mxu0 0.0
    %459 = vmatprep.subr.mxu0 0.0
    %460 = vmatpush1.msra.mxu0 0.0
    %461 = vmatprep.subr.mxu0 0.0
    %462 = vmatpush1.msra.mxu0 0.0
    %463 = vmatprep.subr.mxu0 0.0
    %464 = vmatpush1.msra.mxu0 0.0
    %465 = vmatprep.subr.mxu0 0.0
    %466 = vmatpush1.msra.mxu0 0.0
    %467 = vmatprep.subr.mxu0 0.0
    %468 = vmatpush1.msra.mxu0 0.0
    %469 = vmatprep.subr.mxu0 0.0
    %470 = vmatpush1.msra.mxu0 0.0
    %471 = vmatprep.subr.mxu0 0.0
    %472 = vmatpush1.msra.mxu0 0.0
    %473 = vmatprep.subr.mxu0 0.0
    %474 = vmatpush1.msra.mxu0 0.0
    %475 = vmatprep.subr.mxu0 0.0
    %476 = vmatpush1.msra.mxu0 0.0
    %477 = vmatprep.subr.mxu0 0.0
    %478 = vmatpush1.msra.mxu0 0.0
    %479 = vmatprep.subr.mxu0 0.0
    %480 = vmatpush1.msra.mxu0 0.0
    %481 = vmatprep.subr.mxu0 0.0
    %482 = vmatpush1.msra.mxu0 0.0
    %483 = vmatprep.subr.mxu0 0.0
    %484 = vmatpush1.msra.mxu0 0.0
    %485 = vmatprep.subr.mxu0 0.0
    %486 = vmatpush1.msra.mxu0 0.0
    %487 = vmatprep.subr.mxu0 0.0
    %488 = vmatpush1.msra.mxu0 0.0
    %489 = vmatprep.subr.mxu0 0.0
    %490 = vmatpush1.msra.mxu0 0.0
    %491 = vmatprep.subr.mxu0 0.0
    %492 = vmatpush1.msra.mxu0 0.0
    %493 = vmatprep.subr.mxu0 0.0
    %494 = vmatpush1.msra.mxu0 0.0
    %495 = vmatprep.mubr.f32.mxu0 0.0
    %496 = vmatmul.mubr.f32.gmra.mrb[0].mxu0 %v408
    %v497 = vpop.f32.mrb[0].mxu0
    %v498 = vadd.f32 %v389, %v497
    %v499 = vpop.f32.mrb[0].mxu0
    %v500 = vadd.f32 %v393, %v499
    %501 = vmatprep.mubr.f32.mxu0 0.0
    %502 = vmatmul.mubr.f32.gmra.mrb[0].mxu0 %v411
    %v503 = vpop.f32.mrb[0].mxu0
    %v504 = vadd.f32 %v389, %v503
    %v505 = vpop.f32.mrb[0].mxu0
    %v506 = vadd.f32 %v393, %v505
    %507 = vmatprep.mubr.f32.mxu0 0.0
    %508 = vmatmul.mubr.f32.gmra.mrb[0].mxu0 %v414
    %v509 = vpop.f32.mrb[0].mxu0
    %v510 = vadd.f32 %v389, %v509
    %v511 = vpop.f32.mrb[0].mxu0
    %v512 = vadd.f32 %v393, %v511
    %513 = vmatprep.mubr.f32.mxu0 0.0
    %514 = vmatmul.mubr.f32.gmra.mrb[0].mxu0 %v417
    %v515 = vpop.f32.mrb[0].mxu0
    %v516 = vadd.f32 %v389, %v515
    %v517 = vpop.f32.mrb[0].mxu0
    %v518 = vadd.f32 %v393, %v517
    %519 = vmatprep.mubr.f32.mxu0 0.0
    %520 = vmatmul.mubr.f32.gmra.mrb[0].mxu0 %v420
    %v521 = vpop.f32.mrb[0].mxu0
    %v522 = vadd.f32 %v389, %v521
    %v523 = vpop.f32.mrb[0].mxu0
    %v524 = vadd.f32 %v393, %v523
    %525 = vmatprep.mubr.f32.mxu0 0.0
    %526 = vmatmul.mubr.f32.gmra.mrb[0].mxu0 %v423
    %v527 = vpop.f32.mrb[0].mxu0
    %v528 = vadd.f32 %v389, %v527
    %v529 = vpop.f32.mrb[0].mxu0
    %v530 = vadd.f32 %v393, %v529
    %531 = vmatprep.mubr.f32.mxu0 0.0
    %532 = vmatmul.mubr.f32.gmra.mrb[0].mxu0 %v426
    %v533 = vpop.f32.mrb[0].mxu0
    %v534 = vadd.f32 %v389, %v533
    %v535 = vpop.f32.mrb[0].mxu0
    %v536 = vadd.f32 %v393, %v535
    %537 = vmatprep.mubr.f32.mxu0 0.0
    %538 = vmatmul.mubr.f32.gmra.mrb[0].mxu0 %v429
    %v539 = vpop.f32.mrb[0].mxu0
    %v540 = vadd.f32 %v389, %v539
    %v541 = vpop.f32.mrb[0].mxu0
    %v542 = vadd.f32 %v393, %v541
    %543 = vdwg.mxu0
    %544 = vmatprep.subr.mxu0 %v371
    %545 = vmatpush1.msra.mxu0 %v370
    %546 = vmatprep.subr.mxu0 %v375
    %547 = vmatpush1.msra.mxu0 %v374
    %548 = vmatprep.subr.mxu0 %v379
    %549 = vmatpush1.msra.mxu0 %v378
    %550 = vmatprep.subr.mxu0 %v383
    %551 = vmatpush1.msra.mxu0 %v382
    %552 = vmatprep.subr.mxu0 0.0
    %553 = vmatpush1.msra.mxu0 0.0
    %554 = vmatprep.subr.mxu0 0.0
    %555 = vmatpush1.msra.mxu0 0.0
    %556 = vmatprep.subr.mxu0 0.0
    %557 = vmatpush1.msra.mxu0 0.0
    %558 = vmatprep.subr.mxu0 0.0
    %559 = vmatpush1.msra.mxu0 0.0
    %560 = vmatprep.subr.mxu0 0.0
    %561 = vmatpush1.msra.mxu0 0.0
    %562 = vmatprep.subr.mxu0 0.0
    %563 = vmatpush1.msra.mxu0 0.0
    %564 = vmatprep.subr.mxu0 0.0
    %565 = vmatpush1.msra.mxu0 0.0
    %566 = vmatprep.subr.mxu0 0.0
    %567 = vmatpush1.msra.mxu0 0.0
    %568 = vmatprep.subr.mxu0 0.0
    %569 = vmatpush1.msra.mxu0 0.0
    %570 = vmatprep.subr.mxu0 0.0
    %571 = vmatpush1.msra.mxu0 0.0
    %572 = vmatprep.subr.mxu0 0.0
    %573 = vmatpush1.msra.mxu0 0.0
    %574 = vmatprep.subr.mxu0 0.0
    %575 = vmatpush1.msra.mxu0 0.0
    %576 = vmatprep.subr.mxu0 0.0
    %577 = vmatpush1.msra.mxu0 0.0
    %578 = vmatprep.subr.mxu0 0.0
    %579 = vmatpush1.msra.mxu0 0.0
    %580 = vmatprep.subr.mxu0 0.0
    %581 = vmatpush1.msra.mxu0 0.0
    %582 = vmatprep.subr.mxu0 0.0
    %583 = vmatpush1.msra.mxu0 0.0
    %584 = vmatprep.subr.mxu0 0.0
    %585 = vmatpush1.msra.mxu0 0.0
    %586 = vmatprep.subr.mxu0 0.0
    %587 = vmatpush1.msra.mxu0 0.0
    %588 = vmatprep.subr.mxu0 0.0
    %589 = vmatpush1.msra.mxu0 0.0
    %590 = vmatprep.subr.mxu0 0.0
    %591 = vmatpush1.msra.mxu0 0.0
    %592 = vmatprep.subr.mxu0 0.0
    %593 = vmatpush1.msra.mxu0 0.0
    %594 = vmatprep.subr.mxu0 0.0
    %595 = vmatpush1.msra.mxu0 0.0
    %596 = vmatprep.subr.mxu0 0.0
    %597 = vmatpush1.msra.mxu0 0.0
    %598 = vmatprep.subr.mxu0 0.0
    %599 = vmatpush1.msra.mxu0 0.0
    %600 = vmatprep.subr.mxu0 0.0
    %601 = vmatpush1.msra.mxu0 0.0
    %602 = vmatprep.subr.mxu0 0.0
    %603 = vmatpush1.msra.mxu0 0.0
    %604 = vmatprep.subr.mxu0 0.0
    %605 = vmatpush1.msra.mxu0 0.0
    %606 = vmatprep.subr.mxu0 0.0
    %607 = vmatpush1.msra.mxu0 0.0
    %608 = vmatprep.mubr.f32.mxu0 0.0
    %609 = vmatmul.mubr.f32.gmra.mrb[0].mxu0 %v408
    %v610 = vpop.f32.mrb[0].mxu0
    %v611 = vadd.f32 %v397, %v610
    %v612 = vpop.f32.mrb[0].mxu0
    %v613 = vadd.f32 %v401, %v612
    %614 = vmatprep.mubr.f32.mxu0 0.0
    %615 = vmatmul.mubr.f32.gmra.mrb[0].mxu0 %v411
    %v616 = vpop.f32.mrb[0].mxu0
    %v617 = vadd.f32 %v397, %v616
    %v618 = vpop.f32.mrb[0].mxu0
    %v619 = vadd.f32 %v401, %v618
    %620 = vmatprep.mubr.f32.mxu0 0.0
    %621 = vmatmul.mubr.f32.gmra.mrb[0].mxu0 %v414
    %v622 = vpop.f32.mrb[0].mxu0
    %v623 = vadd.f32 %v397, %v622
    %v624 = vpop.f32.mrb[0].mxu0
    %v625 = vadd.f32 %v401, %v624
    %626 = vmatprep.mubr.f32.mxu0 0.0
    %627 = vmatmul.mubr.f32.gmra.mrb[0].mxu0 %v417
    %v628 = vpop.f32.mrb[0].mxu0
    %v629 = vadd.f32 %v397, %v628
    %v630 = vpop.f32.mrb[0].mxu0
    %v631 = vadd.f32 %v401, %v630
    %632 = vmatprep.mubr.f32.mxu0 0.0
    %633 = vmatmul.mubr.f32.gmra.mrb[0].mxu0 %v420
    %v634 = vpop.f32.mrb[0].mxu0
    %v635 = vadd.f32 %v397, %v634
    %v636 = vpop.f32.mrb[0].mxu0
    %v637 = vadd.f32 %v401, %v636
    %638 = vmatprep.mubr.f32.mxu0 0.0
    %639 = vmatmul.mubr.f32.gmra.mrb[0].mxu0 %v423
    %v640 = vpop.f32.mrb[0].mxu0
    %v641 = vadd.f32 %v397, %v640
    %v642 = vpop.f32.mrb[0].mxu0
    %v643 = vadd.f32 %v401, %v642
    %644 = vmatprep.mubr.f32.mxu0 0.0
    %645 = vmatmul.mubr.f32.gmra.mrb[0].mxu0 %v426
    %v646 = vpop.f32.mrb[0].mxu0
    %v647 = vadd.f32 %v397, %v646
    %v648 = vpop.f32.mrb[0].mxu0
    %v649 = vadd.f32 %v401, %v648
    %650 = vmatprep.mubr.f32.mxu0 0.0
    %651 = vmatmul.mubr.f32.gmra.mrb[0].mxu0 %v429
    %v652 = vpop.f32.mrb[0].mxu0
    %v653 = vadd.f32 %v397, %v652
    %v654 = vpop.f32.mrb[0].mxu0
    %v655 = vadd.f32 %v401, %v654
    %656 = vdwg.mxu0
    %657 = vst [vmem:[#allocation3] sm:$0xff] %v498
    %658 = vst [vmem:[#allocation3 + $0x8] sm:$0xff] %v500
    %659 = vst [vmem:[#allocation3 + $0x10] sm:$0xff] %v611
    %660 = vst [vmem:[#allocation3 + $0x18] sm:$0xff] %v613
    %661 = vst [vmem:[#allocation3 + $0x20] sm:$0xff] %v504
    %662 = vst [vmem:[#allocation3 + $0x28] sm:$0xff] %v506
    %663 = vst [vmem:[#allocation3 + $0x30] sm:$0xff] %v617
    %664 = vst [vmem:[#allocation3 + $0x38] sm:$0xff] %v619
    %665 = vst [vmem:[#allocation3 + $0x40] sm:$0xff] %v510
    %666 = vst [vmem:[#allocation3 + $0x48] sm:$0xff] %v512
    %667 = vst [vmem:[#allocation3 + $0x50] sm:$0xff] %v623
    %668 = vst [vmem:[#allocation3 + $0x58] sm:$0xff] %v625
    %669 = vst [vmem:[#allocation3 + $0x60] sm:$0xff] %v516
    %670 = vst [vmem:[#allocation3 + $0x68] sm:$0xff] %v518
    %671 = vst [vmem:[#allocation3 + $0x70] sm:$0xff] %v629
    %672 = vst [vmem:[#allocation3 + $0x78] sm:$0xff] %v631
    %673 = vst [vmem:[#allocation3 + $0x80] sm:$0xff] %v522
    %674 = vst [vmem:[#allocation3 + $0x88] sm:$0xff] %v524
    %675 = vst [vmem:[#allocation3 + $0x90] sm:$0xff] %v635
    %676 = vst [vmem:[#allocation3 + $0x98] sm:$0xff] %v637
    %677 = vst [vmem:[#allocation3 + $0xa0] sm:$0xff] %v528
    %678 = vst [vmem:[#allocation3 + $0xa8] sm:$0xff] %v530
    %679 = vst [vmem:[#allocation3 + $0xb0] sm:$0xff] %v641
    %680 = vst [vmem:[#allocation3 + $0xb8] sm:$0xff] %v643
    %681 = vst [vmem:[#allocation3 + $0xc0] sm:$0xff] %v534
    %682 = vst [vmem:[#allocation3 + $0xc8] sm:$0xff] %v536
    %683 = vst [vmem:[#allocation3 + $0xd0] sm:$0xff] %v647
    %684 = vst [vmem:[#allocation3 + $0xd8] sm:$0xff] %v649
    %685 = vst [vmem:[#allocation3 + $0xe0] sm:$0xff] %v540
    %686 = vst [vmem:[#allocation3 + $0xe8] sm:$0xff] %v542
    %687 = vst [vmem:[#allocation3 + $0xf0] sm:$0xff] %v653
    %688 = vst [vmem:[#allocation3 + $0xf8] sm:$0xff] %v655
    %s689 = smul.u32 0, 4
    %s690 = smul.addr %s689, 8
    %s691 = scalar_lea.vmem [#allocation3], %s690
    %v692 = vld [vmem:[%s691] sm:$0xff]
    %v693 = vld [vmem:[%s691 + $0x8] sm:$0xff]
    %v694 = vld [vmem:[%s691 + $0x10] sm:$0xff]
    %v695 = vld [vmem:[%s691 + $0x18] sm:$0xff]
    %v696 = vld [vmem:[#allocation8] sm:$0xff]
    %v697 = vld [vmem:[#allocation8 + $0x8] sm:$0xff]
    %v698 = vld [vmem:[#allocation8 + $0x10] sm:$0xff]
    %v699 = vld [vmem:[#allocation8 + $0x18] sm:$0xff]
    %v700 = vld [vmem:[#allocation8 + $0x20] sm:$0xff]
    %v701 = vld [vmem:[#allocation8 + $0x28] sm:$0xff]
    %v702 = vld [vmem:[#allocation8 + $0x30] sm:$0xff]
    %v703 = vld [vmem:[#allocation8 + $0x38] sm:$0xff]
    %v704 = vld [vmem:[#allocation8 + $0x40] sm:$0xff]
    %v705 = vld [vmem:[#allocation8 + $0x48] sm:$0xff]
    %v706 = vld [vmem:[#allocation8 + $0x50] sm:$0xff]
    %v707 = vld [vmem:[#allocation8 + $0x58] sm:$0xff]
    %v708 = vld [vmem:[#allocation8 + $0x60] sm:$0xff]
    %v709 = vld [vmem:[#allocation8 + $0x68] sm:$0xff]
    %v710 = vld [vmem:[#allocation8 + $0x70] sm:$0xff]
    %v711 = vld [vmem:[#allocation8 + $0x78] sm:$0xff]
    %v712 = vld [vmem:[#allocation8 + $0x80] sm:$0xff]
    %v713 = vld [vmem:[#allocation8 + $0x88] sm:$0xff]
    %v714 = vld [vmem:[#allocation8 + $0x90] sm:$0xff]
    %v715 = vld [vmem:[#allocation8 + $0x98] sm:$0xff]
    %v716 = vld [vmem:[#allocation8 + $0xa0] sm:$0xff]
    %v717 = vld [vmem:[#allocation8 + $0xa8] sm:$0xff]
    %v718 = vld [vmem:[#allocation8 + $0xb0] sm:$0xff]
    %v719 = vld [vmem:[#allocation8 + $0xb8] sm:$0xff]
    %v720 = vld [vmem:[#allocation8 + $0xc0] sm:$0xff]
    %v721 = vld [vmem:[#allocation8 + $0xc8] sm:$0xff]
    %v722 = vld [vmem:[#allocation8 + $0xd0] sm:$0xff]
    %v723 = vld [vmem:[#allocation8 + $0xd8] sm:$0xff]
    %v724 = vld [vmem:[#allocation8 + $0xe0] sm:$0xff]
    %v725 = vld [vmem:[#allocation8 + $0xe8] sm:$0xff]
    %v726 = vld [vmem:[#allocation8 + $0xf0] sm:$0xff]
    %v727 = vld [vmem:[#allocation8 + $0xf8] sm:$0xff]
    %v728 = vld [vmem:[#allocation8 + $0x100] sm:$0xff]
    %v729 = vld [vmem:[#allocation8 + $0x108] sm:$0xff]
    %v730 = vld [vmem:[#allocation8 + $0x110] sm:$0xff]
    %v731 = vld [vmem:[#allocation8 + $0x118] sm:$0xff]
    %v732 = vld [vmem:[#allocation8 + $0x120] sm:$0xff]
    %v733 = vld [vmem:[#allocation8 + $0x128] sm:$0xff]
    %v734 = vld [vmem:[#allocation8 + $0x130] sm:$0xff]
    %v735 = vld [vmem:[#allocation8 + $0x138] sm:$0xff]
    %v736 = vld [vmem:[#allocation8 + $0x140] sm:$0xff]
    %v737 = vld [vmem:[#allocation8 + $0x148] sm:$0xff]
    %v738 = vld [vmem:[#allocation8 + $0x150] sm:$0xff]
    %v739 = vld [vmem:[#allocation8 + $0x158] sm:$0xff]
    %v740 = vld [vmem:[#allocation8 + $0x160] sm:$0xff]
    %v741 = vld [vmem:[#allocation8 + $0x168] sm:$0xff]
    %v742 = vld [vmem:[#allocation8 + $0x170] sm:$0xff]
    %v743 = vld [vmem:[#allocation8 + $0x178] sm:$0xff]
    %v744 = vld [vmem:[#allocation8 + $0x180] sm:$0xff]
    %v745 = vld [vmem:[#allocation8 + $0x188] sm:$0xff]
    %v746 = vld [vmem:[#allocation8 + $0x190] sm:$0xff]
    %v747 = vld [vmem:[#allocation8 + $0x198] sm:$0xff]
    %v748 = vld [vmem:[#allocation8 + $0x1a0] sm:$0xff]
    %v749 = vld [vmem:[#allocation8 + $0x1a8] sm:$0xff]
    %v750 = vld [vmem:[#allocation8 + $0x1b0] sm:$0xff]
    %v751 = vld [vmem:[#allocation8 + $0x1b8] sm:$0xff]
    %v752 = vld [vmem:[#allocation8 + $0x1c0] sm:$0xff]
    %v753 = vld [vmem:[#allocation8 + $0x1c8] sm:$0xff]
    %v754 = vld [vmem:[#allocation8 + $0x1d0] sm:$0xff]
    %v755 = vld [vmem:[#allocation8 + $0x1d8] sm:$0xff]
    %v756 = vld [vmem:[#allocation8 + $0x1e0] sm:$0xff]
    %v757 = vld [vmem:[#allocation8 + $0x1e8] sm:$0xff]
    %v758 = vld [vmem:[#allocation8 + $0x1f0] sm:$0xff]
    %v759 = vld [vmem:[#allocation8 + $0x1f8] sm:$0xff]
    %760 = vmatprep.subr.mxu0 %v697
    %761 = vmatpush1.msra.mxu0 %v696
    %762 = vmatprep.subr.mxu0 %v701
    %763 = vmatpush1.msra.mxu0 %v700
    %764 = vmatprep.subr.mxu0 %v705
    %765 = vmatpush1.msra.mxu0 %v704
    %766 = vmatprep.subr.mxu0 %v709
    %767 = vmatpush1.msra.mxu0 %v708
    %768 = vmatprep.subr.mxu0 %v713
    %769 = vmatpush1.msra.mxu0 %v712
    %770 = vmatprep.subr.mxu0 %v717
    %771 = vmatpush1.msra.mxu0 %v716
    %772 = vmatprep.subr.mxu0 %v721
    %773 = vmatpush1.msra.mxu0 %v720
    %774 = vmatprep.subr.mxu0 %v725
    %775 = vmatpush1.msra.mxu0 %v724
    %776 = vmatprep.subr.mxu0 %v729
    %777 = vmatpush1.msra.mxu0 %v728
    %778 = vmatprep.subr.mxu0 %v733
    %779 = vmatpush1.msra.mxu0 %v732
    %780 = vmatprep.subr.mxu0 %v737
    %781 = vmatpush1.msra.mxu0 %v736
    %782 = vmatprep.subr.mxu0 %v741
    %783 = vmatpush1.msra.mxu0 %v740
    %784 = vmatprep.subr.mxu0 %v745
    %785 = vmatpush1.msra.mxu0 %v744
    %786 = vmatprep.subr.mxu0 %v749
    %787 = vmatpush1.msra.mxu0 %v748
    %788 = vmatprep.subr.mxu0 %v753
    %789 = vmatpush1.msra.mxu0 %v752
    %790 = vmatprep.subr.mxu0 %v757
    %791 = vmatpush1.msra.mxu0 %v756
    %792 = vmatprep.subr.mxu0 0.0
    %793 = vmatpush1.msra.mxu0 0.0
    %794 = vmatprep.subr.mxu0 0.0
    %795 = vmatpush1.msra.mxu0 0.0
    %796 = vmatprep.subr.mxu0 0.0
    %797 = vmatpush1.msra.mxu0 0.0
    %798 = vmatprep.subr.mxu0 0.0
    %799 = vmatpush1.msra.mxu0 0.0
    %800 = vmatprep.subr.mxu0 0.0
    %801 = vmatpush1.msra.mxu0 0.0
    %802 = vmatprep.subr.mxu0 0.0
    %803 = vmatpush1.msra.mxu0 0.0
    %804 = vmatprep.subr.mxu0 0.0
    %805 = vmatpush1.msra.mxu0 0.0
    %806 = vmatprep.subr.mxu0 0.0
    %807 = vmatpush1.msra.mxu0 0.0
    %808 = vmatprep.subr.mxu0 0.0
    %809 = vmatpush1.msra.mxu0 0.0
    %810 = vmatprep.subr.mxu0 0.0
    %811 = vmatpush1.msra.mxu0 0.0
    %812 = vmatprep.subr.mxu0 0.0
    %813 = vmatpush1.msra.mxu0 0.0
    %814 = vmatprep.subr.mxu0 0.0
    %815 = vmatpush1.msra.mxu0 0.0
    %816 = vmatprep.subr.mxu0 0.0
    %817 = vmatpush1.msra.mxu0 0.0
    %818 = vmatprep.subr.mxu0 0.0
    %819 = vmatpush1.msra.mxu0 0.0
    %820 = vmatprep.subr.mxu0 0.0
    %821 = vmatpush1.msra.mxu0 0.0
    %822 = vmatprep.subr.mxu0 0.0
    %823 = vmatpush1.msra.mxu0 0.0
    %824 = vmatprep.mubr.f32.mxu0 0.0
    %825 = vmatmul.mubr.f32.gmra.mrb[0].mxu0 0.0
    %v826 = vpop.f32.mrb[0].mxu0
    %v827 = vadd.f32 0.0, %v826
    %v828 = vpop.f32.mrb[0].mxu0
    %v829 = vadd.f32 0.0, %v828
    %830 = vdwg.mxu0
    %831 = vmatprep.subr.mxu0 %v699
    %832 = vmatpush1.msra.mxu0 %v698
    %833 = vmatprep.subr.mxu0 %v703
    %834 = vmatpush1.msra.mxu0 %v702
    %835 = vmatprep.subr.mxu0 %v707
    %836 = vmatpush1.msra.mxu0 %v706
    %837 = vmatprep.subr.mxu0 %v711
    %838 = vmatpush1.msra.mxu0 %v710
    %839 = vmatprep.subr.mxu0 %v715
    %840 = vmatpush1.msra.mxu0 %v714
    %841 = vmatprep.subr.mxu0 %v719
    %842 = vmatpush1.msra.mxu0 %v718
    %843 = vmatprep.subr.mxu0 %v723
    %844 = vmatpush1.msra.mxu0 %v722
    %845 = vmatprep.subr.mxu0 %v727
    %846 = vmatpush1.msra.mxu0 %v726
    %847 = vmatprep.subr.mxu0 %v731
    %848 = vmatpush1.msra.mxu0 %v730
    %849 = vmatprep.subr.mxu0 %v735
    %850 = vmatpush1.msra.mxu0 %v734
    %851 = vmatprep.subr.mxu0 %v739
    %852 = vmatpush1.msra.mxu0 %v738
    %853 = vmatprep.subr.mxu0 %v743
    %854 = vmatpush1.msra.mxu0 %v742
    %855 = vmatprep.subr.mxu0 %v747
    %856 = vmatpush1.msra.mxu0 %v746
    %857 = vmatprep.subr.mxu0 %v751
    %858 = vmatpush1.msra.mxu0 %v750
    %859 = vmatprep.subr.mxu0 %v755
    %860 = vmatpush1.msra.mxu0 %v754
    %861 = vmatprep.subr.mxu0 %v759
    %862 = vmatpush1.msra.mxu0 %v758
    %863 = vmatprep.subr.mxu0 0.0
    %864 = vmatpush1.msra.mxu0 0.0
    %865 = vmatprep.subr.mxu0 0.0
    %866 = vmatpush1.msra.mxu0 0.0
    %867 = vmatprep.subr.mxu0 0.0
    %868 = vmatpush1.msra.mxu0 0.0
    %869 = vmatprep.subr.mxu0 0.0
    %870 = vmatpush1.msra.mxu0 0.0
    %871 = vmatprep.subr.mxu0 0.0
    %872 = vmatpush1.msra.mxu0 0.0
    %873 = vmatprep.subr.mxu0 0.0
    %874 = vmatpush1.msra.mxu0 0.0
    %875 = vmatprep.subr.mxu0 0.0
    %876 = vmatpush1.msra.mxu0 0.0
    %877 = vmatprep.subr.mxu0 0.0
    %878 = vmatpush1.msra.mxu0 0.0
    %879 = vmatprep.subr.mxu0 0.0
    %880 = vmatpush1.msra.mxu0 0.0
    %881 = vmatprep.subr.mxu0 0.0
    %882 = vmatpush1.msra.mxu0 0.0
    %883 = vmatprep.subr.mxu0 0.0
    %884 = vmatpush1.msra.mxu0 0.0
    %885 = vmatprep.subr.mxu0 0.0
    %886 = vmatpush1.msra.mxu0 0.0
    %887 = vmatprep.subr.mxu0 0.0
    %888 = vmatpush1.msra.mxu0 0.0
    %889 = vmatprep.subr.mxu0 0.0
    %890 = vmatpush1.msra.mxu0 0.0
    %891 = vmatprep.subr.mxu0 0.0
    %892 = vmatpush1.msra.mxu0 0.0
    %893 = vmatprep.subr.mxu0 0.0
    %894 = vmatpush1.msra.mxu0 0.0
    %895 = vmatprep.mubr.f32.mxu0 0.0
    %896 = vmatmul.mubr.f32.gmra.mrb[0].mxu0 0.0
    %v897 = vpop.f32.mrb[0].mxu0
    %v898 = vadd.f32 0.0, %v897
    %v899 = vpop.f32.mrb[0].mxu0
    %v900 = vadd.f32 0.0, %v899
    %901 = vdwg.mxu0
    %v902 = vadd.f32 %v692, %v827
    %v903 = vadd.f32 %v693, %v829
    %v904 = vadd.f32 %v694, %v898
    %v905 = vadd.f32 %v695, %v900
    %v906 = vxor.u32 %v902, 2147483648
    %v907 = vxor.u32 %v903, 2147483648
    %v908 = vxor.u32 %v904, 2147483648
    %v909 = vmul.f32 %v906, 1.442695
    %v910 = vpow.pop %v909
    %v911 = vmul.f32 %v907, 1.442695
    %v912 = vpow.pop %v911
    %v913 = vmul.f32 %v908, 1.442695
    %v914 = vpow.pop %v913
    %v915 = vadd.f32 %v910, 1.0
    %v916 = vadd.f32 %v912, 1.0
    %v917 = vadd.f32 %v914, 1.0
    %v918 = vrcp.pop %v915
    %v919 = vmul.f32 1.0, %v918
    %v920 = vrcp.pop %v916
    %v921 = vmul.f32 1.0, %v920
    %v922 = vrcp.pop %v917
    %v923 = vmul.f32 1.0, %v922
    %v924 = vtanh.pop %v905
    %v925 = vmul.f32 %v921, 0.0
    %v926 = vmul.f32 %v919, %v924
    %v927 = vadd.f32 %v925, %v926
    %v928 = vtanh.pop %v927
    %v929 = vmul.f32 %v923, %v928
    %930 = vst [vmem:[#allocation4] sm:$0xff] %v929
    %s931 = smul.u32 1, 4
    %s932 = smul.addr %s931, 8
    %s933 = scalar_lea.vmem [#allocation3], %s932
    %v934 = vld [vmem:[%s933] sm:$0xff]
    %v935 = vld [vmem:[%s933 + $0x8] sm:$0xff]
    %v936 = vld [vmem:[%s933 + $0x10] sm:$0xff]
    %v937 = vld [vmem:[%s933 + $0x18] sm:$0xff]
    %v938 = vld [vmem:[#allocation8] sm:$0xff]
    %v939 = vld [vmem:[#allocation8 + $0x8] sm:$0xff]
    %v940 = vld [vmem:[#allocation8 + $0x10] sm:$0xff]
    %v941 = vld [vmem:[#allocation8 + $0x18] sm:$0xff]
    %v942 = vld [vmem:[#allocation8 + $0x20] sm:$0xff]
    %v943 = vld [vmem:[#allocation8 + $0x28] sm:$0xff]
    %v944 = vld [vmem:[#allocation8 + $0x30] sm:$0xff]
    %v945 = vld [vmem:[#allocation8 + $0x38] sm:$0xff]
    %v946 = vld [vmem:[#allocation8 + $0x40] sm:$0xff]
    %v947 = vld [vmem:[#allocation8 + $0x48] sm:$0xff]
    %v948 = vld [vmem:[#allocation8 + $0x50] sm:$0xff]
    %v949 = vld [vmem:[#allocation8 + $0x58] sm:$0xff]
    %v950 = vld [vmem:[#allocation8 + $0x60] sm:$0xff]
    %v951 = vld [vmem:[#allocation8 + $0x68] sm:$0xff]
    %v952 = vld [vmem:[#allocation8 + $0x70] sm:$0xff]
    %v953 = vld [vmem:[#allocation8 + $0x78] sm:$0xff]
    %v954 = vld [vmem:[#allocation8 + $0x80] sm:$0xff]
    %v955 = vld [vmem:[#allocation8 + $0x88] sm:$0xff]
    %v956 = vld [vmem:[#allocation8 + $0x90] sm:$0xff]
    %v957 = vld [vmem:[#allocation8 + $0x98] sm:$0xff]
    %v958 = vld [vmem:[#allocation8 + $0xa0] sm:$0xff]
    %v959 = vld [vmem:[#allocation8 + $0xa8] sm:$0xff]
    %v960 = vld [vmem:[#allocation8 + $0xb0] sm:$0xff]
    %v961 = vld [vmem:[#allocation8 + $0xb8] sm:$0xff]
    %v962 = vld [vmem:[#allocation8 + $0xc0] sm:$0xff]
    %v963 = vld [vmem:[#allocation8 + $0xc8] sm:$0xff]
    %v964 = vld [vmem:[#allocation8 + $0xd0] sm:$0xff]
    %v965 = vld [vmem:[#allocation8 + $0xd8] sm:$0xff]
    %v966 = vld [vmem:[#allocation8 + $0xe0] sm:$0xff]
    %v967 = vld [vmem:[#allocation8 + $0xe8] sm:$0xff]
    %v968 = vld [vmem:[#allocation8 + $0xf0] sm:$0xff]
    %v969 = vld [vmem:[#allocation8 + $0xf8] sm:$0xff]
    %v970 = vld [vmem:[#allocation8 + $0x100] sm:$0xff]
    %v971 = vld [vmem:[#allocation8 + $0x108] sm:$0xff]
    %v972 = vld [vmem:[#allocation8 + $0x110] sm:$0xff]
    %v973 = vld [vmem:[#allocation8 + $0x118] sm:$0xff]
    %v974 = vld [vmem:[#allocation8 + $0x120] sm:$0xff]
    %v975 = vld [vmem:[#allocation8 + $0x128] sm:$0xff]
    %v976 = vld [vmem:[#allocation8 + $0x130] sm:$0xff]
    %v977 = vld [vmem:[#allocation8 + $0x138] sm:$0xff]
    %v978 = vld [vmem:[#allocation8 + $0x140] sm:$0xff]
    %v979 = vld [vmem:[#allocation8 + $0x148] sm:$0xff]
    %v980 = vld [vmem:[#allocation8 + $0x150] sm:$0xff]
    %v981 = vld [vmem:[#allocation8 + $0x158] sm:$0xff]
    %v982 = vld [vmem:[#allocation8 + $0x160] sm:$0xff]
    %v983 = vld [vmem:[#allocation8 + $0x168] sm:$0xff]
    %v984 = vld [vmem:[#allocation8 + $0x170] sm:$0xff]
    %v985 = vld [vmem:[#allocation8 + $0x178] sm:$0xff]
    %v986 = vld [vmem:[#allocation8 + $0x180] sm:$0xff]
    %v987 = vld [vmem:[#allocation8 + $0x188] sm:$0xff]
    %v988 = vld [vmem:[#allocation8 + $0x190] sm:$0xff]
    %v989 = vld [vmem:[#allocation8 + $0x198] sm:$0xff]
    %v990 = vld [vmem:[#allocation8 + $0x1a0] sm:$0xff]
    %v991 = vld [vmem:[#allocation8 + $0x1a8] sm:$0xff]
    %v992 = vld [vmem:[#allocation8 + $0x1b0] sm:$0xff]
    %v993 = vld [vmem:[#allocation8 + $0x1b8] sm:$0xff]
    %v994 = vld [vmem:[#allocation8 + $0x1c0] sm:$0xff]
    %v995 = vld [vmem:[#allocation8 + $0x1c8] sm:$0xff]
    %v996 = vld [vmem:[#allocation8 + $0x1d0] sm:$0xff]
    %v997 = vld [vmem:[#allocation8 + $0x1d8] sm:$0xff]
    %v998 = vld [vmem:[#allocation8 + $0x1e0] sm:$0xff]
    %v999 = vld [vmem:[#allocation8 + $0x1e8] sm:$0xff]
    %v1000 = vld [vmem:[#allocation8 + $0x1f0] sm:$0xff]
    %v1001 = vld [vmem:[#allocation8 + $0x1f8] sm:$0xff]
    %1002 = vmatprep.subr.mxu0 %v939
    %1003 = vmatpush1.msra.mxu0 %v938
    %1004 = vmatprep.subr.mxu0 %v943
    %1005 = vmatpush1.msra.mxu0 %v942
    %1006 = vmatprep.subr.mxu0 %v947
    %1007 = vmatpush1.msra.mxu0 %v946
    %1008 = vmatprep.subr.mxu0 %v951
    %1009 = vmatpush1.msra.mxu0 %v950
    %1010 = vmatprep.subr.mxu0 %v955
    %1011 = vmatpush1.msra.mxu0 %v954
    %1012 = vmatprep.subr.mxu0 %v959
    %1013 = vmatpush1.msra.mxu0 %v958
    %1014 = vmatprep.subr.mxu0 %v963
    %1015 = vmatpush1.msra.mxu0 %v962
    %1016 = vmatprep.subr.mxu0 %v967
    %1017 = vmatpush1.msra.mxu0 %v966
    %1018 = vmatprep.subr.mxu0 %v971
    %1019 = vmatpush1.msra.mxu0 %v970
    %1020 = vmatprep.subr.mxu0 %v975
    %1021 = vmatpush1.msra.mxu0 %v974
    %1022 = vmatprep.subr.mxu0 %v979
    %1023 = vmatpush1.msra.mxu0 %v978
    %1024 = vmatprep.subr.mxu0 %v983
    %1025 = vmatpush1.msra.mxu0 %v982
    %1026 = vmatprep.subr.mxu0 %v987
    %1027 = vmatpush1.msra.mxu0 %v986
    %1028 = vmatprep.subr.mxu0 %v991
    %1029 = vmatpush1.msra.mxu0 %v990
    %1030 = vmatprep.subr.mxu0 %v995
    %1031 = vmatpush1.msra.mxu0 %v994
    %1032 = vmatprep.subr.mxu0 %v999
    %1033 = vmatpush1.msra.mxu0 %v998
    %1034 = vmatprep.subr.mxu0 0.0
    %1035 = vmatpush1.msra.mxu0 0.0
    %1036 = vmatprep.subr.mxu0 0.0
    %1037 = vmatpush1.msra.mxu0 0.0
    %1038 = vmatprep.subr.mxu0 0.0
    %1039 = vmatpush1.msra.mxu0 0.0
    %1040 = vmatprep.subr.mxu0 0.0
    %1041 = vmatpush1.msra.mxu0 0.0
    %1042 = vmatprep.subr.mxu0 0.0
    %1043 = vmatpush1.msra.mxu0 0.0
    %1044 = vmatprep.subr.mxu0 0.0
    %1045 = vmatpush1.msra.mxu0 0.0
    %1046 = vmatprep.subr.mxu0 0.0
    %1047 = vmatpush1.msra.mxu0 0.0
    %1048 = vmatprep.subr.mxu0 0.0
    %1049 = vmatpush1.msra.mxu0 0.0
    %1050 = vmatprep.subr.mxu0 0.0
    %1051 = vmatpush1.msra.mxu0 0.0
    %1052 = vmatprep.subr.mxu0 0.0
    %1053 = vmatpush1.msra.mxu0 0.0
    %1054 = vmatprep.subr.mxu0 0.0
    %1055 = vmatpush1.msra.mxu0 0.0
    %1056 = vmatprep.subr.mxu0 0.0
    %1057 = vmatpush1.msra.mxu0 0.0
    %1058 = vmatprep.subr.mxu0 0.0
    %1059 = vmatpush1.msra.mxu0 0.0
    %1060 = vmatprep.subr.mxu0 0.0
    %1061 = vmatpush1.msra.mxu0 0.0
    %1062 = vmatprep.subr.mxu0 0.0
    %1063 = vmatpush1.msra.mxu0 0.0
    %1064 = vmatprep.subr.mxu0 0.0
    %1065 = vmatpush1.msra.mxu0 0.0
    %1066 = vmatprep.mubr.f32.mxu0 0.0
    %1067 = vmatmul.mubr.f32.gmra.mrb[0].mxu0 %v929
    %v1068 = vpop.f32.mrb[0].mxu0
    %v1069 = vadd.f32 0.0, %v1068
    %v1070 = vpop.f32.mrb[0].mxu0
    %v1071 = vadd.f32 0.0, %v1070
    %1072 = vdwg.mxu0
    %1073 = vmatprep.subr.mxu0 %v941
    %1074 = vmatpush1.msra.mxu0 %v940
    %1075 = vmatprep.subr.mxu0 %v945
    %1076 = vmatpush1.msra.mxu0 %v944
    %1077 = vmatprep.subr.mxu0 %v949
    %1078 = vmatpush1.msra.mxu0 %v948
    %1079 = vmatprep.subr.mxu0 %v953
    %1080 = vmatpush1.msra.mxu0 %v952
    %1081 = vmatprep.subr.mxu0 %v957
    %1082 = vmatpush1.msra.mxu0 %v956
    %1083 = vmatprep.subr.mxu0 %v961
    %1084 = vmatpush1.msra.mxu0 %v960
    %1085 = vmatprep.subr.mxu0 %v965
    %1086 = vmatpush1.msra.mxu0 %v964
    %1087 = vmatprep.subr.mxu0 %v969
    %1088 = vmatpush1.msra.mxu0 %v968
    %1089 = vmatprep.subr.mxu0 %v973
    %1090 = vmatpush1.msra.mxu0 %v972
    %1091 = vmatprep.subr.mxu0 %v977
    %1092 = vmatpush1.msra.mxu0 %v976
    %1093 = vmatprep.subr.mxu0 %v981
    %1094 = vmatpush1.msra.mxu0 %v980
    %1095 = vmatprep.subr.mxu0 %v985
    %1096 = vmatpush1.msra.mxu0 %v984
    %1097 = vmatprep.subr.mxu0 %v989
    %1098 = vmatpush1.msra.mxu0 %v988
    %1099 = vmatprep.subr.mxu0 %v993
    %1100 = vmatpush1.msra.mxu0 %v992
    %1101 = vmatprep.subr.mxu0 %v997
    %1102 = vmatpush1.msra.mxu0 %v996
    %1103 = vmatprep.subr.mxu0 %v1001
    %1104 = vmatpush1.msra.mxu0 %v1000
    %1105 = vmatprep.subr.mxu0 0.0
    %1106 = vmatpush1.msra.mxu0 0.0
    %1107 = vmatprep.subr.mxu0 0.0
    %1108 = vmatpush1.msra.mxu0 0.0
    %1109 = vmatprep.subr.mxu0 0.0
    %1110 = vmatpush1.msra.mxu0 0.0
    %1111 = vmatprep.subr.mxu0 0.0
    %1112 = vmatpush1.msra.mxu0 0.0
    %1113 = vmatprep.subr.mxu0 0.0
    %1114 = vmatpush1.msra.mxu0 0.0
    %1115 = vmatprep.subr.mxu0 0.0
    %1116 = vmatpush1.msra.mxu0 0.0
    %1117 = vmatprep.subr.mxu0 0.0
    %1118 = vmatpush1.msra.mxu0 0.0
    %1119 = vmatprep.subr.mxu0 0.0
    %1120 = vmatpush1.msra.mxu0 0.0
    %1121 = vmatprep.subr.mxu0 0.0
    %1122 = vmatpush1.msra.mxu0 0.0
    %1123 = vmatprep.subr.mxu0 0.0
    %1124 = vmatpush1.msra.mxu0 0.0
    %1125 = vmatprep.subr.mxu0 0.0
    %1126 = vmatpush1.msra.mxu0 0.0
    %1127 = vmatprep.subr.mxu0 0.0
    %1128 = vmatpush1.msra.mxu0 0.0
    %1129 = vmatprep.subr.mxu0 0.0
    %1130 = vmatpush1.msra.mxu0 0.0
    %1131 = vmatprep.subr.mxu0 0.0
    %1132 = vmatpush1.msra.mxu0 0.0
    %1133 = vmatprep.subr.mxu0 0.0
    %1134 = vmatpush1.msra.mxu0 0.0
    %1135 = vmatprep.subr.mxu0 0.0
    %1136 = vmatpush1.msra.mxu0 0.0
    %1137 = vmatprep.mubr.f32.mxu0 0.0
    %1138 = vmatmul.mubr.f32.gmra.mrb[0].mxu0 %v929
    %v1139 = vpop.f32.mrb[0].mxu0
    %v1140 = vadd.f32 0.0, %v1139
    %v1141 = vpop.f32.mrb[0].mxu0
    %v1142 = vadd.f32 0.0, %v1141
    %1143 = vdwg.mxu0
    %v1144 = vadd.f32 %v934, %v1069
    %v1145 = vadd.f32 %v935, %v1071
    %v1146 = vadd.f32 %v936, %v1140
    %v1147 = vadd.f32 %v937, %v1142
    %v1148 = vxor.u32 %v1144, 2147483648
    %v1149 = vxor.u32 %v1145, 2147483648
    %v1150 = vxor.u32 %v1146, 2147483648
    %v1151 = vmul.f32 %v1148, 1.442695
    %v1152 = vpow.pop %v1151
    %v1153 = vmul.f32 %v1149, 1.442695
    %v1154 = vpow.pop %v1153
    %v1155 = vmul.f32 %v1150, 1.442695
    %v1156 = vpow.pop %v1155
    %v1157 = vadd.f32 %v1152, 1.0
    %v1158 = vadd.f32 %v1154, 1.0
    %v1159 = vadd.f32 %v1156, 1.0
    %v1160 = vrcp.pop %v1157
    %v1161 = vmul.f32 1.0, %v1160
    %v1162 = vrcp.pop %v1158
    %v1163 = vmul.f32 1.0, %v1162
    %v1164 = vrcp.pop %v1159
    %v1165 = vmul.f32 1.0, %v1164
    %v1166 = vtanh.pop %v1147
    %v1167 = vmul.f32 %v1163, %v927
    %v1168 = vmul.f32 %v1161, %v1166
    %v1169 = vadd.f32 %v1167, %v1168
    %v1170 = vtanh.pop %v1169
    %v1171 = vmul.f32 %v1165, %v1170
    %s1172 = scalar_lea.vmem [#allocation4], 8
    %1173 = vst [vmem:[%s1172] sm:$0xff] %v1171
    %s1174 = smul.u32 2, 4
    %s1175 = smul.addr %s1174, 8
    %s1176 = scalar_lea.vmem [#allocation3], %s1175
    %v1177 = vld [vmem:[%s1176] sm:$0xff]
    %v1178 = vld [vmem:[%s1176 + $0x8] sm:$0xff]
    %v1179 = vld [vmem:[%s1176 + $0x10] sm:$0xff]
    %v1180 = vld [vmem:[%s1176 + $0x18] sm:$0xff]
    %v1181 = vld [vmem:[#allocation8] sm:$0xff]
    %v1182 = vld [vmem:[#allocation8 + $0x8] sm:$0xff]
    %v1183 = vld [vmem:[#allocation8 + $0x10] sm:$0xff]
    %v1184 = vld [vmem:[#allocation8 + $0x18] sm:$0xff]
    %v1185 = vld [vmem:[#allocation8 + $0x20] sm:$0xff]
    %v1186 = vld [vmem:[#allocation8 + $0x28] sm:$0xff]
    %v1187 = vld [vmem:[#allocation8 + $0x30] sm:$0xff]
    %v1188 = vld [vmem:[#allocation8 + $0x38] sm:$0xff]
    %v1189 = vld [vmem:[#allocation8 + $0x40] sm:$0xff]
    %v1190 = vld [vmem:[#allocation8 + $0x48] sm:$0xff]
    %v1191 = vld [vmem:[#allocation8 + $0x50] sm:$0xff]
    %v1192 = vld [vmem:[#allocation8 + $0x58] sm:$0xff]
    %v1193 = vld [vmem:[#allocation8 + $0x60] sm:$0xff]
    %v1194 = vld [vmem:[#allocation8 + $0x68] sm:$0xff]
    %v1195 = vld [vmem:[#allocation8 + $0x70] sm:$0xff]
    %v1196 = vld [vmem:[#allocation8 + $0x78] sm:$0xff]
    %v1197 = vld [vmem:[#allocation8 + $0x80] sm:$0xff]
    %v1198 = vld [vmem:[#allocation8 + $0x88] sm:$0xff]
    %v1199 = vld [vmem:[#allocation8 + $0x90] sm:$0xff]
    %v1200 = vld [vmem:[#allocation8 + $0x98] sm:$0xff]
    %v1201 = vld [vmem:[#allocation8 + $0xa0] sm:$0xff]
    %v1202 = vld [vmem:[#allocation8 + $0xa8] sm:$0xff]
    %v1203 = vld [vmem:[#allocation8 + $0xb0] sm:$0xff]
    %v1204 = vld [vmem:[#allocation8 + $0xb8] sm:$0xff]
    %v1205 = vld [vmem:[#allocation8 + $0xc0] sm:$0xff]
    %v1206 = vld [vmem:[#allocation8 + $0xc8] sm:$0xff]
    %v1207 = vld [vmem:[#allocation8 + $0xd0] sm:$0xff]
    %v1208 = vld [vmem:[#allocation8 + $0xd8] sm:$0xff]
    %v1209 = vld [vmem:[#allocation8 + $0xe0] sm:$0xff]
    %v1210 = vld [vmem:[#allocation8 + $0xe8] sm:$0xff]
    %v1211 = vld [vmem:[#allocation8 + $0xf0] sm:$0xff]
    %v1212 = vld [vmem:[#allocation8 + $0xf8] sm:$0xff]
    %v1213 = vld [vmem:[#allocation8 + $0x100] sm:$0xff]
    %v1214 = vld [vmem:[#allocation8 + $0x108] sm:$0xff]
    %v1215 = vld [vmem:[#allocation8 + $0x110] sm:$0xff]
    %v1216 = vld [vmem:[#allocation8 + $0x118] sm:$0xff]
    %v1217 = vld [vmem:[#allocation8 + $0x120] sm:$0xff]
    %v1218 = vld [vmem:[#allocation8 + $0x128] sm:$0xff]
    %v1219 = vld [vmem:[#allocation8 + $0x130] sm:$0xff]
    %v1220 = vld [vmem:[#allocation8 + $0x138] sm:$0xff]
    %v1221 = vld [vmem:[#allocation8 + $0x140] sm:$0xff]
    %v1222 = vld [vmem:[#allocation8 + $0x148] sm:$0xff]
    %v1223 = vld [vmem:[#allocation8 + $0x150] sm:$0xff]
    %v1224 = vld [vmem:[#allocation8 + $0x158] sm:$0xff]
    %v1225 = vld [vmem:[#allocation8 + $0x160] sm:$0xff]
    %v1226 = vld [vmem:[#allocation8 + $0x168] sm:$0xff]
    %v1227 = vld [vmem:[#allocation8 + $0x170] sm:$0xff]
    %v1228 = vld [vmem:[#allocation8 + $0x178] sm:$0xff]
    %v1229 = vld [vmem:[#allocation8 + $0x180] sm:$0xff]
    %v1230 = vld [vmem:[#allocation8 + $0x188] sm:$0xff]
    %v1231 = vld [vmem:[#allocation8 + $0x190] sm:$0xff]
    %v1232 = vld [vmem:[#allocation8 + $0x198] sm:$0xff]
    %v1233 = vld [vmem:[#allocation8 + $0x1a0] sm:$0xff]
    %v1234 = vld [vmem:[#allocation8 + $0x1a8] sm:$0xff]
    %v1235 = vld [vmem:[#allocation8 + $0x1b0] sm:$0xff]
    %v1236 = vld [vmem:[#allocation8 + $0x1b8] sm:$0xff]
    %v1237 = vld [vmem:[#allocation8 + $0x1c0] sm:$0xff]
    %v1238 = vld [vmem:[#allocation8 + $0x1c8] sm:$0xff]
    %v1239 = vld [vmem:[#allocation8 + $0x1d0] sm:$0xff]
    %v1240 = vld [vmem:[#allocation8 + $0x1d8] sm:$0xff]
    %v1241 = vld [vmem:[#allocation8 + $0x1e0] sm:$0xff]
    %v1242 = vld [vmem:[#allocation8 + $0x1e8] sm:$0xff]
    %v1243 = vld [vmem:[#allocation8 + $0x1f0] sm:$0xff]
    %v1244 = vld [vmem:[#allocation8 + $0x1f8] sm:$0xff]
    %1245 = vmatprep.subr.mxu0 %v1182
    %1246 = vmatpush1.msra.mxu0 %v1181
    %1247 = vmatprep.subr.mxu0 %v1186
    %1248 = vmatpush1.msra.mxu0 %v1185
    %1249 = vmatprep.subr.mxu0 %v1190
    %1250 = vmatpush1.msra.mxu0 %v1189
    %1251 = vmatprep.subr.mxu0 %v1194
    %1252 = vmatpush1.msra.mxu0 %v1193
    %1253 = vmatprep.subr.mxu0 %v1198
    %1254 = vmatpush1.msra.mxu0 %v1197
    %1255 = vmatprep.subr.mxu0 %v1202
    %1256 = vmatpush1.msra.mxu0 %v1201
    %1257 = vmatprep.subr.mxu0 %v1206
    %1258 = vmatpush1.msra.mxu0 %v1205
    %1259 = vmatprep.subr.mxu0 %v1210
    %1260 = vmatpush1.msra.mxu0 %v1209
    %1261 = vmatprep.subr.mxu0 %v1214
    %1262 = vmatpush1.msra.mxu0 %v1213
    %1263 = vmatprep.subr.mxu0 %v1218
    %1264 = vmatpush1.msra.mxu0 %v1217
    %1265 = vmatprep.subr.mxu0 %v1222
    %1266 = vmatpush1.msra.mxu0 %v1221
    %1267 = vmatprep.subr.mxu0 %v1226
    %1268 = vmatpush1.msra.mxu0 %v1225
    %1269 = vmatprep.subr.mxu0 %v1230
    %1270 = vmatpush1.msra.mxu0 %v1229
    %1271 = vmatprep.subr.mxu0 %v1234
    %1272 = vmatpush1.msra.mxu0 %v1233
    %1273 = vmatprep.subr.mxu0 %v1238
    %1274 = vmatpush1.msra.mxu0 %v1237
    %1275 = vmatprep.subr.mxu0 %v1242
    %1276 = vmatpush1.msra.mxu0 %v1241
    %1277 = vmatprep.subr.mxu0 0.0
    %1278 = vmatpush1.msra.mxu0 0.0
    %1279 = vmatprep.subr.mxu0 0.0
    %1280 = vmatpush1.msra.mxu0 0.0
    %1281 = vmatprep.subr.mxu0 0.0
    %1282 = vmatpush1.msra.mxu0 0.0
    %1283 = vmatprep.subr.mxu0 0.0
    %1284 = vmatpush1.msra.mxu0 0.0
    %1285 = vmatprep.subr.mxu0 0.0
    %1286 = vmatpush1.msra.mxu0 0.0
    %1287 = vmatprep.subr.mxu0 0.0
    %1288 = vmatpush1.msra.mxu0 0.0
    %1289 = vmatprep.subr.mxu0 0.0
    %1290 = vmatpush1.msra.mxu0 0.0
    %1291 = vmatprep.subr.mxu0 0.0
    %1292 = vmatpush1.msra.mxu0 0.0
    %1293 = vmatprep.subr.mxu0 0.0
    %1294 = vmatpush1.msra.mxu0 0.0
    %1295 = vmatprep.subr.mxu0 0.0
    %1296 = vmatpush1.msra.mxu0 0.0
    %1297 = vmatprep.subr.mxu0 0.0
    %1298 = vmatpush1.msra.mxu0 0.0
    %1299 = vmatprep.subr.mxu0 0.0
    %1300 = vmatpush1.msra.mxu0 0.0
    %1301 = vmatprep.subr.mxu0 0.0
    %1302 = vmatpush1.msra.mxu0 0.0
    %1303 = vmatprep.subr.mxu0 0.0
    %1304 = vmatpush1.msra.mxu0 0.0
    %1305 = vmatprep.subr.mxu0 0.0
    %1306 = vmatpush1.msra.mxu0 0.0
    %1307 = vmatprep.subr.mxu0 0.0
    %1308 = vmatpush1.msra.mxu0 0.0
    %1309 = vmatprep.mubr.f32.mxu0 0.0
    %1310 = vmatmul.mubr.f32.gmra.mrb[0].mxu0 %v1171
    %v1311 = vpop.f32.mrb[0].mxu0
    %v1312 = vadd.f32 0.0, %v1311
    %v1313 = vpop.f32.mrb[0].mxu0
    %v1314 = vadd.f32 0.0, %v1313
    %1315 = vdwg.mxu0
    %1316 = vmatprep.subr.mxu0 %v1184
    %1317 = vmatpush1.msra.mxu0 %v1183
    %1318 = vmatprep.subr.mxu0 %v1188
    %1319 = vmatpush1.msra.mxu0 %v1187
    %1320 = vmatprep.subr.mxu0 %v1192
    %1321 = vmatpush1.msra.mxu0 %v1191
    %1322 = vmatprep.subr.mxu0 %v1196
    %1323 = vmatpush1.msra.mxu0 %v1195
    %1324 = vmatprep.subr.mxu0 %v1200
    %1325 = vmatpush1.msra.mxu0 %v1199
    %1326 = vmatprep.subr.mxu0 %v1204
    %1327 = vmatpush1.msra.mxu0 %v1203
    %1328 = vmatprep.subr.mxu0 %v1208
    %1329 = vmatpush1.msra.mxu0 %v1207
    %1330 = vmatprep.subr.mxu0 %v1212
    %1331 = vmatpush1.msra.mxu0 %v1211
    %1332 = vmatprep.subr.mxu0 %v1216
    %1333 = vmatpush1.msra.mxu0 %v1215
    %1334 = vmatprep.subr.mxu0 %v1220
    %1335 = vmatpush1.msra.mxu0 %v1219
    %1336 = vmatprep.subr.mxu0 %v1224
    %1337 = vmatpush1.msra.mxu0 %v1223
    %1338 = vmatprep.subr.mxu0 %v1228
    %1339 = vmatpush1.msra.mxu0 %v1227
    %1340 = vmatprep.subr.mxu0 %v1232
    %1341 = vmatpush1.msra.mxu0 %v1231
    %1342 = vmatprep.subr.mxu0 %v1236
    %1343 = vmatpush1.msra.mxu0 %v1235
    %1344 = vmatprep.subr.mxu0 %v1240
    %1345 = vmatpush1.msra.mxu0 %v1239
    %1346 = vmatprep.subr.mxu0 %v1244
    %1347 = vmatpush1.msra.mxu0 %v1243
    %1348 = vmatprep.subr.mxu0 0.0
    %1349 = vmatpush1.msra.mxu0 0.0
    %1350 = vmatprep.subr.mxu0 0.0
    %1351 = vmatpush1.msra.mxu0 0.0
    %1352 = vmatprep.subr.mxu0 0.0
    %1353 = vmatpush1.msra.mxu0 0.0
    %1354 = vmatprep.subr.mxu0 0.0
    %1355 = vmatpush1.msra.mxu0 0.0
    %1356 = vmatprep.subr.mxu0 0.0
    %1357 = vmatpush1.msra.mxu0 0.0
    %1358 = vmatprep.subr.mxu0 0.0
    %1359 = vmatpush1.msra.mxu0 0.0
    %1360 = vmatprep.subr.mxu0 0.0
    %1361 = vmatpush1.msra.mxu0 0.0
    %1362 = vmatprep.subr.mxu0 0.0
    %1363 = vmatpush1.msra.mxu0 0.0
    %1364 = vmatprep.subr.mxu0 0.0
    %1365 = vmatpush1.msra.mxu0 0.0
    %1366 = vmatprep.subr.mxu0 0.0
    %1367 = vmatpush1.msra.mxu0 0.0
    %1368 = vmatprep.subr.mxu0 0.0
    %1369 = vmatpush1.msra.mxu0 0.0
    %1370 = vmatprep.subr.mxu0 0.0
    %1371 = vmatpush1.msra.mxu0 0.0
    %1372 = vmatprep.subr.mxu0 0.0
    %1373 = vmatpush1.msra.mxu0 0.0
    %1374 = vmatprep.subr.mxu0 0.0
    %1375 = vmatpush1.msra.mxu0 0.0
    %1376 = vmatprep.subr.mxu0 0.0
    %1377 = vmatpush1.msra.mxu0 0.0
    %1378 = vmatprep.subr.mxu0 0.0
    %1379 = vmatpush1.msra.mxu0 0.0
    %1380 = vmatprep.mubr.f32.mxu0 0.0
    %1381 = vmatmul.mubr.f32.gmra.mrb[0].mxu0 %v1171
    %v1382 = vpop.f32.mrb[0].mxu0
    %v1383 = vadd.f32 0.0, %v1382
    %v1384 = vpop.f32.mrb[0].mxu0
    %v1385 = vadd.f32 0.0, %v1384
    %1386 = vdwg.mxu0
    %v1387 = vadd.f32 %v1177, %v1312
    %v1388 = vadd.f32 %v1178, %v1314
    %v1389 = vadd.f32 %v1179, %v1383
    %v1390 = vadd.f32 %v1180, %v1385
    %v1391 = vxor.u32 %v1387, 2147483648
    %v1392 = vxor.u32 %v1388, 2147483648
    %v1393 = vxor.u32 %v1389, 2147483648
    %v1394 = vmul.f32 %v1391, 1.442695
    %v1395 = vpow.pop %v1394
    %v1396 = vmul.f32 %v1392, 1.442695
    %v1397 = vpow.pop %v1396
    %v1398 = vmul.f32 %v1393, 1.442695
    %v1399 = vpow.pop %v1398
    %v1400 = vadd.f32 %v1395, 1.0
    %v1401 = vadd.f32 %v1397, 1.0
    %v1402 = vadd.f32 %v1399, 1.0
    %v1403 = vrcp.pop %v1400
    %v1404 = vmul.f32 1.0, %v1403
    %v1405 = vrcp.pop %v1401
    %v1406 = vmul.f32 1.0, %v1405
    %v1407 = vrcp.pop %v1402
    %v1408 = vmul.f32 1.0, %v1407
    %v1409 = vtanh.pop %v1390
    %v1410 = vmul.f32 %v1406, %v1169
    %v1411 = vmul.f32 %v1404, %v1409
    %v1412 = vadd.f32 %v1410, %v1411
    %v1413 = vtanh.pop %v1412
    %v1414 = vmul.f32 %v1408, %v1413
    %s1415 = scalar_lea.vmem [#allocation4], 16
    %1416 = vst [vmem:[%s1415] sm:$0xff] %v1414
    %s1417 = smul.u32 3, 4
    %s1418 = smul.addr %s1417, 8
    %s1419 = scalar_lea.vmem [#allocation3], %s1418
    %v1420 = vld [vmem:[%s1419] sm:$0xff]
    %v1421 = vld [vmem:[%s1419 + $0x8] sm:$0xff]
    %v1422 = vld [vmem:[%s1419 + $0x10] sm:$0xff]
    %v1423 = vld [vmem:[%s1419 + $0x18] sm:$0xff]
    %v1424 = vld [vmem:[#allocation8] sm:$0xff]
    %v1425 = vld [vmem:[#allocation8 + $0x8] sm:$0xff]
    %v1426 = vld [vmem:[#allocation8 + $0x10] sm:$0xff]
    %v1427 = vld [vmem:[#allocation8 + $0x18] sm:$0xff]
    %v1428 = vld [vmem:[#allocation8 + $0x20] sm:$0xff]
    %v1429 = vld [vmem:[#allocation8 + $0x28] sm:$0xff]
    %v1430 = vld [vmem:[#allocation8 + $0x30] sm:$0xff]
    %v1431 = vld [vmem:[#allocation8 + $0x38] sm:$0xff]
    %v1432 = vld [vmem:[#allocation8 + $0x40] sm:$0xff]
    %v1433 = vld [vmem:[#allocation8 + $0x48] sm:$0xff]
    %v1434 = vld [vmem:[#allocation8 + $0x50] sm:$0xff]
    %v1435 = vld [vmem:[#allocation8 + $0x58] sm:$0xff]
    %v1436 = vld [vmem:[#allocation8 + $0x60] sm:$0xff]
    %v1437 = vld [vmem:[#allocation8 + $0x68] sm:$0xff]
    %v1438 = vld [vmem:[#allocation8 + $0x70] sm:$0xff]
    %v1439 = vld [vmem:[#allocation8 + $0x78] sm:$0xff]
    %v1440 = vld [vmem:[#allocation8 + $0x80] sm:$0xff]
    %v1441 = vld [vmem:[#allocation8 + $0x88] sm:$0xff]
    %v1442 = vld [vmem:[#allocation8 + $0x90] sm:$0xff]
    %v1443 = vld [vmem:[#allocation8 + $0x98] sm:$0xff]
    %v1444 = vld [vmem:[#allocation8 + $0xa0] sm:$0xff]
    %v1445 = vld [vmem:[#allocation8 + $0xa8] sm:$0xff]
    %v1446 = vld [vmem:[#allocation8 + $0xb0] sm:$0xff]
    %v1447 = vld [vmem:[#allocation8 + $0xb8] sm:$0xff]
    %v1448 = vld [vmem:[#allocation8 + $0xc0] sm:$0xff]
    %v1449 = vld [vmem:[#allocation8 + $0xc8] sm:$0xff]
    %v1450 = vld [vmem:[#allocation8 + $0xd0] sm:$0xff]
    %v1451 = vld [vmem:[#allocation8 + $0xd8] sm:$0xff]
    %v1452 = vld [vmem:[#allocation8 + $0xe0] sm:$0xff]
    %v1453 = vld [vmem:[#allocation8 + $0xe8] sm:$0xff]
    %v1454 = vld [vmem:[#allocation8 + $0xf0] sm:$0xff]
    %v1455 = vld [vmem:[#allocation8 + $0xf8] sm:$0xff]
    %v1456 = vld [vmem:[#allocation8 + $0x100] sm:$0xff]
    %v1457 = vld [vmem:[#allocation8 + $0x108] sm:$0xff]
    %v1458 = vld [vmem:[#allocation8 + $0x110] sm:$0xff]
    %v1459 = vld [vmem:[#allocation8 + $0x118] sm:$0xff]
    %v1460 = vld [vmem:[#allocation8 + $0x120] sm:$0xff]
    %v1461 = vld [vmem:[#allocation8 + $0x128] sm:$0xff]
    %v1462 = vld [vmem:[#allocation8 + $0x130] sm:$0xff]
    %v1463 = vld [vmem:[#allocation8 + $0x138] sm:$0xff]
    %v1464 = vld [vmem:[#allocation8 + $0x140] sm:$0xff]
    %v1465 = vld [vmem:[#allocation8 + $0x148] sm:$0xff]
    %v1466 = vld [vmem:[#allocation8 + $0x150] sm:$0xff]
    %v1467 = vld [vmem:[#allocation8 + $0x158] sm:$0xff]
    %v1468 = vld [vmem:[#allocation8 + $0x160] sm:$0xff]
    %v1469 = vld [vmem:[#allocation8 + $0x168] sm:$0xff]
    %v1470 = vld [vmem:[#allocation8 + $0x170] sm:$0xff]
    %v1471 = vld [vmem:[#allocation8 + $0x178] sm:$0xff]
    %v1472 = vld [vmem:[#allocation8 + $0x180] sm:$0xff]
    %v1473 = vld [vmem:[#allocation8 + $0x188] sm:$0xff]
    %v1474 = vld [vmem:[#allocation8 + $0x190] sm:$0xff]
    %v1475 = vld [vmem:[#allocation8 + $0x198] sm:$0xff]
    %v1476 = vld [vmem:[#allocation8 + $0x1a0] sm:$0xff]
    %v1477 = vld [vmem:[#allocation8 + $0x1a8] sm:$0xff]
    %v1478 = vld [vmem:[#allocation8 + $0x1b0] sm:$0xff]
    %v1479 = vld [vmem:[#allocation8 + $0x1b8] sm:$0xff]
    %v1480 = vld [vmem:[#allocation8 + $0x1c0] sm:$0xff]
    %v1481 = vld [vmem:[#allocation8 + $0x1c8] sm:$0xff]
    %v1482 = vld [vmem:[#allocation8 + $0x1d0] sm:$0xff]
    %v1483 = vld [vmem:[#allocation8 + $0x1d8] sm:$0xff]
    %v1484 = vld [vmem:[#allocation8 + $0x1e0] sm:$0xff]
    %v1485 = vld [vmem:[#allocation8 + $0x1e8] sm:$0xff]
    %v1486 = vld [vmem:[#allocation8 + $0x1f0] sm:$0xff]
    %v1487 = vld [vmem:[#allocation8 + $0x1f8] sm:$0xff]
    %1488 = vmatprep.subr.mxu0 %v1425
    %1489 = vmatpush1.msra.mxu0 %v1424
    %1490 = vmatprep.subr.mxu0 %v1429
    %1491 = vmatpush1.msra.mxu0 %v1428
    %1492 = vmatprep.subr.mxu0 %v1433
    %1493 = vmatpush1.msra.mxu0 %v1432
    %1494 = vmatprep.subr.mxu0 %v1437
    %1495 = vmatpush1.msra.mxu0 %v1436
    %1496 = vmatprep.subr.mxu0 %v1441
    %1497 = vmatpush1.msra.mxu0 %v1440
    %1498 = vmatprep.subr.mxu0 %v1445
    %1499 = vmatpush1.msra.mxu0 %v1444
    %1500 = vmatprep.subr.mxu0 %v1449
    %1501 = vmatpush1.msra.mxu0 %v1448
    %1502 = vmatprep.subr.mxu0 %v1453
    %1503 = vmatpush1.msra.mxu0 %v1452
    %1504 = vmatprep.subr.mxu0 %v1457
    %1505 = vmatpush1.msra.mxu0 %v1456
    %1506 = vmatprep.subr.mxu0 %v1461
    %1507 = vmatpush1.msra.mxu0 %v1460
    %1508 = vmatprep.subr.mxu0 %v1465
    %1509 = vmatpush1.msra.mxu0 %v1464
    %1510 = vmatprep.subr.mxu0 %v1469
    %1511 = vmatpush1.msra.mxu0 %v1468
    %1512 = vmatprep.subr.mxu0 %v1473
    %1513 = vmatpush1.msra.mxu0 %v1472
    %1514 = vmatprep.subr.mxu0 %v1477
    %1515 = vmatpush1.msra.mxu0 %v1476
    %1516 = vmatprep.subr.mxu0 %v1481
    %1517 = vmatpush1.msra.mxu0 %v1480
    %1518 = vmatprep.subr.mxu0 %v1485
    %1519 = vmatpush1.msra.mxu0 %v1484
    %1520 = vmatprep.subr.mxu0 0.0
    %1521 = vmatpush1.msra.mxu0 0.0
    %1522 = vmatprep.subr.mxu0 0.0
    %1523 = vmatpush1.msra.mxu0 0.0
    %1524 = vmatprep.subr.mxu0 0.0
    %1525 = vmatpush1.msra.mxu0 0.0
    %1526 = vmatprep.subr.mxu0 0.0
    %1527 = vmatpush1.msra.mxu0 0.0
    %1528 = vmatprep.subr.mxu0 0.0
    %1529 = vmatpush1.msra.mxu0 0.0
    %1530 = vmatprep.subr.mxu0 0.0
    %1531 = vmatpush1.msra.mxu0 0.0
    %1532 = vmatprep.subr.mxu0 0.0
    %1533 = vmatpush1.msra.mxu0 0.0
    %1534 = vmatprep.subr.mxu0 0.0
    %1535 = vmatpush1.msra.mxu0 0.0
    %1536 = vmatprep.subr.mxu0 0.0
    %1537 = vmatpush1.msra.mxu0 0.0
    %1538 = vmatprep.subr.mxu0 0.0
    %1539 = vmatpush1.msra.mxu0 0.0
    %1540 = vmatprep.subr.mxu0 0.0
    %1541 = vmatpush1.msra.mxu0 0.0
    %1542 = vmatprep.subr.mxu0 0.0
    %1543 = vmatpush1.msra.mxu0 0.0
    %1544 = vmatprep.subr.mxu0 0.0
    %1545 = vmatpush1.msra.mxu0 0.0
    %1546 = vmatprep.subr.mxu0 0.0
    %1547 = vmatpush1.msra.mxu0 0.0
    %1548 = vmatprep.subr.mxu0 0.0
    %1549 = vmatpush1.msra.mxu0 0.0
    %1550 = vmatprep.subr.mxu0 0.0
    %1551 = vmatpush1.msra.mxu0 0.0
    %1552 = vmatprep.mubr.f32.mxu0 0.0
    %1553 = vmatmul.mubr.f32.gmra.mrb[0].mxu0 %v1414
    %v1554 = vpop.f32.mrb[0].mxu0
    %v1555 = vadd.f32 0.0, %v1554
    %v1556 = vpop.f32.mrb[0].mxu0
    %v1557 = vadd.f32 0.0, %v1556
    %1558 = vdwg.mxu0
    %1559 = vmatprep.subr.mxu0 %v1427
    %1560 = vmatpush1.msra.mxu0 %v1426
    %1561 = vmatprep.subr.mxu0 %v1431
    %1562 = vmatpush1.msra.mxu0 %v1430
    %1563 = vmatprep.subr.mxu0 %v1435
    %1564 = vmatpush1.msra.mxu0 %v1434
    %1565 = vmatprep.subr.mxu0 %v1439
    %1566 = vmatpush1.msra.mxu0 %v1438
    %1567 = vmatprep.subr.mxu0 %v1443
    %1568 = vmatpush1.msra.mxu0 %v1442
    %1569 = vmatprep.subr.mxu0 %v1447
    %1570 = vmatpush1.msra.mxu0 %v1446
    %1571 = vmatprep.subr.mxu0 %v1451
    %1572 = vmatpush1.msra.mxu0 %v1450
    %1573 = vmatprep.subr.mxu0 %v1455
    %1574 = vmatpush1.msra.mxu0 %v1454
    %1575 = vmatprep.subr.mxu0 %v1459
    %1576 = vmatpush1.msra.mxu0 %v1458
    %1577 = vmatprep.subr.mxu0 %v1463
    %1578 = vmatpush1.msra.mxu0 %v1462
    %1579 = vmatprep.subr.mxu0 %v1467
    %1580 = vmatpush1.msra.mxu0 %v1466
    %1581 = vmatprep.subr.mxu0 %v1471
    %1582 = vmatpush1.msra.mxu0 %v1470
    %1583 = vmatprep.subr.mxu0 %v1475
    %1584 = vmatpush1.msra.mxu0 %v1474
    %1585 = vmatprep.subr.mxu0 %v1479
    %1586 = vmatpush1.msra.mxu0 %v1478
    %1587 = vmatprep.subr.mxu0 %v1483
    %1588 = vmatpush1.msra.mxu0 %v1482
    %1589 = vmatprep.subr.mxu0 %v1487
    %1590 = vmatpush1.msra.mxu0 %v1486
    %1591 = vmatprep.subr.mxu0 0.0
    %1592 = vmatpush1.msra.mxu0 0.0
    %1593 = vmatprep.subr.mxu0 0.0
    %1594 = vmatpush1.msra.mxu0 0.0
    %1595 = vmatprep.subr.mxu0 0.0
    %1596 = vmatpush1.msra.mxu0 0.0
    %1597 = vmatprep.subr.mxu0 0.0
    %1598 = vmatpush1.msra.mxu0 0.0
    %1599 = vmatprep.subr.mxu0 0.0
    %1600 = vmatpush1.msra.mxu0 0.0
    %1601 = vmatprep.subr.mxu0 0.0
    %1602 = vmatpush1.msra.mxu0 0.0
    %1603 = vmatprep.subr.mxu0 0.0
    %1604 = vmatpush1.msra.mxu0 0.0
    %1605 = vmatprep.subr.mxu0 0.0
    %1606 = vmatpush1.msra.mxu0 0.0
    %1607 = vmatprep.subr.mxu0 0.0
    %1608 = vmatpush1.msra.mxu0 0.0
    %1609 = vmatprep.subr.mxu0 0.0
    %1610 = vmatpush1.msra.mxu0 0.0
    %1611 = vmatprep.subr.mxu0 0.0
    %1612 = vmatpush1.msra.mxu0 0.0
    %1613 = vmatprep.subr.mxu0 0.0
    %1614 = vmatpush1.msra.mxu0 0.0
    %1615 = vmatprep.subr.mxu0 0.0
    %1616 = vmatpush1.msra.mxu0 0.0
    %1617 = vmatprep.subr.mxu0 0.0
    %1618 = vmatpush1.msra.mxu0 0.0
    %1619 = vmatprep.subr.mxu0 0.0
    %1620 = vmatpush1.msra.mxu0 0.0
    %1621 = vmatprep.subr.mxu0 0.0
    %1622 = vmatpush1.msra.mxu0 0.0
    %1623 = vmatprep.mubr.f32.mxu0 0.0
    %1624 = vmatmul.mubr.f32.gmra.mrb[0].mxu0 %v1414
    %v1625 = vpop.f32.mrb[0].mxu0
    %v1626 = vadd.f32 0.0, %v1625
    %v1627 = vpop.f32.mrb[0].mxu0
    %v1628 = vadd.f32 0.0, %v1627
    %1629 = vdwg.mxu0
    %v1630 = vadd.f32 %v1420, %v1555
    %v1631 = vadd.f32 %v1421, %v1557
    %v1632 = vadd.f32 %v1422, %v1626
    %v1633 = vadd.f32 %v1423, %v1628
    %v1634 = vxor.u32 %v1630, 2147483648
    %v1635 = vxor.u32 %v1631, 2147483648
    %v1636 = vxor.u32 %v1632, 2147483648
    %v1637 = vmul.f32 %v1634, 1.442695
    %v1638 = vpow.pop %v1637
    %v1639 = vmul.f32 %v1635, 1.442695
    %v1640 = vpow.pop %v1639
    %v1641 = vmul.f32 %v1636, 1.442695
    %v1642 = vpow.pop %v1641
    %v1643 = vadd.f32 %v1638, 1.0
    %v1644 = vadd.f32 %v1640, 1.0
    %v1645 = vadd.f32 %v1642, 1.0
    %v1646 = vrcp.pop %v1643
    %v1647 = vmul.f32 1.0, %v1646
    %v1648 = vrcp.pop %v1644
    %v1649 = vmul.f32 1.0, %v1648
    %v1650 = vrcp.pop %v1645
    %v1651 = vmul.f32 1.0, %v1650
    %v1652 = vtanh.pop %v1633
    %v1653 = vmul.f32 %v1649, %v1412
    %v1654 = vmul.f32 %v1647, %v1652
    %v1655 = vadd.f32 %v1653, %v1654
    %v1656 = vtanh.pop %v1655
    %v1657 = vmul.f32 %v1651, %v1656
    %s1658 = scalar_lea.vmem [#allocation4], 24
    %1659 = vst [vmem:[%s1658] sm:$0xff] %v1657
    %s1660 = smul.u32 4, 4
    %s1661 = smul.addr %s1660, 8
    %s1662 = scalar_lea.vmem [#allocation3], %s1661
    %v1663 = vld [vmem:[%s1662] sm:$0xff]
    %v1664 = vld [vmem:[%s1662 + $0x8] sm:$0xff]
    %v1665 = vld [vmem:[%s1662 + $0x10] sm:$0xff]
    %v1666 = vld [vmem:[%s1662 + $0x18] sm:$0xff]
    %v1667 = vld [vmem:[#allocation8] sm:$0xff]
    %v1668 = vld [vmem:[#allocation8 + $0x8] sm:$0xff]
    %v1669 = vld [vmem:[#allocation8 + $0x10] sm:$0xff]
    %v1670 = vld [vmem:[#allocation8 + $0x18] sm:$0xff]
    %v1671 = vld [vmem:[#allocation8 + $0x20] sm:$0xff]
    %v1672 = vld [vmem:[#allocation8 + $0x28] sm:$0xff]
    %v1673 = vld [vmem:[#allocation8 + $0x30] sm:$0xff]
    %v1674 = vld [vmem:[#allocation8 + $0x38] sm:$0xff]
    %v1675 = vld [vmem:[#allocation8 + $0x40] sm:$0xff]
    %v1676 = vld [vmem:[#allocation8 + $0x48] sm:$0xff]
    %v1677 = vld [vmem:[#allocation8 + $0x50] sm:$0xff]
    %v1678 = vld [vmem:[#allocation8 + $0x58] sm:$0xff]
    %v1679 = vld [vmem:[#allocation8 + $0x60] sm:$0xff]
    %v1680 = vld [vmem:[#allocation8 + $0x68] sm:$0xff]
    %v1681 = vld [vmem:[#allocation8 + $0x70] sm:$0xff]
    %v1682 = vld [vmem:[#allocation8 + $0x78] sm:$0xff]
    %v1683 = vld [vmem:[#allocation8 + $0x80] sm:$0xff]
    %v1684 = vld [vmem:[#allocation8 + $0x88] sm:$0xff]
    %v1685 = vld [vmem:[#allocation8 + $0x90] sm:$0xff]
    %v1686 = vld [vmem:[#allocation8 + $0x98] sm:$0xff]
    %v1687 = vld [vmem:[#allocation8 + $0xa0] sm:$0xff]
    %v1688 = vld [vmem:[#allocation8 + $0xa8] sm:$0xff]
    %v1689 = vld [vmem:[#allocation8 + $0xb0] sm:$0xff]
    %v1690 = vld [vmem:[#allocation8 + $0xb8] sm:$0xff]
    %v1691 = vld [vmem:[#allocation8 + $0xc0] sm:$0xff]
    %v1692 = vld [vmem:[#allocation8 + $0xc8] sm:$0xff]
    %v1693 = vld [vmem:[#allocation8 + $0xd0] sm:$0xff]
    %v1694 = vld [vmem:[#allocation8 + $0xd8] sm:$0xff]
    %v1695 = vld [vmem:[#allocation8 + $0xe0] sm:$0xff]
    %v1696 = vld [vmem:[#allocation8 + $0xe8] sm:$0xff]
    %v1697 = vld [vmem:[#allocation8 + $0xf0] sm:$0xff]
    %v1698 = vld [vmem:[#allocation8 + $0xf8] sm:$0xff]
    %v1699 = vld [vmem:[#allocation8 + $0x100] sm:$0xff]
    %v1700 = vld [vmem:[#allocation8 + $0x108] sm:$0xff]
    %v1701 = vld [vmem:[#allocation8 + $0x110] sm:$0xff]
    %v1702 = vld [vmem:[#allocation8 + $0x118] sm:$0xff]
    %v1703 = vld [vmem:[#allocation8 + $0x120] sm:$0xff]
    %v1704 = vld [vmem:[#allocation8 + $0x128] sm:$0xff]
    %v1705 = vld [vmem:[#allocation8 + $0x130] sm:$0xff]
    %v1706 = vld [vmem:[#allocation8 + $0x138] sm:$0xff]
    %v1707 = vld [vmem:[#allocation8 + $0x140] sm:$0xff]
    %v1708 = vld [vmem:[#allocation8 + $0x148] sm:$0xff]
    %v1709 = vld [vmem:[#allocation8 + $0x150] sm:$0xff]
    %v1710 = vld [vmem:[#allocation8 + $0x158] sm:$0xff]
    %v1711 = vld [vmem:[#allocation8 + $0x160] sm:$0xff]
    %v1712 = vld [vmem:[#allocation8 + $0x168] sm:$0xff]
    %v1713 = vld [vmem:[#allocation8 + $0x170] sm:$0xff]
    %v1714 = vld [vmem:[#allocation8 + $0x178] sm:$0xff]
    %v1715 = vld [vmem:[#allocation8 + $0x180] sm:$0xff]
    %v1716 = vld [vmem:[#allocation8 + $0x188] sm:$0xff]
    %v1717 = vld [vmem:[#allocation8 + $0x190] sm:$0xff]
    %v1718 = vld [vmem:[#allocation8 + $0x198] sm:$0xff]
    %v1719 = vld [vmem:[#allocation8 + $0x1a0] sm:$0xff]
    %v1720 = vld [vmem:[#allocation8 + $0x1a8] sm:$0xff]
    %v1721 = vld [vmem:[#allocation8 + $0x1b0] sm:$0xff]
    %v1722 = vld [vmem:[#allocation8 + $0x1b8] sm:$0xff]
    %v1723 = vld [vmem:[#allocation8 + $0x1c0] sm:$0xff]
    %v1724 = vld [vmem:[#allocation8 + $0x1c8] sm:$0xff]
    %v1725 = vld [vmem:[#allocation8 + $0x1d0] sm:$0xff]
    %v1726 = vld [vmem:[#allocation8 + $0x1d8] sm:$0xff]
    %v1727 = vld [vmem:[#allocation8 + $0x1e0] sm:$0xff]
    %v1728 = vld [vmem:[#allocation8 + $0x1e8] sm:$0xff]
    %v1729 = vld [vmem:[#allocation8 + $0x1f0] sm:$0xff]
    %v1730 = vld [vmem:[#allocation8 + $0x1f8] sm:$0xff]
    %1731 = vmatprep.subr.mxu0 %v1668
    %1732 = vmatpush1.msra.mxu0 %v1667
    %1733 = vmatprep.subr.mxu0 %v1672
    %1734 = vmatpush1.msra.mxu0 %v1671
    %1735 = vmatprep.subr.mxu0 %v1676
    %1736 = vmatpush1.msra.mxu0 %v1675
    %1737 = vmatprep.subr.mxu0 %v1680
    %1738 = vmatpush1.msra.mxu0 %v1679
    %1739 = vmatprep.subr.mxu0 %v1684
    %1740 = vmatpush1.msra.mxu0 %v1683
    %1741 = vmatprep.subr.mxu0 %v1688
    %1742 = vmatpush1.msra.mxu0 %v1687
    %1743 = vmatprep.subr.mxu0 %v1692
    %1744 = vmatpush1.msra.mxu0 %v1691
    %1745 = vmatprep.subr.mxu0 %v1696
    %1746 = vmatpush1.msra.mxu0 %v1695
    %1747 = vmatprep.subr.mxu0 %v1700
    %1748 = vmatpush1.msra.mxu0 %v1699
    %1749 = vmatprep.subr.mxu0 %v1704
    %1750 = vmatpush1.msra.mxu0 %v1703
    %1751 = vmatprep.subr.mxu0 %v1708
    %1752 = vmatpush1.msra.mxu0 %v1707
    %1753 = vmatprep.subr.mxu0 %v1712
    %1754 = vmatpush1.msra.mxu0 %v1711
    %1755 = vmatprep.subr.mxu0 %v1716
    %1756 = vmatpush1.msra.mxu0 %v1715
    %1757 = vmatprep.subr.mxu0 %v1720
    %1758 = vmatpush1.msra.mxu0 %v1719
    %1759 = vmatprep.subr.mxu0 %v1724
    %1760 = vmatpush1.msra.mxu0 %v1723
    %1761 = vmatprep.subr.mxu0 %v1728
    %1762 = vmatpush1.msra.mxu0 %v1727
    %1763 = vmatprep.subr.mxu0 0.0
    %1764 = vmatpush1.msra.mxu0 0.0
    %1765 = vmatprep.subr.mxu0 0.0
    %1766 = vmatpush1.msra.mxu0 0.0
    %1767 = vmatprep.subr.mxu0 0.0
    %1768 = vmatpush1.msra.mxu0 0.0
    %1769 = vmatprep.subr.mxu0 0.0
    %1770 = vmatpush1.msra.mxu0 0.0
    %1771 = vmatprep.subr.mxu0 0.0
    %1772 = vmatpush1.msra.mxu0 0.0
    %1773 = vmatprep.subr.mxu0 0.0
    %1774 = vmatpush1.msra.mxu0 0.0
    %1775 = vmatprep.subr.mxu0 0.0
    %1776 = vmatpush1.msra.mxu0 0.0
    %1777 = vmatprep.subr.mxu0 0.0
    %1778 = vmatpush1.msra.mxu0 0.0
    %1779 = vmatprep.subr.mxu0 0.0
    %1780 = vmatpush1.msra.mxu0 0.0
    %1781 = vmatprep.subr.mxu0 0.0
    %1782 = vmatpush1.msra.mxu0 0.0
    %1783 = vmatprep.subr.mxu0 0.0
    %1784 = vmatpush1.msra.mxu0 0.0
    %1785 = vmatprep.subr.mxu0 0.0
    %1786 = vmatpush1.msra.mxu0 0.0
    %1787 = vmatprep.subr.mxu0 0.0
    %1788 = vmatpush1.msra.mxu0 0.0
    %1789 = vmatprep.subr.mxu0 0.0
    %1790 = vmatpush1.msra.mxu0 0.0
    %1791 = vmatprep.subr.mxu0 0.0
    %1792 = vmatpush1.msra.mxu0 0.0
    %1793 = vmatprep.subr.mxu0 0.0
    %1794 = vmatpush1.msra.mxu0 0.0
    %1795 = vmatprep.mubr.f32.mxu0 0.0
    %1796 = vmatmul.mubr.f32.gmra.mrb[0].mxu0 %v1657
    %v1797 = vpop.f32.mrb[0].mxu0
    %v1798 = vadd.f32 0.0, %v1797
    %v1799 = vpop.f32.mrb[0].mxu0
    %v1800 = vadd.f32 0.0, %v1799
    %1801 = vdwg.mxu0
    %1802 = vmatprep.subr.mxu0 %v1670
    %1803 = vmatpush1.msra.mxu0 %v1669
    %1804 = vmatprep.subr.mxu0 %v1674
    %1805 = vmatpush1.msra.mxu0 %v1673
    %1806 = vmatprep.subr.mxu0 %v1678
    %1807 = vmatpush1.msra.mxu0 %v1677
    %1808 = vmatprep.subr.mxu0 %v1682
    %1809 = vmatpush1.msra.mxu0 %v1681
    %1810 = vmatprep.subr.mxu0 %v1686
    %1811 = vmatpush1.msra.mxu0 %v1685
    %1812 = vmatprep.subr.mxu0 %v1690
    %1813 = vmatpush1.msra.mxu0 %v1689
    %1814 = vmatprep.subr.mxu0 %v1694
    %1815 = vmatpush1.msra.mxu0 %v1693
    %1816 = vmatprep.subr.mxu0 %v1698
    %1817 = vmatpush1.msra.mxu0 %v1697
    %1818 = vmatprep.subr.mxu0 %v1702
    %1819 = vmatpush1.msra.mxu0 %v1701
    %1820 = vmatprep.subr.mxu0 %v1706
    %1821 = vmatpush1.msra.mxu0 %v1705
    %1822 = vmatprep.subr.mxu0 %v1710
    %1823 = vmatpush1.msra.mxu0 %v1709
    %1824 = vmatprep.subr.mxu0 %v1714
    %1825 = vmatpush1.msra.mxu0 %v1713
    %1826 = vmatprep.subr.mxu0 %v1718
    %1827 = vmatpush1.msra.mxu0 %v1717
    %1828 = vmatprep.subr.mxu0 %v1722
    %1829 = vmatpush1.msra.mxu0 %v1721
    %1830 = vmatprep.subr.mxu0 %v1726
    %1831 = vmatpush1.msra.mxu0 %v1725
    %1832 = vmatprep.subr.mxu0 %v1730
    %1833 = vmatpush1.msra.mxu0 %v1729
    %1834 = vmatprep.subr.mxu0 0.0
    %1835 = vmatpush1.msra.mxu0 0.0
    %1836 = vmatprep.subr.mxu0 0.0
    %1837 = vmatpush1.msra.mxu0 0.0
    %1838 = vmatprep.subr.mxu0 0.0
    %1839 = vmatpush1.msra.mxu0 0.0
    %1840 = vmatprep.subr.mxu0 0.0
    %1841 = vmatpush1.msra.mxu0 0.0
    %1842 = vmatprep.subr.mxu0 0.0
    %1843 = vmatpush1.msra.mxu0 0.0
    %1844 = vmatprep.subr.mxu0 0.0
    %1845 = vmatpush1.msra.mxu0 0.0
    %1846 = vmatprep.subr.mxu0 0.0
    %1847 = vmatpush1.msra.mxu0 0.0
    %1848 = vmatprep.subr.mxu0 0.0
    %1849 = vmatpush1.msra.mxu0 0.0
    %1850 = vmatprep.subr.mxu0 0.0
    %1851 = vmatpush1.msra.mxu0 0.0
    %1852 = vmatprep.subr.mxu0 0.0
    %1853 = vmatpush1.msra.mxu0 0.0
    %1854 = vmatprep.subr.mxu0 0.0
    %1855 = vmatpush1.msra.mxu0 0.0
    %1856 = vmatprep.subr.mxu0 0.0
    %1857 = vmatpush1.msra.mxu0 0.0
    %1858 = vmatprep.subr.mxu0 0.0
    %1859 = vmatpush1.msra.mxu0 0.0
    %1860 = vmatprep.subr.mxu0 0.0
    %1861 = vmatpush1.msra.mxu0 0.0
    %1862 = vmatprep.subr.mxu0 0.0
    %1863 = vmatpush1.msra.mxu0 0.0
    %1864 = vmatprep.subr.mxu0 0.0
    %1865 = vmatpush1.msra.mxu0 0.0
    %1866 = vmatprep.mubr.f32.mxu0 0.0
    %1867 = vmatmul.mubr.f32.gmra.mrb[0].mxu0 %v1657
    %v1868 = vpop.f32.mrb[0].mxu0
    %v1869 = vadd.f32 0.0, %v1868
    %v1870 = vpop.f32.mrb[0].mxu0
    %v1871 = vadd.f32 0.0, %v1870
    %1872 = vdwg.mxu0
    %v1873 = vadd.f32 %v1663, %v1798
    %v1874 = vadd.f32 %v1664, %v1800
    %v1875 = vadd.f32 %v1665, %v1869
    %v1876 = vadd.f32 %v1666, %v1871
    %v1877 = vxor.u32 %v1873, 2147483648
    %v1878 = vxor.u32 %v1874, 2147483648
    %v1879 = vxor.u32 %v1875, 2147483648
    %v1880 = vmul.f32 %v1877, 1.442695
    %v1881 = vpow.pop %v1880
    %v1882 = vmul.f32 %v1878, 1.442695
    %v1883 = vpow.pop %v1882
    %v1884 = vmul.f32 %v1879, 1.442695
    %v1885 = vpow.pop %v1884
    %v1886 = vadd.f32 %v1881, 1.0
    %v1887 = vadd.f32 %v1883, 1.0
    %v1888 = vadd.f32 %v1885, 1.0
    %v1889 = vrcp.pop %v1886
    %v1890 = vmul.f32 1.0, %v1889
    %v1891 = vrcp.pop %v1887
    %v1892 = vmul.f32 1.0, %v1891
    %v1893 = vrcp.pop %v1888
    %v1894 = vmul.f32 1.0, %v1893
    %v1895 = vtanh.pop %v1876
    %v1896 = vmul.f32 %v1892, %v1655
    %v1897 = vmul.f32 %v1890, %v1895
    %v1898 = vadd.f32 %v1896, %v1897
    %v1899 = vtanh.pop %v1898
    %v1900 = vmul.f32 %v1894, %v1899
    %s1901 = scalar_lea.vmem [#allocation4], 32
    %1902 = vst [vmem:[%s1901] sm:$0xff] %v1900
    %s1903 = smul.u32 5, 4
    %s1904 = smul.addr %s1903, 8
    %s1905 = scalar_lea.vmem [#allocation3], %s1904
    %v1906 = vld [vmem:[%s1905] sm:$0xff]
    %v1907 = vld [vmem:[%s1905 + $0x8] sm:$0xff]
    %v1908 = vld [vmem:[%s1905 + $0x10] sm:$0xff]
    %v1909 = vld [vmem:[%s1905 + $0x18] sm:$0xff]
    %v1910 = vld [vmem:[#allocation8] sm:$0xff]
    %v1911 = vld [vmem:[#allocation8 + $0x8] sm:$0xff]
    %v1912 = vld [vmem:[#allocation8 + $0x10] sm:$0xff]
    %v1913 = vld [vmem:[#allocation8 + $0x18] sm:$0xff]
    %v1914 = vld [vmem:[#allocation8 + $0x20] sm:$0xff]
    %v1915 = vld [vmem:[#allocation8 + $0x28] sm:$0xff]
    %v1916 = vld [vmem:[#allocation8 + $0x30] sm:$0xff]
    %v1917 = vld [vmem:[#allocation8 + $0x38] sm:$0xff]
    %v1918 = vld [vmem:[#allocation8 + $0x40] sm:$0xff]
    %v1919 = vld [vmem:[#allocation8 + $0x48] sm:$0xff]
    %v1920 = vld [vmem:[#allocation8 + $0x50] sm:$0xff]
    %v1921 = vld [vmem:[#allocation8 + $0x58] sm:$0xff]
    %v1922 = vld [vmem:[#allocation8 + $0x60] sm:$0xff]
    %v1923 = vld [vmem:[#allocation8 + $0x68] sm:$0xff]
    %v1924 = vld [vmem:[#allocation8 + $0x70] sm:$0xff]
    %v1925 = vld [vmem:[#allocation8 + $0x78] sm:$0xff]
    %v1926 = vld [vmem:[#allocation8 + $0x80] sm:$0xff]
    %v1927 = vld [vmem:[#allocation8 + $0x88] sm:$0xff]
    %v1928 = vld [vmem:[#allocation8 + $0x90] sm:$0xff]
    %v1929 = vld [vmem:[#allocation8 + $0x98] sm:$0xff]
    %v1930 = vld [vmem:[#allocation8 + $0xa0] sm:$0xff]
    %v1931 = vld [vmem:[#allocation8 + $0xa8] sm:$0xff]
    %v1932 = vld [vmem:[#allocation8 + $0xb0] sm:$0xff]
    %v1933 = vld [vmem:[#allocation8 + $0xb8] sm:$0xff]
    %v1934 = vld [vmem:[#allocation8 + $0xc0] sm:$0xff]
    %v1935 = vld [vmem:[#allocation8 + $0xc8] sm:$0xff]
    %v1936 = vld [vmem:[#allocation8 + $0xd0] sm:$0xff]
    %v1937 = vld [vmem:[#allocation8 + $0xd8] sm:$0xff]
    %v1938 = vld [vmem:[#allocation8 + $0xe0] sm:$0xff]
    %v1939 = vld [vmem:[#allocation8 + $0xe8] sm:$0xff]
    %v1940 = vld [vmem:[#allocation8 + $0xf0] sm:$0xff]
    %v1941 = vld [vmem:[#allocation8 + $0xf8] sm:$0xff]
    %v1942 = vld [vmem:[#allocation8 + $0x100] sm:$0xff]
    %v1943 = vld [vmem:[#allocation8 + $0x108] sm:$0xff]
    %v1944 = vld [vmem:[#allocation8 + $0x110] sm:$0xff]
    %v1945 = vld [vmem:[#allocation8 + $0x118] sm:$0xff]
    %v1946 = vld [vmem:[#allocation8 + $0x120] sm:$0xff]
    %v1947 = vld [vmem:[#allocation8 + $0x128] sm:$0xff]
    %v1948 = vld [vmem:[#allocation8 + $0x130] sm:$0xff]
    %v1949 = vld [vmem:[#allocation8 + $0x138] sm:$0xff]
    %v1950 = vld [vmem:[#allocation8 + $0x140] sm:$0xff]
    %v1951 = vld [vmem:[#allocation8 + $0x148] sm:$0xff]
    %v1952 = vld [vmem:[#allocation8 + $0x150] sm:$0xff]
    %v1953 = vld [vmem:[#allocation8 + $0x158] sm:$0xff]
    %v1954 = vld [vmem:[#allocation8 + $0x160] sm:$0xff]
    %v1955 = vld [vmem:[#allocation8 + $0x168] sm:$0xff]
    %v1956 = vld [vmem:[#allocation8 + $0x170] sm:$0xff]
    %v1957 = vld [vmem:[#allocation8 + $0x178] sm:$0xff]
    %v1958 = vld [vmem:[#allocation8 + $0x180] sm:$0xff]
    %v1959 = vld [vmem:[#allocation8 + $0x188] sm:$0xff]
    %v1960 = vld [vmem:[#allocation8 + $0x190] sm:$0xff]
    %v1961 = vld [vmem:[#allocation8 + $0x198] sm:$0xff]
    %v1962 = vld [vmem:[#allocation8 + $0x1a0] sm:$0xff]
    %v1963 = vld [vmem:[#allocation8 + $0x1a8] sm:$0xff]
    %v1964 = vld [vmem:[#allocation8 + $0x1b0] sm:$0xff]
    %v1965 = vld [vmem:[#allocation8 + $0x1b8] sm:$0xff]
    %v1966 = vld [vmem:[#allocation8 + $0x1c0] sm:$0xff]
    %v1967 = vld [vmem:[#allocation8 + $0x1c8] sm:$0xff]
    %v1968 = vld [vmem:[#allocation8 + $0x1d0] sm:$0xff]
    %v1969 = vld [vmem:[#allocation8 + $0x1d8] sm:$0xff]
    %v1970 = vld [vmem:[#allocation8 + $0x1e0] sm:$0xff]
    %v1971 = vld [vmem:[#allocation8 + $0x1e8] sm:$0xff]
    %v1972 = vld [vmem:[#allocation8 + $0x1f0] sm:$0xff]
    %v1973 = vld [vmem:[#allocation8 + $0x1f8] sm:$0xff]
    %1974 = vmatprep.subr.mxu0 %v1911
    %1975 = vmatpush1.msra.mxu0 %v1910
    %1976 = vmatprep.subr.mxu0 %v1915
    %1977 = vmatpush1.msra.mxu0 %v1914
    %1978 = vmatprep.subr.mxu0 %v1919
    %1979 = vmatpush1.msra.mxu0 %v1918
    %1980 = vmatprep.subr.mxu0 %v1923
    %1981 = vmatpush1.msra.mxu0 %v1922
    %1982 = vmatprep.subr.mxu0 %v1927
    %1983 = vmatpush1.msra.mxu0 %v1926
    %1984 = vmatprep.subr.mxu0 %v1931
    %1985 = vmatpush1.msra.mxu0 %v1930
    %1986 = vmatprep.subr.mxu0 %v1935
    %1987 = vmatpush1.msra.mxu0 %v1934
    %1988 = vmatprep.subr.mxu0 %v1939
    %1989 = vmatpush1.msra.mxu0 %v1938
    %1990 = vmatprep.subr.mxu0 %v1943
    %1991 = vmatpush1.msra.mxu0 %v1942
    %1992 = vmatprep.subr.mxu0 %v1947
    %1993 = vmatpush1.msra.mxu0 %v1946
    %1994 = vmatprep.subr.mxu0 %v1951
    %1995 = vmatpush1.msra.mxu0 %v1950
    %1996 = vmatprep.subr.mxu0 %v1955
    %1997 = vmatpush1.msra.mxu0 %v1954
    %1998 = vmatprep.subr.mxu0 %v1959
    %1999 = vmatpush1.msra.mxu0 %v1958
    %2000 = vmatprep.subr.mxu0 %v1963
    %2001 = vmatpush1.msra.mxu0 %v1962
    %2002 = vmatprep.subr.mxu0 %v1967
    %2003 = vmatpush1.msra.mxu0 %v1966
    %2004 = vmatprep.subr.mxu0 %v1971
    %2005 = vmatpush1.msra.mxu0 %v1970
    %2006 = vmatprep.subr.mxu0 0.0
    %2007 = vmatpush1.msra.mxu0 0.0
    %2008 = vmatprep.subr.mxu0 0.0
    %2009 = vmatpush1.msra.mxu0 0.0
    %2010 = vmatprep.subr.mxu0 0.0
    %2011 = vmatpush1.msra.mxu0 0.0
    %2012 = vmatprep.subr.mxu0 0.0
    %2013 = vmatpush1.msra.mxu0 0.0
    %2014 = vmatprep.subr.mxu0 0.0
    %2015 = vmatpush1.msra.mxu0 0.0
    %2016 = vmatprep.subr.mxu0 0.0
    %2017 = vmatpush1.msra.mxu0 0.0
    %2018 = vmatprep.subr.mxu0 0.0
    %2019 = vmatpush1.msra.mxu0 0.0
    %2020 = vmatprep.subr.mxu0 0.0
    %2021 = vmatpush1.msra.mxu0 0.0
    %2022 = vmatprep.subr.mxu0 0.0
    %2023 = vmatpush1.msra.mxu0 0.0
    %2024 = vmatprep.subr.mxu0 0.0
    %2025 = vmatpush1.msra.mxu0 0.0
    %2026 = vmatprep.subr.mxu0 0.0
    %2027 = vmatpush1.msra.mxu0 0.0
    %2028 = vmatprep.subr.mxu0 0.0
    %2029 = vmatpush1.msra.mxu0 0.0
    %2030 = vmatprep.subr.mxu0 0.0
    %2031 = vmatpush1.msra.mxu0 0.0
    %2032 = vmatprep.subr.mxu0 0.0
    %2033 = vmatpush1.msra.mxu0 0.0
    %2034 = vmatprep.subr.mxu0 0.0
    %2035 = vmatpush1.msra.mxu0 0.0
    %2036 = vmatprep.subr.mxu0 0.0
    %2037 = vmatpush1.msra.mxu0 0.0
    %2038 = vmatprep.mubr.f32.mxu0 0.0
    %2039 = vmatmul.mubr.f32.gmra.mrb[0].mxu0 %v1900
    %v2040 = vpop.f32.mrb[0].mxu0
    %v2041 = vadd.f32 0.0, %v2040
    %v2042 = vpop.f32.mrb[0].mxu0
    %v2043 = vadd.f32 0.0, %v2042
    %2044 = vdwg.mxu0
    %2045 = vmatprep.subr.mxu0 %v1913
    %2046 = vmatpush1.msra.mxu0 %v1912
    %2047 = vmatprep.subr.mxu0 %v1917
    %2048 = vmatpush1.msra.mxu0 %v1916
    %2049 = vmatprep.subr.mxu0 %v1921
    %2050 = vmatpush1.msra.mxu0 %v1920
    %2051 = vmatprep.subr.mxu0 %v1925
    %2052 = vmatpush1.msra.mxu0 %v1924
    %2053 = vmatprep.subr.mxu0 %v1929
    %2054 = vmatpush1.msra.mxu0 %v1928
    %2055 = vmatprep.subr.mxu0 %v1933
    %2056 = vmatpush1.msra.mxu0 %v1932
    %2057 = vmatprep.subr.mxu0 %v1937
    %2058 = vmatpush1.msra.mxu0 %v1936
    %2059 = vmatprep.subr.mxu0 %v1941
    %2060 = vmatpush1.msra.mxu0 %v1940
    %2061 = vmatprep.subr.mxu0 %v1945
    %2062 = vmatpush1.msra.mxu0 %v1944
    %2063 = vmatprep.subr.mxu0 %v1949
    %2064 = vmatpush1.msra.mxu0 %v1948
    %2065 = vmatprep.subr.mxu0 %v1953
    %2066 = vmatpush1.msra.mxu0 %v1952
    %2067 = vmatprep.subr.mxu0 %v1957
    %2068 = vmatpush1.msra.mxu0 %v1956
    %2069 = vmatprep.subr.mxu0 %v1961
    %2070 = vmatpush1.msra.mxu0 %v1960
    %2071 = vmatprep.subr.mxu0 %v1965
    %2072 = vmatpush1.msra.mxu0 %v1964
    %2073 = vmatprep.subr.mxu0 %v1969
    %2074 = vmatpush1.msra.mxu0 %v1968
    %2075 = vmatprep.subr.mxu0 %v1973
    %2076 = vmatpush1.msra.mxu0 %v1972
    %2077 = vmatprep.subr.mxu0 0.0
    %2078 = vmatpush1.msra.mxu0 0.0
    %2079 = vmatprep.subr.mxu0 0.0
    %2080 = vmatpush1.msra.mxu0 0.0
    %2081 = vmatprep.subr.mxu0 0.0
    %2082 = vmatpush1.msra.mxu0 0.0
    %2083 = vmatprep.subr.mxu0 0.0
    %2084 = vmatpush1.msra.mxu0 0.0
    %2085 = vmatprep.subr.mxu0 0.0
    %2086 = vmatpush1.msra.mxu0 0.0
    %2087 = vmatprep.subr.mxu0 0.0
    %2088 = vmatpush1.msra.mxu0 0.0
    %2089 = vmatprep.subr.mxu0 0.0
    %2090 = vmatpush1.msra.mxu0 0.0
    %2091 = vmatprep.subr.mxu0 0.0
    %2092 = vmatpush1.msra.mxu0 0.0
    %2093 = vmatprep.subr.mxu0 0.0
    %2094 = vmatpush1.msra.mxu0 0.0
    %2095 = vmatprep.subr.mxu0 0.0
    %2096 = vmatpush1.msra.mxu0 0.0
    %2097 = vmatprep.subr.mxu0 0.0
    %2098 = vmatpush1.msra.mxu0 0.0
    %2099 = vmatprep.subr.mxu0 0.0
    %2100 = vmatpush1.msra.mxu0 0.0
    %2101 = vmatprep.subr.mxu0 0.0
    %2102 = vmatpush1.msra.mxu0 0.0
    %2103 = vmatprep.subr.mxu0 0.0
    %2104 = vmatpush1.msra.mxu0 0.0
    %2105 = vmatprep.subr.mxu0 0.0
    %2106 = vmatpush1.msra.mxu0 0.0
    %2107 = vmatprep.subr.mxu0 0.0
    %2108 = vmatpush1.msra.mxu0 0.0
    %2109 = vmatprep.mubr.f32.mxu0 0.0
    %2110 = vmatmul.mubr.f32.gmra.mrb[0].mxu0 %v1900
    %v2111 = vpop.f32.mrb[0].mxu0
    %v2112 = vadd.f32 0.0, %v2111
    %v2113 = vpop.f32.mrb[0].mxu0
    %v2114 = vadd.f32 0.0, %v2113
    %2115 = vdwg.mxu0
    %v2116 = vadd.f32 %v1906, %v2041
    %v2117 = vadd.f32 %v1907, %v2043
    %v2118 = vadd.f32 %v1908, %v2112
    %v2119 = vadd.f32 %v1909, %v2114
    %v2120 = vxor.u32 %v2116, 2147483648
    %v2121 = vxor.u32 %v2117, 2147483648
    %v2122 = vxor.u32 %v2118, 2147483648
    %v2123 = vmul.f32 %v2120, 1.442695
    %v2124 = vpow.pop %v2123
    %v2125 = vmul.f32 %v2121, 1.442695
    %v2126 = vpow.pop %v2125
    %v2127 = vmul.f32 %v2122, 1.442695
    %v2128 = vpow.pop %v2127
    %v2129 = vadd.f32 %v2124, 1.0
    %v2130 = vadd.f32 %v2126, 1.0
    %v2131 = vadd.f32 %v2128, 1.0
    %v2132 = vrcp.pop %v2129
    %v2133 = vmul.f32 1.0, %v2132
    %v2134 = vrcp.pop %v2130
    %v2135 = vmul.f32 1.0, %v2134
    %v2136 = vrcp.pop %v2131
    %v2137 = vmul.f32 1.0, %v2136
    %v2138 = vtanh.pop %v2119
    %v2139 = vmul.f32 %v2135, %v1898
    %v2140 = vmul.f32 %v2133, %v2138
    %v2141 = vadd.f32 %v2139, %v2140
    %v2142 = vtanh.pop %v2141
    %v2143 = vmul.f32 %v2137, %v2142
    %s2144 = scalar_lea.vmem [#allocation4], 40
    %2145 = vst [vmem:[%s2144] sm:$0xff] %v2143
    %s2146 = smul.u32 6, 4
    %s2147 = smul.addr %s2146, 8
    %s2148 = scalar_lea.vmem [#allocation3], %s2147
    %v2149 = vld [vmem:[%s2148] sm:$0xff]
    %v2150 = vld [vmem:[%s2148 + $0x8] sm:$0xff]
    %v2151 = vld [vmem:[%s2148 + $0x10] sm:$0xff]
    %v2152 = vld [vmem:[%s2148 + $0x18] sm:$0xff]
    %v2153 = vld [vmem:[#allocation8] sm:$0xff]
    %v2154 = vld [vmem:[#allocation8 + $0x8] sm:$0xff]
    %v2155 = vld [vmem:[#allocation8 + $0x10] sm:$0xff]
    %v2156 = vld [vmem:[#allocation8 + $0x18] sm:$0xff]
    %v2157 = vld [vmem:[#allocation8 + $0x20] sm:$0xff]
    %v2158 = vld [vmem:[#allocation8 + $0x28] sm:$0xff]
    %v2159 = vld [vmem:[#allocation8 + $0x30] sm:$0xff]
    %v2160 = vld [vmem:[#allocation8 + $0x38] sm:$0xff]
    %v2161 = vld [vmem:[#allocation8 + $0x40] sm:$0xff]
    %v2162 = vld [vmem:[#allocation8 + $0x48] sm:$0xff]
    %v2163 = vld [vmem:[#allocation8 + $0x50] sm:$0xff]
    %v2164 = vld [vmem:[#allocation8 + $0x58] sm:$0xff]
    %v2165 = vld [vmem:[#allocation8 + $0x60] sm:$0xff]
    %v2166 = vld [vmem:[#allocation8 + $0x68] sm:$0xff]
    %v2167 = vld [vmem:[#allocation8 + $0x70] sm:$0xff]
    %v2168 = vld [vmem:[#allocation8 + $0x78] sm:$0xff]
    %v2169 = vld [vmem:[#allocation8 + $0x80] sm:$0xff]
    %v2170 = vld [vmem:[#allocation8 + $0x88] sm:$0xff]
    %v2171 = vld [vmem:[#allocation8 + $0x90] sm:$0xff]
    %v2172 = vld [vmem:[#allocation8 + $0x98] sm:$0xff]
    %v2173 = vld [vmem:[#allocation8 + $0xa0] sm:$0xff]
    %v2174 = vld [vmem:[#allocation8 + $0xa8] sm:$0xff]
    %v2175 = vld [vmem:[#allocation8 + $0xb0] sm:$0xff]
    %v2176 = vld [vmem:[#allocation8 + $0xb8] sm:$0xff]
    %v2177 = vld [vmem:[#allocation8 + $0xc0] sm:$0xff]
    %v2178 = vld [vmem:[#allocation8 + $0xc8] sm:$0xff]
    %v2179 = vld [vmem:[#allocation8 + $0xd0] sm:$0xff]
    %v2180 = vld [vmem:[#allocation8 + $0xd8] sm:$0xff]
    %v2181 = vld [vmem:[#allocation8 + $0xe0] sm:$0xff]
    %v2182 = vld [vmem:[#allocation8 + $0xe8] sm:$0xff]
    %v2183 = vld [vmem:[#allocation8 + $0xf0] sm:$0xff]
    %v2184 = vld [vmem:[#allocation8 + $0xf8] sm:$0xff]
    %v2185 = vld [vmem:[#allocation8 + $0x100] sm:$0xff]
    %v2186 = vld [vmem:[#allocation8 + $0x108] sm:$0xff]
    %v2187 = vld [vmem:[#allocation8 + $0x110] sm:$0xff]
    %v2188 = vld [vmem:[#allocation8 + $0x118] sm:$0xff]
    %v2189 = vld [vmem:[#allocation8 + $0x120] sm:$0xff]
    %v2190 = vld [vmem:[#allocation8 + $0x128] sm:$0xff]
    %v2191 = vld [vmem:[#allocation8 + $0x130] sm:$0xff]
    %v2192 = vld [vmem:[#allocation8 + $0x138] sm:$0xff]
    %v2193 = vld [vmem:[#allocation8 + $0x140] sm:$0xff]
    %v2194 = vld [vmem:[#allocation8 + $0x148] sm:$0xff]
    %v2195 = vld [vmem:[#allocation8 + $0x150] sm:$0xff]
    %v2196 = vld [vmem:[#allocation8 + $0x158] sm:$0xff]
    %v2197 = vld [vmem:[#allocation8 + $0x160] sm:$0xff]
    %v2198 = vld [vmem:[#allocation8 + $0x168] sm:$0xff]
    %v2199 = vld [vmem:[#allocation8 + $0x170] sm:$0xff]
    %v2200 = vld [vmem:[#allocation8 + $0x178] sm:$0xff]
    %v2201 = vld [vmem:[#allocation8 + $0x180] sm:$0xff]
    %v2202 = vld [vmem:[#allocation8 + $0x188] sm:$0xff]
    %v2203 = vld [vmem:[#allocation8 + $0x190] sm:$0xff]
    %v2204 = vld [vmem:[#allocation8 + $0x198] sm:$0xff]
    %v2205 = vld [vmem:[#allocation8 + $0x1a0] sm:$0xff]
    %v2206 = vld [vmem:[#allocation8 + $0x1a8] sm:$0xff]
    %v2207 = vld [vmem:[#allocation8 + $0x1b0] sm:$0xff]
    %v2208 = vld [vmem:[#allocation8 + $0x1b8] sm:$0xff]
    %v2209 = vld [vmem:[#allocation8 + $0x1c0] sm:$0xff]
    %v2210 = vld [vmem:[#allocation8 + $0x1c8] sm:$0xff]
    %v2211 = vld [vmem:[#allocation8 + $0x1d0] sm:$0xff]
    %v2212 = vld [vmem:[#allocation8 + $0x1d8] sm:$0xff]
    %v2213 = vld [vmem:[#allocation8 + $0x1e0] sm:$0xff]
    %v2214 = vld [vmem:[#allocation8 + $0x1e8] sm:$0xff]
    %v2215 = vld [vmem:[#allocation8 + $0x1f0] sm:$0xff]
    %v2216 = vld [vmem:[#allocation8 + $0x1f8] sm:$0xff]
    %2217 = vmatprep.subr.mxu0 %v2154
    %2218 = vmatpush1.msra.mxu0 %v2153
    %2219 = vmatprep.subr.mxu0 %v2158
    %2220 = vmatpush1.msra.mxu0 %v2157
    %2221 = vmatprep.subr.mxu0 %v2162
    %2222 = vmatpush1.msra.mxu0 %v2161
    %2223 = vmatprep.subr.mxu0 %v2166
    %2224 = vmatpush1.msra.mxu0 %v2165
    %2225 = vmatprep.subr.mxu0 %v2170
    %2226 = vmatpush1.msra.mxu0 %v2169
    %2227 = vmatprep.subr.mxu0 %v2174
    %2228 = vmatpush1.msra.mxu0 %v2173
    %2229 = vmatprep.subr.mxu0 %v2178
    %2230 = vmatpush1.msra.mxu0 %v2177
    %2231 = vmatprep.subr.mxu0 %v2182
    %2232 = vmatpush1.msra.mxu0 %v2181
    %2233 = vmatprep.subr.mxu0 %v2186
    %2234 = vmatpush1.msra.mxu0 %v2185
    %2235 = vmatprep.subr.mxu0 %v2190
    %2236 = vmatpush1.msra.mxu0 %v2189
    %2237 = vmatprep.subr.mxu0 %v2194
    %2238 = vmatpush1.msra.mxu0 %v2193
    %2239 = vmatprep.subr.mxu0 %v2198
    %2240 = vmatpush1.msra.mxu0 %v2197
    %2241 = vmatprep.subr.mxu0 %v2202
    %2242 = vmatpush1.msra.mxu0 %v2201
    %2243 = vmatprep.subr.mxu0 %v2206
    %2244 = vmatpush1.msra.mxu0 %v2205
    %2245 = vmatprep.subr.mxu0 %v2210
    %2246 = vmatpush1.msra.mxu0 %v2209
    %2247 = vmatprep.subr.mxu0 %v2214
    %2248 = vmatpush1.msra.mxu0 %v2213
    %2249 = vmatprep.subr.mxu0 0.0
    %2250 = vmatpush1.msra.mxu0 0.0
    %2251 = vmatprep.subr.mxu0 0.0
    %2252 = vmatpush1.msra.mxu0 0.0
    %2253 = vmatprep.subr.mxu0 0.0
    %2254 = vmatpush1.msra.mxu0 0.0
    %2255 = vmatprep.subr.mxu0 0.0
    %2256 = vmatpush1.msra.mxu0 0.0
    %2257 = vmatprep.subr.mxu0 0.0
    %2258 = vmatpush1.msra.mxu0 0.0
    %2259 = vmatprep.subr.mxu0 0.0
    %2260 = vmatpush1.msra.mxu0 0.0
    %2261 = vmatprep.subr.mxu0 0.0
    %2262 = vmatpush1.msra.mxu0 0.0
    %2263 = vmatprep.subr.mxu0 0.0
    %2264 = vmatpush1.msra.mxu0 0.0
    %2265 = vmatprep.subr.mxu0 0.0
    %2266 = vmatpush1.msra.mxu0 0.0
    %2267 = vmatprep.subr.mxu0 0.0
    %2268 = vmatpush1.msra.mxu0 0.0
    %2269 = vmatprep.subr.mxu0 0.0
    %2270 = vmatpush1.msra.mxu0 0.0
    %2271 = vmatprep.subr.mxu0 0.0
    %2272 = vmatpush1.msra.mxu0 0.0
    %2273 = vmatprep.subr.mxu0 0.0
    %2274 = vmatpush1.msra.mxu0 0.0
    %2275 = vmatprep.subr.mxu0 0.0
    %2276 = vmatpush1.msra.mxu0 0.0
    %2277 = vmatprep.subr.mxu0 0.0
    %2278 = vmatpush1.msra.mxu0 0.0
    %2279 = vmatprep.subr.mxu0 0.0
    %2280 = vmatpush1.msra.mxu0 0.0
    %2281 = vmatprep.mubr.f32.mxu0 0.0
    %2282 = vmatmul.mubr.f32.gmra.mrb[0].mxu0 %v2143
    %v2283 = vpop.f32.mrb[0].mxu0
    %v2284 = vadd.f32 0.0, %v2283
    %v2285 = vpop.f32.mrb[0].mxu0
    %v2286 = vadd.f32 0.0, %v2285
    %2287 = vdwg.mxu0
    %2288 = vmatprep.subr.mxu0 %v2156
    %2289 = vmatpush1.msra.mxu0 %v2155
    %2290 = vmatprep.subr.mxu0 %v2160
    %2291 = vmatpush1.msra.mxu0 %v2159
    %2292 = vmatprep.subr.mxu0 %v2164
    %2293 = vmatpush1.msra.mxu0 %v2163
    %2294 = vmatprep.subr.mxu0 %v2168
    %2295 = vmatpush1.msra.mxu0 %v2167
    %2296 = vmatprep.subr.mxu0 %v2172
    %2297 = vmatpush1.msra.mxu0 %v2171
    %2298 = vmatprep.subr.mxu0 %v2176
    %2299 = vmatpush1.msra.mxu0 %v2175
    %2300 = vmatprep.subr.mxu0 %v2180
    %2301 = vmatpush1.msra.mxu0 %v2179
    %2302 = vmatprep.subr.mxu0 %v2184
    %2303 = vmatpush1.msra.mxu0 %v2183
    %2304 = vmatprep.subr.mxu0 %v2188
    %2305 = vmatpush1.msra.mxu0 %v2187
    %2306 = vmatprep.subr.mxu0 %v2192
    %2307 = vmatpush1.msra.mxu0 %v2191
    %2308 = vmatprep.subr.mxu0 %v2196
    %2309 = vmatpush1.msra.mxu0 %v2195
    %2310 = vmatprep.subr.mxu0 %v2200
    %2311 = vmatpush1.msra.mxu0 %v2199
    %2312 = vmatprep.subr.mxu0 %v2204
    %2313 = vmatpush1.msra.mxu0 %v2203
    %2314 = vmatprep.subr.mxu0 %v2208
    %2315 = vmatpush1.msra.mxu0 %v2207
    %2316 = vmatprep.subr.mxu0 %v2212
    %2317 = vmatpush1.msra.mxu0 %v2211
    %2318 = vmatprep.subr.mxu0 %v2216
    %2319 = vmatpush1.msra.mxu0 %v2215
    %2320 = vmatprep.subr.mxu0 0.0
    %2321 = vmatpush1.msra.mxu0 0.0
    %2322 = vmatprep.subr.mxu0 0.0
    %2323 = vmatpush1.msra.mxu0 0.0
    %2324 = vmatprep.subr.mxu0 0.0
    %2325 = vmatpush1.msra.mxu0 0.0
    %2326 = vmatprep.subr.mxu0 0.0
    %2327 = vmatpush1.msra.mxu0 0.0
    %2328 = vmatprep.subr.mxu0 0.0
    %2329 = vmatpush1.msra.mxu0 0.0
    %2330 = vmatprep.subr.mxu0 0.0
    %2331 = vmatpush1.msra.mxu0 0.0
    %2332 = vmatprep.subr.mxu0 0.0
    %2333 = vmatpush1.msra.mxu0 0.0
    %2334 = vmatprep.subr.mxu0 0.0
    %2335 = vmatpush1.msra.mxu0 0.0
    %2336 = vmatprep.subr.mxu0 0.0
    %2337 = vmatpush1.msra.mxu0 0.0
    %2338 = vmatprep.subr.mxu0 0.0
    %2339 = vmatpush1.msra.mxu0 0.0
    %2340 = vmatprep.subr.mxu0 0.0
    %2341 = vmatpush1.msra.mxu0 0.0
    %2342 = vmatprep.subr.mxu0 0.0
    %2343 = vmatpush1.msra.mxu0 0.0
    %2344 = vmatprep.subr.mxu0 0.0
    %2345 = vmatpush1.msra.mxu0 0.0
    %2346 = vmatprep.subr.mxu0 0.0
    %2347 = vmatpush1.msra.mxu0 0.0
    %2348 = vmatprep.subr.mxu0 0.0
    %2349 = vmatpush1.msra.mxu0 0.0
    %2350 = vmatprep.subr.mxu0 0.0
    %2351 = vmatpush1.msra.mxu0 0.0
    %2352 = vmatprep.mubr.f32.mxu0 0.0
    %2353 = vmatmul.mubr.f32.gmra.mrb[0].mxu0 %v2143
    %v2354 = vpop.f32.mrb[0].mxu0
    %v2355 = vadd.f32 0.0, %v2354
    %v2356 = vpop.f32.mrb[0].mxu0
    %v2357 = vadd.f32 0.0, %v2356
    %2358 = vdwg.mxu0
    %v2359 = vadd.f32 %v2149, %v2284
    %v2360 = vadd.f32 %v2150, %v2286
    %v2361 = vadd.f32 %v2151, %v2355
    %v2362 = vadd.f32 %v2152, %v2357
    %v2363 = vxor.u32 %v2359, 2147483648
    %v2364 = vxor.u32 %v2360, 2147483648
    %v2365 = vxor.u32 %v2361, 2147483648
    %v2366 = vmul.f32 %v2363, 1.442695
    %v2367 = vpow.pop %v2366
    %v2368 = vmul.f32 %v2364, 1.442695
    %v2369 = vpow.pop %v2368
    %v2370 = vmul.f32 %v2365, 1.442695
    %v2371 = vpow.pop %v2370
    %v2372 = vadd.f32 %v2367, 1.0
    %v2373 = vadd.f32 %v2369, 1.0
    %v2374 = vadd.f32 %v2371, 1.0
    %v2375 = vrcp.pop %v2372
    %v2376 = vmul.f32 1.0, %v2375
    %v2377 = vrcp.pop %v2373
    %v2378 = vmul.f32 1.0, %v2377
    %v2379 = vrcp.pop %v2374
    %v2380 = vmul.f32 1.0, %v2379
    %v2381 = vtanh.pop %v2362
    %v2382 = vmul.f32 %v2378, %v2141
    %v2383 = vmul.f32 %v2376, %v2381
    %v2384 = vadd.f32 %v2382, %v2383
    %v2385 = vtanh.pop %v2384
    %v2386 = vmul.f32 %v2380, %v2385
    %s2387 = scalar_lea.vmem [#allocation4], 48
    %2388 = vst [vmem:[%s2387] sm:$0xff] %v2386
    %s2389 = smul.u32 7, 4
    %s2390 = smul.addr %s2389, 8
    %s2391 = scalar_lea.vmem [#allocation3], %s2390
    %v2392 = vld [vmem:[%s2391] sm:$0xff]
    %v2393 = vld [vmem:[%s2391 + $0x8] sm:$0xff]
    %v2394 = vld [vmem:[%s2391 + $0x10] sm:$0xff]
    %v2395 = vld [vmem:[%s2391 + $0x18] sm:$0xff]
    %v2396 = vld [vmem:[#allocation8] sm:$0xff]
    %v2397 = vld [vmem:[#allocation8 + $0x8] sm:$0xff]
    %v2398 = vld [vmem:[#allocation8 + $0x10] sm:$0xff]
    %v2399 = vld [vmem:[#allocation8 + $0x18] sm:$0xff]
    %v2400 = vld [vmem:[#allocation8 + $0x20] sm:$0xff]
    %v2401 = vld [vmem:[#allocation8 + $0x28] sm:$0xff]
    %v2402 = vld [vmem:[#allocation8 + $0x30] sm:$0xff]
    %v2403 = vld [vmem:[#allocation8 + $0x38] sm:$0xff]
    %v2404 = vld [vmem:[#allocation8 + $0x40] sm:$0xff]
    %v2405 = vld [vmem:[#allocation8 + $0x48] sm:$0xff]
    %v2406 = vld [vmem:[#allocation8 + $0x50] sm:$0xff]
    %v2407 = vld [vmem:[#allocation8 + $0x58] sm:$0xff]
    %v2408 = vld [vmem:[#allocation8 + $0x60] sm:$0xff]
    %v2409 = vld [vmem:[#allocation8 + $0x68] sm:$0xff]
    %v2410 = vld [vmem:[#allocation8 + $0x70] sm:$0xff]
    %v2411 = vld [vmem:[#allocation8 + $0x78] sm:$0xff]
    %v2412 = vld [vmem:[#allocation8 + $0x80] sm:$0xff]
    %v2413 = vld [vmem:[#allocation8 + $0x88] sm:$0xff]
    %v2414 = vld [vmem:[#allocation8 + $0x90] sm:$0xff]
    %v2415 = vld [vmem:[#allocation8 + $0x98] sm:$0xff]
    %v2416 = vld [vmem:[#allocation8 + $0xa0] sm:$0xff]
    %v2417 = vld [vmem:[#allocation8 + $0xa8] sm:$0xff]
    %v2418 = vld [vmem:[#allocation8 + $0xb0] sm:$0xff]
    %v2419 = vld [vmem:[#allocation8 + $0xb8] sm:$0xff]
    %v2420 = vld [vmem:[#allocation8 + $0xc0] sm:$0xff]
    %v2421 = vld [vmem:[#allocation8 + $0xc8] sm:$0xff]
    %v2422 = vld [vmem:[#allocation8 + $0xd0] sm:$0xff]
    %v2423 = vld [vmem:[#allocation8 + $0xd8] sm:$0xff]
    %v2424 = vld [vmem:[#allocation8 + $0xe0] sm:$0xff]
    %v2425 = vld [vmem:[#allocation8 + $0xe8] sm:$0xff]
    %v2426 = vld [vmem:[#allocation8 + $0xf0] sm:$0xff]
    %v2427 = vld [vmem:[#allocation8 + $0xf8] sm:$0xff]
    %v2428 = vld [vmem:[#allocation8 + $0x100] sm:$0xff]
    %v2429 = vld [vmem:[#allocation8 + $0x108] sm:$0xff]
    %v2430 = vld [vmem:[#allocation8 + $0x110] sm:$0xff]
    %v2431 = vld [vmem:[#allocation8 + $0x118] sm:$0xff]
    %v2432 = vld [vmem:[#allocation8 + $0x120] sm:$0xff]
    %v2433 = vld [vmem:[#allocation8 + $0x128] sm:$0xff]
    %v2434 = vld [vmem:[#allocation8 + $0x130] sm:$0xff]
    %v2435 = vld [vmem:[#allocation8 + $0x138] sm:$0xff]
    %v2436 = vld [vmem:[#allocation8 + $0x140] sm:$0xff]
    %v2437 = vld [vmem:[#allocation8 + $0x148] sm:$0xff]
    %v2438 = vld [vmem:[#allocation8 + $0x150] sm:$0xff]
    %v2439 = vld [vmem:[#allocation8 + $0x158] sm:$0xff]
    %v2440 = vld [vmem:[#allocation8 + $0x160] sm:$0xff]
    %v2441 = vld [vmem:[#allocation8 + $0x168] sm:$0xff]
    %v2442 = vld [vmem:[#allocation8 + $0x170] sm:$0xff]
    %v2443 = vld [vmem:[#allocation8 + $0x178] sm:$0xff]
    %v2444 = vld [vmem:[#allocation8 + $0x180] sm:$0xff]
    %v2445 = vld [vmem:[#allocation8 + $0x188] sm:$0xff]
    %v2446 = vld [vmem:[#allocation8 + $0x190] sm:$0xff]
    %v2447 = vld [vmem:[#allocation8 + $0x198] sm:$0xff]
    %v2448 = vld [vmem:[#allocation8 + $0x1a0] sm:$0xff]
    %v2449 = vld [vmem:[#allocation8 + $0x1a8] sm:$0xff]
    %v2450 = vld [vmem:[#allocation8 + $0x1b0] sm:$0xff]
    %v2451 = vld [vmem:[#allocation8 + $0x1b8] sm:$0xff]
    %v2452 = vld [vmem:[#allocation8 + $0x1c0] sm:$0xff]
    %v2453 = vld [vmem:[#allocation8 + $0x1c8] sm:$0xff]
    %v2454 = vld [vmem:[#allocation8 + $0x1d0] sm:$0xff]
    %v2455 = vld [vmem:[#allocation8 + $0x1d8] sm:$0xff]
    %v2456 = vld [vmem:[#allocation8 + $0x1e0] sm:$0xff]
    %v2457 = vld [vmem:[#allocation8 + $0x1e8] sm:$0xff]
    %v2458 = vld [vmem:[#allocation8 + $0x1f0] sm:$0xff]
    %v2459 = vld [vmem:[#allocation8 + $0x1f8] sm:$0xff]
    %2460 = vmatprep.subr.mxu0 %v2397
    %2461 = vmatpush1.msra.mxu0 %v2396
    %2462 = vmatprep.subr.mxu0 %v2401
    %2463 = vmatpush1.msra.mxu0 %v2400
    %2464 = vmatprep.subr.mxu0 %v2405
    %2465 = vmatpush1.msra.mxu0 %v2404
    %2466 = vmatprep.subr.mxu0 %v2409
    %2467 = vmatpush1.msra.mxu0 %v2408
    %2468 = vmatprep.subr.mxu0 %v2413
    %2469 = vmatpush1.msra.mxu0 %v2412
    %2470 = vmatprep.subr.mxu0 %v2417
    %2471 = vmatpush1.msra.mxu0 %v2416
    %2472 = vmatprep.subr.mxu0 %v2421
    %2473 = vmatpush1.msra.mxu0 %v2420
    %2474 = vmatprep.subr.mxu0 %v2425
    %2475 = vmatpush1.msra.mxu0 %v2424
    %2476 = vmatprep.subr.mxu0 %v2429
    %2477 = vmatpush1.msra.mxu0 %v2428
    %2478 = vmatprep.subr.mxu0 %v2433
    %2479 = vmatpush1.msra.mxu0 %v2432
    %2480 = vmatprep.subr.mxu0 %v2437
    %2481 = vmatpush1.msra.mxu0 %v2436
    %2482 = vmatprep.subr.mxu0 %v2441
    %2483 = vmatpush1.msra.mxu0 %v2440
    %2484 = vmatprep.subr.mxu0 %v2445
    %2485 = vmatpush1.msra.mxu0 %v2444
    %2486 = vmatprep.subr.mxu0 %v2449
    %2487 = vmatpush1.msra.mxu0 %v2448
    %2488 = vmatprep.subr.mxu0 %v2453
    %2489 = vmatpush1.msra.mxu0 %v2452
    %2490 = vmatprep.subr.mxu0 %v2457
    %2491 = vmatpush1.msra.mxu0 %v2456
    %2492 = vmatprep.subr.mxu0 0.0
    %2493 = vmatpush1.msra.mxu0 0.0
    %2494 = vmatprep.subr.mxu0 0.0
    %2495 = vmatpush1.msra.mxu0 0.0
    %2496 = vmatprep.subr.mxu0 0.0
    %2497 = vmatpush1.msra.mxu0 0.0
    %2498 = vmatprep.subr.mxu0 0.0
    %2499 = vmatpush1.msra.mxu0 0.0
    %2500 = vmatprep.subr.mxu0 0.0
    %2501 = vmatpush1.msra.mxu0 0.0
    %2502 = vmatprep.subr.mxu0 0.0
    %2503 = vmatpush1.msra.mxu0 0.0
    %2504 = vmatprep.subr.mxu0 0.0
    %2505 = vmatpush1.msra.mxu0 0.0
    %2506 = vmatprep.subr.mxu0 0.0
    %2507 = vmatpush1.msra.mxu0 0.0
    %2508 = vmatprep.subr.mxu0 0.0
    %2509 = vmatpush1.msra.mxu0 0.0
    %2510 = vmatprep.subr.mxu0 0.0
    %2511 = vmatpush1.msra.mxu0 0.0
    %2512 = vmatprep.subr.mxu0 0.0
    %2513 = vmatpush1.msra.mxu0 0.0
    %2514 = vmatprep.subr.mxu0 0.0
    %2515 = vmatpush1.msra.mxu0 0.0
    %2516 = vmatprep.subr.mxu0 0.0
    %2517 = vmatpush1.msra.mxu0 0.0
    %2518 = vmatprep.subr.mxu0 0.0
    %2519 = vmatpush1.msra.mxu0 0.0
    %2520 = vmatprep.subr.mxu0 0.0
    %2521 = vmatpush1.msra.mxu0 0.0
    %2522 = vmatprep.subr.mxu0 0.0
    %2523 = vmatpush1.msra.mxu0 0.0
    %2524 = vmatprep.mubr.f32.mxu0 0.0
    %2525 = vmatmul.mubr.f32.gmra.mrb[0].mxu0 %v2386
    %v2526 = vpop.f32.mrb[0].mxu0
    %v2527 = vadd.f32 0.0, %v2526
    %v2528 = vpop.f32.mrb[0].mxu0
    %v2529 = vadd.f32 0.0, %v2528
    %2530 = vdwg.mxu0
    %2531 = vmatprep.subr.mxu0 %v2399
    %2532 = vmatpush1.msra.mxu0 %v2398
    %2533 = vmatprep.subr.mxu0 %v2403
    %2534 = vmatpush1.msra.mxu0 %v2402
    %2535 = vmatprep.subr.mxu0 %v2407
    %2536 = vmatpush1.msra.mxu0 %v2406
    %2537 = vmatprep.subr.mxu0 %v2411
    %2538 = vmatpush1.msra.mxu0 %v2410
    %2539 = vmatprep.subr.mxu0 %v2415
    %2540 = vmatpush1.msra.mxu0 %v2414
    %2541 = vmatprep.subr.mxu0 %v2419
    %2542 = vmatpush1.msra.mxu0 %v2418
    %2543 = vmatprep.subr.mxu0 %v2423
    %2544 = vmatpush1.msra.mxu0 %v2422
    %2545 = vmatprep.subr.mxu0 %v2427
    %2546 = vmatpush1.msra.mxu0 %v2426
    %2547 = vmatprep.subr.mxu0 %v2431
    %2548 = vmatpush1.msra.mxu0 %v2430
    %2549 = vmatprep.subr.mxu0 %v2435
    %2550 = vmatpush1.msra.mxu0 %v2434
    %2551 = vmatprep.subr.mxu0 %v2439
    %2552 = vmatpush1.msra.mxu0 %v2438
    %2553 = vmatprep.subr.mxu0 %v2443
    %2554 = vmatpush1.msra.mxu0 %v2442
    %2555 = vmatprep.subr.mxu0 %v2447
    %2556 = vmatpush1.msra.mxu0 %v2446
    %2557 = vmatprep.subr.mxu0 %v2451
    %2558 = vmatpush1.msra.mxu0 %v2450
    %2559 = vmatprep.subr.mxu0 %v2455
    %2560 = vmatpush1.msra.mxu0 %v2454
    %2561 = vmatprep.subr.mxu0 %v2459
    %2562 = vmatpush1.msra.mxu0 %v2458
    %2563 = vmatprep.subr.mxu0 0.0
    %2564 = vmatpush1.msra.mxu0 0.0
    %2565 = vmatprep.subr.mxu0 0.0
    %2566 = vmatpush1.msra.mxu0 0.0
    %2567 = vmatprep.subr.mxu0 0.0
    %2568 = vmatpush1.msra.mxu0 0.0
    %2569 = vmatprep.subr.mxu0 0.0
    %2570 = vmatpush1.msra.mxu0 0.0
    %2571 = vmatprep.subr.mxu0 0.0
    %2572 = vmatpush1.msra.mxu0 0.0
    %2573 = vmatprep.subr.mxu0 0.0
    %2574 = vmatpush1.msra.mxu0 0.0
    %2575 = vmatprep.subr.mxu0 0.0
    %2576 = vmatpush1.msra.mxu0 0.0
    %2577 = vmatprep.subr.mxu0 0.0
    %2578 = vmatpush1.msra.mxu0 0.0
    %2579 = vmatprep.subr.mxu0 0.0
    %2580 = vmatpush1.msra.mxu0 0.0
    %2581 = vmatprep.subr.mxu0 0.0
    %2582 = vmatpush1.msra.mxu0 0.0
    %2583 = vmatprep.subr.mxu0 0.0
    %2584 = vmatpush1.msra.mxu0 0.0
    %2585 = vmatprep.subr.mxu0 0.0
    %2586 = vmatpush1.msra.mxu0 0.0
    %2587 = vmatprep.subr.mxu0 0.0
    %2588 = vmatpush1.msra.mxu0 0.0
    %2589 = vmatprep.subr.mxu0 0.0
    %2590 = vmatpush1.msra.mxu0 0.0
    %2591 = vmatprep.subr.mxu0 0.0
    %2592 = vmatpush1.msra.mxu0 0.0
    %2593 = vmatprep.subr.mxu0 0.0
    %2594 = vmatpush1.msra.mxu0 0.0
    %2595 = vmatprep.mubr.f32.mxu0 0.0
    %2596 = vmatmul.mubr.f32.gmra.mrb[0].mxu0 %v2386
    %v2597 = vpop.f32.mrb[0].mxu0
    %v2598 = vadd.f32 0.0, %v2597
    %v2599 = vpop.f32.mrb[0].mxu0
    %v2600 = vadd.f32 0.0, %v2599
    %2601 = vdwg.mxu0
    %v2602 = vadd.f32 %v2392, %v2527
    %v2603 = vadd.f32 %v2393, %v2529
    %v2604 = vadd.f32 %v2394, %v2598
    %v2605 = vadd.f32 %v2395, %v2600
    %v2606 = vxor.u32 %v2602, 2147483648
    %v2607 = vxor.u32 %v2603, 2147483648
    %v2608 = vxor.u32 %v2604, 2147483648
    %v2609 = vmul.f32 %v2606, 1.442695
    %v2610 = vpow.pop %v2609
    %v2611 = vmul.f32 %v2607, 1.442695
    %v2612 = vpow.pop %v2611
    %v2613 = vmul.f32 %v2608, 1.442695
    %v2614 = vpow.pop %v2613
    %v2615 = vadd.f32 %v2610, 1.0
    %v2616 = vadd.f32 %v2612, 1.0
    %v2617 = vadd.f32 %v2614, 1.0
    %v2618 = vrcp.pop %v2615
    %v2619 = vmul.f32 1.0, %v2618
    %v2620 = vrcp.pop %v2616
    %v2621 = vmul.f32 1.0, %v2620
    %v2622 = vrcp.pop %v2617
    %v2623 = vmul.f32 1.0, %v2622
    %v2624 = vtanh.pop %v2605
    %v2625 = vmul.f32 %v2621, %v2384
    %v2626 = vmul.f32 %v2619, %v2624
    %v2627 = vadd.f32 %v2625, %v2626
    %v2628 = vtanh.pop %v2627
    %v2629 = vmul.f32 %v2623, %v2628
    %s2630 = scalar_lea.vmem [#allocation4], 56
    %2631 = vst [vmem:[%s2630] sm:$0xff] %v2629
    %v2632 = vld [vmem:[#allocation4] sm:$0xff]
    %v2633 = vld [vmem:[#allocation4 + $0x8] sm:$0xff]
    %v2634 = vld [vmem:[#allocation4 + $0x10] sm:$0xff]
    %v2635 = vld [vmem:[#allocation4 + $0x18] sm:$0xff]
    %v2636 = vld [vmem:[#allocation4 + $0x20] sm:$0xff]
    %v2637 = vld [vmem:[#allocation4 + $0x28] sm:$0xff]
    %v2638 = vld [vmem:[#allocation4 + $0x30] sm:$0xff]
    %v2639 = vld [vmem:[#allocation4 + $0x38] sm:$0xff]
    %v2640 = vld [vmem:[#allocation9] sm:$0xff]
    %v2641 = vld [vmem:[#allocation9 + $0x8] sm:$0xff]
    %v2642 = vld [vmem:[#allocation9 + $0x10] sm:$0xff]
    %v2643 = vld [vmem:[#allocation9 + $0x18] sm:$0xff]
    %v2644 = vld [vmem:[#allocation9 + $0x20] sm:$0xff]
    %v2645 = vld [vmem:[#allocation9 + $0x28] sm:$0xff]
    %v2646 = vld [vmem:[#allocation9 + $0x30] sm:$0xff]
    %v2647 = vld [vmem:[#allocation9 + $0x38] sm:$0xff]
    %v2648 = vld [vmem:[#allocation9 + $0x40] sm:$0xff]
    %v2649 = vld [vmem:[#allocation9 + $0x48] sm:$0xff]
    %v2650 = vld [vmem:[#allocation9 + $0x50] sm:$0xff]
    %v2651 = vld [vmem:[#allocation9 + $0x58] sm:$0xff]
    %v2652 = vld [vmem:[#allocation9 + $0x60] sm:$0xff]
    %v2653 = vld [vmem:[#allocation9 + $0x68] sm:$0xff]
    %v2654 = vld [vmem:[#allocation9 + $0x70] sm:$0xff]
    %v2655 = vld [vmem:[#allocation9 + $0x78] sm:$0xff]
    %v2656 = vld [vmem:[#allocation9 + $0x80] sm:$0xff]
    %v2657 = vld [vmem:[#allocation9 + $0x88] sm:$0xff]
    %v2658 = vld [vmem:[#allocation9 + $0x90] sm:$0xff]
    %v2659 = vld [vmem:[#allocation9 + $0x98] sm:$0xff]
    %v2660 = vld [vmem:[#allocation9 + $0xa0] sm:$0xff]
    %v2661 = vld [vmem:[#allocation9 + $0xa8] sm:$0xff]
    %v2662 = vld [vmem:[#allocation9 + $0xb0] sm:$0xff]
    %v2663 = vld [vmem:[#allocation9 + $0xb8] sm:$0xff]
    %v2664 = vld [vmem:[#allocation9 + $0xc0] sm:$0xff]
    %v2665 = vld [vmem:[#allocation9 + $0xc8] sm:$0xff]
    %v2666 = vld [vmem:[#allocation9 + $0xd0] sm:$0xff]
    %v2667 = vld [vmem:[#allocation9 + $0xd8] sm:$0xff]
    %v2668 = vld [vmem:[#allocation9 + $0xe0] sm:$0xff]
    %v2669 = vld [vmem:[#allocation9 + $0xe8] sm:$0xff]
    %v2670 = vld [vmem:[#allocation9 + $0xf0] sm:$0xff]
    %v2671 = vld [vmem:[#allocation9 + $0xf8] sm:$0xff]
    %v2672 = vld [vmem:[#allocation9 + $0x100] sm:$0xff]
    %v2673 = vld [vmem:[#allocation9 + $0x108] sm:$0xff]
    %v2674 = vld [vmem:[#allocation9 + $0x110] sm:$0xff]
    %v2675 = vld [vmem:[#allocation9 + $0x118] sm:$0xff]
    %v2676 = vld [vmem:[#allocation9 + $0x120] sm:$0xff]
    %v2677 = vld [vmem:[#allocation9 + $0x128] sm:$0xff]
    %v2678 = vld [vmem:[#allocation9 + $0x130] sm:$0xff]
    %v2679 = vld [vmem:[#allocation9 + $0x138] sm:$0xff]
    %v2680 = vld [vmem:[#allocation9 + $0x140] sm:$0xff]
    %v2681 = vld [vmem:[#allocation9 + $0x148] sm:$0xff]
    %v2682 = vld [vmem:[#allocation9 + $0x150] sm:$0xff]
    %v2683 = vld [vmem:[#allocation9 + $0x158] sm:$0xff]
    %v2684 = vld [vmem:[#allocation9 + $0x160] sm:$0xff]
    %v2685 = vld [vmem:[#allocation9 + $0x168] sm:$0xff]
    %v2686 = vld [vmem:[#allocation9 + $0x170] sm:$0xff]
    %v2687 = vld [vmem:[#allocation9 + $0x178] sm:$0xff]
    %v2688 = vld [vmem:[#allocation9 + $0x180] sm:$0xff]
    %v2689 = vld [vmem:[#allocation9 + $0x188] sm:$0xff]
    %v2690 = vld [vmem:[#allocation9 + $0x190] sm:$0xff]
    %v2691 = vld [vmem:[#allocation9 + $0x198] sm:$0xff]
    %v2692 = vld [vmem:[#allocation9 + $0x1a0] sm:$0xff]
    %v2693 = vld [vmem:[#allocation9 + $0x1a8] sm:$0xff]
    %v2694 = vld [vmem:[#allocation9 + $0x1b0] sm:$0xff]
    %v2695 = vld [vmem:[#allocation9 + $0x1b8] sm:$0xff]
    %v2696 = vld [vmem:[#allocation9 + $0x1c0] sm:$0xff]
    %v2697 = vld [vmem:[#allocation9 + $0x1c8] sm:$0xff]
    %v2698 = vld [vmem:[#allocation9 + $0x1d0] sm:$0xff]
    %v2699 = vld [vmem:[#allocation9 + $0x1d8] sm:$0xff]
    %v2700 = vld [vmem:[#allocation9 + $0x1e0] sm:$0xff]
    %v2701 = vld [vmem:[#allocation9 + $0x1e8] sm:$0xff]
    %v2702 = vld [vmem:[#allocation9 + $0x1f0] sm:$0xff]
    %v2703 = vld [vmem:[#allocation9 + $0x1f8] sm:$0xff]
    %v2704 = vld [vmem:[%s7] sm:$0xf]
    %v2706 = vlaneseq
    %v2707 = vshrl.u32 %v2706, 7
    %v2708 = vsub.s32 0, %v2707
    %v2709 = vrot.slane %v2704, %v2708
    %v2710 = vlaneseq
    %v2711 = vshrl.u32 %v2710, 7
    %v2712 = vsub.s32 1, %v2711
    %v2713 = vrot.slane %v2704, %v2712
    %v2714 = vlaneseq
    %v2715 = vshrl.u32 %v2714, 7
    %v2716 = vsub.s32 2, %v2715
    %v2717 = vrot.slane %v2704, %v2716
    %v2718 = vlaneseq
    %v2719 = vshrl.u32 %v2718, 7
    %v2720 = vsub.s32 3, %v2719
    %v2721 = vrot.slane %v2704, %v2720
    %2726 = vmatprep.subr.mxu0 %v2641
    %2727 = vmatpush1.msra.mxu0 %v2640
    %2728 = vmatprep.subr.mxu0 %v2645
    %2729 = vmatpush1.msra.mxu0 %v2644
    %2730 = vmatprep.subr.mxu0 %v2649
    %2731 = vmatpush1.msra.mxu0 %v2648
    %2732 = vmatprep.subr.mxu0 %v2653
    %2733 = vmatpush1.msra.mxu0 %v2652
    %2734 = vmatprep.subr.mxu0 %v2657
    %2735 = vmatpush1.msra.mxu0 %v2656
    %2736 = vmatprep.subr.mxu0 %v2661
    %2737 = vmatpush1.msra.mxu0 %v2660
    %2738 = vmatprep.subr.mxu0 %v2665
    %2739 = vmatpush1.msra.mxu0 %v2664
    %2740 = vmatprep.subr.mxu0 %v2669
    %2741 = vmatpush1.msra.mxu0 %v2668
    %2742 = vmatprep.subr.mxu0 %v2673
    %2743 = vmatpush1.msra.mxu0 %v2672
    %2744 = vmatprep.subr.mxu0 %v2677
    %2745 = vmatpush1.msra.mxu0 %v2676
    %2746 = vmatprep.subr.mxu0 %v2681
    %2747 = vmatpush1.msra.mxu0 %v2680
    %2748 = vmatprep.subr.mxu0 %v2685
    %2749 = vmatpush1.msra.mxu0 %v2684
    %2750 = vmatprep.subr.mxu0 %v2689
    %2751 = vmatpush1.msra.mxu0 %v2688
    %2752 = vmatprep.subr.mxu0 %v2693
    %2753 = vmatpush1.msra.mxu0 %v2692
    %2754 = vmatprep.subr.mxu0 %v2697
    %2755 = vmatpush1.msra.mxu0 %v2696
    %2756 = vmatprep.subr.mxu0 %v2701
    %2757 = vmatpush1.msra.mxu0 %v2700
    %2758 = vmatprep.subr.mxu0 0.0
    %2759 = vmatpush1.msra.mxu0 0.0
    %2760 = vmatprep.subr.mxu0 0.0
    %2761 = vmatpush1.msra.mxu0 0.0
    %2762 = vmatprep.subr.mxu0 0.0
    %2763 = vmatpush1.msra.mxu0 0.0
    %2764 = vmatprep.subr.mxu0 0.0
    %2765 = vmatpush1.msra.mxu0 0.0
    %2766 = vmatprep.subr.mxu0 0.0
    %2767 = vmatpush1.msra.mxu0 0.0
    %2768 = vmatprep.subr.mxu0 0.0
    %2769 = vmatpush1.msra.mxu0 0.0
    %2770 = vmatprep.subr.mxu0 0.0
    %2771 = vmatpush1.msra.mxu0 0.0
    %2772 = vmatprep.subr.mxu0 0.0
    %2773 = vmatpush1.msra.mxu0 0.0
    %2774 = vmatprep.subr.mxu0 0.0
    %2775 = vmatpush1.msra.mxu0 0.0
    %2776 = vmatprep.subr.mxu0 0.0
    %2777 = vmatpush1.msra.mxu0 0.0
    %2778 = vmatprep.subr.mxu0 0.0
    %2779 = vmatpush1.msra.mxu0 0.0
    %2780 = vmatprep.subr.mxu0 0.0
    %2781 = vmatpush1.msra.mxu0 0.0
    %2782 = vmatprep.subr.mxu0 0.0
    %2783 = vmatpush1.msra.mxu0 0.0
    %2784 = vmatprep.subr.mxu0 0.0
    %2785 = vmatpush1.msra.mxu0 0.0
    %2786 = vmatprep.subr.mxu0 0.0
    %2787 = vmatpush1.msra.mxu0 0.0
    %2788 = vmatprep.subr.mxu0 0.0
    %2789 = vmatpush1.msra.mxu0 0.0
    %2790 = vmatprep.mubr.f32.mxu0 0.0
    %2791 = vmatmul.mubr.f32.gmra.mrb[0].mxu0 %v2632
    %v2792 = vpop.f32.mrb[0].mxu0
    %v2793 = vadd.f32 %v2709, %v2792
    %v2794 = vpop.f32.mrb[0].mxu0
    %v2795 = vadd.f32 %v2713, %v2794
    %2796 = vmatprep.mubr.f32.mxu0 0.0
    %2797 = vmatmul.mubr.f32.gmra.mrb[0].mxu0 %v2633
    %v2798 = vpop.f32.mrb[0].mxu0
    %v2799 = vadd.f32 %v2709, %v2798
    %v2800 = vpop.f32.mrb[0].mxu0
    %v2801 = vadd.f32 %v2713, %v2800
    %2802 = vmatprep.mubr.f32.mxu0 0.0
    %2803 = vmatmul.mubr.f32.gmra.mrb[0].mxu0 %v2634
    %v2804 = vpop.f32.mrb[0].mxu0
    %v2805 = vadd.f32 %v2709, %v2804
    %v2806 = vpop.f32.mrb[0].mxu0
    %v2807 = vadd.f32 %v2713, %v2806
    %2808 = vmatprep.mubr.f32.mxu0 0.0
    %2809 = vmatmul.mubr.f32.gmra.mrb[0].mxu0 %v2635
    %v2810 = vpop.f32.mrb[0].mxu0
    %v2811 = vadd.f32 %v2709, %v2810
    %v2812 = vpop.f32.mrb[0].mxu0
    %v2813 = vadd.f32 %v2713, %v2812
    %2814 = vmatprep.mubr.f32.mxu0 0.0
    %2815 = vmatmul.mubr.f32.gmra.mrb[0].mxu0 %v2636
    %v2816 = vpop.f32.mrb[0].mxu0
    %v2817 = vadd.f32 %v2709, %v2816
    %v2818 = vpop.f32.mrb[0].mxu0
    %v2819 = vadd.f32 %v2713, %v2818
    %2820 = vmatprep.mubr.f32.mxu0 0.0
    %2821 = vmatmul.mubr.f32.gmra.mrb[0].mxu0 %v2637
    %v2822 = vpop.f32.mrb[0].mxu0
    %v2823 = vadd.f32 %v2709, %v2822
    %v2824 = vpop.f32.mrb[0].mxu0
    %v2825 = vadd.f32 %v2713, %v2824
    %2826 = vmatprep.mubr.f32.mxu0 0.0
    %2827 = vmatmul.mubr.f32.gmra.mrb[0].mxu0 %v2638
    %v2828 = vpop.f32.mrb[0].mxu0
    %v2829 = vadd.f32 %v2709, %v2828
    %v2830 = vpop.f32.mrb[0].mxu0
    %v2831 = vadd.f32 %v2713, %v2830
    %2832 = vmatprep.mubr.f32.mxu0 0.0
    %2833 = vmatmul.mubr.f32.gmra.mrb[0].mxu0 %v2639
    %v2834 = vpop.f32.mrb[0].mxu0
    %v2835 = vadd.f32 %v2709, %v2834
    %v2836 = vpop.f32.mrb[0].mxu0
    %v2837 = vadd.f32 %v2713, %v2836
    %2838 = vdwg.mxu0
    %2839 = vmatprep.subr.mxu0 %v2643
    %2840 = vmatpush1.msra.mxu0 %v2642
    %2841 = vmatprep.subr.mxu0 %v2647
    %2842 = vmatpush1.msra.mxu0 %v2646
    %2843 = vmatprep.subr.mxu0 %v2651
    %2844 = vmatpush1.msra.mxu0 %v2650
    %2845 = vmatprep.subr.mxu0 %v2655
    %2846 = vmatpush1.msra.mxu0 %v2654
    %2847 = vmatprep.subr.mxu0 %v2659
    %2848 = vmatpush1.msra.mxu0 %v2658
    %2849 = vmatprep.subr.mxu0 %v2663
    %2850 = vmatpush1.msra.mxu0 %v2662
    %2851 = vmatprep.subr.mxu0 %v2667
    %2852 = vmatpush1.msra.mxu0 %v2666
    %2853 = vmatprep.subr.mxu0 %v2671
    %2854 = vmatpush1.msra.mxu0 %v2670
    %2855 = vmatprep.subr.mxu0 %v2675
    %2856 = vmatpush1.msra.mxu0 %v2674
    %2857 = vmatprep.subr.mxu0 %v2679
    %2858 = vmatpush1.msra.mxu0 %v2678
    %2859 = vmatprep.subr.mxu0 %v2683
    %2860 = vmatpush1.msra.mxu0 %v2682
    %2861 = vmatprep.subr.mxu0 %v2687
    %2862 = vmatpush1.msra.mxu0 %v2686
    %2863 = vmatprep.subr.mxu0 %v2691
    %2864 = vmatpush1.msra.mxu0 %v2690
    %2865 = vmatprep.subr.mxu0 %v2695
    %2866 = vmatpush1.msra.mxu0 %v2694
    %2867 = vmatprep.subr.mxu0 %v2699
    %2868 = vmatpush1.msra.mxu0 %v2698
    %2869 = vmatprep.subr.mxu0 %v2703
    %2870 = vmatpush1.msra.mxu0 %v2702
    %2871 = vmatprep.subr.mxu0 0.0
    %2872 = vmatpush1.msra.mxu0 0.0
    %2873 = vmatprep.subr.mxu0 0.0
    %2874 = vmatpush1.msra.mxu0 0.0
    %2875 = vmatprep.subr.mxu0 0.0
    %2876 = vmatpush1.msra.mxu0 0.0
    %2877 = vmatprep.subr.mxu0 0.0
    %2878 = vmatpush1.msra.mxu0 0.0
    %2879 = vmatprep.subr.mxu0 0.0
    %2880 = vmatpush1.msra.mxu0 0.0
    %2881 = vmatprep.subr.mxu0 0.0
    %2882 = vmatpush1.msra.mxu0 0.0
    %2883 = vmatprep.subr.mxu0 0.0
    %2884 = vmatpush1.msra.mxu0 0.0
    %2885 = vmatprep.subr.mxu0 0.0
    %2886 = vmatpush1.msra.mxu0 0.0
    %2887 = vmatprep.subr.mxu0 0.0
    %2888 = vmatpush1.msra.mxu0 0.0
    %2889 = vmatprep.subr.mxu0 0.0
    %2890 = vmatpush1.msra.mxu0 0.0
    %2891 = vmatprep.subr.mxu0 0.0
    %2892 = vmatpush1.msra.mxu0 0.0
    %2893 = vmatprep.subr.mxu0 0.0
    %2894 = vmatpush1.msra.mxu0 0.0
    %2895 = vmatprep.subr.mxu0 0.0
    %2896 = vmatpush1.msra.mxu0 0.0
    %2897 = vmatprep.subr.mxu0 0.0
    %2898 = vmatpush1.msra.mxu0 0.0
    %2899 = vmatprep.subr.mxu0 0.0
    %2900 = vmatpush1.msra.mxu0 0.0
    %2901 = vmatprep.subr.mxu0 0.0
    %2902 = vmatpush1.msra.mxu0 0.0
    %2903 = vmatprep.mubr.f32.mxu0 0.0
    %2904 = vmatmul.mubr.f32.gmra.mrb[0].mxu0 %v2632
    %v2905 = vpop.f32.mrb[0].mxu0
    %v2906 = vadd.f32 %v2717, %v2905
    %v2907 = vpop.f32.mrb[0].mxu0
    %v2908 = vadd.f32 %v2721, %v2907
    %2909 = vmatprep.mubr.f32.mxu0 0.0
    %2910 = vmatmul.mubr.f32.gmra.mrb[0].mxu0 %v2633
    %v2911 = vpop.f32.mrb[0].mxu0
    %v2912 = vadd.f32 %v2717, %v2911
    %v2913 = vpop.f32.mrb[0].mxu0
    %v2914 = vadd.f32 %v2721, %v2913
    %2915 = vmatprep.mubr.f32.mxu0 0.0
    %2916 = vmatmul.mubr.f32.gmra.mrb[0].mxu0 %v2634
    %v2917 = vpop.f32.mrb[0].mxu0
    %v2918 = vadd.f32 %v2717, %v2917
    %v2919 = vpop.f32.mrb[0].mxu0
    %v2920 = vadd.f32 %v2721, %v2919
    %2921 = vmatprep.mubr.f32.mxu0 0.0
    %2922 = vmatmul.mubr.f32.gmra.mrb[0].mxu0 %v2635
    %v2923 = vpop.f32.mrb[0].mxu0
    %v2924 = vadd.f32 %v2717, %v2923
    %v2925 = vpop.f32.mrb[0].mxu0
    %v2926 = vadd.f32 %v2721, %v2925
    %2927 = vmatprep.mubr.f32.mxu0 0.0
    %2928 = vmatmul.mubr.f32.gmra.mrb[0].mxu0 %v2636
    %v2929 = vpop.f32.mrb[0].mxu0
    %v2930 = vadd.f32 %v2717, %v2929
    %v2931 = vpop.f32.mrb[0].mxu0
    %v2932 = vadd.f32 %v2721, %v2931
    %2933 = vmatprep.mubr.f32.mxu0 0.0
    %2934 = vmatmul.mubr.f32.gmra.mrb[0].mxu0 %v2637
    %v2935 = vpop.f32.mrb[0].mxu0
    %v2936 = vadd.f32 %v2717, %v2935
    %v2937 = vpop.f32.mrb[0].mxu0
    %v2938 = vadd.f32 %v2721, %v2937
    %2939 = vmatprep.mubr.f32.mxu0 0.0
    %2940 = vmatmul.mubr.f32.gmra.mrb[0].mxu0 %v2638
    %v2941 = vpop.f32.mrb[0].mxu0
    %v2942 = vadd.f32 %v2717, %v2941
    %v2943 = vpop.f32.mrb[0].mxu0
    %v2944 = vadd.f32 %v2721, %v2943
    %2945 = vmatprep.mubr.f32.mxu0 0.0
    %2946 = vmatmul.mubr.f32.gmra.mrb[0].mxu0 %v2639
    %v2947 = vpop.f32.mrb[0].mxu0
    %v2948 = vadd.f32 %v2717, %v2947
    %v2949 = vpop.f32.mrb[0].mxu0
    %v2950 = vadd.f32 %v2721, %v2949
    %2951 = vdwg.mxu0
    %2952 = vst [vmem:[#allocation3] sm:$0xff] %v2793
    %2953 = vst [vmem:[#allocation3 + $0x8] sm:$0xff] %v2795
    %2954 = vst [vmem:[#allocation3 + $0x10] sm:$0xff] %v2906
    %2955 = vst [vmem:[#allocation3 + $0x18] sm:$0xff] %v2908
    %2956 = vst [vmem:[#allocation3 + $0x20] sm:$0xff] %v2799
    %2957 = vst [vmem:[#allocation3 + $0x28] sm:$0xff] %v2801
    %2958 = vst [vmem:[#allocation3 + $0x30] sm:$0xff] %v2912
    %2959 = vst [vmem:[#allocation3 + $0x38] sm:$0xff] %v2914
    %2960 = vst [vmem:[#allocation3 + $0x40] sm:$0xff] %v2805
    %2961 = vst [vmem:[#allocation3 + $0x48] sm:$0xff] %v2807
    %2962 = vst [vmem:[#allocation3 + $0x50] sm:$0xff] %v2918
    %2963 = vst [vmem:[#allocation3 + $0x58] sm:$0xff] %v2920
    %2964 = vst [vmem:[#allocation3 + $0x60] sm:$0xff] %v2811
    %2965 = vst [vmem:[#allocation3 + $0x68] sm:$0xff] %v2813
    %2966 = vst [vmem:[#allocation3 + $0x70] sm:$0xff] %v2924
    %2967 = vst [vmem:[#allocation3 + $0x78] sm:$0xff] %v2926
    %2968 = vst [vmem:[#allocation3 + $0x80] sm:$0xff] %v2817
    %2969 = vst [vmem:[#allocation3 + $0x88] sm:$0xff] %v2819
    %2970 = vst [vmem:[#allocation3 + $0x90] sm:$0xff] %v2930
    %2971 = vst [vmem:[#allocation3 + $0x98] sm:$0xff] %v2932
    %2972 = vst [vmem:[#allocation3 + $0xa0] sm:$0xff] %v2823
    %2973 = vst [vmem:[#allocation3 + $0xa8] sm:$0xff] %v2825
    %2974 = vst [vmem:[#allocation3 + $0xb0] sm:$0xff] %v2936
    %2975 = vst [vmem:[#allocation3 + $0xb8] sm:$0xff] %v2938
    %2976 = vst [vmem:[#allocation3 + $0xc0] sm:$0xff] %v2829
    %2977 = vst [vmem:[#allocation3 + $0xc8] sm:$0xff] %v2831
    %2978 = vst [vmem:[#allocation3 + $0xd0] sm:$0xff] %v2942
    %2979 = vst [vmem:[#allocation3 + $0xd8] sm:$0xff] %v2944
    %2980 = vst [vmem:[#allocation3 + $0xe0] sm:$0xff] %v2835
    %2981 = vst [vmem:[#allocation3 + $0xe8] sm:$0xff] %v2837
    %2982 = vst [vmem:[#allocation3 + $0xf0] sm:$0xff] %v2948
    %2983 = vst [vmem:[#allocation3 + $0xf8] sm:$0xff] %v2950
    %v2984 = vld [vmem:[%s691] sm:$0xff]
    %v2985 = vld [vmem:[%s691 + $0x8] sm:$0xff]
    %v2986 = vld [vmem:[%s691 + $0x10] sm:$0xff]
    %v2987 = vld [vmem:[%s691 + $0x18] sm:$0xff]
    %v2988 = vld [vmem:[#allocation11] sm:$0xff]
    %v2989 = vld [vmem:[#allocation11 + $0x8] sm:$0xff]
    %v2990 = vld [vmem:[#allocation11 + $0x10] sm:$0xff]
    %v2991 = vld [vmem:[#allocation11 + $0x18] sm:$0xff]
    %v2992 = vld [vmem:[#allocation11 + $0x20] sm:$0xff]
    %v2993 = vld [vmem:[#allocation11 + $0x28] sm:$0xff]
    %v2994 = vld [vmem:[#allocation11 + $0x30] sm:$0xff]
    %v2995 = vld [vmem:[#allocation11 + $0x38] sm:$0xff]
    %v2996 = vld [vmem:[#allocation11 + $0x40] sm:$0xff]
    %v2997 = vld [vmem:[#allocation11 + $0x48] sm:$0xff]
    %v2998 = vld [vmem:[#allocation11 + $0x50] sm:$0xff]
    %v2999 = vld [vmem:[#allocation11 + $0x58] sm:$0xff]
    %v3000 = vld [vmem:[#allocation11 + $0x60] sm:$0xff]
    %v3001 = vld [vmem:[#allocation11 + $0x68] sm:$0xff]
    %v3002 = vld [vmem:[#allocation11 + $0x70] sm:$0xff]
    %v3003 = vld [vmem:[#allocation11 + $0x78] sm:$0xff]
    %v3004 = vld [vmem:[#allocation11 + $0x80] sm:$0xff]
    %v3005 = vld [vmem:[#allocation11 + $0x88] sm:$0xff]
    %v3006 = vld [vmem:[#allocation11 + $0x90] sm:$0xff]
    %v3007 = vld [vmem:[#allocation11 + $0x98] sm:$0xff]
    %v3008 = vld [vmem:[#allocation11 + $0xa0] sm:$0xff]
    %v3009 = vld [vmem:[#allocation11 + $0xa8] sm:$0xff]
    %v3010 = vld [vmem:[#allocation11 + $0xb0] sm:$0xff]
    %v3011 = vld [vmem:[#allocation11 + $0xb8] sm:$0xff]
    %v3012 = vld [vmem:[#allocation11 + $0xc0] sm:$0xff]
    %v3013 = vld [vmem:[#allocation11 + $0xc8] sm:$0xff]
    %v3014 = vld [vmem:[#allocation11 + $0xd0] sm:$0xff]
    %v3015 = vld [vmem:[#allocation11 + $0xd8] sm:$0xff]
    %v3016 = vld [vmem:[#allocation11 + $0xe0] sm:$0xff]
    %v3017 = vld [vmem:[#allocation11 + $0xe8] sm:$0xff]
    %v3018 = vld [vmem:[#allocation11 + $0xf0] sm:$0xff]
    %v3019 = vld [vmem:[#allocation11 + $0xf8] sm:$0xff]
    %v3020 = vld [vmem:[#allocation11 + $0x100] sm:$0xff]
    %v3021 = vld [vmem:[#allocation11 + $0x108] sm:$0xff]
    %v3022 = vld [vmem:[#allocation11 + $0x110] sm:$0xff]
    %v3023 = vld [vmem:[#allocation11 + $0x118] sm:$0xff]
    %v3024 = vld [vmem:[#allocation11 + $0x120] sm:$0xff]
    %v3025 = vld [vmem:[#allocation11 + $0x128] sm:$0xff]
    %v3026 = vld [vmem:[#allocation11 + $0x130] sm:$0xff]
    %v3027 = vld [vmem:[#allocation11 + $0x138] sm:$0xff]
    %v3028 = vld [vmem:[#allocation11 + $0x140] sm:$0xff]
    %v3029 = vld [vmem:[#allocation11 + $0x148] sm:$0xff]
    %v3030 = vld [vmem:[#allocation11 + $0x150] sm:$0xff]
    %v3031 = vld [vmem:[#allocation11 + $0x158] sm:$0xff]
    %v3032 = vld [vmem:[#allocation11 + $0x160] sm:$0xff]
    %v3033 = vld [vmem:[#allocation11 + $0x168] sm:$0xff]
    %v3034 = vld [vmem:[#allocation11 + $0x170] sm:$0xff]
    %v3035 = vld [vmem:[#allocation11 + $0x178] sm:$0xff]
    %v3036 = vld [vmem:[#allocation11 + $0x180] sm:$0xff]
    %v3037 = vld [vmem:[#allocation11 + $0x188] sm:$0xff]
    %v3038 = vld [vmem:[#allocation11 + $0x190] sm:$0xff]
    %v3039 = vld [vmem:[#allocation11 + $0x198] sm:$0xff]
    %v3040 = vld [vmem:[#allocation11 + $0x1a0] sm:$0xff]
    %v3041 = vld [vmem:[#allocation11 + $0x1a8] sm:$0xff]
    %v3042 = vld [vmem:[#allocation11 + $0x1b0] sm:$0xff]
    %v3043 = vld [vmem:[#allocation11 + $0x1b8] sm:$0xff]
    %v3044 = vld [vmem:[#allocation11 + $0x1c0] sm:$0xff]
    %v3045 = vld [vmem:[#allocation11 + $0x1c8] sm:$0xff]
    %v3046 = vld [vmem:[#allocation11 + $0x1d0] sm:$0xff]
    %v3047 = vld [vmem:[#allocation11 + $0x1d8] sm:$0xff]
    %v3048 = vld [vmem:[#allocation11 + $0x1e0] sm:$0xff]
    %v3049 = vld [vmem:[#allocation11 + $0x1e8] sm:$0xff]
    %v3050 = vld [vmem:[#allocation11 + $0x1f0] sm:$0xff]
    %v3051 = vld [vmem:[#allocation11 + $0x1f8] sm:$0xff]
    %3052 = vmatprep.subr.mxu0 %v2989
    %3053 = vmatpush1.msra.mxu0 %v2988
    %3054 = vmatprep.subr.mxu0 %v2993
    %3055 = vmatpush1.msra.mxu0 %v2992
    %3056 = vmatprep.subr.mxu0 %v2997
    %3057 = vmatpush1.msra.mxu0 %v2996
    %3058 = vmatprep.subr.mxu0 %v3001
    %3059 = vmatpush1.msra.mxu0 %v3000
    %3060 = vmatprep.subr.mxu0 %v3005
    %3061 = vmatpush1.msra.mxu0 %v3004
    %3062 = vmatprep.subr.mxu0 %v3009
    %3063 = vmatpush1.msra.mxu0 %v3008
    %3064 = vmatprep.subr.mxu0 %v3013
    %3065 = vmatpush1.msra.mxu0 %v3012
    %3066 = vmatprep.subr.mxu0 %v3017
    %3067 = vmatpush1.msra.mxu0 %v3016
    %3068 = vmatprep.subr.mxu0 %v3021
    %3069 = vmatpush1.msra.mxu0 %v3020
    %3070 = vmatprep.subr.mxu0 %v3025
    %3071 = vmatpush1.msra.mxu0 %v3024
    %3072 = vmatprep.subr.mxu0 %v3029
    %3073 = vmatpush1.msra.mxu0 %v3028
    %3074 = vmatprep.subr.mxu0 %v3033
    %3075 = vmatpush1.msra.mxu0 %v3032
    %3076 = vmatprep.subr.mxu0 %v3037
    %3077 = vmatpush1.msra.mxu0 %v3036
    %3078 = vmatprep.subr.mxu0 %v3041
    %3079 = vmatpush1.msra.mxu0 %v3040
    %3080 = vmatprep.subr.mxu0 %v3045
    %3081 = vmatpush1.msra.mxu0 %v3044
    %3082 = vmatprep.subr.mxu0 %v3049
    %3083 = vmatpush1.msra.mxu0 %v3048
    %3084 = vmatprep.subr.mxu0 0.0
    %3085 = vmatpush1.msra.mxu0 0.0
    %3086 = vmatprep.subr.mxu0 0.0
    %3087 = vmatpush1.msra.mxu0 0.0
    %3088 = vmatprep.subr.mxu0 0.0
    %3089 = vmatpush1.msra.mxu0 0.0
    %3090 = vmatprep.subr.mxu0 0.0
    %3091 = vmatpush1.msra.mxu0 0.0
    %3092 = vmatprep.subr.mxu0 0.0
    %3093 = vmatpush1.msra.mxu0 0.0
    %3094 = vmatprep.subr.mxu0 0.0
    %3095 = vmatpush1.msra.mxu0 0.0
    %3096 = vmatprep.subr.mxu0 0.0
    %3097 = vmatpush1.msra.mxu0 0.0
    %3098 = vmatprep.subr.mxu0 0.0
    %3099 = vmatpush1.msra.mxu0 0.0
    %3100 = vmatprep.subr.mxu0 0.0
    %3101 = vmatpush1.msra.mxu0 0.0
    %3102 = vmatprep.subr.mxu0 0.0
    %3103 = vmatpush1.msra.mxu0 0.0
    %3104 = vmatprep.subr.mxu0 0.0
    %3105 = vmatpush1.msra.mxu0 0.0
    %3106 = vmatprep.subr.mxu0 0.0
    %3107 = vmatpush1.msra.mxu0 0.0
    %3108 = vmatprep.subr.mxu0 0.0
    %3109 = vmatpush1.msra.mxu0 0.0
    %3110 = vmatprep.subr.mxu0 0.0
    %3111 = vmatpush1.msra.mxu0 0.0
    %3112 = vmatprep.subr.mxu0 0.0
    %3113 = vmatpush1.msra.mxu0 0.0
    %3114 = vmatprep.subr.mxu0 0.0
    %3115 = vmatpush1.msra.mxu0 0.0
    %3116 = vmatprep.mubr.f32.mxu0 0.0
    %3117 = vmatmul.mubr.f32.gmra.mrb[0].mxu0 0.0
    %v3118 = vpop.f32.mrb[0].mxu0
    %v3119 = vadd.f32 0.0, %v3118
    %v3120 = vpop.f32.mrb[0].mxu0
    %v3121 = vadd.f32 0.0, %v3120
    %3122 = vdwg.mxu0
    %3123 = vmatprep.subr.mxu0 %v2991
    %3124 = vmatpush1.msra.mxu0 %v2990
    %3125 = vmatprep.subr.mxu0 %v2995
    %3126 = vmatpush1.msra.mxu0 %v2994
    %3127 = vmatprep.subr.mxu0 %v2999
    %3128 = vmatpush1.msra.mxu0 %v2998
    %3129 = vmatprep.subr.mxu0 %v3003
    %3130 = vmatpush1.msra.mxu0 %v3002
    %3131 = vmatprep.subr.mxu0 %v3007
    %3132 = vmatpush1.msra.mxu0 %v3006
    %3133 = vmatprep.subr.mxu0 %v3011
    %3134 = vmatpush1.msra.mxu0 %v3010
    %3135 = vmatprep.subr.mxu0 %v3015
    %3136 = vmatpush1.msra.mxu0 %v3014
    %3137 = vmatprep.subr.mxu0 %v3019
    %3138 = vmatpush1.msra.mxu0 %v3018
    %3139 = vmatprep.subr.mxu0 %v3023
    %3140 = vmatpush1.msra.mxu0 %v3022
    %3141 = vmatprep.subr.mxu0 %v3027
    %3142 = vmatpush1.msra.mxu0 %v3026
    %3143 = vmatprep.subr.mxu0 %v3031
    %3144 = vmatpush1.msra.mxu0 %v3030
    %3145 = vmatprep.subr.mxu0 %v3035
    %3146 = vmatpush1.msra.mxu0 %v3034
    %3147 = vmatprep.subr.mxu0 %v3039
    %3148 = vmatpush1.msra.mxu0 %v3038
    %3149 = vmatprep.subr.mxu0 %v3043
    %3150 = vmatpush1.msra.mxu0 %v3042
    %3151 = vmatprep.subr.mxu0 %v3047
    %3152 = vmatpush1.msra.mxu0 %v3046
    %3153 = vmatprep.subr.mxu0 %v3051
    %3154 = vmatpush1.msra.mxu0 %v3050
    %3155 = vmatprep.subr.mxu0 0.0
    %3156 = vmatpush1.msra.mxu0 0.0
    %3157 = vmatprep.subr.mxu0 0.0
    %3158 = vmatpush1.msra.mxu0 0.0
    %3159 = vmatprep.subr.mxu0 0.0
    %3160 = vmatpush1.msra.mxu0 0.0
    %3161 = vmatprep.subr.mxu0 0.0
    %3162 = vmatpush1.msra.mxu0 0.0
    %3163 = vmatprep.subr.mxu0 0.0
    %3164 = vmatpush1.msra.mxu0 0.0
    %3165 = vmatprep.subr.mxu0 0.0
    %3166 = vmatpush1.msra.mxu0 0.0
    %3167 = vmatprep.subr.mxu0 0.0
    %3168 = vmatpush1.msra.mxu0 0.0
    %3169 = vmatprep.subr.mxu0 0.0
    %3170 = vmatpush1.msra.mxu0 0.0
    %3171 = vmatprep.subr.mxu0 0.0
    %3172 = vmatpush1.msra.mxu0 0.0
    %3173 = vmatprep.subr.mxu0 0.0
    %3174 = vmatpush1.msra.mxu0 0.0
    %3175 = vmatprep.subr.mxu0 0.0
    %3176 = vmatpush1.msra.mxu0 0.0
    %3177 = vmatprep.subr.mxu0 0.0
    %3178 = vmatpush1.msra.mxu0 0.0
    %3179 = vmatprep.subr.mxu0 0.0
    %3180 = vmatpush1.msra.mxu0 0.0
    %3181 = vmatprep.subr.mxu0 0.0
    %3182 = vmatpush1.msra.mxu0 0.0
    %3183 = vmatprep.subr.mxu0 0.0
    %3184 = vmatpush1.msra.mxu0 0.0
    %3185 = vmatprep.subr.mxu0 0.0
    %3186 = vmatpush1.msra.mxu0 0.0
    %3187 = vmatprep.mubr.f32.mxu0 0.0
    %3188 = vmatmul.mubr.f32.gmra.mrb[0].mxu0 0.0
    %v3189 = vpop.f32.mrb[0].mxu0
    %v3190 = vadd.f32 0.0, %v3189
    %v3191 = vpop.f32.mrb[0].mxu0
    %v3192 = vadd.f32 0.0, %v3191
    %3193 = vdwg.mxu0
    %v3194 = vadd.f32 %v2984, %v3119
    %v3195 = vadd.f32 %v2985, %v3121
    %v3196 = vadd.f32 %v2986, %v3190
    %v3197 = vadd.f32 %v2987, %v3192
    %v3198 = vxor.u32 %v3194, 2147483648
    %v3199 = vxor.u32 %v3195, 2147483648
    %v3200 = vxor.u32 %v3196, 2147483648
    %v3201 = vmul.f32 %v3198, 1.442695
    %v3202 = vpow.pop %v3201
    %v3203 = vmul.f32 %v3199, 1.442695
    %v3204 = vpow.pop %v3203
    %v3205 = vmul.f32 %v3200, 1.442695
    %v3206 = vpow.pop %v3205
    %v3207 = vadd.f32 %v3202, 1.0
    %v3208 = vadd.f32 %v3204, 1.0
    %v3209 = vadd.f32 %v3206, 1.0
    %v3210 = vrcp.pop %v3207
    %v3211 = vmul.f32 1.0, %v3210
    %v3212 = vrcp.pop %v3208
    %v3213 = vmul.f32 1.0, %v3212
    %v3214 = vrcp.pop %v3209
    %v3215 = vmul.f32 1.0, %v3214
    %v3216 = vtanh.pop %v3197
    %v3217 = vmul.f32 %v3213, 0.0
    %v3218 = vmul.f32 %v3211, %v3216
    %v3219 = vadd.f32 %v3217, %v3218
    %v3220 = vtanh.pop %v3219
    %v3221 = vmul.f32 %v3215, %v3220
    %v3222 = vld [vmem:[%s933] sm:$0xff]
    %v3223 = vld [vmem:[%s933 + $0x8] sm:$0xff]
    %v3224 = vld [vmem:[%s933 + $0x10] sm:$0xff]
    %v3225 = vld [vmem:[%s933 + $0x18] sm:$0xff]
    %3226 = vmatprep.subr.mxu0 %v2989
    %3227 = vmatpush1.msra.mxu0 %v2988
    %3228 = vmatprep.subr.mxu0 %v2993
    %3229 = vmatpush1.msra.mxu0 %v2992
    %3230 = vmatprep.subr.mxu0 %v2997
    %3231 = vmatpush1.msra.mxu0 %v2996
    %3232 = vmatprep.subr.mxu0 %v3001
    %3233 = vmatpush1.msra.mxu0 %v3000
    %3234 = vmatprep.subr.mxu0 %v3005
    %3235 = vmatpush1.msra.mxu0 %v3004
    %3236 = vmatprep.subr.mxu0 %v3009
    %3237 = vmatpush1.msra.mxu0 %v3008
    %3238 = vmatprep.subr.mxu0 %v3013
    %3239 = vmatpush1.msra.mxu0 %v3012
    %3240 = vmatprep.subr.mxu0 %v3017
    %3241 = vmatpush1.msra.mxu0 %v3016
    %3242 = vmatprep.subr.mxu0 %v3021
    %3243 = vmatpush1.msra.mxu0 %v3020
    %3244 = vmatprep.subr.mxu0 %v3025
    %3245 = vmatpush1.msra.mxu0 %v3024
    %3246 = vmatprep.subr.mxu0 %v3029
    %3247 = vmatpush1.msra.mxu0 %v3028
    %3248 = vmatprep.subr.mxu0 %v3033
    %3249 = vmatpush1.msra.mxu0 %v3032
    %3250 = vmatprep.subr.mxu0 %v3037
    %3251 = vmatpush1.msra.mxu0 %v3036
    %3252 = vmatprep.subr.mxu0 %v3041
    %3253 = vmatpush1.msra.mxu0 %v3040
    %3254 = vmatprep.subr.mxu0 %v3045
    %3255 = vmatpush1.msra.mxu0 %v3044
    %3256 = vmatprep.subr.mxu0 %v3049
    %3257 = vmatpush1.msra.mxu0 %v3048
    %3258 = vmatprep.subr.mxu0 0.0
    %3259 = vmatpush1.msra.mxu0 0.0
    %3260 = vmatprep.subr.mxu0 0.0
    %3261 = vmatpush1.msra.mxu0 0.0
    %3262 = vmatprep.subr.mxu0 0.0
    %3263 = vmatpush1.msra.mxu0 0.0
    %3264 = vmatprep.subr.mxu0 0.0
    %3265 = vmatpush1.msra.mxu0 0.0
    %3266 = vmatprep.subr.mxu0 0.0
    %3267 = vmatpush1.msra.mxu0 0.0
    %3268 = vmatprep.subr.mxu0 0.0
    %3269 = vmatpush1.msra.mxu0 0.0
    %3270 = vmatprep.subr.mxu0 0.0
    %3271 = vmatpush1.msra.mxu0 0.0
    %3272 = vmatprep.subr.mxu0 0.0
    %3273 = vmatpush1.msra.mxu0 0.0
    %3274 = vmatprep.subr.mxu0 0.0
    %3275 = vmatpush1.msra.mxu0 0.0
    %3276 = vmatprep.subr.mxu0 0.0
    %3277 = vmatpush1.msra.mxu0 0.0
    %3278 = vmatprep.subr.mxu0 0.0
    %3279 = vmatpush1.msra.mxu0 0.0
    %3280 = vmatprep.subr.mxu0 0.0
    %3281 = vmatpush1.msra.mxu0 0.0
    %3282 = vmatprep.subr.mxu0 0.0
    %3283 = vmatpush1.msra.mxu0 0.0
    %3284 = vmatprep.subr.mxu0 0.0
    %3285 = vmatpush1.msra.mxu0 0.0
    %3286 = vmatprep.subr.mxu0 0.0
    %3287 = vmatpush1.msra.mxu0 0.0
    %3288 = vmatprep.subr.mxu0 0.0
    %3289 = vmatpush1.msra.mxu0 0.0
    %3290 = vmatprep.mubr.f32.mxu0 0.0
    %3291 = vmatmul.mubr.f32.gmra.mrb[0].mxu0 %v3221
    %v3292 = vpop.f32.mrb[0].mxu0
    %v3293 = vadd.f32 0.0, %v3292
    %v3294 = vpop.f32.mrb[0].mxu0
    %v3295 = vadd.f32 0.0, %v3294
    %3296 = vdwg.mxu0
    %3297 = vmatprep.subr.mxu0 %v2991
    %3298 = vmatpush1.msra.mxu0 %v2990
    %3299 = vmatprep.subr.mxu0 %v2995
    %3300 = vmatpush1.msra.mxu0 %v2994
    %3301 = vmatprep.subr.mxu0 %v2999
    %3302 = vmatpush1.msra.mxu0 %v2998
    %3303 = vmatprep.subr.mxu0 %v3003
    %3304 = vmatpush1.msra.mxu0 %v3002
    %3305 = vmatprep.subr.mxu0 %v3007
    %3306 = vmatpush1.msra.mxu0 %v3006
    %3307 = vmatprep.subr.mxu0 %v3011
    %3308 = vmatpush1.msra.mxu0 %v3010
    %3309 = vmatprep.subr.mxu0 %v3015
    %3310 = vmatpush1.msra.mxu0 %v3014
    %3311 = vmatprep.subr.mxu0 %v3019
    %3312 = vmatpush1.msra.mxu0 %v3018
    %3313 = vmatprep.subr.mxu0 %v3023
    %3314 = vmatpush1.msra.mxu0 %v3022
    %3315 = vmatprep.subr.mxu0 %v3027
    %3316 = vmatpush1.msra.mxu0 %v3026
    %3317 = vmatprep.subr.mxu0 %v3031
    %3318 = vmatpush1.msra.mxu0 %v3030
    %3319 = vmatprep.subr.mxu0 %v3035
    %3320 = vmatpush1.msra.mxu0 %v3034
    %3321 = vmatprep.subr.mxu0 %v3039
    %3322 = vmatpush1.msra.mxu0 %v3038
    %3323 = vmatprep.subr.mxu0 %v3043
    %3324 = vmatpush1.msra.mxu0 %v3042
    %3325 = vmatprep.subr.mxu0 %v3047
    %3326 = vmatpush1.msra.mxu0 %v3046
    %3327 = vmatprep.subr.mxu0 %v3051
    %3328 = vmatpush1.msra.mxu0 %v3050
    %3329 = vmatprep.subr.mxu0 0.0
    %3330 = vmatpush1.msra.mxu0 0.0
    %3331 = vmatprep.subr.mxu0 0.0
    %3332 = vmatpush1.msra.mxu0 0.0
    %3333 = vmatprep.subr.mxu0 0.0
    %3334 = vmatpush1.msra.mxu0 0.0
    %3335 = vmatprep.subr.mxu0 0.0
    %3336 = vmatpush1.msra.mxu0 0.0
    %3337 = vmatprep.subr.mxu0 0.0
    %3338 = vmatpush1.msra.mxu0 0.0
    %3339 = vmatprep.subr.mxu0 0.0
    %3340 = vmatpush1.msra.mxu0 0.0
    %3341 = vmatprep.subr.mxu0 0.0
    %3342 = vmatpush1.msra.mxu0 0.0
    %3343 = vmatprep.subr.mxu0 0.0
    %3344 = vmatpush1.msra.mxu0 0.0
    %3345 = vmatprep.subr.mxu0 0.0
    %3346 = vmatpush1.msra.mxu0 0.0
    %3347 = vmatprep.subr.mxu0 0.0
    %3348 = vmatpush1.msra.mxu0 0.0
    %3349 = vmatprep.subr.mxu0 0.0
    %3350 = vmatpush1.msra.mxu0 0.0
    %3351 = vmatprep.subr.mxu0 0.0
    %3352 = vmatpush1.msra.mxu0 0.0
    %3353 = vmatprep.subr.mxu0 0.0
    %3354 = vmatpush1.msra.mxu0 0.0
    %3355 = vmatprep.subr.mxu0 0.0
    %3356 = vmatpush1.msra.mxu0 0.0
    %3357 = vmatprep.subr.mxu0 0.0
    %3358 = vmatpush1.msra.mxu0 0.0
    %3359 = vmatprep.subr.mxu0 0.0
    %3360 = vmatpush1.msra.mxu0 0.0
    %3361 = vmatprep.mubr.f32.mxu0 0.0
    %3362 = vmatmul.mubr.f32.gmra.mrb[0].mxu0 %v3221
    %v3363 = vpop.f32.mrb[0].mxu0
    %v3364 = vadd.f32 0.0, %v3363
    %v3365 = vpop.f32.mrb[0].mxu0
    %v3366 = vadd.f32 0.0, %v3365
    %3367 = vdwg.mxu0
    %v3368 = vadd.f32 %v3222, %v3293
    %v3369 = vadd.f32 %v3223, %v3295
    %v3370 = vadd.f32 %v3224, %v3364
    %v3371 = vadd.f32 %v3225, %v3366
    %v3372 = vxor.u32 %v3368, 2147483648
    %v3373 = vxor.u32 %v3369, 2147483648
    %v3374 = vxor.u32 %v3370, 2147483648
    %v3375 = vmul.f32 %v3372, 1.442695
    %v3376 = vpow.pop %v3375
    %v3377 = vmul.f32 %v3373, 1.442695
    %v3378 = vpow.pop %v3377
    %v3379 = vmul.f32 %v3374, 1.442695
    %v3380 = vpow.pop %v3379
    %v3381 = vadd.f32 %v3376, 1.0
    %v3382 = vadd.f32 %v3378, 1.0
    %v3383 = vadd.f32 %v3380, 1.0
    %v3384 = vrcp.pop %v3381
    %v3385 = vmul.f32 1.0, %v3384
    %v3386 = vrcp.pop %v3382
    %v3387 = vmul.f32 1.0, %v3386
    %v3388 = vrcp.pop %v3383
    %v3389 = vmul.f32 1.0, %v3388
    %v3390 = vtanh.pop %v3371
    %v3391 = vmul.f32 %v3387, %v3219
    %v3392 = vmul.f32 %v3385, %v3390
    %v3393 = vadd.f32 %v3391, %v3392
    %v3394 = vtanh.pop %v3393
    %v3395 = vmul.f32 %v3389, %v3394
    %v3396 = vld [vmem:[%s1176] sm:$0xff]
    %v3397 = vld [vmem:[%s1176 + $0x8] sm:$0xff]
    %v3398 = vld [vmem:[%s1176 + $0x10] sm:$0xff]
    %v3399 = vld [vmem:[%s1176 + $0x18] sm:$0xff]
    %3400 = vmatprep.subr.mxu0 %v2989
    %3401 = vmatpush1.msra.mxu0 %v2988
    %3402 = vmatprep.subr.mxu0 %v2993
    %3403 = vmatpush1.msra.mxu0 %v2992
    %3404 = vmatprep.subr.mxu0 %v2997
    %3405 = vmatpush1.msra.mxu0 %v2996
    %3406 = vmatprep.subr.mxu0 %v3001
    %3407 = vmatpush1.msra.mxu0 %v3000
    %3408 = vmatprep.subr.mxu0 %v3005
    %3409 = vmatpush1.msra.mxu0 %v3004
    %3410 = vmatprep.subr.mxu0 %v3009
    %3411 = vmatpush1.msra.mxu0 %v3008
    %3412 = vmatprep.subr.mxu0 %v3013
    %3413 = vmatpush1.msra.mxu0 %v3012
    %3414 = vmatprep.subr.mxu0 %v3017
    %3415 = vmatpush1.msra.mxu0 %v3016
    %3416 = vmatprep.subr.mxu0 %v3021
    %3417 = vmatpush1.msra.mxu0 %v3020
    %3418 = vmatprep.subr.mxu0 %v3025
    %3419 = vmatpush1.msra.mxu0 %v3024
    %3420 = vmatprep.subr.mxu0 %v3029
    %3421 = vmatpush1.msra.mxu0 %v3028
    %3422 = vmatprep.subr.mxu0 %v3033
    %3423 = vmatpush1.msra.mxu0 %v3032
    %3424 = vmatprep.subr.mxu0 %v3037
    %3425 = vmatpush1.msra.mxu0 %v3036
    %3426 = vmatprep.subr.mxu0 %v3041
    %3427 = vmatpush1.msra.mxu0 %v3040
    %3428 = vmatprep.subr.mxu0 %v3045
    %3429 = vmatpush1.msra.mxu0 %v3044
    %3430 = vmatprep.subr.mxu0 %v3049
    %3431 = vmatpush1.msra.mxu0 %v3048
    %3432 = vmatprep.subr.mxu0 0.0
    %3433 = vmatpush1.msra.mxu0 0.0
    %3434 = vmatprep.subr.mxu0 0.0
    %3435 = vmatpush1.msra.mxu0 0.0
    %3436 = vmatprep.subr.mxu0 0.0
    %3437 = vmatpush1.msra.mxu0 0.0
    %3438 = vmatprep.subr.mxu0 0.0
    %3439 = vmatpush1.msra.mxu0 0.0
    %3440 = vmatprep.subr.mxu0 0.0
    %3441 = vmatpush1.msra.mxu0 0.0
    %3442 = vmatprep.subr.mxu0 0.0
    %3443 = vmatpush1.msra.mxu0 0.0
    %3444 = vmatprep.subr.mxu0 0.0
    %3445 = vmatpush1.msra.mxu0 0.0
    %3446 = vmatprep.subr.mxu0 0.0
    %3447 = vmatpush1.msra.mxu0 0.0
    %3448 = vmatprep.subr.mxu0 0.0
    %3449 = vmatpush1.msra.mxu0 0.0
    %3450 = vmatprep.subr.mxu0 0.0
    %3451 = vmatpush1.msra.mxu0 0.0
    %3452 = vmatprep.subr.mxu0 0.0
    %3453 = vmatpush1.msra.mxu0 0.0
    %3454 = vmatprep.subr.mxu0 0.0
    %3455 = vmatpush1.msra.mxu0 0.0
    %3456 = vmatprep.subr.mxu0 0.0
    %3457 = vmatpush1.msra.mxu0 0.0
    %3458 = vmatprep.subr.mxu0 0.0
    %3459 = vmatpush1.msra.mxu0 0.0
    %3460 = vmatprep.subr.mxu0 0.0
    %3461 = vmatpush1.msra.mxu0 0.0
    %3462 = vmatprep.subr.mxu0 0.0
    %3463 = vmatpush1.msra.mxu0 0.0
    %3464 = vmatprep.mubr.f32.mxu0 0.0
    %3465 = vmatmul.mubr.f32.gmra.mrb[0].mxu0 %v3395
    %v3466 = vpop.f32.mrb[0].mxu0
    %v3467 = vadd.f32 0.0, %v3466
    %v3468 = vpop.f32.mrb[0].mxu0
    %v3469 = vadd.f32 0.0, %v3468
    %3470 = vdwg.mxu0
    %3471 = vmatprep.subr.mxu0 %v2991
    %3472 = vmatpush1.msra.mxu0 %v2990
    %3473 = vmatprep.subr.mxu0 %v2995
    %3474 = vmatpush1.msra.mxu0 %v2994
    %3475 = vmatprep.subr.mxu0 %v2999
    %3476 = vmatpush1.msra.mxu0 %v2998
    %3477 = vmatprep.subr.mxu0 %v3003
    %3478 = vmatpush1.msra.mxu0 %v3002
    %3479 = vmatprep.subr.mxu0 %v3007
    %3480 = vmatpush1.msra.mxu0 %v3006
    %3481 = vmatprep.subr.mxu0 %v3011
    %3482 = vmatpush1.msra.mxu0 %v3010
    %3483 = vmatprep.subr.mxu0 %v3015
    %3484 = vmatpush1.msra.mxu0 %v3014
    %3485 = vmatprep.subr.mxu0 %v3019
    %3486 = vmatpush1.msra.mxu0 %v3018
    %3487 = vmatprep.subr.mxu0 %v3023
    %3488 = vmatpush1.msra.mxu0 %v3022
    %3489 = vmatprep.subr.mxu0 %v3027
    %3490 = vmatpush1.msra.mxu0 %v3026
    %3491 = vmatprep.subr.mxu0 %v3031
    %3492 = vmatpush1.msra.mxu0 %v3030
    %3493 = vmatprep.subr.mxu0 %v3035
    %3494 = vmatpush1.msra.mxu0 %v3034
    %3495 = vmatprep.subr.mxu0 %v3039
    %3496 = vmatpush1.msra.mxu0 %v3038
    %3497 = vmatprep.subr.mxu0 %v3043
    %3498 = vmatpush1.msra.mxu0 %v3042
    %3499 = vmatprep.subr.mxu0 %v3047
    %3500 = vmatpush1.msra.mxu0 %v3046
    %3501 = vmatprep.subr.mxu0 %v3051
    %3502 = vmatpush1.msra.mxu0 %v3050
    %3503 = vmatprep.subr.mxu0 0.0
    %3504 = vmatpush1.msra.mxu0 0.0
    %3505 = vmatprep.subr.mxu0 0.0
    %3506 = vmatpush1.msra.mxu0 0.0
    %3507 = vmatprep.subr.mxu0 0.0
    %3508 = vmatpush1.msra.mxu0 0.0
    %3509 = vmatprep.subr.mxu0 0.0
    %3510 = vmatpush1.msra.mxu0 0.0
    %3511 = vmatprep.subr.mxu0 0.0
    %3512 = vmatpush1.msra.mxu0 0.0
    %3513 = vmatprep.subr.mxu0 0.0
    %3514 = vmatpush1.msra.mxu0 0.0
    %3515 = vmatprep.subr.mxu0 0.0
    %3516 = vmatpush1.msra.mxu0 0.0
    %3517 = vmatprep.subr.mxu0 0.0
    %3518 = vmatpush1.msra.mxu0 0.0
    %3519 = vmatprep.subr.mxu0 0.0
    %3520 = vmatpush1.msra.mxu0 0.0
    %3521 = vmatprep.subr.mxu0 0.0
    %3522 = vmatpush1.msra.mxu0 0.0
    %3523 = vmatprep.subr.mxu0 0.0
    %3524 = vmatpush1.msra.mxu0 0.0
    %3525 = vmatprep.subr.mxu0 0.0
    %3526 = vmatpush1.msra.mxu0 0.0
    %3527 = vmatprep.subr.mxu0 0.0
    %3528 = vmatpush1.msra.mxu0 0.0
    %3529 = vmatprep.subr.mxu0 0.0
    %3530 = vmatpush1.msra.mxu0 0.0
    %3531 = vmatprep.subr.mxu0 0.0
    %3532 = vmatpush1.msra.mxu0 0.0
    %3533 = vmatprep.subr.mxu0 0.0
    %3534 = vmatpush1.msra.mxu0 0.0
    %3535 = vmatprep.mubr.f32.mxu0 0.0
    %3536 = vmatmul.mubr.f32.gmra.mrb[0].mxu0 %v3395
    %v3537 = vpop.f32.mrb[0].mxu0
    %v3538 = vadd.f32 0.0, %v3537
    %v3539 = vpop.f32.mrb[0].mxu0
    %v3540 = vadd.f32 0.0, %v3539
    %3541 = vdwg.mxu0
    %v3542 = vadd.f32 %v3396, %v3467
    %v3543 = vadd.f32 %v3397, %v3469
    %v3544 = vadd.f32 %v3398, %v3538
    %v3545 = vadd.f32 %v3399, %v3540
    %v3546 = vxor.u32 %v3542, 2147483648
    %v3547 = vxor.u32 %v3543, 2147483648
    %v3548 = vxor.u32 %v3544, 2147483648
    %v3549 = vmul.f32 %v3546, 1.442695
    %v3550 = vpow.pop %v3549
    %v3551 = vmul.f32 %v3547, 1.442695
    %v3552 = vpow.pop %v3551
    %v3553 = vmul.f32 %v3548, 1.442695
    %v3554 = vpow.pop %v3553
    %v3555 = vadd.f32 %v3550, 1.0
    %v3556 = vadd.f32 %v3552, 1.0
    %v3557 = vadd.f32 %v3554, 1.0
    %v3558 = vrcp.pop %v3555
    %v3559 = vmul.f32 1.0, %v3558
    %v3560 = vrcp.pop %v3556
    %v3561 = vmul.f32 1.0, %v3560
    %v3562 = vrcp.pop %v3557
    %v3563 = vmul.f32 1.0, %v3562
    %v3564 = vtanh.pop %v3545
    %v3565 = vmul.f32 %v3561, %v3393
    %v3566 = vmul.f32 %v3559, %v3564
    %v3567 = vadd.f32 %v3565, %v3566
    %v3568 = vtanh.pop %v3567
    %v3569 = vmul.f32 %v3563, %v3568
    %v3570 = vld [vmem:[%s1419] sm:$0xff]
    %v3571 = vld [vmem:[%s1419 + $0x8] sm:$0xff]
    %v3572 = vld [vmem:[%s1419 + $0x10] sm:$0xff]
    %v3573 = vld [vmem:[%s1419 + $0x18] sm:$0xff]
    %3574 = vmatprep.subr.mxu0 %v2989
    %3575 = vmatpush1.msra.mxu0 %v2988
    %3576 = vmatprep.subr.mxu0 %v2993
    %3577 = vmatpush1.msra.mxu0 %v2992
    %3578 = vmatprep.subr.mxu0 %v2997
    %3579 = vmatpush1.msra.mxu0 %v2996
    %3580 = vmatprep.subr.mxu0 %v3001
    %3581 = vmatpush1.msra.mxu0 %v3000
    %3582 = vmatprep.subr.mxu0 %v3005
    %3583 = vmatpush1.msra.mxu0 %v3004
    %3584 = vmatprep.subr.mxu0 %v3009
    %3585 = vmatpush1.msra.mxu0 %v3008
    %3586 = vmatprep.subr.mxu0 %v3013
    %3587 = vmatpush1.msra.mxu0 %v3012
    %3588 = vmatprep.subr.mxu0 %v3017
    %3589 = vmatpush1.msra.mxu0 %v3016
    %3590 = vmatprep.subr.mxu0 %v3021
    %3591 = vmatpush1.msra.mxu0 %v3020
    %3592 = vmatprep.subr.mxu0 %v3025
    %3593 = vmatpush1.msra.mxu0 %v3024
    %3594 = vmatprep.subr.mxu0 %v3029
    %3595 = vmatpush1.msra.mxu0 %v3028
    %3596 = vmatprep.subr.mxu0 %v3033
    %3597 = vmatpush1.msra.mxu0 %v3032
    %3598 = vmatprep.subr.mxu0 %v3037
    %3599 = vmatpush1.msra.mxu0 %v3036
    %3600 = vmatprep.subr.mxu0 %v3041
    %3601 = vmatpush1.msra.mxu0 %v3040
    %3602 = vmatprep.subr.mxu0 %v3045
    %3603 = vmatpush1.msra.mxu0 %v3044
    %3604 = vmatprep.subr.mxu0 %v3049
    %3605 = vmatpush1.msra.mxu0 %v3048
    %3606 = vmatprep.subr.mxu0 0.0
    %3607 = vmatpush1.msra.mxu0 0.0
    %3608 = vmatprep.subr.mxu0 0.0
    %3609 = vmatpush1.msra.mxu0 0.0
    %3610 = vmatprep.subr.mxu0 0.0
    %3611 = vmatpush1.msra.mxu0 0.0
    %3612 = vmatprep.subr.mxu0 0.0
    %3613 = vmatpush1.msra.mxu0 0.0
    %3614 = vmatprep.subr.mxu0 0.0
    %3615 = vmatpush1.msra.mxu0 0.0
    %3616 = vmatprep.subr.mxu0 0.0
    %3617 = vmatpush1.msra.mxu0 0.0
    %3618 = vmatprep.subr.mxu0 0.0
    %3619 = vmatpush1.msra.mxu0 0.0
    %3620 = vmatprep.subr.mxu0 0.0
    %3621 = vmatpush1.msra.mxu0 0.0
    %3622 = vmatprep.subr.mxu0 0.0
    %3623 = vmatpush1.msra.mxu0 0.0
    %3624 = vmatprep.subr.mxu0 0.0
    %3625 = vmatpush1.msra.mxu0 0.0
    %3626 = vmatprep.subr.mxu0 0.0
    %3627 = vmatpush1.msra.mxu0 0.0
    %3628 = vmatprep.subr.mxu0 0.0
    %3629 = vmatpush1.msra.mxu0 0.0
    %3630 = vmatprep.subr.mxu0 0.0
    %3631 = vmatpush1.msra.mxu0 0.0
    %3632 = vmatprep.subr.mxu0 0.0
    %3633 = vmatpush1.msra.mxu0 0.0
    %3634 = vmatprep.subr.mxu0 0.0
    %3635 = vmatpush1.msra.mxu0 0.0
    %3636 = vmatprep.subr.mxu0 0.0
    %3637 = vmatpush1.msra.mxu0 0.0
    %3638 = vmatprep.mubr.f32.mxu0 0.0
    %3639 = vmatmul.mubr.f32.gmra.mrb[0].mxu0 %v3569
    %v3640 = vpop.f32.mrb[0].mxu0
    %v3641 = vadd.f32 0.0, %v3640
    %v3642 = vpop.f32.mrb[0].mxu0
    %v3643 = vadd.f32 0.0, %v3642
    %3644 = vdwg.mxu0
    %3645 = vmatprep.subr.mxu0 %v2991
    %3646 = vmatpush1.msra.mxu0 %v2990
    %3647 = vmatprep.subr.mxu0 %v2995
    %3648 = vmatpush1.msra.mxu0 %v2994
    %3649 = vmatprep.subr.mxu0 %v2999
    %3650 = vmatpush1.msra.mxu0 %v2998
    %3651 = vmatprep.subr.mxu0 %v3003
    %3652 = vmatpush1.msra.mxu0 %v3002
    %3653 = vmatprep.subr.mxu0 %v3007
    %3654 = vmatpush1.msra.mxu0 %v3006
    %3655 = vmatprep.subr.mxu0 %v3011
    %3656 = vmatpush1.msra.mxu0 %v3010
    %3657 = vmatprep.subr.mxu0 %v3015
    %3658 = vmatpush1.msra.mxu0 %v3014
    %3659 = vmatprep.subr.mxu0 %v3019
    %3660 = vmatpush1.msra.mxu0 %v3018
    %3661 = vmatprep.subr.mxu0 %v3023
    %3662 = vmatpush1.msra.mxu0 %v3022
    %3663 = vmatprep.subr.mxu0 %v3027
    %3664 = vmatpush1.msra.mxu0 %v3026
    %3665 = vmatprep.subr.mxu0 %v3031
    %3666 = vmatpush1.msra.mxu0 %v3030
    %3667 = vmatprep.subr.mxu0 %v3035
    %3668 = vmatpush1.msra.mxu0 %v3034
    %3669 = vmatprep.subr.mxu0 %v3039
    %3670 = vmatpush1.msra.mxu0 %v3038
    %3671 = vmatprep.subr.mxu0 %v3043
    %3672 = vmatpush1.msra.mxu0 %v3042
    %3673 = vmatprep.subr.mxu0 %v3047
    %3674 = vmatpush1.msra.mxu0 %v3046
    %3675 = vmatprep.subr.mxu0 %v3051
    %3676 = vmatpush1.msra.mxu0 %v3050
    %3677 = vmatprep.subr.mxu0 0.0
    %3678 = vmatpush1.msra.mxu0 0.0
    %3679 = vmatprep.subr.mxu0 0.0
    %3680 = vmatpush1.msra.mxu0 0.0
    %3681 = vmatprep.subr.mxu0 0.0
    %3682 = vmatpush1.msra.mxu0 0.0
    %3683 = vmatprep.subr.mxu0 0.0
    %3684 = vmatpush1.msra.mxu0 0.0
    %3685 = vmatprep.subr.mxu0 0.0
    %3686 = vmatpush1.msra.mxu0 0.0
    %3687 = vmatprep.subr.mxu0 0.0
    %3688 = vmatpush1.msra.mxu0 0.0
    %3689 = vmatprep.subr.mxu0 0.0
    %3690 = vmatpush1.msra.mxu0 0.0
    %3691 = vmatprep.subr.mxu0 0.0
    %3692 = vmatpush1.msra.mxu0 0.0
    %3693 = vmatprep.subr.mxu0 0.0
    %3694 = vmatpush1.msra.mxu0 0.0
    %3695 = vmatprep.subr.mxu0 0.0
    %3696 = vmatpush1.msra.mxu0 0.0
    %3697 = vmatprep.subr.mxu0 0.0
    %3698 = vmatpush1.msra.mxu0 0.0
    %3699 = vmatprep.subr.mxu0 0.0
    %3700 = vmatpush1.msra.mxu0 0.0
    %3701 = vmatprep.subr.mxu0 0.0
    %3702 = vmatpush1.msra.mxu0 0.0
    %3703 = vmatprep.subr.mxu0 0.0
    %3704 = vmatpush1.msra.mxu0 0.0
    %3705 = vmatprep.subr.mxu0 0.0
    %3706 = vmatpush1.msra.mxu0 0.0
    %3707 = vmatprep.subr.mxu0 0.0
    %3708 = vmatpush1.msra.mxu0 0.0
    %3709 = vmatprep.mubr.f32.mxu0 0.0
    %3710 = vmatmul.mubr.f32.gmra.mrb[0].mxu0 %v3569
    %v3711 = vpop.f32.mrb[0].mxu0
    %v3712 = vadd.f32 0.0, %v3711
    %v3713 = vpop.f32.mrb[0].mxu0
    %v3714 = vadd.f32 0.0, %v3713
    %3715 = vdwg.mxu0
    %v3716 = vadd.f32 %v3570, %v3641
    %v3717 = vadd.f32 %v3571, %v3643
    %v3718 = vadd.f32 %v3572, %v3712
    %v3719 = vadd.f32 %v3573, %v3714
    %v3720 = vxor.u32 %v3716, 2147483648
    %v3721 = vxor.u32 %v3717, 2147483648
    %v3722 = vxor.u32 %v3718, 2147483648
    %v3723 = vmul.f32 %v3720, 1.442695
    %v3724 = vpow.pop %v3723
    %v3725 = vmul.f32 %v3721, 1.442695
    %v3726 = vpow.pop %v3725
    %v3727 = vmul.f32 %v3722, 1.442695
    %v3728 = vpow.pop %v3727
    %v3729 = vadd.f32 %v3724, 1.0
    %v3730 = vadd.f32 %v3726, 1.0
    %v3731 = vadd.f32 %v3728, 1.0
    %v3732 = vrcp.pop %v3729
    %v3733 = vmul.f32 1.0, %v3732
    %v3734 = vrcp.pop %v3730
    %v3735 = vmul.f32 1.0, %v3734
    %v3736 = vrcp.pop %v3731
    %v3737 = vmul.f32 1.0, %v3736
    %v3738 = vtanh.pop %v3719
    %v3739 = vmul.f32 %v3735, %v3567
    %v3740 = vmul.f32 %v3733, %v3738
    %v3741 = vadd.f32 %v3739, %v3740
    %v3742 = vtanh.pop %v3741
    %v3743 = vmul.f32 %v3737, %v3742
    %v3744 = vld [vmem:[%s1662] sm:$0xff]
    %v3745 = vld [vmem:[%s1662 + $0x8] sm:$0xff]
    %v3746 = vld [vmem:[%s1662 + $0x10] sm:$0xff]
    %v3747 = vld [vmem:[%s1662 + $0x18] sm:$0xff]
    %3748 = vmatprep.subr.mxu0 %v2989
    %3749 = vmatpush1.msra.mxu0 %v2988
    %3750 = vmatprep.subr.mxu0 %v2993
    %3751 = vmatpush1.msra.mxu0 %v2992
    %3752 = vmatprep.subr.mxu0 %v2997
    %3753 = vmatpush1.msra.mxu0 %v2996
    %3754 = vmatprep.subr.mxu0 %v3001
    %3755 = vmatpush1.msra.mxu0 %v3000
    %3756 = vmatprep.subr.mxu0 %v3005
    %3757 = vmatpush1.msra.mxu0 %v3004
    %3758 = vmatprep.subr.mxu0 %v3009
    %3759 = vmatpush1.msra.mxu0 %v3008
    %3760 = vmatprep.subr.mxu0 %v3013
    %3761 = vmatpush1.msra.mxu0 %v3012
    %3762 = vmatprep.subr.mxu0 %v3017
    %3763 = vmatpush1.msra.mxu0 %v3016
    %3764 = vmatprep.subr.mxu0 %v3021
    %3765 = vmatpush1.msra.mxu0 %v3020
    %3766 = vmatprep.subr.mxu0 %v3025
    %3767 = vmatpush1.msra.mxu0 %v3024
    %3768 = vmatprep.subr.mxu0 %v3029
    %3769 = vmatpush1.msra.mxu0 %v3028
    %3770 = vmatprep.subr.mxu0 %v3033
    %3771 = vmatpush1.msra.mxu0 %v3032
    %3772 = vmatprep.subr.mxu0 %v3037
    %3773 = vmatpush1.msra.mxu0 %v3036
    %3774 = vmatprep.subr.mxu0 %v3041
    %3775 = vmatpush1.msra.mxu0 %v3040
    %3776 = vmatprep.subr.mxu0 %v3045
    %3777 = vmatpush1.msra.mxu0 %v3044
    %3778 = vmatprep.subr.mxu0 %v3049
    %3779 = vmatpush1.msra.mxu0 %v3048
    %3780 = vmatprep.subr.mxu0 0.0
    %3781 = vmatpush1.msra.mxu0 0.0
    %3782 = vmatprep.subr.mxu0 0.0
    %3783 = vmatpush1.msra.mxu0 0.0
    %3784 = vmatprep.subr.mxu0 0.0
    %3785 = vmatpush1.msra.mxu0 0.0
    %3786 = vmatprep.subr.mxu0 0.0
    %3787 = vmatpush1.msra.mxu0 0.0
    %3788 = vmatprep.subr.mxu0 0.0
    %3789 = vmatpush1.msra.mxu0 0.0
    %3790 = vmatprep.subr.mxu0 0.0
    %3791 = vmatpush1.msra.mxu0 0.0
    %3792 = vmatprep.subr.mxu0 0.0
    %3793 = vmatpush1.msra.mxu0 0.0
    %3794 = vmatprep.subr.mxu0 0.0
    %3795 = vmatpush1.msra.mxu0 0.0
    %3796 = vmatprep.subr.mxu0 0.0
    %3797 = vmatpush1.msra.mxu0 0.0
    %3798 = vmatprep.subr.mxu0 0.0
    %3799 = vmatpush1.msra.mxu0 0.0
    %3800 = vmatprep.subr.mxu0 0.0
    %3801 = vmatpush1.msra.mxu0 0.0
    %3802 = vmatprep.subr.mxu0 0.0
    %3803 = vmatpush1.msra.mxu0 0.0
    %3804 = vmatprep.subr.mxu0 0.0
    %3805 = vmatpush1.msra.mxu0 0.0
    %3806 = vmatprep.subr.mxu0 0.0
    %3807 = vmatpush1.msra.mxu0 0.0
    %3808 = vmatprep.subr.mxu0 0.0
    %3809 = vmatpush1.msra.mxu0 0.0
    %3810 = vmatprep.subr.mxu0 0.0
    %3811 = vmatpush1.msra.mxu0 0.0
    %3812 = vmatprep.mubr.f32.mxu0 0.0
    %3813 = vmatmul.mubr.f32.gmra.mrb[0].mxu0 %v3743
    %v3814 = vpop.f32.mrb[0].mxu0
    %v3815 = vadd.f32 0.0, %v3814
    %v3816 = vpop.f32.mrb[0].mxu0
    %v3817 = vadd.f32 0.0, %v3816
    %3818 = vdwg.mxu0
    %3819 = vmatprep.subr.mxu0 %v2991
    %3820 = vmatpush1.msra.mxu0 %v2990
    %3821 = vmatprep.subr.mxu0 %v2995
    %3822 = vmatpush1.msra.mxu0 %v2994
    %3823 = vmatprep.subr.mxu0 %v2999
    %3824 = vmatpush1.msra.mxu0 %v2998
    %3825 = vmatprep.subr.mxu0 %v3003
    %3826 = vmatpush1.msra.mxu0 %v3002
    %3827 = vmatprep.subr.mxu0 %v3007
    %3828 = vmatpush1.msra.mxu0 %v3006
    %3829 = vmatprep.subr.mxu0 %v3011
    %3830 = vmatpush1.msra.mxu0 %v3010
    %3831 = vmatprep.subr.mxu0 %v3015
    %3832 = vmatpush1.msra.mxu0 %v3014
    %3833 = vmatprep.subr.mxu0 %v3019
    %3834 = vmatpush1.msra.mxu0 %v3018
    %3835 = vmatprep.subr.mxu0 %v3023
    %3836 = vmatpush1.msra.mxu0 %v3022
    %3837 = vmatprep.subr.mxu0 %v3027
    %3838 = vmatpush1.msra.mxu0 %v3026
    %3839 = vmatprep.subr.mxu0 %v3031
    %3840 = vmatpush1.msra.mxu0 %v3030
    %3841 = vmatprep.subr.mxu0 %v3035
    %3842 = vmatpush1.msra.mxu0 %v3034
    %3843 = vmatprep.subr.mxu0 %v3039
    %3844 = vmatpush1.msra.mxu0 %v3038
    %3845 = vmatprep.subr.mxu0 %v3043
    %3846 = vmatpush1.msra.mxu0 %v3042
    %3847 = vmatprep.subr.mxu0 %v3047
    %3848 = vmatpush1.msra.mxu0 %v3046
    %3849 = vmatprep.subr.mxu0 %v3051
    %3850 = vmatpush1.msra.mxu0 %v3050
    %3851 = vmatprep.subr.mxu0 0.0
    %3852 = vmatpush1.msra.mxu0 0.0
    %3853 = vmatprep.subr.mxu0 0.0
    %3854 = vmatpush1.msra.mxu0 0.0
    %3855 = vmatprep.subr.mxu0 0.0
    %3856 = vmatpush1.msra.mxu0 0.0
    %3857 = vmatprep.subr.mxu0 0.0
    %3858 = vmatpush1.msra.mxu0 0.0
    %3859 = vmatprep.subr.mxu0 0.0
    %3860 = vmatpush1.msra.mxu0 0.0
    %3861 = vmatprep.subr.mxu0 0.0
    %3862 = vmatpush1.msra.mxu0 0.0
    %3863 = vmatprep.subr.mxu0 0.0
    %3864 = vmatpush1.msra.mxu0 0.0
    %3865 = vmatprep.subr.mxu0 0.0
    %3866 = vmatpush1.msra.mxu0 0.0
    %3867 = vmatprep.subr.mxu0 0.0
    %3868 = vmatpush1.msra.mxu0 0.0
    %3869 = vmatprep.subr.mxu0 0.0
    %3870 = vmatpush1.msra.mxu0 0.0
    %3871 = vmatprep.subr.mxu0 0.0
    %3872 = vmatpush1.msra.mxu0 0.0
    %3873 = vmatprep.subr.mxu0 0.0
    %3874 = vmatpush1.msra.mxu0 0.0
    %3875 = vmatprep.subr.mxu0 0.0
    %3876 = vmatpush1.msra.mxu0 0.0
    %3877 = vmatprep.subr.mxu0 0.0
    %3878 = vmatpush1.msra.mxu0 0.0
    %3879 = vmatprep.subr.mxu0 0.0
    %3880 = vmatpush1.msra.mxu0 0.0
    %3881 = vmatprep.subr.mxu0 0.0
    %3882 = vmatpush1.msra.mxu0 0.0
    %3883 = vmatprep.mubr.f32.mxu0 0.0
    %3884 = vmatmul.mubr.f32.gmra.mrb[0].mxu0 %v3743
    %v3885 = vpop.f32.mrb[0].mxu0
    %v3886 = vadd.f32 0.0, %v3885
    %v3887 = vpop.f32.mrb[0].mxu0
    %v3888 = vadd.f32 0.0, %v3887
    %3889 = vdwg.mxu0
    %v3890 = vadd.f32 %v3744, %v3815
    %v3891 = vadd.f32 %v3745, %v3817
    %v3892 = vadd.f32 %v3746, %v3886
    %v3893 = vadd.f32 %v3747, %v3888
    %v3894 = vxor.u32 %v3890, 2147483648
    %v3895 = vxor.u32 %v3891, 2147483648
    %v3896 = vxor.u32 %v3892, 2147483648
    %v3897 = vmul.f32 %v3894, 1.442695
    %v3898 = vpow.pop %v3897
    %v3899 = vmul.f32 %v3895, 1.442695
    %v3900 = vpow.pop %v3899
    %v3901 = vmul.f32 %v3896, 1.442695
    %v3902 = vpow.pop %v3901
    %v3903 = vadd.f32 %v3898, 1.0
    %v3904 = vadd.f32 %v3900, 1.0
    %v3905 = vadd.f32 %v3902, 1.0
    %v3906 = vrcp.pop %v3903
    %v3907 = vmul.f32 1.0, %v3906
    %v3908 = vrcp.pop %v3904
    %v3909 = vmul.f32 1.0, %v3908
    %v3910 = vrcp.pop %v3905
    %v3911 = vmul.f32 1.0, %v3910
    %v3912 = vtanh.pop %v3893
    %v3913 = vmul.f32 %v3909, %v3741
    %v3914 = vmul.f32 %v3907, %v3912
    %v3915 = vadd.f32 %v3913, %v3914
    %v3916 = vtanh.pop %v3915
    %v3917 = vmul.f32 %v3911, %v3916
    %v3918 = vld [vmem:[%s1905] sm:$0xff]
    %v3919 = vld [vmem:[%s1905 + $0x8] sm:$0xff]
    %v3920 = vld [vmem:[%s1905 + $0x10] sm:$0xff]
    %v3921 = vld [vmem:[%s1905 + $0x18] sm:$0xff]
    %3922 = vmatprep.subr.mxu0 %v2989
    %3923 = vmatpush1.msra.mxu0 %v2988
    %3924 = vmatprep.subr.mxu0 %v2993
    %3925 = vmatpush1.msra.mxu0 %v2992
    %3926 = vmatprep.subr.mxu0 %v2997
    %3927 = vmatpush1.msra.mxu0 %v2996
    %3928 = vmatprep.subr.mxu0 %v3001
    %3929 = vmatpush1.msra.mxu0 %v3000
    %3930 = vmatprep.subr.mxu0 %v3005
    %3931 = vmatpush1.msra.mxu0 %v3004
    %3932 = vmatprep.subr.mxu0 %v3009
    %3933 = vmatpush1.msra.mxu0 %v3008
    %3934 = vmatprep.subr.mxu0 %v3013
    %3935 = vmatpush1.msra.mxu0 %v3012
    %3936 = vmatprep.subr.mxu0 %v3017
    %3937 = vmatpush1.msra.mxu0 %v3016
    %3938 = vmatprep.subr.mxu0 %v3021
    %3939 = vmatpush1.msra.mxu0 %v3020
    %3940 = vmatprep.subr.mxu0 %v3025
    %3941 = vmatpush1.msra.mxu0 %v3024
    %3942 = vmatprep.subr.mxu0 %v3029
    %3943 = vmatpush1.msra.mxu0 %v3028
    %3944 = vmatprep.subr.mxu0 %v3033
    %3945 = vmatpush1.msra.mxu0 %v3032
    %3946 = vmatprep.subr.mxu0 %v3037
    %3947 = vmatpush1.msra.mxu0 %v3036
    %3948 = vmatprep.subr.mxu0 %v3041
    %3949 = vmatpush1.msra.mxu0 %v3040
    %3950 = vmatprep.subr.mxu0 %v3045
    %3951 = vmatpush1.msra.mxu0 %v3044
    %3952 = vmatprep.subr.mxu0 %v3049
    %3953 = vmatpush1.msra.mxu0 %v3048
    %3954 = vmatprep.subr.mxu0 0.0
    %3955 = vmatpush1.msra.mxu0 0.0
    %3956 = vmatprep.subr.mxu0 0.0
    %3957 = vmatpush1.msra.mxu0 0.0
    %3958 = vmatprep.subr.mxu0 0.0
    %3959 = vmatpush1.msra.mxu0 0.0
    %3960 = vmatprep.subr.mxu0 0.0
    %3961 = vmatpush1.msra.mxu0 0.0
    %3962 = vmatprep.subr.mxu0 0.0
    %3963 = vmatpush1.msra.mxu0 0.0
    %3964 = vmatprep.subr.mxu0 0.0
    %3965 = vmatpush1.msra.mxu0 0.0
    %3966 = vmatprep.subr.mxu0 0.0
    %3967 = vmatpush1.msra.mxu0 0.0
    %3968 = vmatprep.subr.mxu0 0.0
    %3969 = vmatpush1.msra.mxu0 0.0
    %3970 = vmatprep.subr.mxu0 0.0
    %3971 = vmatpush1.msra.mxu0 0.0
    %3972 = vmatprep.subr.mxu0 0.0
    %3973 = vmatpush1.msra.mxu0 0.0
    %3974 = vmatprep.subr.mxu0 0.0
    %3975 = vmatpush1.msra.mxu0 0.0
    %3976 = vmatprep.subr.mxu0 0.0
    %3977 = vmatpush1.msra.mxu0 0.0
    %3978 = vmatprep.subr.mxu0 0.0
    %3979 = vmatpush1.msra.mxu0 0.0
    %3980 = vmatprep.subr.mxu0 0.0
    %3981 = vmatpush1.msra.mxu0 0.0
    %3982 = vmatprep.subr.mxu0 0.0
    %3983 = vmatpush1.msra.mxu0 0.0
    %3984 = vmatprep.subr.mxu0 0.0
    %3985 = vmatpush1.msra.mxu0 0.0
    %3986 = vmatprep.mubr.f32.mxu0 0.0
    %3987 = vmatmul.mubr.f32.gmra.mrb[0].mxu0 %v3917
    %v3988 = vpop.f32.mrb[0].mxu0
    %v3989 = vadd.f32 0.0, %v3988
    %v3990 = vpop.f32.mrb[0].mxu0
    %v3991 = vadd.f32 0.0, %v3990
    %3992 = vdwg.mxu0
    %3993 = vmatprep.subr.mxu0 %v2991
    %3994 = vmatpush1.msra.mxu0 %v2990
    %3995 = vmatprep.subr.mxu0 %v2995
    %3996 = vmatpush1.msra.mxu0 %v2994
    %3997 = vmatprep.subr.mxu0 %v2999
    %3998 = vmatpush1.msra.mxu0 %v2998
    %3999 = vmatprep.subr.mxu0 %v3003
    %4000 = vmatpush1.msra.mxu0 %v3002
    %4001 = vmatprep.subr.mxu0 %v3007
    %4002 = vmatpush1.msra.mxu0 %v3006
    %4003 = vmatprep.subr.mxu0 %v3011
    %4004 = vmatpush1.msra.mxu0 %v3010
    %4005 = vmatprep.subr.mxu0 %v3015
    %4006 = vmatpush1.msra.mxu0 %v3014
    %4007 = vmatprep.subr.mxu0 %v3019
    %4008 = vmatpush1.msra.mxu0 %v3018
    %4009 = vmatprep.subr.mxu0 %v3023
    %4010 = vmatpush1.msra.mxu0 %v3022
    %4011 = vmatprep.subr.mxu0 %v3027
    %4012 = vmatpush1.msra.mxu0 %v3026
    %4013 = vmatprep.subr.mxu0 %v3031
    %4014 = vmatpush1.msra.mxu0 %v3030
    %4015 = vmatprep.subr.mxu0 %v3035
    %4016 = vmatpush1.msra.mxu0 %v3034
    %4017 = vmatprep.subr.mxu0 %v3039
    %4018 = vmatpush1.msra.mxu0 %v3038
    %4019 = vmatprep.subr.mxu0 %v3043
    %4020 = vmatpush1.msra.mxu0 %v3042
    %4021 = vmatprep.subr.mxu0 %v3047
    %4022 = vmatpush1.msra.mxu0 %v3046
    %4023 = vmatprep.subr.mxu0 %v3051
    %4024 = vmatpush1.msra.mxu0 %v3050
    %4025 = vmatprep.subr.mxu0 0.0
    %4026 = vmatpush1.msra.mxu0 0.0
    %4027 = vmatprep.subr.mxu0 0.0
    %4028 = vmatpush1.msra.mxu0 0.0
    %4029 = vmatprep.subr.mxu0 0.0
    %4030 = vmatpush1.msra.mxu0 0.0
    %4031 = vmatprep.subr.mxu0 0.0
    %4032 = vmatpush1.msra.mxu0 0.0
    %4033 = vmatprep.subr.mxu0 0.0
    %4034 = vmatpush1.msra.mxu0 0.0
    %4035 = vmatprep.subr.mxu0 0.0
    %4036 = vmatpush1.msra.mxu0 0.0
    %4037 = vmatprep.subr.mxu0 0.0
    %4038 = vmatpush1.msra.mxu0 0.0
    %4039 = vmatprep.subr.mxu0 0.0
    %4040 = vmatpush1.msra.mxu0 0.0
    %4041 = vmatprep.subr.mxu0 0.0
    %4042 = vmatpush1.msra.mxu0 0.0
    %4043 = vmatprep.subr.mxu0 0.0
    %4044 = vmatpush1.msra.mxu0 0.0
    %4045 = vmatprep.subr.mxu0 0.0
    %4046 = vmatpush1.msra.mxu0 0.0
    %4047 = vmatprep.subr.mxu0 0.0
    %4048 = vmatpush1.msra.mxu0 0.0
    %4049 = vmatprep.subr.mxu0 0.0
    %4050 = vmatpush1.msra.mxu0 0.0
    %4051 = vmatprep.subr.mxu0 0.0
    %4052 = vmatpush1.msra.mxu0 0.0
    %4053 = vmatprep.subr.mxu0 0.0
    %4054 = vmatpush1.msra.mxu0 0.0
    %4055 = vmatprep.subr.mxu0 0.0
    %4056 = vmatpush1.msra.mxu0 0.0
    %4057 = vmatprep.mubr.f32.mxu0 0.0
    %4058 = vmatmul.mubr.f32.gmra.mrb[0].mxu0 %v3917
    %v4059 = vpop.f32.mrb[0].mxu0
    %v4060 = vadd.f32 0.0, %v4059
    %v4061 = vpop.f32.mrb[0].mxu0
    %v4062 = vadd.f32 0.0, %v4061
    %4063 = vdwg.mxu0
    %v4064 = vadd.f32 %v3918, %v3989
    %v4065 = vadd.f32 %v3919, %v3991
    %v4066 = vadd.f32 %v3920, %v4060
    %v4067 = vadd.f32 %v3921, %v4062
    %v4068 = vxor.u32 %v4064, 2147483648
    %v4069 = vxor.u32 %v4065, 2147483648
    %v4070 = vxor.u32 %v4066, 2147483648
    %v4071 = vmul.f32 %v4068, 1.442695
    %v4072 = vpow.pop %v4071
    %v4073 = vmul.f32 %v4069, 1.442695
    %v4074 = vpow.pop %v4073
    %v4075 = vmul.f32 %v4070, 1.442695
    %v4076 = vpow.pop %v4075
    %v4077 = vadd.f32 %v4072, 1.0
    %v4078 = vadd.f32 %v4074, 1.0
    %v4079 = vadd.f32 %v4076, 1.0
    %v4080 = vrcp.pop %v4077
    %v4081 = vmul.f32 1.0, %v4080
    %v4082 = vrcp.pop %v4078
    %v4083 = vmul.f32 1.0, %v4082
    %v4084 = vrcp.pop %v4079
    %v4085 = vmul.f32 1.0, %v4084
    %v4086 = vtanh.pop %v4067
    %v4087 = vmul.f32 %v4083, %v3915
    %v4088 = vmul.f32 %v4081, %v4086
    %v4089 = vadd.f32 %v4087, %v4088
    %v4090 = vtanh.pop %v4089
    %v4091 = vmul.f32 %v4085, %v4090
    %v4092 = vld [vmem:[%s2148] sm:$0xff]
    %v4093 = vld [vmem:[%s2148 + $0x8] sm:$0xff]
    %v4094 = vld [vmem:[%s2148 + $0x10] sm:$0xff]
    %v4095 = vld [vmem:[%s2148 + $0x18] sm:$0xff]
    %4096 = vmatprep.subr.mxu0 %v2989
    %4097 = vmatpush1.msra.mxu0 %v2988
    %4098 = vmatprep.subr.mxu0 %v2993
    %4099 = vmatpush1.msra.mxu0 %v2992
    %4100 = vmatprep.subr.mxu0 %v2997
    %4101 = vmatpush1.msra.mxu0 %v2996
    %4102 = vmatprep.subr.mxu0 %v3001
    %4103 = vmatpush1.msra.mxu0 %v3000
    %4104 = vmatprep.subr.mxu0 %v3005
    %4105 = vmatpush1.msra.mxu0 %v3004
    %4106 = vmatprep.subr.mxu0 %v3009
    %4107 = vmatpush1.msra.mxu0 %v3008
    %4108 = vmatprep.subr.mxu0 %v3013
    %4109 = vmatpush1.msra.mxu0 %v3012
    %4110 = vmatprep.subr.mxu0 %v3017
    %4111 = vmatpush1.msra.mxu0 %v3016
    %4112 = vmatprep.subr.mxu0 %v3021
    %4113 = vmatpush1.msra.mxu0 %v3020
    %4114 = vmatprep.subr.mxu0 %v3025
    %4115 = vmatpush1.msra.mxu0 %v3024
    %4116 = vmatprep.subr.mxu0 %v3029
    %4117 = vmatpush1.msra.mxu0 %v3028
    %4118 = vmatprep.subr.mxu0 %v3033
    %4119 = vmatpush1.msra.mxu0 %v3032
    %4120 = vmatprep.subr.mxu0 %v3037
    %4121 = vmatpush1.msra.mxu0 %v3036
    %4122 = vmatprep.subr.mxu0 %v3041
    %4123 = vmatpush1.msra.mxu0 %v3040
    %4124 = vmatprep.subr.mxu0 %v3045
    %4125 = vmatpush1.msra.mxu0 %v3044
    %4126 = vmatprep.subr.mxu0 %v3049
    %4127 = vmatpush1.msra.mxu0 %v3048
    %4128 = vmatprep.subr.mxu0 0.0
    %4129 = vmatpush1.msra.mxu0 0.0
    %4130 = vmatprep.subr.mxu0 0.0
    %4131 = vmatpush1.msra.mxu0 0.0
    %4132 = vmatprep.subr.mxu0 0.0
    %4133 = vmatpush1.msra.mxu0 0.0
    %4134 = vmatprep.subr.mxu0 0.0
    %4135 = vmatpush1.msra.mxu0 0.0
    %4136 = vmatprep.subr.mxu0 0.0
    %4137 = vmatpush1.msra.mxu0 0.0
    %4138 = vmatprep.subr.mxu0 0.0
    %4139 = vmatpush1.msra.mxu0 0.0
    %4140 = vmatprep.subr.mxu0 0.0
    %4141 = vmatpush1.msra.mxu0 0.0
    %4142 = vmatprep.subr.mxu0 0.0
    %4143 = vmatpush1.msra.mxu0 0.0
    %4144 = vmatprep.subr.mxu0 0.0
    %4145 = vmatpush1.msra.mxu0 0.0
    %4146 = vmatprep.subr.mxu0 0.0
    %4147 = vmatpush1.msra.mxu0 0.0
    %4148 = vmatprep.subr.mxu0 0.0
    %4149 = vmatpush1.msra.mxu0 0.0
    %4150 = vmatprep.subr.mxu0 0.0
    %4151 = vmatpush1.msra.mxu0 0.0
    %4152 = vmatprep.subr.mxu0 0.0
    %4153 = vmatpush1.msra.mxu0 0.0
    %4154 = vmatprep.subr.mxu0 0.0
    %4155 = vmatpush1.msra.mxu0 0.0
    %4156 = vmatprep.subr.mxu0 0.0
    %4157 = vmatpush1.msra.mxu0 0.0
    %4158 = vmatprep.subr.mxu0 0.0
    %4159 = vmatpush1.msra.mxu0 0.0
    %4160 = vmatprep.mubr.f32.mxu0 0.0
    %4161 = vmatmul.mubr.f32.gmra.mrb[0].mxu0 %v4091
    %v4162 = vpop.f32.mrb[0].mxu0
    %v4163 = vadd.f32 0.0, %v4162
    %v4164 = vpop.f32.mrb[0].mxu0
    %v4165 = vadd.f32 0.0, %v4164
    %4166 = vdwg.mxu0
    %4167 = vmatprep.subr.mxu0 %v2991
    %4168 = vmatpush1.msra.mxu0 %v2990
    %4169 = vmatprep.subr.mxu0 %v2995
    %4170 = vmatpush1.msra.mxu0 %v2994
    %4171 = vmatprep.subr.mxu0 %v2999
    %4172 = vmatpush1.msra.mxu0 %v2998
    %4173 = vmatprep.subr.mxu0 %v3003
    %4174 = vmatpush1.msra.mxu0 %v3002
    %4175 = vmatprep.subr.mxu0 %v3007
    %4176 = vmatpush1.msra.mxu0 %v3006
    %4177 = vmatprep.subr.mxu0 %v3011
    %4178 = vmatpush1.msra.mxu0 %v3010
    %4179 = vmatprep.subr.mxu0 %v3015
    %4180 = vmatpush1.msra.mxu0 %v3014
    %4181 = vmatprep.subr.mxu0 %v3019
    %4182 = vmatpush1.msra.mxu0 %v3018
    %4183 = vmatprep.subr.mxu0 %v3023
    %4184 = vmatpush1.msra.mxu0 %v3022
    %4185 = vmatprep.subr.mxu0 %v3027
    %4186 = vmatpush1.msra.mxu0 %v3026
    %4187 = vmatprep.subr.mxu0 %v3031
    %4188 = vmatpush1.msra.mxu0 %v3030
    %4189 = vmatprep.subr.mxu0 %v3035
    %4190 = vmatpush1.msra.mxu0 %v3034
    %4191 = vmatprep.subr.mxu0 %v3039
    %4192 = vmatpush1.msra.mxu0 %v3038
    %4193 = vmatprep.subr.mxu0 %v3043
    %4194 = vmatpush1.msra.mxu0 %v3042
    %4195 = vmatprep.subr.mxu0 %v3047
    %4196 = vmatpush1.msra.mxu0 %v3046
    %4197 = vmatprep.subr.mxu0 %v3051
    %4198 = vmatpush1.msra.mxu0 %v3050
    %4199 = vmatprep.subr.mxu0 0.0
    %4200 = vmatpush1.msra.mxu0 0.0
    %4201 = vmatprep.subr.mxu0 0.0
    %4202 = vmatpush1.msra.mxu0 0.0
    %4203 = vmatprep.subr.mxu0 0.0
    %4204 = vmatpush1.msra.mxu0 0.0
    %4205 = vmatprep.subr.mxu0 0.0
    %4206 = vmatpush1.msra.mxu0 0.0
    %4207 = vmatprep.subr.mxu0 0.0
    %4208 = vmatpush1.msra.mxu0 0.0
    %4209 = vmatprep.subr.mxu0 0.0
    %4210 = vmatpush1.msra.mxu0 0.0
    %4211 = vmatprep.subr.mxu0 0.0
    %4212 = vmatpush1.msra.mxu0 0.0
    %4213 = vmatprep.subr.mxu0 0.0
    %4214 = vmatpush1.msra.mxu0 0.0
    %4215 = vmatprep.subr.mxu0 0.0
    %4216 = vmatpush1.msra.mxu0 0.0
    %4217 = vmatprep.subr.mxu0 0.0
    %4218 = vmatpush1.msra.mxu0 0.0
    %4219 = vmatprep.subr.mxu0 0.0
    %4220 = vmatpush1.msra.mxu0 0.0
    %4221 = vmatprep.subr.mxu0 0.0
    %4222 = vmatpush1.msra.mxu0 0.0
    %4223 = vmatprep.subr.mxu0 0.0
    %4224 = vmatpush1.msra.mxu0 0.0
    %4225 = vmatprep.subr.mxu0 0.0
    %4226 = vmatpush1.msra.mxu0 0.0
    %4227 = vmatprep.subr.mxu0 0.0
    %4228 = vmatpush1.msra.mxu0 0.0
    %4229 = vmatprep.subr.mxu0 0.0
    %4230 = vmatpush1.msra.mxu0 0.0
    %4231 = vmatprep.mubr.f32.mxu0 0.0
    %4232 = vmatmul.mubr.f32.gmra.mrb[0].mxu0 %v4091
    %v4233 = vpop.f32.mrb[0].mxu0
    %v4234 = vadd.f32 0.0, %v4233
    %v4235 = vpop.f32.mrb[0].mxu0
    %v4236 = vadd.f32 0.0, %v4235
    %4237 = vdwg.mxu0
    %v4238 = vadd.f32 %v4092, %v4163
    %v4239 = vadd.f32 %v4093, %v4165
    %v4240 = vadd.f32 %v4094, %v4234
    %v4241 = vadd.f32 %v4095, %v4236
    %v4242 = vxor.u32 %v4238, 2147483648
    %v4243 = vxor.u32 %v4239, 2147483648
    %v4244 = vxor.u32 %v4240, 2147483648
    %v4245 = vmul.f32 %v4242, 1.442695
    %v4246 = vpow.pop %v4245
    %v4247 = vmul.f32 %v4243, 1.442695
    %v4248 = vpow.pop %v4247
    %v4249 = vmul.f32 %v4244, 1.442695
    %v4250 = vpow.pop %v4249
    %v4251 = vadd.f32 %v4246, 1.0
    %v4252 = vadd.f32 %v4248, 1.0
    %v4253 = vadd.f32 %v4250, 1.0
    %v4254 = vrcp.pop %v4251
    %v4255 = vmul.f32 1.0, %v4254
    %v4256 = vrcp.pop %v4252
    %v4257 = vmul.f32 1.0, %v4256
    %v4258 = vrcp.pop %v4253
    %v4259 = vmul.f32 1.0, %v4258
    %v4260 = vtanh.pop %v4241
    %v4261 = vmul.f32 %v4257, %v4089
    %v4262 = vmul.f32 %v4255, %v4260
    %v4263 = vadd.f32 %v4261, %v4262
    %v4264 = vtanh.pop %v4263
    %v4265 = vmul.f32 %v4259, %v4264
    %v4266 = vld [vmem:[%s2391] sm:$0xff]
    %v4267 = vld [vmem:[%s2391 + $0x8] sm:$0xff]
    %v4268 = vld [vmem:[%s2391 + $0x10] sm:$0xff]
    %v4269 = vld [vmem:[%s2391 + $0x18] sm:$0xff]
    %4270 = vmatprep.subr.mxu0 %v2989
    %4271 = vmatpush1.msra.mxu0 %v2988
    %4272 = vmatprep.subr.mxu0 %v2993
    %4273 = vmatpush1.msra.mxu0 %v2992
    %4274 = vmatprep.subr.mxu0 %v2997
    %4275 = vmatpush1.msra.mxu0 %v2996
    %4276 = vmatprep.subr.mxu0 %v3001
    %4277 = vmatpush1.msra.mxu0 %v3000
    %4278 = vmatprep.subr.mxu0 %v3005
    %4279 = vmatpush1.msra.mxu0 %v3004
    %4280 = vmatprep.subr.mxu0 %v3009
    %4281 = vmatpush1.msra.mxu0 %v3008
    %4282 = vmatprep.subr.mxu0 %v3013
    %4283 = vmatpush1.msra.mxu0 %v3012
    %4284 = vmatprep.subr.mxu0 %v3017
    %4285 = vmatpush1.msra.mxu0 %v3016
    %4286 = vmatprep.subr.mxu0 %v3021
    %4287 = vmatpush1.msra.mxu0 %v3020
    %4288 = vmatprep.subr.mxu0 %v3025
    %4289 = vmatpush1.msra.mxu0 %v3024
    %4290 = vmatprep.subr.mxu0 %v3029
    %4291 = vmatpush1.msra.mxu0 %v3028
    %4292 = vmatprep.subr.mxu0 %v3033
    %4293 = vmatpush1.msra.mxu0 %v3032
    %4294 = vmatprep.subr.mxu0 %v3037
    %4295 = vmatpush1.msra.mxu0 %v3036
    %4296 = vmatprep.subr.mxu0 %v3041
    %4297 = vmatpush1.msra.mxu0 %v3040
    %4298 = vmatprep.subr.mxu0 %v3045
    %4299 = vmatpush1.msra.mxu0 %v3044
    %4300 = vmatprep.subr.mxu0 %v3049
    %4301 = vmatpush1.msra.mxu0 %v3048
    %4302 = vmatprep.subr.mxu0 0.0
    %4303 = vmatpush1.msra.mxu0 0.0
    %4304 = vmatprep.subr.mxu0 0.0
    %4305 = vmatpush1.msra.mxu0 0.0
    %4306 = vmatprep.subr.mxu0 0.0
    %4307 = vmatpush1.msra.mxu0 0.0
    %4308 = vmatprep.subr.mxu0 0.0
    %4309 = vmatpush1.msra.mxu0 0.0
    %4310 = vmatprep.subr.mxu0 0.0
    %4311 = vmatpush1.msra.mxu0 0.0
    %4312 = vmatprep.subr.mxu0 0.0
    %4313 = vmatpush1.msra.mxu0 0.0
    %4314 = vmatprep.subr.mxu0 0.0
    %4315 = vmatpush1.msra.mxu0 0.0
    %4316 = vmatprep.subr.mxu0 0.0
    %4317 = vmatpush1.msra.mxu0 0.0
    %4318 = vmatprep.subr.mxu0 0.0
    %4319 = vmatpush1.msra.mxu0 0.0
    %4320 = vmatprep.subr.mxu0 0.0
    %4321 = vmatpush1.msra.mxu0 0.0
    %4322 = vmatprep.subr.mxu0 0.0
    %4323 = vmatpush1.msra.mxu0 0.0
    %4324 = vmatprep.subr.mxu0 0.0
    %4325 = vmatpush1.msra.mxu0 0.0
    %4326 = vmatprep.subr.mxu0 0.0
    %4327 = vmatpush1.msra.mxu0 0.0
    %4328 = vmatprep.subr.mxu0 0.0
    %4329 = vmatpush1.msra.mxu0 0.0
    %4330 = vmatprep.subr.mxu0 0.0
    %4331 = vmatpush1.msra.mxu0 0.0
    %4332 = vmatprep.subr.mxu0 0.0
    %4333 = vmatpush1.msra.mxu0 0.0
    %4334 = vmatprep.mubr.f32.mxu0 0.0
    %4335 = vmatmul.mubr.f32.gmra.mrb[0].mxu0 %v4265
    %v4336 = vpop.f32.mrb[0].mxu0
    %v4337 = vadd.f32 0.0, %v4336
    %v4338 = vpop.f32.mrb[0].mxu0
    %v4339 = vadd.f32 0.0, %v4338
    %4340 = vdwg.mxu0
    %4341 = vmatprep.subr.mxu0 %v2991
    %4342 = vmatpush1.msra.mxu0 %v2990
    %4343 = vmatprep.subr.mxu0 %v2995
    %4344 = vmatpush1.msra.mxu0 %v2994
    %4345 = vmatprep.subr.mxu0 %v2999
    %4346 = vmatpush1.msra.mxu0 %v2998
    %4347 = vmatprep.subr.mxu0 %v3003
    %4348 = vmatpush1.msra.mxu0 %v3002
    %4349 = vmatprep.subr.mxu0 %v3007
    %4350 = vmatpush1.msra.mxu0 %v3006
    %4351 = vmatprep.subr.mxu0 %v3011
    %4352 = vmatpush1.msra.mxu0 %v3010
    %4353 = vmatprep.subr.mxu0 %v3015
    %4354 = vmatpush1.msra.mxu0 %v3014
    %4355 = vmatprep.subr.mxu0 %v3019
    %4356 = vmatpush1.msra.mxu0 %v3018
    %4357 = vmatprep.subr.mxu0 %v3023
    %4358 = vmatpush1.msra.mxu0 %v3022
    %4359 = vmatprep.subr.mxu0 %v3027
    %4360 = vmatpush1.msra.mxu0 %v3026
    %4361 = vmatprep.subr.mxu0 %v3031
    %4362 = vmatpush1.msra.mxu0 %v3030
    %4363 = vmatprep.subr.mxu0 %v3035
    %4364 = vmatpush1.msra.mxu0 %v3034
    %4365 = vmatprep.subr.mxu0 %v3039
    %4366 = vmatpush1.msra.mxu0 %v3038
    %4367 = vmatprep.subr.mxu0 %v3043
    %4368 = vmatpush1.msra.mxu0 %v3042
    %4369 = vmatprep.subr.mxu0 %v3047
    %4370 = vmatpush1.msra.mxu0 %v3046
    %4371 = vmatprep.subr.mxu0 %v3051
    %4372 = vmatpush1.msra.mxu0 %v3050
    %4373 = vmatprep.subr.mxu0 0.0
    %4374 = vmatpush1.msra.mxu0 0.0
    %4375 = vmatprep.subr.mxu0 0.0
    %4376 = vmatpush1.msra.mxu0 0.0
    %4377 = vmatprep.subr.mxu0 0.0
    %4378 = vmatpush1.msra.mxu0 0.0
    %4379 = vmatprep.subr.mxu0 0.0
    %4380 = vmatpush1.msra.mxu0 0.0
    %4381 = vmatprep.subr.mxu0 0.0
    %4382 = vmatpush1.msra.mxu0 0.0
    %4383 = vmatprep.subr.mxu0 0.0
    %4384 = vmatpush1.msra.mxu0 0.0
    %4385 = vmatprep.subr.mxu0 0.0
    %4386 = vmatpush1.msra.mxu0 0.0
    %4387 = vmatprep.subr.mxu0 0.0
    %4388 = vmatpush1.msra.mxu0 0.0
    %4389 = vmatprep.subr.mxu0 0.0
    %4390 = vmatpush1.msra.mxu0 0.0
    %4391 = vmatprep.subr.mxu0 0.0
    %4392 = vmatpush1.msra.mxu0 0.0
    %4393 = vmatprep.subr.mxu0 0.0
    %4394 = vmatpush1.msra.mxu0 0.0
    %4395 = vmatprep.subr.mxu0 0.0
    %4396 = vmatpush1.msra.mxu0 0.0
    %4397 = vmatprep.subr.mxu0 0.0
    %4398 = vmatpush1.msra.mxu0 0.0
    %4399 = vmatprep.subr.mxu0 0.0
    %4400 = vmatpush1.msra.mxu0 0.0
    %4401 = vmatprep.subr.mxu0 0.0
    %4402 = vmatpush1.msra.mxu0 0.0
    %4403 = vmatprep.subr.mxu0 0.0
    %4404 = vmatpush1.msra.mxu0 0.0
    %4405 = vmatprep.mubr.f32.mxu0 0.0
    %4406 = vmatmul.mubr.f32.gmra.mrb[0].mxu0 %v4265
    %v4407 = vpop.f32.mrb[0].mxu0
    %v4408 = vadd.f32 0.0, %v4407
    %v4409 = vpop.f32.mrb[0].mxu0
    %v4410 = vadd.f32 0.0, %v4409
    %4411 = vdwg.mxu0
    %v4412 = vadd.f32 %v4266, %v4337
    %v4413 = vadd.f32 %v4267, %v4339
    %v4414 = vadd.f32 %v4268, %v4408
    %v4415 = vadd.f32 %v4269, %v4410
    %v4416 = vxor.u32 %v4412, 2147483648
    %v4417 = vxor.u32 %v4413, 2147483648
    %v4418 = vxor.u32 %v4414, 2147483648
    %v4419 = vmul.f32 %v4416, 1.442695
    %v4420 = vpow.pop %v4419
    %v4421 = vmul.f32 %v4417, 1.442695
    %v4422 = vpow.pop %v4421
    %v4423 = vmul.f32 %v4418, 1.442695
    %v4424 = vpow.pop %v4423
    %v4425 = vadd.f32 %v4420, 1.0
    %v4426 = vadd.f32 %v4422, 1.0
    %v4427 = vadd.f32 %v4424, 1.0
    %v4428 = vrcp.pop %v4425
    %v4429 = vmul.f32 1.0, %v4428
    %v4430 = vrcp.pop %v4426
    %v4431 = vmul.f32 1.0, %v4430
    %v4432 = vrcp.pop %v4427
    %v4433 = vmul.f32 1.0, %v4432
    %v4434 = vtanh.pop %v4415
    %v4435 = vmul.f32 %v4431, %v4263
    %v4436 = vmul.f32 %v4429, %v4434
    %v4437 = vadd.f32 %v4435, %v4436
    %v4438 = vtanh.pop %v4437
    %v4439 = vmul.f32 %v4433, %v4438
    %v4440 = vld [vmem:[#allocation12] sm:$0xff]
    %v4441 = vld [vmem:[#allocation12 + $0x8] sm:$0xff]
    %v4442 = vld [vmem:[#allocation12 + $0x10] sm:$0xff]
    %v4443 = vld [vmem:[#allocation12 + $0x18] sm:$0xff]
    %v4444 = vld [vmem:[#allocation12 + $0x20] sm:$0xff]
    %v4445 = vld [vmem:[#allocation12 + $0x28] sm:$0xff]
    %v4446 = vld [vmem:[#allocation12 + $0x30] sm:$0xff]
    %v4447 = vld [vmem:[#allocation12 + $0x38] sm:$0xff]
    %v4448 = vld [vmem:[#allocation12 + $0x40] sm:$0xff]
    %v4449 = vld [vmem:[#allocation12 + $0x48] sm:$0xff]
    %v4450 = vld [vmem:[#allocation12 + $0x50] sm:$0xff]
    %v4451 = vld [vmem:[#allocation12 + $0x58] sm:$0xff]
    %v4452 = vld [vmem:[#allocation12 + $0x60] sm:$0xff]
    %v4453 = vld [vmem:[#allocation12 + $0x68] sm:$0xff]
    %v4454 = vld [vmem:[#allocation12 + $0x70] sm:$0xff]
    %v4455 = vld [vmem:[#allocation12 + $0x78] sm:$0xff]
    %v4456 = vld [vmem:[%s9] sm:$0x1]
    %v4458 = vlaneseq
    %v4459 = vshrl.u32 %v4458, 7
    %v4460 = vsub.s32 0, %v4459
    %v4461 = vrot.slane %v4456, %v4460
    %4463 = vmatprep.subr.mxu0 0.0
    %4464 = vmatpush1.msra.mxu0 %v4440
    %4465 = vmatprep.subr.mxu0 0.0
    %4466 = vmatpush1.msra.mxu0 %v4441
    %4467 = vmatprep.subr.mxu0 0.0
    %4468 = vmatpush1.msra.mxu0 %v4442
    %4469 = vmatprep.subr.mxu0 0.0
    %4470 = vmatpush1.msra.mxu0 %v4443
    %4471 = vmatprep.subr.mxu0 0.0
    %4472 = vmatpush1.msra.mxu0 %v4444
    %4473 = vmatprep.subr.mxu0 0.0
    %4474 = vmatpush1.msra.mxu0 %v4445
    %4475 = vmatprep.subr.mxu0 0.0
    %4476 = vmatpush1.msra.mxu0 %v4446
    %4477 = vmatprep.subr.mxu0 0.0
    %4478 = vmatpush1.msra.mxu0 %v4447
    %4479 = vmatprep.subr.mxu0 0.0
    %4480 = vmatpush1.msra.mxu0 %v4448
    %4481 = vmatprep.subr.mxu0 0.0
    %4482 = vmatpush1.msra.mxu0 %v4449
    %4483 = vmatprep.subr.mxu0 0.0
    %4484 = vmatpush1.msra.mxu0 %v4450
    %4485 = vmatprep.subr.mxu0 0.0
    %4486 = vmatpush1.msra.mxu0 %v4451
    %4487 = vmatprep.subr.mxu0 0.0
    %4488 = vmatpush1.msra.mxu0 %v4452
    %4489 = vmatprep.subr.mxu0 0.0
    %4490 = vmatpush1.msra.mxu0 %v4453
    %4491 = vmatprep.subr.mxu0 0.0
    %4492 = vmatpush1.msra.mxu0 %v4454
    %4493 = vmatprep.subr.mxu0 0.0
    %4494 = vmatpush1.msra.mxu0 %v4455
    %4495 = vmatprep.subr.mxu0 0.0
    %4496 = vmatpush1.msra.mxu0 0.0
    %4497 = vmatprep.subr.mxu0 0.0
    %4498 = vmatpush1.msra.mxu0 0.0
    %4499 = vmatprep.subr.mxu0 0.0
    %4500 = vmatpush1.msra.mxu0 0.0
    %4501 = vmatprep.subr.mxu0 0.0
    %4502 = vmatpush1.msra.mxu0 0.0
    %4503 = vmatprep.subr.mxu0 0.0
    %4504 = vmatpush1.msra.mxu0 0.0
    %4505 = vmatprep.subr.mxu0 0.0
    %4506 = vmatpush1.msra.mxu0 0.0
    %4507 = vmatprep.subr.mxu0 0.0
    %4508 = vmatpush1.msra.mxu0 0.0
    %4509 = vmatprep.subr.mxu0 0.0
    %4510 = vmatpush1.msra.mxu0 0.0
    %4511 = vmatprep.subr.mxu0 0.0
    %4512 = vmatpush1.msra.mxu0 0.0
    %4513 = vmatprep.subr.mxu0 0.0
    %4514 = vmatpush1.msra.mxu0 0.0
    %4515 = vmatprep.subr.mxu0 0.0
    %4516 = vmatpush1.msra.mxu0 0.0
    %4517 = vmatprep.subr.mxu0 0.0
    %4518 = vmatpush1.msra.mxu0 0.0
    %4519 = vmatprep.subr.mxu0 0.0
    %4520 = vmatpush1.msra.mxu0 0.0
    %4521 = vmatprep.subr.mxu0 0.0
    %4522 = vmatpush1.msra.mxu0 0.0
    %4523 = vmatprep.subr.mxu0 0.0
    %4524 = vmatpush1.msra.mxu0 0.0
    %4525 = vmatprep.subr.mxu0 0.0
    %4526 = vmatpush1.msra.mxu0 0.0
    %4527 = vmatprep.mubr.f32.mxu0 0.0
    %4528 = vmatmul.mubr.f32.gmra.mrb[0].mxu0 %v4439
    %v4529 = vpop.f32.mrb[0].mxu0
    %v4530 = vadd.f32 %v4461, %v4529
    %v4531 = vpop.f32.mrb[0].mxu0
    %4532 = vdwg.mxu0
    %4533 = vst [vmem:[%s10] sm:$0xff] %v4530
    // Predicated region
    $region62: #{lstm_forward.1} parent=1 // pred_check
      _
    $region63: #{lstm_forward.1} parent=1 // pred_check_branch
      %4535 = sbr.rel (0) target = $region65
    $region64: #{lstm_forward.1} parent=1 // pred_region
      _
    $region65: #{lstm_forward.1} parent=1 // pred_fallthru
      _
    // Predicated region
    $region66: #{lstm_forward.1} parent=1 // pred_check
      _
    $region67: #{lstm_forward.1} parent=1 // pred_check_branch
      %4537 = sbr.rel (0) target = $region69
    $region68: #{lstm_forward.1} parent=1 // pred_region
      _
    $region69: #{lstm_forward.1} parent=1 // pred_fallthru
      _
    %4538 = vsyncpa [#allocation6], 1
    %4539 = vsyncpa [#allocation10], 1
    %4540 = vsyncpa [#allocation13], 1
    %4541 = vsyncpa [#allocation7], 1

</llo_original>
